<compile_context>
chip_gen: v7x
topology: tpu7x:2x2x1
jax: 0.10.0
libtpu: 0.0.40
codegen_flags: <defaults>
</compile_context>

<pallas_src>
import functools

import jax
import jax.numpy as jnp
from jax import lax
from jax.experimental import pallas as pl
from jax.experimental.pallas import tpu as pltpu


def _block_kernel(x_ref, w1_ref, s1_ref, b1_ref, w2_ref, s2_ref, b2_ref,
                  o_ref, xpad_ref, apad_ref, *, H, W, KH, KW, C_in, Cp):
    """Fused Conv(same)+BN+ReLU -> Conv(same)+BN+ReLU -> MaxPool(2,2) for one image."""
    ph, pw = KH // 2, KW // 2
    HP, WP = H + 2 * ph, W + 2 * pw

    # ---- stage the unpadded image into a zero-haloed VMEM scratch -------------
    # Only the halo border is zeroed each step (interior is fully overwritten), so
    # there is no full-scratch zero-fill and no cross-iteration dependency.
    xpad_ref[0:ph, :, :] = jnp.zeros((ph, WP, C_in), jnp.float32)
    xpad_ref[ph + H:HP, :, :] = jnp.zeros((ph, WP, C_in), jnp.float32)
    xpad_ref[:, 0:pw, :] = jnp.zeros((HP, pw, C_in), jnp.float32)
    xpad_ref[:, pw + W:WP, :] = jnp.zeros((HP, pw, C_in), jnp.float32)
    xpad_ref[ph:ph + H, pw:pw + W, :] = x_ref[0]

    # ---- conv1 ('same'): one im2col MXU matmul + folded BN + ReLU -------------
    patches1 = jnp.concatenate(
        [xpad_ref[kh:kh + H, kw:kw + W, :]
         for kh in range(KH) for kw in range(KW)],
        axis=-1)                                         # (H, W, KH*KW*C_in)
    # W is a multiple of 8, so merging (H, W) is layout-preserving (no relayout).
    acc1 = jnp.dot(patches1.reshape(H * W, KH * KW * C_in), w1_ref[...],
                   preferred_element_type=jnp.float32)   # (H*W, Cp)
    act1 = jnp.maximum(acc1 * s1_ref[0] + b1_ref[0], 0.0).reshape(H, W, Cp)

    # ---- stage act1 into a zero-haloed scratch for the second 'same' conv -----
    apad_ref[0:ph, :, :] = jnp.zeros((ph, WP, Cp), jnp.float32)
    apad_ref[ph + H:HP, :, :] = jnp.zeros((ph, WP, Cp), jnp.float32)
    apad_ref[:, 0:pw, :] = jnp.zeros((HP, pw, Cp), jnp.float32)
    apad_ref[:, pw + W:WP, :] = jnp.zeros((HP, pw, Cp), jnp.float32)
    apad_ref[ph:ph + H, pw:pw + W, :] = act1

    # ---- conv2 ('same') + BN + ReLU: 9 accumulating full-K (Cp=128) matmuls ---
    acc2 = jnp.zeros((H * W, Cp), jnp.float32)
    for kh in range(KH):
        for kw in range(KW):
            patch = apad_ref[kh:kh + H, kw:kw + W, :].reshape(H * W, Cp)
            acc2 = acc2 + jnp.dot(patch, w2_ref[kh, kw],
                                  preferred_element_type=jnp.float32)
    act2 = jnp.maximum(acc2 * s2_ref[0] + b2_ref[0], 0.0).reshape(H, W, Cp)

    # ---- MaxPool2d(2, 2): H-pool splits only the outer dim (pure VPU max);
    # the W-pool needs one sublane regroup — negligible at this size. -----------
    p = act2.reshape(H // 2, 2, W, Cp).max(axis=1)
    p = p.reshape(H // 2, W // 2, 2, Cp).max(axis=2)
    o_ref[0] = p.astype(o_ref.dtype)                     # lane-dense (Cp=128) store


def _fold_bn(conv_bias, gamma, beta, mean, var, eps=1e-5):
    """Fold conv bias + eval-mode BatchNorm into per-channel (scale, bias)."""
    inv = gamma / jnp.sqrt(var + eps)
    return inv.astype(jnp.float32), ((conv_bias - mean) * inv + beta).astype(jnp.float32)


def block_forward(x_nchw, params):
    """Runs the fused Pallas kernel. Input/output are NCHW like the PyTorch module."""
    x = jnp.transpose(x_nchw, (0, 2, 3, 1)).astype(jnp.float32)   # NCHW -> NHWC
    N, H, W, C_in = x.shape
    w1 = params["w1"].astype(jnp.float32)
    w2 = params["w2"].astype(jnp.float32)
    KH, KW, _, C1 = w1.shape
    assert H % 2 == 0 and W % 2 == 0, "MaxPool(2,2) assumes even spatial dims"
    assert KH % 2 == 1 and KW % 2 == 1, "'same' padding implemented for odd kernels"

    Cp = ((C1 + 127) // 128) * 128           # pad channels to full 128-lane width
    ph, pw = KH // 2, KW // 2

    s1, b1 = _fold_bn(params["b1"], params["g1"], params["beta1"],
                      params["m1"], params["v1"])
    s2, b2 = _fold_bn(params["b2"], params["g2"], params["beta2"],
                      params["m2"], params["v2"])

    def pad_vec(v):                          # (C1,) -> (1, Cp), zero lane padding
        return jnp.zeros((1, Cp), jnp.float32).at[0, :C1].set(v)

    # conv1 weights as a single im2col matrix (row order = (kh, kw, c_in)), out
    # channels zero-padded to Cp lanes.
    w1_mat = jnp.zeros((KH * KW * C_in, Cp), jnp.float32).at[:, :C1].set(
        w1.reshape(KH * KW * C_in, C1))
    # conv2 weights with both in- and out-channels zero-padded to Cp (the padded
    # act1 channels are exactly zero, so the extra rows contribute nothing).
    w2_pad = jnp.zeros((KH, KW, Cp, Cp), jnp.float32).at[:, :, :C1, :C1].set(w2)

    kernel = functools.partial(_block_kernel, H=H, W=W, KH=KH, KW=KW,
                               C_in=C_in, Cp=Cp)

    out_nhwc = pl.pallas_call(
        kernel,
        out_shape=jax.ShapeDtypeStruct((N, H // 2, W // 2, Cp), jnp.float32),
        grid_spec=pltpu.PrefetchScalarGridSpec(
            num_scalar_prefetch=0,
            grid=(N,),
            in_specs=[
                pl.BlockSpec((1, H, W, C_in), lambda b: (b, 0, 0, 0)),
                pl.BlockSpec((KH * KW * C_in, Cp), lambda b: (0, 0)),
                pl.BlockSpec((1, Cp), lambda b: (0, 0)),
                pl.BlockSpec((1, Cp), lambda b: (0, 0)),
                pl.BlockSpec((KH, KW, Cp, Cp), lambda b: (0, 0, 0, 0)),
                pl.BlockSpec((1, Cp), lambda b: (0, 0)),
                pl.BlockSpec((1, Cp), lambda b: (0, 0)),
            ],
            out_specs=pl.BlockSpec((1, H // 2, W // 2, Cp),
                                   lambda b: (b, 0, 0, 0)),
            scratch_shapes=[
                pltpu.VMEM((H + 2 * ph, W + 2 * pw, C_in), jnp.float32),
                pltpu.VMEM((H + 2 * ph, W + 2 * pw, Cp), jnp.float32),
            ],
        ),
        # Batch iterations are independent -> "parallel" lets v7x use both TCs.
        compiler_params=pltpu.CompilerParams(dimension_semantics=("parallel",)),
    )(x, w1_mat, pad_vec(s1), pad_vec(b1), w2_pad, pad_vec(s2), pad_vec(b2))

    out_nhwc = out_nhwc[:, :, :, :C1]                    # strip lane padding
    return jnp.transpose(out_nhwc, (0, 3, 1, 2))         # NHWC -> NCHW


def reference_forward(x_nchw, params, eps=1e-5):
    """Pure-JAX reference (lax.conv + BN(eval) + ReLU, twice, then 2x2 max pool)."""
    x = jnp.transpose(x_nchw, (0, 2, 3, 1)).astype(jnp.float32)

    def conv_bn_relu(x, w, b, g, beta, m, v):
        y = lax.conv_general_dilated(
            x, w, window_strides=(1, 1), padding="SAME",
            dimension_numbers=("NHWC", "HWIO", "NHWC"))
        y = y + b
        y = (y - m) / jnp.sqrt(v + eps) * g + beta
        return jnp.maximum(y, 0.0)

    y = conv_bn_relu(x, params["w1"], params["b1"], params["g1"],
                     params["beta1"], params["m1"], params["v1"])
    y = conv_bn_relu(y, params["w2"], params["b2"], params["g2"],
                     params["beta2"], params["m2"], params["v2"])
    y = lax.reduce_window(y, -jnp.inf, lax.max,
                          (1, 2, 2, 1), (1, 2, 2, 1), "VALID")
    return jnp.transpose(y, (0, 3, 1, 2))


if __name__ == "__main__":
    key = jax.random.PRNGKey(0)
    N, C_in, H, W = 2, 4, 16, 16
    num_filters, ksize = 32, 3

    ks = jax.random.split(key, 13)
    params = {
        # conv1 + bn1
        "w1": 0.1 * jax.random.normal(ks[0], (ksize, ksize, C_in, num_filters), jnp.float32),
        "b1": 0.1 * jax.random.normal(ks[1], (num_filters,), jnp.float32),
        "g1": 1.0 + 0.1 * jax.random.normal(ks[2], (num_filters,), jnp.float32),
        "beta1": 0.1 * jax.random.normal(ks[3], (num_filters,), jnp.float32),
        "m1": 0.1 * jax.random.normal(ks[4], (num_filters,), jnp.float32),
        "v1": jnp.abs(1.0 + 0.1 * jax.random.normal(ks[5], (num_filters,), jnp.float32)),
        # conv2 + bn2
        "w2": 0.1 * jax.random.normal(ks[6], (ksize, ksize, num_filters, num_filters), jnp.float32),
        "b2": 0.1 * jax.random.normal(ks[7], (num_filters,), jnp.float32),
        "g2": 1.0 + 0.1 * jax.random.normal(ks[8], (num_filters,), jnp.float32),
        "beta2": 0.1 * jax.random.normal(ks[9], (num_filters,), jnp.float32),
        "m2": 0.1 * jax.random.normal(ks[10], (num_filters,), jnp.float32),
        "v2": jnp.abs(1.0 + 0.1 * jax.random.normal(ks[11], (num_filters,), jnp.float32)),
    }
    x = jax.random.normal(ks[12], (N, C_in, H, W), jnp.float32)

    out = jax.block_until_ready(block_forward(x, params))
    ref = reference_forward(x, params)

    assert out.shape == (N, num_filters, H // 2, W // 2), out.shape
    assert jnp.allclose(out, ref, atol=1e-4, rtol=1e-4), float(jnp.max(jnp.abs(out - ref)))
    print("KERNEL_OK")
</pallas_src>

<mosaic_0001>
module attributes {stable_mosaic.version = 11 : i64} {
  func.func @_block_kernel(%arg0: i32, %arg1: memref<1x16x16x4xf32, #tpu.memory_space<vmem>>, %arg2: memref<36x128xf32, #tpu.memory_space<vmem>>, %arg3: memref<1x128xf32, #tpu.memory_space<vmem>>, %arg4: memref<1x128xf32, #tpu.memory_space<vmem>>, %arg5: memref<3x3x128x128xf32, #tpu.memory_space<vmem>>, %arg6: memref<1x128xf32, #tpu.memory_space<vmem>>, %arg7: memref<1x128xf32, #tpu.memory_space<vmem>>, %arg8: memref<1x8x8x128xf32, #tpu.memory_space<vmem>>, %arg9: memref<18x18x4xf32, #tpu.memory_space<vmem>>, %arg10: memref<18x18x128xf32, #tpu.memory_space<vmem>>) attributes {dimension_semantics = [#tpu.dimension_semantics<parallel>], iteration_bounds = array<i64: 2>, scalar_prefetch = 0 : i64, scratch_operands = 2 : i64, tpu.core_type = #tpu.core_type<tc>, window_params = [{transform_indices = @transform_0, window_bounds = array<i64: 1, 16, 16, 4>}, {pipeline_mode = #tpu.pipeline_mode<synchronous>, transform_indices = @transform_1, window_bounds = array<i64: 36, 128>}, {pipeline_mode = #tpu.pipeline_mode<synchronous>, transform_indices = @transform_2, window_bounds = array<i64: 1, 128>}, {pipeline_mode = #tpu.pipeline_mode<synchronous>, transform_indices = @transform_3, window_bounds = array<i64: 1, 128>}, {pipeline_mode = #tpu.pipeline_mode<synchronous>, transform_indices = @transform_4, window_bounds = array<i64: 3, 3, 128, 128>}, {pipeline_mode = #tpu.pipeline_mode<synchronous>, transform_indices = @transform_5, window_bounds = array<i64: 1, 128>}, {pipeline_mode = #tpu.pipeline_mode<synchronous>, transform_indices = @transform_6, window_bounds = array<i64: 1, 128>}, {transform_indices = @transform_7, window_bounds = array<i64: 1, 8, 8, 128>}]} {
    %cst = arith.constant 0.000000e+00 : f32
    %0 = vector.broadcast %cst : f32 to vector<1x18x4xf32>
    %c0 = arith.constant 0 : index
    %c0_0 = arith.constant 0 : index
    %c0_1 = arith.constant 0 : index
    %1 = vector.load %arg9[%c0, %c0_0, %c0_1] : memref<18x18x4xf32, #tpu.memory_space<vmem>>, vector<1x18x4xf32>
    tpu.vector_store %arg9[%c0, %c0_0, %c0_1], %0 {strides = array<i32>} : memref<18x18x4xf32, #tpu.memory_space<vmem>>, vector<1x18x4xf32>,
    %cst_2 = arith.constant 0.000000e+00 : f32
    %2 = vector.broadcast %cst_2 : f32 to vector<1x18x4xf32>
    %c17 = arith.constant 17 : index
    %c0_3 = arith.constant 0 : index
    %c0_4 = arith.constant 0 : index
    %3 = vector.load %arg9[%c17, %c0_3, %c0_4] : memref<18x18x4xf32, #tpu.memory_space<vmem>>, vector<1x18x4xf32>
    tpu.vector_store %arg9[%c17, %c0_3, %c0_4], %2 {strides = array<i32>} : memref<18x18x4xf32, #tpu.memory_space<vmem>>, vector<1x18x4xf32>,
    %cst_5 = arith.constant 0.000000e+00 : f32
    %4 = vector.broadcast %cst_5 : f32 to vector<18x1x4xf32>
    %c0_6 = arith.constant 0 : index
    %c0_7 = arith.constant 0 : index
    %c0_8 = arith.constant 0 : index
    %5 = vector.load %arg9[%c0_6, %c0_7, %c0_8] : memref<18x18x4xf32, #tpu.memory_space<vmem>>, vector<18x1x4xf32>
    tpu.vector_store %arg9[%c0_6, %c0_7, %c0_8], %4 {strides = array<i32>} : memref<18x18x4xf32, #tpu.memory_space<vmem>>, vector<18x1x4xf32>,
    %cst_9 = arith.constant 0.000000e+00 : f32
    %6 = vector.broadcast %cst_9 : f32 to vector<18x1x4xf32>
    %c0_10 = arith.constant 0 : index
    %c17_11 = arith.constant 17 : index
    %c0_12 = arith.constant 0 : index
    %7 = vector.load %arg9[%c0_10, %c17_11, %c0_12] : memref<18x18x4xf32, #tpu.memory_space<vmem>>, vector<18x1x4xf32>
    tpu.vector_store %arg9[%c0_10, %c17_11, %c0_12], %6 {strides = array<i32>} : memref<18x18x4xf32, #tpu.memory_space<vmem>>, vector<18x1x4xf32>,
    %c0_13 = arith.constant 0 : index
    %c0_14 = arith.constant 0 : index
    %c0_15 = arith.constant 0 : index
    %c0_16 = arith.constant 0 : index
    %8 = vector.load %arg1[%c0_13, %c0_14, %c0_15, %c0_16] : memref<1x16x16x4xf32, #tpu.memory_space<vmem>>, vector<1x16x16x4xf32>
    %9 = vector.shape_cast %8 : vector<1x16x16x4xf32> to vector<16x16x4xf32>
    %c1 = arith.constant 1 : index
    %c1_17 = arith.constant 1 : index
    %c0_18 = arith.constant 0 : index
    %10 = vector.load %arg9[%c1, %c1_17, %c0_18] : memref<18x18x4xf32, #tpu.memory_space<vmem>>, vector<16x16x4xf32>
    tpu.vector_store %arg9[%c1, %c1_17, %c0_18], %9 {strides = array<i32>} : memref<18x18x4xf32, #tpu.memory_space<vmem>>, vector<16x16x4xf32>,
    %c0_19 = arith.constant 0 : index
    %c0_20 = arith.constant 0 : index
    %c0_21 = arith.constant 0 : index
    %11 = vector.load %arg9[%c0_19, %c0_20, %c0_21] : memref<18x18x4xf32, #tpu.memory_space<vmem>>, vector<16x16x4xf32>
    %c0_22 = arith.constant 0 : index
    %c1_23 = arith.constant 1 : index
    %c0_24 = arith.constant 0 : index
    %12 = vector.load %arg9[%c0_22, %c1_23, %c0_24] : memref<18x18x4xf32, #tpu.memory_space<vmem>>, vector<16x16x4xf32>
    %c0_25 = arith.constant 0 : index
    %c2 = arith.constant 2 : index
    %c0_26 = arith.constant 0 : index
    %13 = vector.load %arg9[%c0_25, %c2, %c0_26] : memref<18x18x4xf32, #tpu.memory_space<vmem>>, vector<16x16x4xf32>
    %c1_27 = arith.constant 1 : index
    %c0_28 = arith.constant 0 : index
    %c0_29 = arith.constant 0 : index
    %14 = vector.load %arg9[%c1_27, %c0_28, %c0_29] : memref<18x18x4xf32, #tpu.memory_space<vmem>>, vector<16x16x4xf32>
    %c1_30 = arith.constant 1 : index
    %c1_31 = arith.constant 1 : index
    %c0_32 = arith.constant 0 : index
    %15 = vector.load %arg9[%c1_30, %c1_31, %c0_32] : memref<18x18x4xf32, #tpu.memory_space<vmem>>, vector<16x16x4xf32>
    %c1_33 = arith.constant 1 : index
    %c2_34 = arith.constant 2 : index
    %c0_35 = arith.constant 0 : index
    %16 = vector.load %arg9[%c1_33, %c2_34, %c0_35] : memref<18x18x4xf32, #tpu.memory_space<vmem>>, vector<16x16x4xf32>
    %c2_36 = arith.constant 2 : index
    %c0_37 = arith.constant 0 : index
    %c0_38 = arith.constant 0 : index
    %17 = vector.load %arg9[%c2_36, %c0_37, %c0_38] : memref<18x18x4xf32, #tpu.memory_space<vmem>>, vector<16x16x4xf32>
    %c2_39 = arith.constant 2 : index
    %c1_40 = arith.constant 1 : index
    %c0_41 = arith.constant 0 : index
    %18 = vector.load %arg9[%c2_39, %c1_40, %c0_41] : memref<18x18x4xf32, #tpu.memory_space<vmem>>, vector<16x16x4xf32>
    %c2_42 = arith.constant 2 : index
    %c2_43 = arith.constant 2 : index
    %c0_44 = arith.constant 0 : index
    %19 = vector.load %arg9[%c2_42, %c2_43, %c0_44] : memref<18x18x4xf32, #tpu.memory_space<vmem>>, vector<16x16x4xf32>
    %20 = tpu.concatenate %11, %12, %13, %14, %15, %16, %17, %18, %19 in 2 : vector<16x16x4xf32>, vector<16x16x4xf32>, vector<16x16x4xf32>, vector<16x16x4xf32>, vector<16x16x4xf32>, vector<16x16x4xf32>, vector<16x16x4xf32>, vector<16x16x4xf32>, vector<16x16x4xf32> -> vector<16x16x36xf32>
    %21 = vector.shape_cast %20 : vector<16x16x36xf32> to vector<256x36xf32>
    %c0_45 = arith.constant 0 : index
    %c0_46 = arith.constant 0 : index
    %22 = vector.load %arg2[%c0_45, %c0_46] : memref<36x128xf32, #tpu.memory_space<vmem>>, vector<36x128xf32>
    %cst_47 = arith.constant dense<0.000000e+00> : vector<256x128xf32>
    %23 = tpu.matmul %21, %22, %cst_47 {dimension_numbers = #tpu.dot_dimension_numbers<[1], [0], [0], [1], [0, 0, 1, 1], [], []>} : vector<256x36xf32>, vector<36x128xf32>, vector<256x128xf32> -> vector<256x128xf32>
    %c0_48 = arith.constant 0 : index
    %c0_49 = arith.constant 0 : index
    %24 = vector.load %arg3[%c0_48, %c0_49] : memref<1x128xf32, #tpu.memory_space<vmem>>, vector<1x128xf32>
    %25 = vector.shape_cast %24 : vector<1x128xf32> to vector<128xf32>
    %26 = vector.shape_cast %25 : vector<128xf32> to vector<1x128xf32>
    %27 = vector.broadcast %26 : vector<1x128xf32> to vector<256x128xf32>
    %28 = arith.mulf %23, %27 : vector<256x128xf32>
    %c0_50 = arith.constant 0 : index
    %c0_51 = arith.constant 0 : index
    %29 = vector.load %arg4[%c0_50, %c0_51] : memref<1x128xf32, #tpu.memory_space<vmem>>, vector<1x128xf32>
    %30 = vector.shape_cast %29 : vector<1x128xf32> to vector<128xf32>
    %31 = vector.shape_cast %30 : vector<128xf32> to vector<1x128xf32>
    %32 = vector.broadcast %31 : vector<1x128xf32> to vector<256x128xf32>
    %33 = arith.addf %28, %32 : vector<256x128xf32>
    %cst_52 = arith.constant 0.000000e+00 : f32
    %34 = vector.broadcast %cst_52 : f32 to vector<256x128xf32>
    %35 = arith.maximumf %33, %34 : vector<256x128xf32>
    %36 = vector.shape_cast %35 : vector<256x128xf32> to vector<16x16x128xf32>
    %cst_53 = arith.constant 0.000000e+00 : f32
    %37 = vector.broadcast %cst_53 : f32 to vector<1x18x128xf32>
    %c0_54 = arith.constant 0 : index
    %c0_55 = arith.constant 0 : index
    %c0_56 = arith.constant 0 : index
    %38 = vector.load %arg10[%c0_54, %c0_55, %c0_56] : memref<18x18x128xf32, #tpu.memory_space<vmem>>, vector<1x18x128xf32>
    tpu.vector_store %arg10[%c0_54, %c0_55, %c0_56], %37 {strides = array<i32>} : memref<18x18x128xf32, #tpu.memory_space<vmem>>, vector<1x18x128xf32>,
    %cst_57 = arith.constant 0.000000e+00 : f32
    %39 = vector.broadcast %cst_57 : f32 to vector<1x18x128xf32>
    %c17_58 = arith.constant 17 : index
    %c0_59 = arith.constant 0 : index
    %c0_60 = arith.constant 0 : index
    %40 = vector.load %arg10[%c17_58, %c0_59, %c0_60] : memref<18x18x128xf32, #tpu.memory_space<vmem>>, vector<1x18x128xf32>
    tpu.vector_store %arg10[%c17_58, %c0_59, %c0_60], %39 {strides = array<i32>} : memref<18x18x128xf32, #tpu.memory_space<vmem>>, vector<1x18x128xf32>,
    %cst_61 = arith.constant 0.000000e+00 : f32
    %41 = vector.broadcast %cst_61 : f32 to vector<18x1x128xf32>
    %c0_62 = arith.constant 0 : index
    %c0_63 = arith.constant 0 : index
    %c0_64 = arith.constant 0 : index
    %42 = vector.load %arg10[%c0_62, %c0_63, %c0_64] : memref<18x18x128xf32, #tpu.memory_space<vmem>>, vector<18x1x128xf32>
    tpu.vector_store %arg10[%c0_62, %c0_63, %c0_64], %41 {strides = array<i32>} : memref<18x18x128xf32, #tpu.memory_space<vmem>>, vector<18x1x128xf32>,
    %cst_65 = arith.constant 0.000000e+00 : f32
    %43 = vector.broadcast %cst_65 : f32 to vector<18x1x128xf32>
    %c0_66 = arith.constant 0 : index
    %c17_67 = arith.constant 17 : index
    %c0_68 = arith.constant 0 : index
    %44 = vector.load %arg10[%c0_66, %c17_67, %c0_68] : memref<18x18x128xf32, #tpu.memory_space<vmem>>, vector<18x1x128xf32>
    tpu.vector_store %arg10[%c0_66, %c17_67, %c0_68], %43 {strides = array<i32>} : memref<18x18x128xf32, #tpu.memory_space<vmem>>, vector<18x1x128xf32>,
    %c1_69 = arith.constant 1 : index
    %c1_70 = arith.constant 1 : index
    %c0_71 = arith.constant 0 : index
    %45 = vector.load %arg10[%c1_69, %c1_70, %c0_71] : memref<18x18x128xf32, #tpu.memory_space<vmem>>, vector<16x16x128xf32>
    tpu.vector_store %arg10[%c1_69, %c1_70, %c0_71], %36 {strides = array<i32>} : memref<18x18x128xf32, #tpu.memory_space<vmem>>, vector<16x16x128xf32>,
    %cst_72 = arith.constant 0.000000e+00 : f32
    %46 = vector.broadcast %cst_72 : f32 to vector<256x128xf32>
    %c0_73 = arith.constant 0 : index
    %c0_74 = arith.constant 0 : index
    %c0_75 = arith.constant 0 : index
    %47 = vector.load %arg10[%c0_73, %c0_74, %c0_75] : memref<18x18x128xf32, #tpu.memory_space<vmem>>, vector<16x16x128xf32>
    %48 = vector.shape_cast %47 : vector<16x16x128xf32> to vector<256x128xf32>
    %c0_76 = arith.constant 0 : index
    %c0_77 = arith.constant 0 : index
    %c0_78 = arith.constant 0 : index
    %c0_79 = arith.constant 0 : index
    %49 = vector.load %arg5[%c0_76, %c0_77, %c0_78, %c0_79] : memref<3x3x128x128xf32, #tpu.memory_space<vmem>>, vector<1x1x128x128xf32>
    %50 = vector.shape_cast %49 : vector<1x1x128x128xf32> to vector<128x128xf32>
    %cst_80 = arith.constant dense<0.000000e+00> : vector<256x128xf32>
    %51 = tpu.matmul %48, %50, %cst_80 {dimension_numbers = #tpu.dot_dimension_numbers<[1], [0], [0], [1], [0, 0, 1, 1], [], []>} : vector<256x128xf32>, vector<128x128xf32>, vector<256x128xf32> -> vector<256x128xf32>
    %52 = arith.addf %46, %51 : vector<256x128xf32>
    %c0_81 = arith.constant 0 : index
    %c1_82 = arith.constant 1 : index
    %c0_83 = arith.constant 0 : index
    %53 = vector.load %arg10[%c0_81, %c1_82, %c0_83] : memref<18x18x128xf32, #tpu.memory_space<vmem>>, vector<16x16x128xf32>
    %54 = vector.shape_cast %53 : vector<16x16x128xf32> to vector<256x128xf32>
    %c0_84 = arith.constant 0 : index
    %c1_85 = arith.constant 1 : index
    %c0_86 = arith.constant 0 : index
    %c0_87 = arith.constant 0 : index
    %55 = vector.load %arg5[%c0_84, %c1_85, %c0_86, %c0_87] : memref<3x3x128x128xf32, #tpu.memory_space<vmem>>, vector<1x1x128x128xf32>
    %56 = vector.shape_cast %55 : vector<1x1x128x128xf32> to vector<128x128xf32>
    %cst_88 = arith.constant dense<0.000000e+00> : vector<256x128xf32>
    %57 = tpu.matmul %54, %56, %cst_88 {dimension_numbers = #tpu.dot_dimension_numbers<[1], [0], [0], [1], [0, 0, 1, 1], [], []>} : vector<256x128xf32>, vector<128x128xf32>, vector<256x128xf32> -> vector<256x128xf32>
    %58 = arith.addf %52, %57 : vector<256x128xf32>
    %c0_89 = arith.constant 0 : index
    %c2_90 = arith.constant 2 : index
    %c0_91 = arith.constant 0 : index
    %59 = vector.load %arg10[%c0_89, %c2_90, %c0_91] : memref<18x18x128xf32, #tpu.memory_space<vmem>>, vector<16x16x128xf32>
    %60 = vector.shape_cast %59 : vector<16x16x128xf32> to vector<256x128xf32>
    %c0_92 = arith.constant 0 : index
    %c2_93 = arith.constant 2 : index
    %c0_94 = arith.constant 0 : index
    %c0_95 = arith.constant 0 : index
    %61 = vector.load %arg5[%c0_92, %c2_93, %c0_94, %c0_95] : memref<3x3x128x128xf32, #tpu.memory_space<vmem>>, vector<1x1x128x128xf32>
    %62 = vector.shape_cast %61 : vector<1x1x128x128xf32> to vector<128x128xf32>
    %cst_96 = arith.constant dense<0.000000e+00> : vector<256x128xf32>
    %63 = tpu.matmul %60, %62, %cst_96 {dimension_numbers = #tpu.dot_dimension_numbers<[1], [0], [0], [1], [0, 0, 1, 1], [], []>} : vector<256x128xf32>, vector<128x128xf32>, vector<256x128xf32> -> vector<256x128xf32>
    %64 = arith.addf %58, %63 : vector<256x128xf32>
    %c1_97 = arith.constant 1 : index
    %c0_98 = arith.constant 0 : index
    %c0_99 = arith.constant 0 : index
    %65 = vector.load %arg10[%c1_97, %c0_98, %c0_99] : memref<18x18x128xf32, #tpu.memory_space<vmem>>, vector<16x16x128xf32>
    %66 = vector.shape_cast %65 : vector<16x16x128xf32> to vector<256x128xf32>
    %c1_100 = arith.constant 1 : index
    %c0_101 = arith.constant 0 : index
    %c0_102 = arith.constant 0 : index
    %c0_103 = arith.constant 0 : index
    %67 = vector.load %arg5[%c1_100, %c0_101, %c0_102, %c0_103] : memref<3x3x128x128xf32, #tpu.memory_space<vmem>>, vector<1x1x128x128xf32>
    %68 = vector.shape_cast %67 : vector<1x1x128x128xf32> to vector<128x128xf32>
    %cst_104 = arith.constant dense<0.000000e+00> : vector<256x128xf32>
    %69 = tpu.matmul %66, %68, %cst_104 {dimension_numbers = #tpu.dot_dimension_numbers<[1], [0], [0], [1], [0, 0, 1, 1], [], []>} : vector<256x128xf32>, vector<128x128xf32>, vector<256x128xf32> -> vector<256x128xf32>
    %70 = arith.addf %64, %69 : vector<256x128xf32>
    %c1_105 = arith.constant 1 : index
    %c1_106 = arith.constant 1 : index
    %c0_107 = arith.constant 0 : index
    %71 = vector.load %arg10[%c1_105, %c1_106, %c0_107] : memref<18x18x128xf32, #tpu.memory_space<vmem>>, vector<16x16x128xf32>
    %72 = vector.shape_cast %71 : vector<16x16x128xf32> to vector<256x128xf32>
    %c1_108 = arith.constant 1 : index
    %c1_109 = arith.constant 1 : index
    %c0_110 = arith.constant 0 : index
    %c0_111 = arith.constant 0 : index
    %73 = vector.load %arg5[%c1_108, %c1_109, %c0_110, %c0_111] : memref<3x3x128x128xf32, #tpu.memory_space<vmem>>, vector<1x1x128x128xf32>
    %74 = vector.shape_cast %73 : vector<1x1x128x128xf32> to vector<128x128xf32>
    %cst_112 = arith.constant dense<0.000000e+00> : vector<256x128xf32>
    %75 = tpu.matmul %72, %74, %cst_112 {dimension_numbers = #tpu.dot_dimension_numbers<[1], [0], [0], [1], [0, 0, 1, 1], [], []>} : vector<256x128xf32>, vector<128x128xf32>, vector<256x128xf32> -> vector<256x128xf32>
    %76 = arith.addf %70, %75 : vector<256x128xf32>
    %c1_113 = arith.constant 1 : index
    %c2_114 = arith.constant 2 : index
    %c0_115 = arith.constant 0 : index
    %77 = vector.load %arg10[%c1_113, %c2_114, %c0_115] : memref<18x18x128xf32, #tpu.memory_space<vmem>>, vector<16x16x128xf32>
    %78 = vector.shape_cast %77 : vector<16x16x128xf32> to vector<256x128xf32>
    %c1_116 = arith.constant 1 : index
    %c2_117 = arith.constant 2 : index
    %c0_118 = arith.constant 0 : index
    %c0_119 = arith.constant 0 : index
    %79 = vector.load %arg5[%c1_116, %c2_117, %c0_118, %c0_119] : memref<3x3x128x128xf32, #tpu.memory_space<vmem>>, vector<1x1x128x128xf32>
    %80 = vector.shape_cast %79 : vector<1x1x128x128xf32> to vector<128x128xf32>
    %cst_120 = arith.constant dense<0.000000e+00> : vector<256x128xf32>
    %81 = tpu.matmul %78, %80, %cst_120 {dimension_numbers = #tpu.dot_dimension_numbers<[1], [0], [0], [1], [0, 0, 1, 1], [], []>} : vector<256x128xf32>, vector<128x128xf32>, vector<256x128xf32> -> vector<256x128xf32>
    %82 = arith.addf %76, %81 : vector<256x128xf32>
    %c2_121 = arith.constant 2 : index
    %c0_122 = arith.constant 0 : index
    %c0_123 = arith.constant 0 : index
    %83 = vector.load %arg10[%c2_121, %c0_122, %c0_123] : memref<18x18x128xf32, #tpu.memory_space<vmem>>, vector<16x16x128xf32>
    %84 = vector.shape_cast %83 : vector<16x16x128xf32> to vector<256x128xf32>
    %c2_124 = arith.constant 2 : index
    %c0_125 = arith.constant 0 : index
    %c0_126 = arith.constant 0 : index
    %c0_127 = arith.constant 0 : index
    %85 = vector.load %arg5[%c2_124, %c0_125, %c0_126, %c0_127] : memref<3x3x128x128xf32, #tpu.memory_space<vmem>>, vector<1x1x128x128xf32>
    %86 = vector.shape_cast %85 : vector<1x1x128x128xf32> to vector<128x128xf32>
    %cst_128 = arith.constant dense<0.000000e+00> : vector<256x128xf32>
    %87 = tpu.matmul %84, %86, %cst_128 {dimension_numbers = #tpu.dot_dimension_numbers<[1], [0], [0], [1], [0, 0, 1, 1], [], []>} : vector<256x128xf32>, vector<128x128xf32>, vector<256x128xf32> -> vector<256x128xf32>
    %88 = arith.addf %82, %87 : vector<256x128xf32>
    %c2_129 = arith.constant 2 : index
    %c1_130 = arith.constant 1 : index
    %c0_131 = arith.constant 0 : index
    %89 = vector.load %arg10[%c2_129, %c1_130, %c0_131] : memref<18x18x128xf32, #tpu.memory_space<vmem>>, vector<16x16x128xf32>
    %90 = vector.shape_cast %89 : vector<16x16x128xf32> to vector<256x128xf32>
    %c2_132 = arith.constant 2 : index
    %c1_133 = arith.constant 1 : index
    %c0_134 = arith.constant 0 : index
    %c0_135 = arith.constant 0 : index
    %91 = vector.load %arg5[%c2_132, %c1_133, %c0_134, %c0_135] : memref<3x3x128x128xf32, #tpu.memory_space<vmem>>, vector<1x1x128x128xf32>
    %92 = vector.shape_cast %91 : vector<1x1x128x128xf32> to vector<128x128xf32>
    %cst_136 = arith.constant dense<0.000000e+00> : vector<256x128xf32>
    %93 = tpu.matmul %90, %92, %cst_136 {dimension_numbers = #tpu.dot_dimension_numbers<[1], [0], [0], [1], [0, 0, 1, 1], [], []>} : vector<256x128xf32>, vector<128x128xf32>, vector<256x128xf32> -> vector<256x128xf32>
    %94 = arith.addf %88, %93 : vector<256x128xf32>
    %c2_137 = arith.constant 2 : index
    %c2_138 = arith.constant 2 : index
    %c0_139 = arith.constant 0 : index
    %95 = vector.load %arg10[%c2_137, %c2_138, %c0_139] : memref<18x18x128xf32, #tpu.memory_space<vmem>>, vector<16x16x128xf32>
    %96 = vector.shape_cast %95 : vector<16x16x128xf32> to vector<256x128xf32>
    %c2_140 = arith.constant 2 : index
    %c2_141 = arith.constant 2 : index
    %c0_142 = arith.constant 0 : index
    %c0_143 = arith.constant 0 : index
    %97 = vector.load %arg5[%c2_140, %c2_141, %c0_142, %c0_143] : memref<3x3x128x128xf32, #tpu.memory_space<vmem>>, vector<1x1x128x128xf32>
    %98 = vector.shape_cast %97 : vector<1x1x128x128xf32> to vector<128x128xf32>
    %cst_144 = arith.constant dense<0.000000e+00> : vector<256x128xf32>
    %99 = tpu.matmul %96, %98, %cst_144 {dimension_numbers = #tpu.dot_dimension_numbers<[1], [0], [0], [1], [0, 0, 1, 1], [], []>} : vector<256x128xf32>, vector<128x128xf32>, vector<256x128xf32> -> vector<256x128xf32>
    %100 = arith.addf %94, %99 : vector<256x128xf32>
    %c0_145 = arith.constant 0 : index
    %c0_146 = arith.constant 0 : index
    %101 = vector.load %arg6[%c0_145, %c0_146] : memref<1x128xf32, #tpu.memory_space<vmem>>, vector<1x128xf32>
    %102 = vector.shape_cast %101 : vector<1x128xf32> to vector<128xf32>
    %103 = vector.shape_cast %102 : vector<128xf32> to vector<1x128xf32>
    %104 = vector.broadcast %103 : vector<1x128xf32> to vector<256x128xf32>
    %105 = arith.mulf %100, %104 : vector<256x128xf32>
    %c0_147 = arith.constant 0 : index
    %c0_148 = arith.constant 0 : index
    %106 = vector.load %arg7[%c0_147, %c0_148] : memref<1x128xf32, #tpu.memory_space<vmem>>, vector<1x128xf32>
    %107 = vector.shape_cast %106 : vector<1x128xf32> to vector<128xf32>
    %108 = vector.shape_cast %107 : vector<128xf32> to vector<1x128xf32>
    %109 = vector.broadcast %108 : vector<1x128xf32> to vector<256x128xf32>
    %110 = arith.addf %105, %109 : vector<256x128xf32>
    %cst_149 = arith.constant 0.000000e+00 : f32
    %111 = vector.broadcast %cst_149 : f32 to vector<256x128xf32>
    %112 = arith.maximumf %110, %111 : vector<256x128xf32>
    %113 = vector.shape_cast %112 : vector<256x128xf32> to vector<16x16x128xf32>
    %114 = vector.shape_cast %113 : vector<16x16x128xf32> to vector<8x2x16x128xf32>
    %cst_150 = arith.constant dense<0xFF800000> : vector<8x16x128xf32>
    %115 = vector.multi_reduction <maximumf>, %114, %cst_150 [1] : vector<8x2x16x128xf32> to vector<8x16x128xf32>
    %116 = vector.shape_cast %115 : vector<8x16x128xf32> to vector<8x8x2x128xf32>
    %cst_151 = arith.constant dense<0xFF800000> : vector<8x8x128xf32>
    %117 = vector.multi_reduction <maximumf>, %116, %cst_151 [2] : vector<8x8x2x128xf32> to vector<8x8x128xf32>
    %c0_152 = arith.constant 0 : index
    %c0_153 = arith.constant 0 : index
    %c0_154 = arith.constant 0 : index
    %c0_155 = arith.constant 0 : index
    %118 = vector.load %arg8[%c0_152, %c0_153, %c0_154, %c0_155] : memref<1x8x8x128xf32, #tpu.memory_space<vmem>>, vector<1x8x8x128xf32>
    %119 = vector.shape_cast %118 : vector<1x8x8x128xf32> to vector<8x8x128xf32>
    %120 = vector.shape_cast %117 : vector<8x8x128xf32> to vector<1x8x8x128xf32>
    tpu.vector_store %arg8[%c0_152, %c0_153, %c0_154, %c0_155], %120 {strides = array<i32>} : memref<1x8x8x128xf32, #tpu.memory_space<vmem>>, vector<1x8x8x128xf32>,
    return
  }
  func.func @transform_0(%arg0: i32) -> (i32, i32, i32, i32) {
    %c0_i32 = arith.constant 0 : i32
    %c0_i32_0 = arith.constant 0 : i32
    %c0_i32_1 = arith.constant 0 : i32
    %c0_i32_2 = arith.constant 0 : i32
    return %arg0, %c0_i32, %c0_i32_0, %c0_i32_1 : i32, i32, i32, i32
  }
  func.func @transform_1(%arg0: i32) -> (i32, i32) {
    %c0_i32 = arith.constant 0 : i32
    %c0_i32_0 = arith.constant 0 : i32
    %c0_i32_1 = arith.constant 0 : i32
    return %c0_i32, %c0_i32_0 : i32, i32
  }
  func.func @transform_2(%arg0: i32) -> (i32, i32) {
    %c0_i32 = arith.constant 0 : i32
    %c0_i32_0 = arith.constant 0 : i32
    %c0_i32_1 = arith.constant 0 : i32
    return %c0_i32, %c0_i32_0 : i32, i32
  }
  func.func @transform_3(%arg0: i32) -> (i32, i32) {
    %c0_i32 = arith.constant 0 : i32
    %c0_i32_0 = arith.constant 0 : i32
    %c0_i32_1 = arith.constant 0 : i32
    return %c0_i32, %c0_i32_0 : i32, i32
  }
  func.func @transform_4(%arg0: i32) -> (i32, i32, i32, i32) {
    %c0_i32 = arith.constant 0 : i32
    %c0_i32_0 = arith.constant 0 : i32
    %c0_i32_1 = arith.constant 0 : i32
    %c0_i32_2 = arith.constant 0 : i32
    %c0_i32_3 = arith.constant 0 : i32
    return %c0_i32, %c0_i32_0, %c0_i32_1, %c0_i32_2 : i32, i32, i32, i32
  }
  func.func @transform_5(%arg0: i32) -> (i32, i32) {
    %c0_i32 = arith.constant 0 : i32
    %c0_i32_0 = arith.constant 0 : i32
    %c0_i32_1 = arith.constant 0 : i32
    return %c0_i32, %c0_i32_0 : i32, i32
  }
  func.func @transform_6(%arg0: i32) -> (i32, i32) {
    %c0_i32 = arith.constant 0 : i32
    %c0_i32_0 = arith.constant 0 : i32
    %c0_i32_1 = arith.constant 0 : i32
    return %c0_i32, %c0_i32_0 : i32, i32
  }
  func.func @transform_7(%arg0: i32) -> (i32, i32, i32, i32) {
    %c0_i32 = arith.constant 0 : i32
    %c0_i32_0 = arith.constant 0 : i32
    %c0_i32_1 = arith.constant 0 : i32
    %c0_i32_2 = arith.constant 0 : i32
    return %arg0, %c0_i32, %c0_i32_0, %c0_i32_1 : i32, i32, i32, i32
  }
}

</mosaic_0001>

<llo_original>
// kernel: tpu_custom_call.1
$region0: #{tpu_custom_call.1}
  #allocation0 [shape = 'u32[]', space=smem, size = 0x4, offset = 0x4, fixed_abs, tag = 'smem constant byte address 0x4 - core index']
  #allocation1 [shape = 'u32[144,128]{1,0:T(1,128)}', space=vmem, size = 0x12000, scoped, tag = 'internal scratch']
  #allocation2 [shape = 'f32[18,18,4]{2,1,0:T(8,128)}', space=vmem, size = 0x36000, scoped, tag = 'scratch operand']
  #allocation3 [shape = 'f32[18,18,128]{2,1,0:T(8,128)}', space=vmem, size = 0x36000, scoped, tag = 'scratch operand']
  %s0 = inlined_call_operand.vmem [shape: f32[2,16,16,4], index: 0, kind: input, shape index: {}]
  %s1 = inlined_call_operand.vmem [shape: f32[36,128], index: 1, kind: input, shape index: {}]
  %s2 = inlined_call_operand.vmem [shape: f32[1,128], index: 2, kind: input, shape index: {}]
  %s3 = inlined_call_operand.vmem [shape: f32[1,128], index: 3, kind: input, shape index: {}]
  %s4 = inlined_call_operand.hbm [shape: f32[3,3,128,128], index: 4, kind: input, shape index: {}]
  %s5 = inlined_call_operand.vmem [shape: f32[1,128], index: 5, kind: input, shape index: {}]
  %s6 = inlined_call_operand.vmem [shape: f32[1,128], index: 6, kind: input, shape index: {}]
  %s7 = inlined_call_operand.hbm [shape: f32[2,8,8,128], index: 7, kind: output, shape index: {}]
  %s8 = sld [smem:[#allocation0]]
  $region65: #{tpu_custom_call.1} parent=0
    _
  %s10 = ssub.s32 1, %s8
  %s11 = scalar_select 0, %s10, %s8
  $region1: #{tpu_custom_call.1} parent=0
    #allocation4 [shape = 'u8[589824]{0}', space=vmem, size = 0x90000, scoped, tag = 'input window, operand 4, single buffered']
    #allocation5 [shape = 's32[2]{0}', space=sflag, size = 0x8, scoped, tag = 'scoped memory for tpu_custom_call.1']
    #allocation6 [shape = 's32[2]{0}', space=sflag, size = 0x8, scoped, tag = 'scoped memory for tpu_custom_call.1']
    #allocation7 [shape = 'u8[65536]{0}', space=vmem, size = 0x10000, scoped, tag = 'output window, operand 0']
    %12 = vsyncpa [#allocation5], 0
    %13 = vsyncpa [#allocation6], 0
    %s14 = scalar_lea.sflag [#allocation6], 1
    %15 = vsyncpa %s14, 0
    loop: start=0, step=1, limit=4
    $region2: #{tpu_custom_call.1} parent=1 // loop_pre_header
      _
    $region3: #{tpu_custom_call.1} parent=1 // loop_header
      %s17 = sphi 0, %s21
      %p18 = scmp.ge.s32.totalorder %s17, 4
      %s27 = sphi 0, %s29
      %s30 = sphi 0, %s27
      %s31 = sphi 0, %s30
      %s47 = sphi 0, %s31
      %s51 = sphi 0, %s51
      %s53 = sphi 0, %s51
      %s54 = sphi 0, %s53
      %s68 = sphi 0, %s54
      %s72 = sphi 0, %s72
      %s74 = sphi 0, %s72
      %s75 = sphi 0, %s74
      %s89 = sphi 0, %s75
      %s93 = sphi 0, %s93
      %s95 = sphi 0, %s93
      %s96 = sphi 0, %s95
      %s110 = sphi 0, %s96
      %s114 = sphi 0, %s114
      %s116 = sphi 0, %s114
      %s117 = sphi 0, %s116
      %s131 = sphi 0, %s117
      %s135 = sphi 0, %s135
      %s137 = sphi 0, %s135
      %s138 = sphi 0, %s137
      %s152 = sphi 0, %s138
      %s156 = sphi 0, %s156
      %s158 = sphi 0, %s156
      %s159 = sphi 0, %s158
      %s173 = sphi 0, %s159
      %s179 = sphi 0, %s181
      %s182 = sphi 0, %s179
      %s183 = sphi 0, %s182
      %s199 = sphi 0, %s183
    $region4: #{tpu_custom_call.1} parent=1 // loop_header_branch
      %20 = sbr.rel (%p18) target = $region8
    $region5: #{tpu_custom_call.1} parent=1 // loop_body
      %s22 = ssub.s32 %s17, 1
      %s23 = ssub.s32 %s17, 2
      %s24 = sadd.s32 %s17, 1
      %s25 = ssub.s32 %s17, %s24
      %p26 = scmp.eq.s32.totalorder %s25, 0
      %s28 = sadd.s32 %s27, 1
      %s29 = scalar_select %p26, %s27, %s28
      %p32 = pneg %p26
      %p33 = scmp.eq.s32.totalorder %s17, 1
      %p34 = por %p32, %p33
      %p35 = scmp.ne.s32.totalorder %s27, %s30
      %p36 = scmp.eq.s32.totalorder %s17, 0
      %p37 = por %p35, %p36
      %p38 = scmp.ne.s32.totalorder %s27, %s30
      %p39 = scmp.eq.s32.totalorder %s22, 1
      %p40 = por %p38, %p39
      %p41 = scmp.ne.s32.totalorder %s30, %s31
      %p42 = scmp.eq.s32.totalorder %s22, 0
      %p43 = por %p41, %p42
      %p44 = scmp.ne.s32.totalorder %s30, %s31
      %p45 = scmp.eq.s32.totalorder %s23, 1
      %p46 = por %p44, %p45
      %p48 = scmp.ne.s32.totalorder %s31, %s47
      %p49 = scmp.eq.s32.totalorder %s23, 0
      %p50 = por %p48, %p49
      %s52 = sadd.s32 %s51, 1
      %p55 = scmp.eq.s32.totalorder %s17, 1
      %p56 = scmp.ne.s32.totalorder %s51, %s53
      %p57 = scmp.eq.s32.totalorder %s17, 0
      %p58 = por %p56, %p57
      %p59 = scmp.ne.s32.totalorder %s51, %s53
      %p60 = scmp.eq.s32.totalorder %s22, 1
      %p61 = por %p59, %p60
      %p62 = scmp.ne.s32.totalorder %s53, %s54
      %p63 = scmp.eq.s32.totalorder %s22, 0
      %p64 = por %p62, %p63
      %p65 = scmp.ne.s32.totalorder %s53, %s54
      %p66 = scmp.eq.s32.totalorder %s23, 1
      %p67 = por %p65, %p66
      %p69 = scmp.ne.s32.totalorder %s54, %s68
      %p70 = scmp.eq.s32.totalorder %s23, 0
      %p71 = por %p69, %p70
      %s73 = sadd.s32 %s72, 1
      %p76 = scmp.eq.s32.totalorder %s17, 1
      %p77 = scmp.ne.s32.totalorder %s72, %s74
      %p78 = scmp.eq.s32.totalorder %s17, 0
      %p79 = por %p77, %p78
      %p80 = scmp.ne.s32.totalorder %s72, %s74
      %p81 = scmp.eq.s32.totalorder %s22, 1
      %p82 = por %p80, %p81
      %p83 = scmp.ne.s32.totalorder %s74, %s75
      %p84 = scmp.eq.s32.totalorder %s22, 0
      %p85 = por %p83, %p84
      %p86 = scmp.ne.s32.totalorder %s74, %s75
      %p87 = scmp.eq.s32.totalorder %s23, 1
      %p88 = por %p86, %p87
      %p90 = scmp.ne.s32.totalorder %s75, %s89
      %p91 = scmp.eq.s32.totalorder %s23, 0
      %p92 = por %p90, %p91
      %s94 = sadd.s32 %s93, 1
      %p97 = scmp.eq.s32.totalorder %s17, 1
      %p98 = scmp.ne.s32.totalorder %s93, %s95
      %p99 = scmp.eq.s32.totalorder %s17, 0
      %p100 = por %p98, %p99
      %p101 = scmp.ne.s32.totalorder %s93, %s95
      %p102 = scmp.eq.s32.totalorder %s22, 1
      %p103 = por %p101, %p102
      %p104 = scmp.ne.s32.totalorder %s95, %s96
      %p105 = scmp.eq.s32.totalorder %s22, 0
      %p106 = por %p104, %p105
      %p107 = scmp.ne.s32.totalorder %s95, %s96
      %p108 = scmp.eq.s32.totalorder %s23, 1
      %p109 = por %p107, %p108
      %p111 = scmp.ne.s32.totalorder %s96, %s110
      %p112 = scmp.eq.s32.totalorder %s23, 0
      %p113 = por %p111, %p112
      %s115 = sadd.s32 %s114, 1
      %p118 = scmp.eq.s32.totalorder %s17, 1
      %p119 = scmp.ne.s32.totalorder %s114, %s116
      %p120 = scmp.eq.s32.totalorder %s17, 0
      %p121 = por %p119, %p120
      %p122 = scmp.ne.s32.totalorder %s114, %s116
      %p123 = scmp.eq.s32.totalorder %s22, 1
      %p124 = por %p122, %p123
      %p125 = scmp.ne.s32.totalorder %s116, %s117
      %p126 = scmp.eq.s32.totalorder %s22, 0
      %p127 = por %p125, %p126
      %p128 = scmp.ne.s32.totalorder %s116, %s117
      %p129 = scmp.eq.s32.totalorder %s23, 1
      %p130 = por %p128, %p129
      %p132 = scmp.ne.s32.totalorder %s117, %s131
      %p133 = scmp.eq.s32.totalorder %s23, 0
      %p134 = por %p132, %p133
      %s136 = sadd.s32 %s135, 1
      %p139 = scmp.eq.s32.totalorder %s17, 1
      %p140 = scmp.ne.s32.totalorder %s135, %s137
      %p141 = scmp.eq.s32.totalorder %s17, 0
      %p142 = por %p140, %p141
      %p143 = scmp.ne.s32.totalorder %s135, %s137
      %p144 = scmp.eq.s32.totalorder %s22, 1
      %p145 = por %p143, %p144
      %p146 = scmp.ne.s32.totalorder %s137, %s138
      %p147 = scmp.eq.s32.totalorder %s22, 0
      %p148 = por %p146, %p147
      %p149 = scmp.ne.s32.totalorder %s137, %s138
      %p150 = scmp.eq.s32.totalorder %s23, 1
      %p151 = por %p149, %p150
      %p153 = scmp.ne.s32.totalorder %s138, %s152
      %p154 = scmp.eq.s32.totalorder %s23, 0
      %p155 = por %p153, %p154
      %s157 = sadd.s32 %s156, 1
      %p160 = scmp.eq.s32.totalorder %s17, 1
      %p161 = scmp.ne.s32.totalorder %s156, %s158
      %p162 = scmp.eq.s32.totalorder %s17, 0
      %p163 = por %p161, %p162
      %p164 = scmp.ne.s32.totalorder %s156, %s158
      %p165 = scmp.eq.s32.totalorder %s22, 1
      %p166 = por %p164, %p165
      %p167 = scmp.ne.s32.totalorder %s158, %s159
      %p168 = scmp.eq.s32.totalorder %s22, 0
      %p169 = por %p167, %p168
      %p170 = scmp.ne.s32.totalorder %s158, %s159
      %p171 = scmp.eq.s32.totalorder %s23, 1
      %p172 = por %p170, %p171
      %p174 = scmp.ne.s32.totalorder %s159, %s173
      %p175 = scmp.eq.s32.totalorder %s23, 0
      %p176 = por %p174, %p175
      %s177 = ssub.s32 %s17, %s24
      %p178 = scmp.eq.s32.totalorder %s177, 0
      %s180 = sadd.s32 %s179, 1
      %s181 = scalar_select %p178, %s179, %s180
      %p184 = pneg %p178
      %p185 = scmp.eq.s32.totalorder %s17, 1
      %p186 = por %p184, %p185
      %p187 = scmp.ne.s32.totalorder %s179, %s182
      %p188 = scmp.eq.s32.totalorder %s17, 0
      %p189 = por %p187, %p188
      %p190 = scmp.ne.s32.totalorder %s179, %s182
      %p191 = scmp.eq.s32.totalorder %s22, 1
      %p192 = por %p190, %p191
      %p193 = scmp.ne.s32.totalorder %s182, %s183
      %p194 = scmp.eq.s32.totalorder %s22, 0
      %p195 = por %p193, %p194
      %p196 = scmp.ne.s32.totalorder %s182, %s183
      %p197 = scmp.eq.s32.totalorder %s23, 1
      %p198 = por %p196, %p197
      %p200 = scmp.ne.s32.totalorder %s183, %s199
      %p201 = scmp.eq.s32.totalorder %s23, 0
      %p202 = por %p200, %p201
      %p203 = scmp.le.s32.totalorder 1, %s17
      %p204 = scmp.lt.s32.totalorder %s17, 3
      %p205 = pnand %p203, %p204
      %p206 = pneg %p205
      // Predicated region
      $region9: #{tpu_custom_call.1} parent=5 // pred_check
        _
      $region10: #{tpu_custom_call.1} parent=5 // pred_check_branch
        %208 = sbr.rel (%p205) target = $region12
      $region11: #{tpu_custom_call.1} parent=5 // pred_region
        %s209 = ssub.s32 %s17, 1
        // Predicated region
        $region13: #{tpu_custom_call.1} parent=11 // pred_check
          %p210 = pneg %p64
        $region14: #{tpu_custom_call.1} parent=11 // pred_check_branch
          %212 = sbr.rel (%p210) target = $region16
        $region15: #{tpu_custom_call.1} parent=11 // pred_region
          _
        $region16: #{tpu_custom_call.1} parent=11 // pred_fallthru
          _
        // Predicated region
        $region17: #{tpu_custom_call.1} parent=11 // pred_check
          %p213 = pneg %p85
        $region18: #{tpu_custom_call.1} parent=11 // pred_check_branch
          %215 = sbr.rel (%p213) target = $region20
        $region19: #{tpu_custom_call.1} parent=11 // pred_region
          _
        $region20: #{tpu_custom_call.1} parent=11 // pred_fallthru
          _
        // Predicated region
        $region21: #{tpu_custom_call.1} parent=11 // pred_check
          %p216 = pneg %p106
        $region22: #{tpu_custom_call.1} parent=11 // pred_check_branch
          %218 = sbr.rel (%p216) target = $region24
        $region23: #{tpu_custom_call.1} parent=11 // pred_region
          _
        $region24: #{tpu_custom_call.1} parent=11 // pred_fallthru
          _
        // Predicated region
        $region25: #{tpu_custom_call.1} parent=11 // pred_check
          %p219 = pneg %p127
        $region26: #{tpu_custom_call.1} parent=11 // pred_check_branch
          %221 = sbr.rel (%p219) target = $region28
        $region27: #{tpu_custom_call.1} parent=11 // pred_region
          %s223 = ssub.s32 18432, 18432
          %224 = vsyncadd [#allocation5], %s223
          %s225 = sshll.u32 [#allocation4], 4
          %s226 = int_to_ptr.vmem [resolvable:$true] %s225
          %231 = dma.hbm_to_vmem [thread:$0]  %s4, 18432, %s226, [#allocation5], 128, 128, 8
        $region28: #{tpu_custom_call.1} parent=11 // pred_fallthru
          _
        // Predicated region
        $region29: #{tpu_custom_call.1} parent=11 // pred_check
          %p232 = pneg %p148
        $region30: #{tpu_custom_call.1} parent=11 // pred_check_branch
          %234 = sbr.rel (%p232) target = $region32
        $region31: #{tpu_custom_call.1} parent=11 // pred_region
          _
        $region32: #{tpu_custom_call.1} parent=11 // pred_fallthru
          _
        // Predicated region
        $region33: #{tpu_custom_call.1} parent=11 // pred_check
          %p235 = pneg %p169
        $region34: #{tpu_custom_call.1} parent=11 // pred_check_branch
          %237 = sbr.rel (%p235) target = $region36
        $region35: #{tpu_custom_call.1} parent=11 // pred_region
          _
        $region36: #{tpu_custom_call.1} parent=11 // pred_fallthru
          _
      $region12: #{tpu_custom_call.1} parent=5 // pred_fallthru
        _
      %p238 = scmp.lt.s32.totalorder %s17, 2
      // Predicated region
      $region37: #{tpu_custom_call.1} parent=5 // pred_check
        %p239 = pneg %p238
      $region38: #{tpu_custom_call.1} parent=5 // pred_check_branch
        %241 = sbr.rel (%p239) target = $region40
      $region39: #{tpu_custom_call.1} parent=5 // pred_region
        // Predicated region
        $region41: #{tpu_custom_call.1} parent=39 // pred_check
          %p242 = pneg %p37
        $region42: #{tpu_custom_call.1} parent=39 // pred_check_branch
          %244 = sbr.rel (%p242) target = $region44
        $region43: #{tpu_custom_call.1} parent=39 // pred_region
          %p245 = scmp.lt.s32.totalorder %s17, 1
          %s246 = scalar_select %p245, %s17, 1
          %s247 = smul.addr %s246, 32
          %s248 = smul.addr %s247, 8
          %s249 = scalar_lea.vmem %s0, %s248
        $region44: #{tpu_custom_call.1} parent=39 // pred_fallthru
          _
      $region40: #{tpu_custom_call.1} parent=5 // pred_fallthru
        _
      %p250 = scmp.le.s32.totalorder 1, %s17
      %p251 = scmp.lt.s32.totalorder %s17, 3
      %p252 = pnand %p250, %p251
      %p253 = pneg %p252
      // Predicated region
      $region45: #{tpu_custom_call.1} parent=5 // pred_check
        _
      $region46: #{tpu_custom_call.1} parent=5 // pred_check_branch
        %255 = sbr.rel (%p252) target = $region48
      $region47: #{tpu_custom_call.1} parent=5 // pred_region
        %s256 = ssub.s32 %s17, 1
        // Predicated region
        $region49: #{tpu_custom_call.1} parent=47 // pred_check
          %p257 = pneg %p127
        $region50: #{tpu_custom_call.1} parent=47 // pred_check_branch
          %259 = sbr.rel (%p257) target = $region52
        $region51: #{tpu_custom_call.1} parent=47 // pred_region
          %260 = dma.done [#allocation5], 18432
        $region52: #{tpu_custom_call.1} parent=47 // pred_fallthru
          _
        %p261 = scmp.lt.s32.totalorder %s22, 1
        %s262 = scalar_select %p261, %s22, 1
        %s263 = smul.addr %s262, 32
        %s264 = smul.addr %s263, 8
        %s265 = scalar_lea.vmem %s0, %s264
        %p266 = pneg %p43
        %p267 = pneg %p40
        %p268 = pneg %p64
        %p269 = pneg %p61
        %p270 = pneg %p85
        %p271 = pneg %p82
        %p272 = pneg %p106
        %p273 = pneg %p103
        %p274 = pneg %p127
        %p275 = pneg %p124
        %p276 = pneg %p148
        %p277 = pneg %p145
        %p278 = pneg %p169
        %p279 = pneg %p166
        %p280 = pneg %p195
        %p281 = pneg %p192
        %s282 = sand.u32 %s182, 1
        %s283 = scalar_lea.sflag [#allocation6], %s282
        %s284 = sand.u32 %s182, 1
        %s285 = smul.addr %s284, 64
        %s286 = scalar_lea.vmem [#allocation7], %s285
        %p287 = scmp.lt.s32.totalorder %s22, 1
        %s288 = scalar_select %p287, %s22, 1
        %s289 = smul.addr %s288, 32
        %s290 = smul.addr %s289, 8
        %s291 = scalar_lea.vmem %s0, %s290
        %vm292 = vcmask 31744
        %293 = vst.msk [vmem:[#allocation2] sm:$0xff] %vm292, 0.0
        %294 = vst.msk [vmem:[#allocation2 + $0x8] sm:$0xff] %vm292, 0.0
        %vm295 = vcmask 25600
        %296 = vst.msk [vmem:[#allocation2 + $0x10] sm:$0x3] %vm295, 0.0
        %s297 = scalar_lea.vmem [#allocation2], 408
        %298 = vst.msk [vmem:[%s297] sm:$0xff] %vm292, 0.0
        %299 = vst.msk [vmem:[%s297 + $0x8] sm:$0xff] %vm292, 0.0
        %300 = vst.msk [vmem:[%s297 + $0x10] sm:$0x3] %vm295, 0.0
        %vm301 = vcmask 24576
        %302 = vst.msk [vmem:[#allocation2] sm:$0x1] %vm301, 0.0
        %303 = vst.msk [vmem:[#allocation2 + $0x18] sm:$0x1] %vm301, 0.0
        %304 = vst.msk [vmem:[#allocation2 + $0x30] sm:$0x1] %vm301, 0.0
        %305 = vst.msk [vmem:[#allocation2 + $0x48] sm:$0x1] %vm301, 0.0
        %306 = vst.msk [vmem:[#allocation2 + $0x60] sm:$0x1] %vm301, 0.0
        %307 = vst.msk [vmem:[#allocation2 + $0x78] sm:$0x1] %vm301, 0.0
        %308 = vst.msk [vmem:[#allocation2 + $0x90] sm:$0x1] %vm301, 0.0
        %309 = vst.msk [vmem:[#allocation2 + $0xa8] sm:$0x1] %vm301, 0.0
        %310 = vst.msk [vmem:[#allocation2 + $0xc0] sm:$0x1] %vm301, 0.0
        %311 = vst.msk [vmem:[#allocation2 + $0xd8] sm:$0x1] %vm301, 0.0
        %312 = vst.msk [vmem:[#allocation2 + $0xf0] sm:$0x1] %vm301, 0.0
        %313 = vst.msk [vmem:[#allocation2 + $0x108] sm:$0x1] %vm301, 0.0
        %314 = vst.msk [vmem:[#allocation2 + $0x120] sm:$0x1] %vm301, 0.0
        %315 = vst.msk [vmem:[#allocation2 + $0x138] sm:$0x1] %vm301, 0.0
        %316 = vst.msk [vmem:[#allocation2 + $0x150] sm:$0x1] %vm301, 0.0
        %317 = vst.msk [vmem:[#allocation2 + $0x168] sm:$0x1] %vm301, 0.0
        %318 = vst.msk [vmem:[#allocation2 + $0x180] sm:$0x1] %vm301, 0.0
        %319 = vst.msk [vmem:[#allocation2 + $0x198] sm:$0x1] %vm301, 0.0
        %320 = vst.msk [vmem:[#allocation2 + $0x11] sm:$0x1] %vm301, 0.0
        %321 = vst.msk [vmem:[#allocation2 + $0x29] sm:$0x1] %vm301, 0.0
        %322 = vst.msk [vmem:[#allocation2 + $0x41] sm:$0x1] %vm301, 0.0
        %323 = vst.msk [vmem:[#allocation2 + $0x59] sm:$0x1] %vm301, 0.0
        %324 = vst.msk [vmem:[#allocation2 + $0x71] sm:$0x1] %vm301, 0.0
        %325 = vst.msk [vmem:[#allocation2 + $0x89] sm:$0x1] %vm301, 0.0
        %326 = vst.msk [vmem:[#allocation2 + $0xa1] sm:$0x1] %vm301, 0.0
        %327 = vst.msk [vmem:[#allocation2 + $0xb9] sm:$0x1] %vm301, 0.0
        %328 = vst.msk [vmem:[#allocation2 + $0xd1] sm:$0x1] %vm301, 0.0
        %329 = vst.msk [vmem:[#allocation2 + $0xe9] sm:$0x1] %vm301, 0.0
        %330 = vst.msk [vmem:[#allocation2 + $0x101] sm:$0x1] %vm301, 0.0
        %331 = vst.msk [vmem:[#allocation2 + $0x119] sm:$0x1] %vm301, 0.0
        %332 = vst.msk [vmem:[#allocation2 + $0x131] sm:$0x1] %vm301, 0.0
        %333 = vst.msk [vmem:[#allocation2 + $0x149] sm:$0x1] %vm301, 0.0
        %334 = vst.msk [vmem:[#allocation2 + $0x161] sm:$0x1] %vm301, 0.0
        %335 = vst.msk [vmem:[#allocation2 + $0x179] sm:$0x1] %vm301, 0.0
        %336 = vst.msk [vmem:[#allocation2 + $0x191] sm:$0x1] %vm301, 0.0
        %337 = vst.msk [vmem:[#allocation2 + $0x1a9] sm:$0x1] %vm301, 0.0
        %v338 = vld [vmem:[%s291] sm:$0xff]
        %v339 = vld [vmem:[%s291 + $0x8] sm:$0xff]
        %v340 = vld [vmem:[%s291 + $0x10] sm:$0xff]
        %v341 = vld [vmem:[%s291 + $0x18] sm:$0xff]
        %v342 = vld [vmem:[%s291 + $0x20] sm:$0xff]
        %v343 = vld [vmem:[%s291 + $0x28] sm:$0xff]
        %v344 = vld [vmem:[%s291 + $0x30] sm:$0xff]
        %v345 = vld [vmem:[%s291 + $0x38] sm:$0xff]
        %v346 = vld [vmem:[%s291 + $0x40] sm:$0xff]
        %v347 = vld [vmem:[%s291 + $0x48] sm:$0xff]
        %v348 = vld [vmem:[%s291 + $0x50] sm:$0xff]
        %v349 = vld [vmem:[%s291 + $0x58] sm:$0xff]
        %v350 = vld [vmem:[%s291 + $0x60] sm:$0xff]
        %v351 = vld [vmem:[%s291 + $0x68] sm:$0xff]
        %v352 = vld [vmem:[%s291 + $0x70] sm:$0xff]
        %v353 = vld [vmem:[%s291 + $0x78] sm:$0xff]
        %v354 = vld [vmem:[%s291 + $0x80] sm:$0xff]
        %v355 = vld [vmem:[%s291 + $0x88] sm:$0xff]
        %v356 = vld [vmem:[%s291 + $0x90] sm:$0xff]
        %v357 = vld [vmem:[%s291 + $0x98] sm:$0xff]
        %v358 = vld [vmem:[%s291 + $0xa0] sm:$0xff]
        %v359 = vld [vmem:[%s291 + $0xa8] sm:$0xff]
        %v360 = vld [vmem:[%s291 + $0xb0] sm:$0xff]
        %v361 = vld [vmem:[%s291 + $0xb8] sm:$0xff]
        %v362 = vld [vmem:[%s291 + $0xc0] sm:$0xff]
        %v363 = vld [vmem:[%s291 + $0xc8] sm:$0xff]
        %v364 = vld [vmem:[%s291 + $0xd0] sm:$0xff]
        %v365 = vld [vmem:[%s291 + $0xd8] sm:$0xff]
        %v366 = vld [vmem:[%s291 + $0xe0] sm:$0xff]
        %v367 = vld [vmem:[%s291 + $0xe8] sm:$0xff]
        %v368 = vld [vmem:[%s291 + $0xf0] sm:$0xff]
        %v369 = vld [vmem:[%s291 + $0xf8] sm:$0xff]
        %s370 = scalar_lea.vmem [#allocation2], 24
        %371 = vst.msk [vmem:[%s370 + $0x1] sm:$0xff] %vm292, %v338
        %372 = vst.msk [vmem:[%s370 + $0x9] sm:$0xff] %vm292, %v339
        %373 = vst.msk [vmem:[%s370 + $0x19] sm:$0xff] %vm292, %v340
        %374 = vst.msk [vmem:[%s370 + $0x21] sm:$0xff] %vm292, %v341
        %375 = vst.msk [vmem:[%s370 + $0x31] sm:$0xff] %vm292, %v342
        %376 = vst.msk [vmem:[%s370 + $0x39] sm:$0xff] %vm292, %v343
        %377 = vst.msk [vmem:[%s370 + $0x49] sm:$0xff] %vm292, %v344
        %378 = vst.msk [vmem:[%s370 + $0x51] sm:$0xff] %vm292, %v345
        %379 = vst.msk [vmem:[%s370 + $0x61] sm:$0xff] %vm292, %v346
        %380 = vst.msk [vmem:[%s370 + $0x69] sm:$0xff] %vm292, %v347
        %381 = vst.msk [vmem:[%s370 + $0x79] sm:$0xff] %vm292, %v348
        %382 = vst.msk [vmem:[%s370 + $0x81] sm:$0xff] %vm292, %v349
        %383 = vst.msk [vmem:[%s370 + $0x91] sm:$0xff] %vm292, %v350
        %384 = vst.msk [vmem:[%s370 + $0x99] sm:$0xff] %vm292, %v351
        %385 = vst.msk [vmem:[%s370 + $0xa9] sm:$0xff] %vm292, %v352
        %386 = vst.msk [vmem:[%s370 + $0xb1] sm:$0xff] %vm292, %v353
        %387 = vst.msk [vmem:[%s370 + $0xc1] sm:$0xff] %vm292, %v354
        %388 = vst.msk [vmem:[%s370 + $0xc9] sm:$0xff] %vm292, %v355
        %389 = vst.msk [vmem:[%s370 + $0xd9] sm:$0xff] %vm292, %v356
        %390 = vst.msk [vmem:[%s370 + $0xe1] sm:$0xff] %vm292, %v357
        %391 = vst.msk [vmem:[%s370 + $0xf1] sm:$0xff] %vm292, %v358
        %392 = vst.msk [vmem:[%s370 + $0xf9] sm:$0xff] %vm292, %v359
        %393 = vst.msk [vmem:[%s370 + $0x109] sm:$0xff] %vm292, %v360
        %394 = vst.msk [vmem:[%s370 + $0x111] sm:$0xff] %vm292, %v361
        %395 = vst.msk [vmem:[%s370 + $0x121] sm:$0xff] %vm292, %v362
        %396 = vst.msk [vmem:[%s370 + $0x129] sm:$0xff] %vm292, %v363
        %397 = vst.msk [vmem:[%s370 + $0x139] sm:$0xff] %vm292, %v364
        %398 = vst.msk [vmem:[%s370 + $0x141] sm:$0xff] %vm292, %v365
        %399 = vst.msk [vmem:[%s370 + $0x151] sm:$0xff] %vm292, %v366
        %400 = vst.msk [vmem:[%s370 + $0x159] sm:$0xff] %vm292, %v367
        %401 = vst.msk [vmem:[%s370 + $0x169] sm:$0xff] %vm292, %v368
        %402 = vst.msk [vmem:[%s370 + $0x171] sm:$0xff] %vm292, %v369
        %v403 = vld [vmem:[#allocation2] sm:$0xff]
        %v404 = vld [vmem:[#allocation2 + $0x8] sm:$0xff]
        %v405 = vld [vmem:[#allocation2 + $0x18] sm:$0xff]
        %v406 = vld [vmem:[#allocation2 + $0x20] sm:$0xff]
        %v407 = vld [vmem:[#allocation2 + $0x30] sm:$0xff]
        %v408 = vld [vmem:[#allocation2 + $0x38] sm:$0xff]
        %v409 = vld [vmem:[#allocation2 + $0x48] sm:$0xff]
        %v410 = vld [vmem:[#allocation2 + $0x50] sm:$0xff]
        %v411 = vld [vmem:[#allocation2 + $0x60] sm:$0xff]
        %v412 = vld [vmem:[#allocation2 + $0x68] sm:$0xff]
        %v413 = vld [vmem:[#allocation2 + $0x78] sm:$0xff]
        %v414 = vld [vmem:[#allocation2 + $0x80] sm:$0xff]
        %v415 = vld [vmem:[#allocation2 + $0x90] sm:$0xff]
        %v416 = vld [vmem:[#allocation2 + $0x98] sm:$0xff]
        %v417 = vld [vmem:[#allocation2 + $0xa8] sm:$0xff]
        %v418 = vld [vmem:[#allocation2 + $0xb0] sm:$0xff]
        %v419 = vld [vmem:[#allocation2 + $0xc0] sm:$0xff]
        %v420 = vld [vmem:[#allocation2 + $0xc8] sm:$0xff]
        %v421 = vld [vmem:[#allocation2 + $0xd8] sm:$0xff]
        %v422 = vld [vmem:[#allocation2 + $0xe0] sm:$0xff]
        %v423 = vld [vmem:[#allocation2 + $0xf0] sm:$0xff]
        %v424 = vld [vmem:[#allocation2 + $0xf8] sm:$0xff]
        %v425 = vld [vmem:[#allocation2 + $0x108] sm:$0xff]
        %v426 = vld [vmem:[#allocation2 + $0x110] sm:$0xff]
        %v427 = vld [vmem:[#allocation2 + $0x120] sm:$0xff]
        %v428 = vld [vmem:[#allocation2 + $0x128] sm:$0xff]
        %v429 = vld [vmem:[#allocation2 + $0x138] sm:$0xff]
        %v430 = vld [vmem:[#allocation2 + $0x140] sm:$0xff]
        %v431 = vld [vmem:[#allocation2 + $0x150] sm:$0xff]
        %v432 = vld [vmem:[#allocation2 + $0x158] sm:$0xff]
        %v433 = vld [vmem:[#allocation2 + $0x168] sm:$0xff]
        %v434 = vld [vmem:[#allocation2 + $0x170] sm:$0xff]
        %v435 = vld [vmem:[#allocation2 + $0x1] sm:$0xff]
        %v436 = vld [vmem:[#allocation2 + $0x9] sm:$0xff]
        %v437 = vld [vmem:[#allocation2 + $0x19] sm:$0xff]
        %v438 = vld [vmem:[#allocation2 + $0x21] sm:$0xff]
        %v439 = vld [vmem:[#allocation2 + $0x31] sm:$0xff]
        %v440 = vld [vmem:[#allocation2 + $0x39] sm:$0xff]
        %v441 = vld [vmem:[#allocation2 + $0x49] sm:$0xff]
        %v442 = vld [vmem:[#allocation2 + $0x51] sm:$0xff]
        %v443 = vld [vmem:[#allocation2 + $0x61] sm:$0xff]
        %v444 = vld [vmem:[#allocation2 + $0x69] sm:$0xff]
        %v445 = vld [vmem:[#allocation2 + $0x79] sm:$0xff]
        %v446 = vld [vmem:[#allocation2 + $0x81] sm:$0xff]
        %v447 = vld [vmem:[#allocation2 + $0x91] sm:$0xff]
        %v448 = vld [vmem:[#allocation2 + $0x99] sm:$0xff]
        %v449 = vld [vmem:[#allocation2 + $0xa9] sm:$0xff]
        %v450 = vld [vmem:[#allocation2 + $0xb1] sm:$0xff]
        %v451 = vld [vmem:[#allocation2 + $0xc1] sm:$0xff]
        %v452 = vld [vmem:[#allocation2 + $0xc9] sm:$0xff]
        %v453 = vld [vmem:[#allocation2 + $0xd9] sm:$0xff]
        %v454 = vld [vmem:[#allocation2 + $0xe1] sm:$0xff]
        %v455 = vld [vmem:[#allocation2 + $0xf1] sm:$0xff]
        %v456 = vld [vmem:[#allocation2 + $0xf9] sm:$0xff]
        %v457 = vld [vmem:[#allocation2 + $0x109] sm:$0xff]
        %v458 = vld [vmem:[#allocation2 + $0x111] sm:$0xff]
        %v459 = vld [vmem:[#allocation2 + $0x121] sm:$0xff]
        %v460 = vld [vmem:[#allocation2 + $0x129] sm:$0xff]
        %v461 = vld [vmem:[#allocation2 + $0x139] sm:$0xff]
        %v462 = vld [vmem:[#allocation2 + $0x141] sm:$0xff]
        %v463 = vld [vmem:[#allocation2 + $0x151] sm:$0xff]
        %v464 = vld [vmem:[#allocation2 + $0x159] sm:$0xff]
        %v465 = vld [vmem:[#allocation2 + $0x169] sm:$0xff]
        %v466 = vld [vmem:[#allocation2 + $0x171] sm:$0xff]
        %v467 = vld [vmem:[#allocation2 + $0x2] sm:$0xff]
        %v468 = vld [vmem:[#allocation2 + $0xa] sm:$0xff]
        %v469 = vld [vmem:[#allocation2 + $0x1a] sm:$0xff]
        %v470 = vld [vmem:[#allocation2 + $0x22] sm:$0xff]
        %v471 = vld [vmem:[#allocation2 + $0x32] sm:$0xff]
        %v472 = vld [vmem:[#allocation2 + $0x3a] sm:$0xff]
        %v473 = vld [vmem:[#allocation2 + $0x4a] sm:$0xff]
        %v474 = vld [vmem:[#allocation2 + $0x52] sm:$0xff]
        %v475 = vld [vmem:[#allocation2 + $0x62] sm:$0xff]
        %v476 = vld [vmem:[#allocation2 + $0x6a] sm:$0xff]
        %v477 = vld [vmem:[#allocation2 + $0x7a] sm:$0xff]
        %v478 = vld [vmem:[#allocation2 + $0x82] sm:$0xff]
        %v479 = vld [vmem:[#allocation2 + $0x92] sm:$0xff]
        %v480 = vld [vmem:[#allocation2 + $0x9a] sm:$0xff]
        %v481 = vld [vmem:[#allocation2 + $0xaa] sm:$0xff]
        %v482 = vld [vmem:[#allocation2 + $0xb2] sm:$0xff]
        %v483 = vld [vmem:[#allocation2 + $0xc2] sm:$0xff]
        %v484 = vld [vmem:[#allocation2 + $0xca] sm:$0xff]
        %v485 = vld [vmem:[#allocation2 + $0xda] sm:$0xff]
        %v486 = vld [vmem:[#allocation2 + $0xe2] sm:$0xff]
        %v487 = vld [vmem:[#allocation2 + $0xf2] sm:$0xff]
        %v488 = vld [vmem:[#allocation2 + $0xfa] sm:$0xff]
        %v489 = vld [vmem:[#allocation2 + $0x10a] sm:$0xff]
        %v490 = vld [vmem:[#allocation2 + $0x112] sm:$0xff]
        %v491 = vld [vmem:[#allocation2 + $0x122] sm:$0xff]
        %v492 = vld [vmem:[#allocation2 + $0x12a] sm:$0xff]
        %v493 = vld [vmem:[#allocation2 + $0x13a] sm:$0xff]
        %v494 = vld [vmem:[#allocation2 + $0x142] sm:$0xff]
        %v495 = vld [vmem:[#allocation2 + $0x152] sm:$0xff]
        %v496 = vld [vmem:[#allocation2 + $0x15a] sm:$0xff]
        %v497 = vld [vmem:[#allocation2 + $0x16a] sm:$0xff]
        %v498 = vld [vmem:[#allocation2 + $0x172] sm:$0xff]
        %v499 = vld [vmem:[%s370] sm:$0xff]
        %v500 = vld [vmem:[%s370 + $0x8] sm:$0xff]
        %v501 = vld [vmem:[%s370 + $0x18] sm:$0xff]
        %v502 = vld [vmem:[%s370 + $0x20] sm:$0xff]
        %v503 = vld [vmem:[%s370 + $0x30] sm:$0xff]
        %v504 = vld [vmem:[%s370 + $0x38] sm:$0xff]
        %v505 = vld [vmem:[%s370 + $0x48] sm:$0xff]
        %v506 = vld [vmem:[%s370 + $0x50] sm:$0xff]
        %v507 = vld [vmem:[%s370 + $0x60] sm:$0xff]
        %v508 = vld [vmem:[%s370 + $0x68] sm:$0xff]
        %v509 = vld [vmem:[%s370 + $0x78] sm:$0xff]
        %v510 = vld [vmem:[%s370 + $0x80] sm:$0xff]
        %v511 = vld [vmem:[%s370 + $0x90] sm:$0xff]
        %v512 = vld [vmem:[%s370 + $0x98] sm:$0xff]
        %v513 = vld [vmem:[%s370 + $0xa8] sm:$0xff]
        %v514 = vld [vmem:[%s370 + $0xb0] sm:$0xff]
        %v515 = vld [vmem:[%s370 + $0xc0] sm:$0xff]
        %v516 = vld [vmem:[%s370 + $0xc8] sm:$0xff]
        %v517 = vld [vmem:[%s370 + $0xd8] sm:$0xff]
        %v518 = vld [vmem:[%s370 + $0xe0] sm:$0xff]
        %v519 = vld [vmem:[%s370 + $0xf0] sm:$0xff]
        %v520 = vld [vmem:[%s370 + $0xf8] sm:$0xff]
        %v521 = vld [vmem:[%s370 + $0x108] sm:$0xff]
        %v522 = vld [vmem:[%s370 + $0x110] sm:$0xff]
        %v523 = vld [vmem:[%s370 + $0x120] sm:$0xff]
        %v524 = vld [vmem:[%s370 + $0x128] sm:$0xff]
        %v525 = vld [vmem:[%s370 + $0x138] sm:$0xff]
        %v526 = vld [vmem:[%s370 + $0x140] sm:$0xff]
        %v527 = vld [vmem:[%s370 + $0x150] sm:$0xff]
        %v528 = vld [vmem:[%s370 + $0x158] sm:$0xff]
        %v529 = vld [vmem:[%s370 + $0x168] sm:$0xff]
        %v530 = vld [vmem:[%s370 + $0x170] sm:$0xff]
        %v531 = vld [vmem:[%s370 + $0x1] sm:$0xff]
        %v532 = vld [vmem:[%s370 + $0x9] sm:$0xff]
        %v533 = vld [vmem:[%s370 + $0x19] sm:$0xff]
        %v534 = vld [vmem:[%s370 + $0x21] sm:$0xff]
        %v535 = vld [vmem:[%s370 + $0x31] sm:$0xff]
        %v536 = vld [vmem:[%s370 + $0x39] sm:$0xff]
        %v537 = vld [vmem:[%s370 + $0x49] sm:$0xff]
        %v538 = vld [vmem:[%s370 + $0x51] sm:$0xff]
        %v539 = vld [vmem:[%s370 + $0x61] sm:$0xff]
        %v540 = vld [vmem:[%s370 + $0x69] sm:$0xff]
        %v541 = vld [vmem:[%s370 + $0x79] sm:$0xff]
        %v542 = vld [vmem:[%s370 + $0x81] sm:$0xff]
        %v543 = vld [vmem:[%s370 + $0x91] sm:$0xff]
        %v544 = vld [vmem:[%s370 + $0x99] sm:$0xff]
        %v545 = vld [vmem:[%s370 + $0xa9] sm:$0xff]
        %v546 = vld [vmem:[%s370 + $0xb1] sm:$0xff]
        %v547 = vld [vmem:[%s370 + $0xc1] sm:$0xff]
        %v548 = vld [vmem:[%s370 + $0xc9] sm:$0xff]
        %v549 = vld [vmem:[%s370 + $0xd9] sm:$0xff]
        %v550 = vld [vmem:[%s370 + $0xe1] sm:$0xff]
        %v551 = vld [vmem:[%s370 + $0xf1] sm:$0xff]
        %v552 = vld [vmem:[%s370 + $0xf9] sm:$0xff]
        %v553 = vld [vmem:[%s370 + $0x109] sm:$0xff]
        %v554 = vld [vmem:[%s370 + $0x111] sm:$0xff]
        %v555 = vld [vmem:[%s370 + $0x121] sm:$0xff]
        %v556 = vld [vmem:[%s370 + $0x129] sm:$0xff]
        %v557 = vld [vmem:[%s370 + $0x139] sm:$0xff]
        %v558 = vld [vmem:[%s370 + $0x141] sm:$0xff]
        %v559 = vld [vmem:[%s370 + $0x151] sm:$0xff]
        %v560 = vld [vmem:[%s370 + $0x159] sm:$0xff]
        %v561 = vld [vmem:[%s370 + $0x169] sm:$0xff]
        %v562 = vld [vmem:[%s370 + $0x171] sm:$0xff]
        %v563 = vld [vmem:[%s370 + $0x2] sm:$0xff]
        %v564 = vld [vmem:[%s370 + $0xa] sm:$0xff]
        %v565 = vld [vmem:[%s370 + $0x1a] sm:$0xff]
        %v566 = vld [vmem:[%s370 + $0x22] sm:$0xff]
        %v567 = vld [vmem:[%s370 + $0x32] sm:$0xff]
        %v568 = vld [vmem:[%s370 + $0x3a] sm:$0xff]
        %v569 = vld [vmem:[%s370 + $0x4a] sm:$0xff]
        %v570 = vld [vmem:[%s370 + $0x52] sm:$0xff]
        %v571 = vld [vmem:[%s370 + $0x62] sm:$0xff]
        %v572 = vld [vmem:[%s370 + $0x6a] sm:$0xff]
        %v573 = vld [vmem:[%s370 + $0x7a] sm:$0xff]
        %v574 = vld [vmem:[%s370 + $0x82] sm:$0xff]
        %v575 = vld [vmem:[%s370 + $0x92] sm:$0xff]
        %v576 = vld [vmem:[%s370 + $0x9a] sm:$0xff]
        %v577 = vld [vmem:[%s370 + $0xaa] sm:$0xff]
        %v578 = vld [vmem:[%s370 + $0xb2] sm:$0xff]
        %v579 = vld [vmem:[%s370 + $0xc2] sm:$0xff]
        %v580 = vld [vmem:[%s370 + $0xca] sm:$0xff]
        %v581 = vld [vmem:[%s370 + $0xda] sm:$0xff]
        %v582 = vld [vmem:[%s370 + $0xe2] sm:$0xff]
        %v583 = vld [vmem:[%s370 + $0xf2] sm:$0xff]
        %v584 = vld [vmem:[%s370 + $0xfa] sm:$0xff]
        %v585 = vld [vmem:[%s370 + $0x10a] sm:$0xff]
        %v586 = vld [vmem:[%s370 + $0x112] sm:$0xff]
        %v587 = vld [vmem:[%s370 + $0x122] sm:$0xff]
        %v588 = vld [vmem:[%s370 + $0x12a] sm:$0xff]
        %v589 = vld [vmem:[%s370 + $0x13a] sm:$0xff]
        %v590 = vld [vmem:[%s370 + $0x142] sm:$0xff]
        %v591 = vld [vmem:[%s370 + $0x152] sm:$0xff]
        %v592 = vld [vmem:[%s370 + $0x15a] sm:$0xff]
        %v593 = vld [vmem:[%s370 + $0x16a] sm:$0xff]
        %v594 = vld [vmem:[%s370 + $0x172] sm:$0xff]
        %s595 = scalar_lea.vmem [#allocation2], 48
        %v596 = vld [vmem:[%s595] sm:$0xff]
        %v597 = vld [vmem:[%s595 + $0x8] sm:$0xff]
        %v598 = vld [vmem:[%s595 + $0x18] sm:$0xff]
        %v599 = vld [vmem:[%s595 + $0x20] sm:$0xff]
        %v600 = vld [vmem:[%s595 + $0x30] sm:$0xff]
        %v601 = vld [vmem:[%s595 + $0x38] sm:$0xff]
        %v602 = vld [vmem:[%s595 + $0x48] sm:$0xff]
        %v603 = vld [vmem:[%s595 + $0x50] sm:$0xff]
        %v604 = vld [vmem:[%s595 + $0x60] sm:$0xff]
        %v605 = vld [vmem:[%s595 + $0x68] sm:$0xff]
        %v606 = vld [vmem:[%s595 + $0x78] sm:$0xff]
        %v607 = vld [vmem:[%s595 + $0x80] sm:$0xff]
        %v608 = vld [vmem:[%s595 + $0x90] sm:$0xff]
        %v609 = vld [vmem:[%s595 + $0x98] sm:$0xff]
        %v610 = vld [vmem:[%s595 + $0xa8] sm:$0xff]
        %v611 = vld [vmem:[%s595 + $0xb0] sm:$0xff]
        %v612 = vld [vmem:[%s595 + $0xc0] sm:$0xff]
        %v613 = vld [vmem:[%s595 + $0xc8] sm:$0xff]
        %v614 = vld [vmem:[%s595 + $0xd8] sm:$0xff]
        %v615 = vld [vmem:[%s595 + $0xe0] sm:$0xff]
        %v616 = vld [vmem:[%s595 + $0xf0] sm:$0xff]
        %v617 = vld [vmem:[%s595 + $0xf8] sm:$0xff]
        %v618 = vld [vmem:[%s595 + $0x108] sm:$0xff]
        %v619 = vld [vmem:[%s595 + $0x110] sm:$0xff]
        %v620 = vld [vmem:[%s595 + $0x120] sm:$0xff]
        %v621 = vld [vmem:[%s595 + $0x128] sm:$0xff]
        %v622 = vld [vmem:[%s595 + $0x138] sm:$0xff]
        %v623 = vld [vmem:[%s595 + $0x140] sm:$0xff]
        %v624 = vld [vmem:[%s595 + $0x150] sm:$0xff]
        %v625 = vld [vmem:[%s595 + $0x158] sm:$0xff]
        %v626 = vld [vmem:[%s595 + $0x168] sm:$0xff]
        %v627 = vld [vmem:[%s595 + $0x170] sm:$0xff]
        %v628 = vld [vmem:[%s595 + $0x1] sm:$0xff]
        %v629 = vld [vmem:[%s595 + $0x9] sm:$0xff]
        %v630 = vld [vmem:[%s595 + $0x19] sm:$0xff]
        %v631 = vld [vmem:[%s595 + $0x21] sm:$0xff]
        %v632 = vld [vmem:[%s595 + $0x31] sm:$0xff]
        %v633 = vld [vmem:[%s595 + $0x39] sm:$0xff]
        %v634 = vld [vmem:[%s595 + $0x49] sm:$0xff]
        %v635 = vld [vmem:[%s595 + $0x51] sm:$0xff]
        %v636 = vld [vmem:[%s595 + $0x61] sm:$0xff]
        %v637 = vld [vmem:[%s595 + $0x69] sm:$0xff]
        %v638 = vld [vmem:[%s595 + $0x79] sm:$0xff]
        %v639 = vld [vmem:[%s595 + $0x81] sm:$0xff]
        %v640 = vld [vmem:[%s595 + $0x91] sm:$0xff]
        %v641 = vld [vmem:[%s595 + $0x99] sm:$0xff]
        %v642 = vld [vmem:[%s595 + $0xa9] sm:$0xff]
        %v643 = vld [vmem:[%s595 + $0xb1] sm:$0xff]
        %v644 = vld [vmem:[%s595 + $0xc1] sm:$0xff]
        %v645 = vld [vmem:[%s595 + $0xc9] sm:$0xff]
        %v646 = vld [vmem:[%s595 + $0xd9] sm:$0xff]
        %v647 = vld [vmem:[%s595 + $0xe1] sm:$0xff]
        %v648 = vld [vmem:[%s595 + $0xf1] sm:$0xff]
        %v649 = vld [vmem:[%s595 + $0xf9] sm:$0xff]
        %v650 = vld [vmem:[%s595 + $0x109] sm:$0xff]
        %v651 = vld [vmem:[%s595 + $0x111] sm:$0xff]
        %v652 = vld [vmem:[%s595 + $0x121] sm:$0xff]
        %v653 = vld [vmem:[%s595 + $0x129] sm:$0xff]
        %v654 = vld [vmem:[%s595 + $0x139] sm:$0xff]
        %v655 = vld [vmem:[%s595 + $0x141] sm:$0xff]
        %v656 = vld [vmem:[%s595 + $0x151] sm:$0xff]
        %v657 = vld [vmem:[%s595 + $0x159] sm:$0xff]
        %v658 = vld [vmem:[%s595 + $0x169] sm:$0xff]
        %v659 = vld [vmem:[%s595 + $0x171] sm:$0xff]
        %v660 = vld [vmem:[%s595 + $0x2] sm:$0xff]
        %v661 = vld [vmem:[%s595 + $0xa] sm:$0xff]
        %v662 = vld [vmem:[%s595 + $0x1a] sm:$0xff]
        %v663 = vld [vmem:[%s595 + $0x22] sm:$0xff]
        %v664 = vld [vmem:[%s595 + $0x32] sm:$0xff]
        %v665 = vld [vmem:[%s595 + $0x3a] sm:$0xff]
        %v666 = vld [vmem:[%s595 + $0x4a] sm:$0xff]
        %v667 = vld [vmem:[%s595 + $0x52] sm:$0xff]
        %v668 = vld [vmem:[%s595 + $0x62] sm:$0xff]
        %v669 = vld [vmem:[%s595 + $0x6a] sm:$0xff]
        %v670 = vld [vmem:[%s595 + $0x7a] sm:$0xff]
        %v671 = vld [vmem:[%s595 + $0x82] sm:$0xff]
        %v672 = vld [vmem:[%s595 + $0x92] sm:$0xff]
        %v673 = vld [vmem:[%s595 + $0x9a] sm:$0xff]
        %v674 = vld [vmem:[%s595 + $0xaa] sm:$0xff]
        %v675 = vld [vmem:[%s595 + $0xb2] sm:$0xff]
        %v676 = vld [vmem:[%s595 + $0xc2] sm:$0xff]
        %v677 = vld [vmem:[%s595 + $0xca] sm:$0xff]
        %v678 = vld [vmem:[%s595 + $0xda] sm:$0xff]
        %v679 = vld [vmem:[%s595 + $0xe2] sm:$0xff]
        %v680 = vld [vmem:[%s595 + $0xf2] sm:$0xff]
        %v681 = vld [vmem:[%s595 + $0xfa] sm:$0xff]
        %v682 = vld [vmem:[%s595 + $0x10a] sm:$0xff]
        %v683 = vld [vmem:[%s595 + $0x112] sm:$0xff]
        %v684 = vld [vmem:[%s595 + $0x122] sm:$0xff]
        %v685 = vld [vmem:[%s595 + $0x12a] sm:$0xff]
        %v686 = vld [vmem:[%s595 + $0x13a] sm:$0xff]
        %v687 = vld [vmem:[%s595 + $0x142] sm:$0xff]
        %v688 = vld [vmem:[%s595 + $0x152] sm:$0xff]
        %v689 = vld [vmem:[%s595 + $0x15a] sm:$0xff]
        %v690 = vld [vmem:[%s595 + $0x16a] sm:$0xff]
        %v691 = vld [vmem:[%s595 + $0x172] sm:$0xff]
        %724 = vrot.lane.b32.xlu0 %v435, 4
        %v725 = vpop.permute.xlu0 %724
        %726 = vrot.lane.b32.xlu0 %v436, 4
        %v727 = vpop.permute.xlu0 %726
        %728 = vrot.lane.b32.xlu0 %v437, 4
        %v729 = vpop.permute.xlu0 %728
        %730 = vrot.lane.b32.xlu0 %v438, 4
        %v731 = vpop.permute.xlu0 %730
        %732 = vrot.lane.b32.xlu0 %v439, 4
        %v733 = vpop.permute.xlu0 %732
        %734 = vrot.lane.b32.xlu0 %v440, 4
        %v735 = vpop.permute.xlu0 %734
        %736 = vrot.lane.b32.xlu0 %v441, 4
        %v737 = vpop.permute.xlu0 %736
        %738 = vrot.lane.b32.xlu0 %v442, 4
        %v739 = vpop.permute.xlu0 %738
        %740 = vrot.lane.b32.xlu0 %v443, 4
        %v741 = vpop.permute.xlu0 %740
        %742 = vrot.lane.b32.xlu0 %v444, 4
        %v743 = vpop.permute.xlu0 %742
        %744 = vrot.lane.b32.xlu0 %v445, 4
        %v745 = vpop.permute.xlu0 %744
        %746 = vrot.lane.b32.xlu0 %v446, 4
        %v747 = vpop.permute.xlu0 %746
        %748 = vrot.lane.b32.xlu0 %v447, 4
        %v749 = vpop.permute.xlu0 %748
        %750 = vrot.lane.b32.xlu0 %v448, 4
        %v751 = vpop.permute.xlu0 %750
        %752 = vrot.lane.b32.xlu0 %v449, 4
        %v753 = vpop.permute.xlu0 %752
        %754 = vrot.lane.b32.xlu0 %v450, 4
        %v755 = vpop.permute.xlu0 %754
        %756 = vrot.lane.b32.xlu0 %v451, 4
        %v757 = vpop.permute.xlu0 %756
        %758 = vrot.lane.b32.xlu0 %v452, 4
        %v759 = vpop.permute.xlu0 %758
        %760 = vrot.lane.b32.xlu0 %v453, 4
        %v761 = vpop.permute.xlu0 %760
        %762 = vrot.lane.b32.xlu0 %v454, 4
        %v763 = vpop.permute.xlu0 %762
        %764 = vrot.lane.b32.xlu0 %v455, 4
        %v765 = vpop.permute.xlu0 %764
        %766 = vrot.lane.b32.xlu0 %v456, 4
        %v767 = vpop.permute.xlu0 %766
        %768 = vrot.lane.b32.xlu0 %v457, 4
        %v769 = vpop.permute.xlu0 %768
        %770 = vrot.lane.b32.xlu0 %v458, 4
        %v771 = vpop.permute.xlu0 %770
        %772 = vrot.lane.b32.xlu0 %v459, 4
        %v773 = vpop.permute.xlu0 %772
        %774 = vrot.lane.b32.xlu0 %v460, 4
        %v775 = vpop.permute.xlu0 %774
        %776 = vrot.lane.b32.xlu0 %v461, 4
        %v777 = vpop.permute.xlu0 %776
        %778 = vrot.lane.b32.xlu0 %v462, 4
        %v779 = vpop.permute.xlu0 %778
        %780 = vrot.lane.b32.xlu0 %v463, 4
        %v781 = vpop.permute.xlu0 %780
        %782 = vrot.lane.b32.xlu0 %v464, 4
        %v783 = vpop.permute.xlu0 %782
        %784 = vrot.lane.b32.xlu0 %v465, 4
        %v785 = vpop.permute.xlu0 %784
        %786 = vrot.lane.b32.xlu0 %v466, 4
        %v787 = vpop.permute.xlu0 %786
        %852 = vrot.lane.b32.xlu0 %v467, 8
        %v853 = vpop.permute.xlu0 %852
        %854 = vrot.lane.b32.xlu0 %v468, 8
        %v855 = vpop.permute.xlu0 %854
        %856 = vrot.lane.b32.xlu0 %v469, 8
        %v857 = vpop.permute.xlu0 %856
        %858 = vrot.lane.b32.xlu0 %v470, 8
        %v859 = vpop.permute.xlu0 %858
        %860 = vrot.lane.b32.xlu0 %v471, 8
        %v861 = vpop.permute.xlu0 %860
        %862 = vrot.lane.b32.xlu0 %v472, 8
        %v863 = vpop.permute.xlu0 %862
        %864 = vrot.lane.b32.xlu0 %v473, 8
        %v865 = vpop.permute.xlu0 %864
        %866 = vrot.lane.b32.xlu0 %v474, 8
        %v867 = vpop.permute.xlu0 %866
        %868 = vrot.lane.b32.xlu0 %v475, 8
        %v869 = vpop.permute.xlu0 %868
        %870 = vrot.lane.b32.xlu0 %v476, 8
        %v871 = vpop.permute.xlu0 %870
        %872 = vrot.lane.b32.xlu0 %v477, 8
        %v873 = vpop.permute.xlu0 %872
        %874 = vrot.lane.b32.xlu0 %v478, 8
        %v875 = vpop.permute.xlu0 %874
        %876 = vrot.lane.b32.xlu0 %v479, 8
        %v877 = vpop.permute.xlu0 %876
        %878 = vrot.lane.b32.xlu0 %v480, 8
        %v879 = vpop.permute.xlu0 %878
        %880 = vrot.lane.b32.xlu0 %v481, 8
        %v881 = vpop.permute.xlu0 %880
        %882 = vrot.lane.b32.xlu0 %v482, 8
        %v883 = vpop.permute.xlu0 %882
        %884 = vrot.lane.b32.xlu0 %v483, 8
        %v885 = vpop.permute.xlu0 %884
        %886 = vrot.lane.b32.xlu0 %v484, 8
        %v887 = vpop.permute.xlu0 %886
        %888 = vrot.lane.b32.xlu0 %v485, 8
        %v889 = vpop.permute.xlu0 %888
        %890 = vrot.lane.b32.xlu0 %v486, 8
        %v891 = vpop.permute.xlu0 %890
        %892 = vrot.lane.b32.xlu0 %v487, 8
        %v893 = vpop.permute.xlu0 %892
        %894 = vrot.lane.b32.xlu0 %v488, 8
        %v895 = vpop.permute.xlu0 %894
        %896 = vrot.lane.b32.xlu0 %v489, 8
        %v897 = vpop.permute.xlu0 %896
        %898 = vrot.lane.b32.xlu0 %v490, 8
        %v899 = vpop.permute.xlu0 %898
        %900 = vrot.lane.b32.xlu0 %v491, 8
        %v901 = vpop.permute.xlu0 %900
        %902 = vrot.lane.b32.xlu0 %v492, 8
        %v903 = vpop.permute.xlu0 %902
        %904 = vrot.lane.b32.xlu0 %v493, 8
        %v905 = vpop.permute.xlu0 %904
        %906 = vrot.lane.b32.xlu0 %v494, 8
        %v907 = vpop.permute.xlu0 %906
        %908 = vrot.lane.b32.xlu0 %v495, 8
        %v909 = vpop.permute.xlu0 %908
        %910 = vrot.lane.b32.xlu0 %v496, 8
        %v911 = vpop.permute.xlu0 %910
        %912 = vrot.lane.b32.xlu0 %v497, 8
        %v913 = vpop.permute.xlu0 %912
        %914 = vrot.lane.b32.xlu0 %v498, 8
        %v915 = vpop.permute.xlu0 %914
        %980 = vrot.lane.b32.xlu0 %v499, 12
        %v981 = vpop.permute.xlu0 %980
        %982 = vrot.lane.b32.xlu0 %v500, 12
        %v983 = vpop.permute.xlu0 %982
        %984 = vrot.lane.b32.xlu0 %v501, 12
        %v985 = vpop.permute.xlu0 %984
        %986 = vrot.lane.b32.xlu0 %v502, 12
        %v987 = vpop.permute.xlu0 %986
        %988 = vrot.lane.b32.xlu0 %v503, 12
        %v989 = vpop.permute.xlu0 %988
        %990 = vrot.lane.b32.xlu0 %v504, 12
        %v991 = vpop.permute.xlu0 %990
        %992 = vrot.lane.b32.xlu0 %v505, 12
        %v993 = vpop.permute.xlu0 %992
        %994 = vrot.lane.b32.xlu0 %v506, 12
        %v995 = vpop.permute.xlu0 %994
        %996 = vrot.lane.b32.xlu0 %v507, 12
        %v997 = vpop.permute.xlu0 %996
        %998 = vrot.lane.b32.xlu0 %v508, 12
        %v999 = vpop.permute.xlu0 %998
        %1000 = vrot.lane.b32.xlu0 %v509, 12
        %v1001 = vpop.permute.xlu0 %1000
        %1002 = vrot.lane.b32.xlu0 %v510, 12
        %v1003 = vpop.permute.xlu0 %1002
        %1004 = vrot.lane.b32.xlu0 %v511, 12
        %v1005 = vpop.permute.xlu0 %1004
        %1006 = vrot.lane.b32.xlu0 %v512, 12
        %v1007 = vpop.permute.xlu0 %1006
        %1008 = vrot.lane.b32.xlu0 %v513, 12
        %v1009 = vpop.permute.xlu0 %1008
        %1010 = vrot.lane.b32.xlu0 %v514, 12
        %v1011 = vpop.permute.xlu0 %1010
        %1012 = vrot.lane.b32.xlu0 %v515, 12
        %v1013 = vpop.permute.xlu0 %1012
        %1014 = vrot.lane.b32.xlu0 %v516, 12
        %v1015 = vpop.permute.xlu0 %1014
        %1016 = vrot.lane.b32.xlu0 %v517, 12
        %v1017 = vpop.permute.xlu0 %1016
        %1018 = vrot.lane.b32.xlu0 %v518, 12
        %v1019 = vpop.permute.xlu0 %1018
        %1020 = vrot.lane.b32.xlu0 %v519, 12
        %v1021 = vpop.permute.xlu0 %1020
        %1022 = vrot.lane.b32.xlu0 %v520, 12
        %v1023 = vpop.permute.xlu0 %1022
        %1024 = vrot.lane.b32.xlu0 %v521, 12
        %v1025 = vpop.permute.xlu0 %1024
        %1026 = vrot.lane.b32.xlu0 %v522, 12
        %v1027 = vpop.permute.xlu0 %1026
        %1028 = vrot.lane.b32.xlu0 %v523, 12
        %v1029 = vpop.permute.xlu0 %1028
        %1030 = vrot.lane.b32.xlu0 %v524, 12
        %v1031 = vpop.permute.xlu0 %1030
        %1032 = vrot.lane.b32.xlu0 %v525, 12
        %v1033 = vpop.permute.xlu0 %1032
        %1034 = vrot.lane.b32.xlu0 %v526, 12
        %v1035 = vpop.permute.xlu0 %1034
        %1036 = vrot.lane.b32.xlu0 %v527, 12
        %v1037 = vpop.permute.xlu0 %1036
        %1038 = vrot.lane.b32.xlu0 %v528, 12
        %v1039 = vpop.permute.xlu0 %1038
        %1040 = vrot.lane.b32.xlu0 %v529, 12
        %v1041 = vpop.permute.xlu0 %1040
        %1042 = vrot.lane.b32.xlu0 %v530, 12
        %v1043 = vpop.permute.xlu0 %1042
        %1108 = vrot.lane.b32.xlu0 %v531, 16
        %v1109 = vpop.permute.xlu0 %1108
        %1110 = vrot.lane.b32.xlu0 %v532, 16
        %v1111 = vpop.permute.xlu0 %1110
        %1112 = vrot.lane.b32.xlu0 %v533, 16
        %v1113 = vpop.permute.xlu0 %1112
        %1114 = vrot.lane.b32.xlu0 %v534, 16
        %v1115 = vpop.permute.xlu0 %1114
        %1116 = vrot.lane.b32.xlu0 %v535, 16
        %v1117 = vpop.permute.xlu0 %1116
        %1118 = vrot.lane.b32.xlu0 %v536, 16
        %v1119 = vpop.permute.xlu0 %1118
        %1120 = vrot.lane.b32.xlu0 %v537, 16
        %v1121 = vpop.permute.xlu0 %1120
        %1122 = vrot.lane.b32.xlu0 %v538, 16
        %v1123 = vpop.permute.xlu0 %1122
        %1124 = vrot.lane.b32.xlu0 %v539, 16
        %v1125 = vpop.permute.xlu0 %1124
        %1126 = vrot.lane.b32.xlu0 %v540, 16
        %v1127 = vpop.permute.xlu0 %1126
        %1128 = vrot.lane.b32.xlu0 %v541, 16
        %v1129 = vpop.permute.xlu0 %1128
        %1130 = vrot.lane.b32.xlu0 %v542, 16
        %v1131 = vpop.permute.xlu0 %1130
        %1132 = vrot.lane.b32.xlu0 %v543, 16
        %v1133 = vpop.permute.xlu0 %1132
        %1134 = vrot.lane.b32.xlu0 %v544, 16
        %v1135 = vpop.permute.xlu0 %1134
        %1136 = vrot.lane.b32.xlu0 %v545, 16
        %v1137 = vpop.permute.xlu0 %1136
        %1138 = vrot.lane.b32.xlu0 %v546, 16
        %v1139 = vpop.permute.xlu0 %1138
        %1140 = vrot.lane.b32.xlu0 %v547, 16
        %v1141 = vpop.permute.xlu0 %1140
        %1142 = vrot.lane.b32.xlu0 %v548, 16
        %v1143 = vpop.permute.xlu0 %1142
        %1144 = vrot.lane.b32.xlu0 %v549, 16
        %v1145 = vpop.permute.xlu0 %1144
        %1146 = vrot.lane.b32.xlu0 %v550, 16
        %v1147 = vpop.permute.xlu0 %1146
        %1148 = vrot.lane.b32.xlu0 %v551, 16
        %v1149 = vpop.permute.xlu0 %1148
        %1150 = vrot.lane.b32.xlu0 %v552, 16
        %v1151 = vpop.permute.xlu0 %1150
        %1152 = vrot.lane.b32.xlu0 %v553, 16
        %v1153 = vpop.permute.xlu0 %1152
        %1154 = vrot.lane.b32.xlu0 %v554, 16
        %v1155 = vpop.permute.xlu0 %1154
        %1156 = vrot.lane.b32.xlu0 %v555, 16
        %v1157 = vpop.permute.xlu0 %1156
        %1158 = vrot.lane.b32.xlu0 %v556, 16
        %v1159 = vpop.permute.xlu0 %1158
        %1160 = vrot.lane.b32.xlu0 %v557, 16
        %v1161 = vpop.permute.xlu0 %1160
        %1162 = vrot.lane.b32.xlu0 %v558, 16
        %v1163 = vpop.permute.xlu0 %1162
        %1164 = vrot.lane.b32.xlu0 %v559, 16
        %v1165 = vpop.permute.xlu0 %1164
        %1166 = vrot.lane.b32.xlu0 %v560, 16
        %v1167 = vpop.permute.xlu0 %1166
        %1168 = vrot.lane.b32.xlu0 %v561, 16
        %v1169 = vpop.permute.xlu0 %1168
        %1170 = vrot.lane.b32.xlu0 %v562, 16
        %v1171 = vpop.permute.xlu0 %1170
        %1236 = vrot.lane.b32.xlu0 %v563, 20
        %v1237 = vpop.permute.xlu0 %1236
        %1238 = vrot.lane.b32.xlu0 %v564, 20
        %v1239 = vpop.permute.xlu0 %1238
        %1240 = vrot.lane.b32.xlu0 %v565, 20
        %v1241 = vpop.permute.xlu0 %1240
        %1242 = vrot.lane.b32.xlu0 %v566, 20
        %v1243 = vpop.permute.xlu0 %1242
        %1244 = vrot.lane.b32.xlu0 %v567, 20
        %v1245 = vpop.permute.xlu0 %1244
        %1246 = vrot.lane.b32.xlu0 %v568, 20
        %v1247 = vpop.permute.xlu0 %1246
        %1248 = vrot.lane.b32.xlu0 %v569, 20
        %v1249 = vpop.permute.xlu0 %1248
        %1250 = vrot.lane.b32.xlu0 %v570, 20
        %v1251 = vpop.permute.xlu0 %1250
        %1252 = vrot.lane.b32.xlu0 %v571, 20
        %v1253 = vpop.permute.xlu0 %1252
        %1254 = vrot.lane.b32.xlu0 %v572, 20
        %v1255 = vpop.permute.xlu0 %1254
        %1256 = vrot.lane.b32.xlu0 %v573, 20
        %v1257 = vpop.permute.xlu0 %1256
        %1258 = vrot.lane.b32.xlu0 %v574, 20
        %v1259 = vpop.permute.xlu0 %1258
        %1260 = vrot.lane.b32.xlu0 %v575, 20
        %v1261 = vpop.permute.xlu0 %1260
        %1262 = vrot.lane.b32.xlu0 %v576, 20
        %v1263 = vpop.permute.xlu0 %1262
        %1264 = vrot.lane.b32.xlu0 %v577, 20
        %v1265 = vpop.permute.xlu0 %1264
        %1266 = vrot.lane.b32.xlu0 %v578, 20
        %v1267 = vpop.permute.xlu0 %1266
        %1268 = vrot.lane.b32.xlu0 %v579, 20
        %v1269 = vpop.permute.xlu0 %1268
        %1270 = vrot.lane.b32.xlu0 %v580, 20
        %v1271 = vpop.permute.xlu0 %1270
        %1272 = vrot.lane.b32.xlu0 %v581, 20
        %v1273 = vpop.permute.xlu0 %1272
        %1274 = vrot.lane.b32.xlu0 %v582, 20
        %v1275 = vpop.permute.xlu0 %1274
        %1276 = vrot.lane.b32.xlu0 %v583, 20
        %v1277 = vpop.permute.xlu0 %1276
        %1278 = vrot.lane.b32.xlu0 %v584, 20
        %v1279 = vpop.permute.xlu0 %1278
        %1280 = vrot.lane.b32.xlu0 %v585, 20
        %v1281 = vpop.permute.xlu0 %1280
        %1282 = vrot.lane.b32.xlu0 %v586, 20
        %v1283 = vpop.permute.xlu0 %1282
        %1284 = vrot.lane.b32.xlu0 %v587, 20
        %v1285 = vpop.permute.xlu0 %1284
        %1286 = vrot.lane.b32.xlu0 %v588, 20
        %v1287 = vpop.permute.xlu0 %1286
        %1288 = vrot.lane.b32.xlu0 %v589, 20
        %v1289 = vpop.permute.xlu0 %1288
        %1290 = vrot.lane.b32.xlu0 %v590, 20
        %v1291 = vpop.permute.xlu0 %1290
        %1292 = vrot.lane.b32.xlu0 %v591, 20
        %v1293 = vpop.permute.xlu0 %1292
        %1294 = vrot.lane.b32.xlu0 %v592, 20
        %v1295 = vpop.permute.xlu0 %1294
        %1296 = vrot.lane.b32.xlu0 %v593, 20
        %v1297 = vpop.permute.xlu0 %1296
        %1298 = vrot.lane.b32.xlu0 %v594, 20
        %v1299 = vpop.permute.xlu0 %1298
        %1364 = vrot.lane.b32.xlu0 %v596, 24
        %v1365 = vpop.permute.xlu0 %1364
        %1366 = vrot.lane.b32.xlu0 %v597, 24
        %v1367 = vpop.permute.xlu0 %1366
        %1368 = vrot.lane.b32.xlu0 %v598, 24
        %v1369 = vpop.permute.xlu0 %1368
        %1370 = vrot.lane.b32.xlu0 %v599, 24
        %v1371 = vpop.permute.xlu0 %1370
        %1372 = vrot.lane.b32.xlu0 %v600, 24
        %v1373 = vpop.permute.xlu0 %1372
        %1374 = vrot.lane.b32.xlu0 %v601, 24
        %v1375 = vpop.permute.xlu0 %1374
        %1376 = vrot.lane.b32.xlu0 %v602, 24
        %v1377 = vpop.permute.xlu0 %1376
        %1378 = vrot.lane.b32.xlu0 %v603, 24
        %v1379 = vpop.permute.xlu0 %1378
        %1380 = vrot.lane.b32.xlu0 %v604, 24
        %v1381 = vpop.permute.xlu0 %1380
        %1382 = vrot.lane.b32.xlu0 %v605, 24
        %v1383 = vpop.permute.xlu0 %1382
        %1384 = vrot.lane.b32.xlu0 %v606, 24
        %v1385 = vpop.permute.xlu0 %1384
        %1386 = vrot.lane.b32.xlu0 %v607, 24
        %v1387 = vpop.permute.xlu0 %1386
        %1388 = vrot.lane.b32.xlu0 %v608, 24
        %v1389 = vpop.permute.xlu0 %1388
        %1390 = vrot.lane.b32.xlu0 %v609, 24
        %v1391 = vpop.permute.xlu0 %1390
        %1392 = vrot.lane.b32.xlu0 %v610, 24
        %v1393 = vpop.permute.xlu0 %1392
        %1394 = vrot.lane.b32.xlu0 %v611, 24
        %v1395 = vpop.permute.xlu0 %1394
        %1396 = vrot.lane.b32.xlu0 %v612, 24
        %v1397 = vpop.permute.xlu0 %1396
        %1398 = vrot.lane.b32.xlu0 %v613, 24
        %v1399 = vpop.permute.xlu0 %1398
        %1400 = vrot.lane.b32.xlu0 %v614, 24
        %v1401 = vpop.permute.xlu0 %1400
        %1402 = vrot.lane.b32.xlu0 %v615, 24
        %v1403 = vpop.permute.xlu0 %1402
        %1404 = vrot.lane.b32.xlu0 %v616, 24
        %v1405 = vpop.permute.xlu0 %1404
        %1406 = vrot.lane.b32.xlu0 %v617, 24
        %v1407 = vpop.permute.xlu0 %1406
        %1408 = vrot.lane.b32.xlu0 %v618, 24
        %v1409 = vpop.permute.xlu0 %1408
        %1410 = vrot.lane.b32.xlu0 %v619, 24
        %v1411 = vpop.permute.xlu0 %1410
        %1412 = vrot.lane.b32.xlu0 %v620, 24
        %v1413 = vpop.permute.xlu0 %1412
        %1414 = vrot.lane.b32.xlu0 %v621, 24
        %v1415 = vpop.permute.xlu0 %1414
        %1416 = vrot.lane.b32.xlu0 %v622, 24
        %v1417 = vpop.permute.xlu0 %1416
        %1418 = vrot.lane.b32.xlu0 %v623, 24
        %v1419 = vpop.permute.xlu0 %1418
        %1420 = vrot.lane.b32.xlu0 %v624, 24
        %v1421 = vpop.permute.xlu0 %1420
        %1422 = vrot.lane.b32.xlu0 %v625, 24
        %v1423 = vpop.permute.xlu0 %1422
        %1424 = vrot.lane.b32.xlu0 %v626, 24
        %v1425 = vpop.permute.xlu0 %1424
        %1426 = vrot.lane.b32.xlu0 %v627, 24
        %v1427 = vpop.permute.xlu0 %1426
        %1492 = vrot.lane.b32.xlu0 %v628, 28
        %v1493 = vpop.permute.xlu0 %1492
        %1494 = vrot.lane.b32.xlu0 %v629, 28
        %v1495 = vpop.permute.xlu0 %1494
        %1496 = vrot.lane.b32.xlu0 %v630, 28
        %v1497 = vpop.permute.xlu0 %1496
        %1498 = vrot.lane.b32.xlu0 %v631, 28
        %v1499 = vpop.permute.xlu0 %1498
        %1500 = vrot.lane.b32.xlu0 %v632, 28
        %v1501 = vpop.permute.xlu0 %1500
        %1502 = vrot.lane.b32.xlu0 %v633, 28
        %v1503 = vpop.permute.xlu0 %1502
        %1504 = vrot.lane.b32.xlu0 %v634, 28
        %v1505 = vpop.permute.xlu0 %1504
        %1506 = vrot.lane.b32.xlu0 %v635, 28
        %v1507 = vpop.permute.xlu0 %1506
        %1508 = vrot.lane.b32.xlu0 %v636, 28
        %v1509 = vpop.permute.xlu0 %1508
        %1510 = vrot.lane.b32.xlu0 %v637, 28
        %v1511 = vpop.permute.xlu0 %1510
        %1512 = vrot.lane.b32.xlu0 %v638, 28
        %v1513 = vpop.permute.xlu0 %1512
        %1514 = vrot.lane.b32.xlu0 %v639, 28
        %v1515 = vpop.permute.xlu0 %1514
        %1516 = vrot.lane.b32.xlu0 %v640, 28
        %v1517 = vpop.permute.xlu0 %1516
        %1518 = vrot.lane.b32.xlu0 %v641, 28
        %v1519 = vpop.permute.xlu0 %1518
        %1520 = vrot.lane.b32.xlu0 %v642, 28
        %v1521 = vpop.permute.xlu0 %1520
        %1522 = vrot.lane.b32.xlu0 %v643, 28
        %v1523 = vpop.permute.xlu0 %1522
        %1524 = vrot.lane.b32.xlu0 %v644, 28
        %v1525 = vpop.permute.xlu0 %1524
        %1526 = vrot.lane.b32.xlu0 %v645, 28
        %v1527 = vpop.permute.xlu0 %1526
        %1528 = vrot.lane.b32.xlu0 %v646, 28
        %v1529 = vpop.permute.xlu0 %1528
        %1530 = vrot.lane.b32.xlu0 %v647, 28
        %v1531 = vpop.permute.xlu0 %1530
        %1532 = vrot.lane.b32.xlu0 %v648, 28
        %v1533 = vpop.permute.xlu0 %1532
        %1534 = vrot.lane.b32.xlu0 %v649, 28
        %v1535 = vpop.permute.xlu0 %1534
        %1536 = vrot.lane.b32.xlu0 %v650, 28
        %v1537 = vpop.permute.xlu0 %1536
        %1538 = vrot.lane.b32.xlu0 %v651, 28
        %v1539 = vpop.permute.xlu0 %1538
        %1540 = vrot.lane.b32.xlu0 %v652, 28
        %v1541 = vpop.permute.xlu0 %1540
        %1542 = vrot.lane.b32.xlu0 %v653, 28
        %v1543 = vpop.permute.xlu0 %1542
        %1544 = vrot.lane.b32.xlu0 %v654, 28
        %v1545 = vpop.permute.xlu0 %1544
        %1546 = vrot.lane.b32.xlu0 %v655, 28
        %v1547 = vpop.permute.xlu0 %1546
        %1548 = vrot.lane.b32.xlu0 %v656, 28
        %v1549 = vpop.permute.xlu0 %1548
        %1550 = vrot.lane.b32.xlu0 %v657, 28
        %v1551 = vpop.permute.xlu0 %1550
        %1552 = vrot.lane.b32.xlu0 %v658, 28
        %v1553 = vpop.permute.xlu0 %1552
        %1554 = vrot.lane.b32.xlu0 %v659, 28
        %v1555 = vpop.permute.xlu0 %1554
        %1620 = vrot.lane.b32.xlu0 %v660, 32
        %v1621 = vpop.permute.xlu0 %1620
        %1622 = vrot.lane.b32.xlu0 %v661, 32
        %v1623 = vpop.permute.xlu0 %1622
        %1624 = vrot.lane.b32.xlu0 %v662, 32
        %v1625 = vpop.permute.xlu0 %1624
        %1626 = vrot.lane.b32.xlu0 %v663, 32
        %v1627 = vpop.permute.xlu0 %1626
        %1628 = vrot.lane.b32.xlu0 %v664, 32
        %v1629 = vpop.permute.xlu0 %1628
        %1630 = vrot.lane.b32.xlu0 %v665, 32
        %v1631 = vpop.permute.xlu0 %1630
        %1632 = vrot.lane.b32.xlu0 %v666, 32
        %v1633 = vpop.permute.xlu0 %1632
        %1634 = vrot.lane.b32.xlu0 %v667, 32
        %v1635 = vpop.permute.xlu0 %1634
        %1636 = vrot.lane.b32.xlu0 %v668, 32
        %v1637 = vpop.permute.xlu0 %1636
        %1638 = vrot.lane.b32.xlu0 %v669, 32
        %v1639 = vpop.permute.xlu0 %1638
        %1640 = vrot.lane.b32.xlu0 %v670, 32
        %v1641 = vpop.permute.xlu0 %1640
        %1642 = vrot.lane.b32.xlu0 %v671, 32
        %v1643 = vpop.permute.xlu0 %1642
        %1644 = vrot.lane.b32.xlu0 %v672, 32
        %v1645 = vpop.permute.xlu0 %1644
        %1646 = vrot.lane.b32.xlu0 %v673, 32
        %v1647 = vpop.permute.xlu0 %1646
        %1648 = vrot.lane.b32.xlu0 %v674, 32
        %v1649 = vpop.permute.xlu0 %1648
        %1650 = vrot.lane.b32.xlu0 %v675, 32
        %v1651 = vpop.permute.xlu0 %1650
        %1652 = vrot.lane.b32.xlu0 %v676, 32
        %v1653 = vpop.permute.xlu0 %1652
        %1654 = vrot.lane.b32.xlu0 %v677, 32
        %v1655 = vpop.permute.xlu0 %1654
        %1656 = vrot.lane.b32.xlu0 %v678, 32
        %v1657 = vpop.permute.xlu0 %1656
        %1658 = vrot.lane.b32.xlu0 %v679, 32
        %v1659 = vpop.permute.xlu0 %1658
        %1660 = vrot.lane.b32.xlu0 %v680, 32
        %v1661 = vpop.permute.xlu0 %1660
        %1662 = vrot.lane.b32.xlu0 %v681, 32
        %v1663 = vpop.permute.xlu0 %1662
        %1664 = vrot.lane.b32.xlu0 %v682, 32
        %v1665 = vpop.permute.xlu0 %1664
        %1666 = vrot.lane.b32.xlu0 %v683, 32
        %v1667 = vpop.permute.xlu0 %1666
        %1668 = vrot.lane.b32.xlu0 %v684, 32
        %v1669 = vpop.permute.xlu0 %1668
        %1670 = vrot.lane.b32.xlu0 %v685, 32
        %v1671 = vpop.permute.xlu0 %1670
        %1672 = vrot.lane.b32.xlu0 %v686, 32
        %v1673 = vpop.permute.xlu0 %1672
        %1674 = vrot.lane.b32.xlu0 %v687, 32
        %v1675 = vpop.permute.xlu0 %1674
        %1676 = vrot.lane.b32.xlu0 %v688, 32
        %v1677 = vpop.permute.xlu0 %1676
        %1678 = vrot.lane.b32.xlu0 %v689, 32
        %v1679 = vpop.permute.xlu0 %1678
        %1680 = vrot.lane.b32.xlu0 %v690, 32
        %v1681 = vpop.permute.xlu0 %1680
        %1682 = vrot.lane.b32.xlu0 %v691, 32
        %v1683 = vpop.permute.xlu0 %1682
        %v1716 = vsel %vm292, %v403, %v725
        %v1717 = vsel %vm292, %v404, %v727
        %v1718 = vsel %vm292, %v405, %v729
        %v1719 = vsel %vm292, %v406, %v731
        %v1720 = vsel %vm292, %v407, %v733
        %v1721 = vsel %vm292, %v408, %v735
        %v1722 = vsel %vm292, %v409, %v737
        %v1723 = vsel %vm292, %v410, %v739
        %v1724 = vsel %vm292, %v411, %v741
        %v1725 = vsel %vm292, %v412, %v743
        %v1726 = vsel %vm292, %v413, %v745
        %v1727 = vsel %vm292, %v414, %v747
        %v1728 = vsel %vm292, %v415, %v749
        %v1729 = vsel %vm292, %v416, %v751
        %v1730 = vsel %vm292, %v417, %v753
        %v1731 = vsel %vm292, %v418, %v755
        %v1732 = vsel %vm292, %v419, %v757
        %v1733 = vsel %vm292, %v420, %v759
        %v1734 = vsel %vm292, %v421, %v761
        %v1735 = vsel %vm292, %v422, %v763
        %v1736 = vsel %vm292, %v423, %v765
        %v1737 = vsel %vm292, %v424, %v767
        %v1738 = vsel %vm292, %v425, %v769
        %v1739 = vsel %vm292, %v426, %v771
        %v1740 = vsel %vm292, %v427, %v773
        %v1741 = vsel %vm292, %v428, %v775
        %v1742 = vsel %vm292, %v429, %v777
        %v1743 = vsel %vm292, %v430, %v779
        %v1744 = vsel %vm292, %v431, %v781
        %v1745 = vsel %vm292, %v432, %v783
        %v1746 = vsel %vm292, %v433, %v785
        %v1747 = vsel %vm292, %v434, %v787
        %vm1748 = vcmask 64512
        %v1749 = vsel %vm1748, %v1716, %v853
        %v1750 = vsel %vm1748, %v1717, %v855
        %v1751 = vsel %vm1748, %v1718, %v857
        %v1752 = vsel %vm1748, %v1719, %v859
        %v1753 = vsel %vm1748, %v1720, %v861
        %v1754 = vsel %vm1748, %v1721, %v863
        %v1755 = vsel %vm1748, %v1722, %v865
        %v1756 = vsel %vm1748, %v1723, %v867
        %v1757 = vsel %vm1748, %v1724, %v869
        %v1758 = vsel %vm1748, %v1725, %v871
        %v1759 = vsel %vm1748, %v1726, %v873
        %v1760 = vsel %vm1748, %v1727, %v875
        %v1761 = vsel %vm1748, %v1728, %v877
        %v1762 = vsel %vm1748, %v1729, %v879
        %v1763 = vsel %vm1748, %v1730, %v881
        %v1764 = vsel %vm1748, %v1731, %v883
        %v1765 = vsel %vm1748, %v1732, %v885
        %v1766 = vsel %vm1748, %v1733, %v887
        %v1767 = vsel %vm1748, %v1734, %v889
        %v1768 = vsel %vm1748, %v1735, %v891
        %v1769 = vsel %vm1748, %v1736, %v893
        %v1770 = vsel %vm1748, %v1737, %v895
        %v1771 = vsel %vm1748, %v1738, %v897
        %v1772 = vsel %vm1748, %v1739, %v899
        %v1773 = vsel %vm1748, %v1740, %v901
        %v1774 = vsel %vm1748, %v1741, %v903
        %v1775 = vsel %vm1748, %v1742, %v905
        %v1776 = vsel %vm1748, %v1743, %v907
        %v1777 = vsel %vm1748, %v1744, %v909
        %v1778 = vsel %vm1748, %v1745, %v911
        %v1779 = vsel %vm1748, %v1746, %v913
        %v1780 = vsel %vm1748, %v1747, %v915
        %vm1781 = vcmask 97280
        %v1782 = vsel %vm1781, %v1749, %v981
        %v1783 = vsel %vm1781, %v1750, %v983
        %v1784 = vsel %vm1781, %v1751, %v985
        %v1785 = vsel %vm1781, %v1752, %v987
        %v1786 = vsel %vm1781, %v1753, %v989
        %v1787 = vsel %vm1781, %v1754, %v991
        %v1788 = vsel %vm1781, %v1755, %v993
        %v1789 = vsel %vm1781, %v1756, %v995
        %v1790 = vsel %vm1781, %v1757, %v997
        %v1791 = vsel %vm1781, %v1758, %v999
        %v1792 = vsel %vm1781, %v1759, %v1001
        %v1793 = vsel %vm1781, %v1760, %v1003
        %v1794 = vsel %vm1781, %v1761, %v1005
        %v1795 = vsel %vm1781, %v1762, %v1007
        %v1796 = vsel %vm1781, %v1763, %v1009
        %v1797 = vsel %vm1781, %v1764, %v1011
        %v1798 = vsel %vm1781, %v1765, %v1013
        %v1799 = vsel %vm1781, %v1766, %v1015
        %v1800 = vsel %vm1781, %v1767, %v1017
        %v1801 = vsel %vm1781, %v1768, %v1019
        %v1802 = vsel %vm1781, %v1769, %v1021
        %v1803 = vsel %vm1781, %v1770, %v1023
        %v1804 = vsel %vm1781, %v1771, %v1025
        %v1805 = vsel %vm1781, %v1772, %v1027
        %v1806 = vsel %vm1781, %v1773, %v1029
        %v1807 = vsel %vm1781, %v1774, %v1031
        %v1808 = vsel %vm1781, %v1775, %v1033
        %v1809 = vsel %vm1781, %v1776, %v1035
        %v1810 = vsel %vm1781, %v1777, %v1037
        %v1811 = vsel %vm1781, %v1778, %v1039
        %v1812 = vsel %vm1781, %v1779, %v1041
        %v1813 = vsel %vm1781, %v1780, %v1043
        %vm1814 = vcmask 130048
        %v1815 = vsel %vm1814, %v1782, %v1109
        %v1816 = vsel %vm1814, %v1783, %v1111
        %v1817 = vsel %vm1814, %v1784, %v1113
        %v1818 = vsel %vm1814, %v1785, %v1115
        %v1819 = vsel %vm1814, %v1786, %v1117
        %v1820 = vsel %vm1814, %v1787, %v1119
        %v1821 = vsel %vm1814, %v1788, %v1121
        %v1822 = vsel %vm1814, %v1789, %v1123
        %v1823 = vsel %vm1814, %v1790, %v1125
        %v1824 = vsel %vm1814, %v1791, %v1127
        %v1825 = vsel %vm1814, %v1792, %v1129
        %v1826 = vsel %vm1814, %v1793, %v1131
        %v1827 = vsel %vm1814, %v1794, %v1133
        %v1828 = vsel %vm1814, %v1795, %v1135
        %v1829 = vsel %vm1814, %v1796, %v1137
        %v1830 = vsel %vm1814, %v1797, %v1139
        %v1831 = vsel %vm1814, %v1798, %v1141
        %v1832 = vsel %vm1814, %v1799, %v1143
        %v1833 = vsel %vm1814, %v1800, %v1145
        %v1834 = vsel %vm1814, %v1801, %v1147
        %v1835 = vsel %vm1814, %v1802, %v1149
        %v1836 = vsel %vm1814, %v1803, %v1151
        %v1837 = vsel %vm1814, %v1804, %v1153
        %v1838 = vsel %vm1814, %v1805, %v1155
        %v1839 = vsel %vm1814, %v1806, %v1157
        %v1840 = vsel %vm1814, %v1807, %v1159
        %v1841 = vsel %vm1814, %v1808, %v1161
        %v1842 = vsel %vm1814, %v1809, %v1163
        %v1843 = vsel %vm1814, %v1810, %v1165
        %v1844 = vsel %vm1814, %v1811, %v1167
        %v1845 = vsel %vm1814, %v1812, %v1169
        %v1846 = vsel %vm1814, %v1813, %v1171
        %vm1847 = vcmask 162816
        %v1848 = vsel %vm1847, %v1815, %v1237
        %v1849 = vsel %vm1847, %v1816, %v1239
        %v1850 = vsel %vm1847, %v1817, %v1241
        %v1851 = vsel %vm1847, %v1818, %v1243
        %v1852 = vsel %vm1847, %v1819, %v1245
        %v1853 = vsel %vm1847, %v1820, %v1247
        %v1854 = vsel %vm1847, %v1821, %v1249
        %v1855 = vsel %vm1847, %v1822, %v1251
        %v1856 = vsel %vm1847, %v1823, %v1253
        %v1857 = vsel %vm1847, %v1824, %v1255
        %v1858 = vsel %vm1847, %v1825, %v1257
        %v1859 = vsel %vm1847, %v1826, %v1259
        %v1860 = vsel %vm1847, %v1827, %v1261
        %v1861 = vsel %vm1847, %v1828, %v1263
        %v1862 = vsel %vm1847, %v1829, %v1265
        %v1863 = vsel %vm1847, %v1830, %v1267
        %v1864 = vsel %vm1847, %v1831, %v1269
        %v1865 = vsel %vm1847, %v1832, %v1271
        %v1866 = vsel %vm1847, %v1833, %v1273
        %v1867 = vsel %vm1847, %v1834, %v1275
        %v1868 = vsel %vm1847, %v1835, %v1277
        %v1869 = vsel %vm1847, %v1836, %v1279
        %v1870 = vsel %vm1847, %v1837, %v1281
        %v1871 = vsel %vm1847, %v1838, %v1283
        %v1872 = vsel %vm1847, %v1839, %v1285
        %v1873 = vsel %vm1847, %v1840, %v1287
        %v1874 = vsel %vm1847, %v1841, %v1289
        %v1875 = vsel %vm1847, %v1842, %v1291
        %v1876 = vsel %vm1847, %v1843, %v1293
        %v1877 = vsel %vm1847, %v1844, %v1295
        %v1878 = vsel %vm1847, %v1845, %v1297
        %v1879 = vsel %vm1847, %v1846, %v1299
        %vm1880 = vcmask 195584
        %v1881 = vsel %vm1880, %v1848, %v1365
        %v1882 = vsel %vm1880, %v1849, %v1367
        %v1883 = vsel %vm1880, %v1850, %v1369
        %v1884 = vsel %vm1880, %v1851, %v1371
        %v1885 = vsel %vm1880, %v1852, %v1373
        %v1886 = vsel %vm1880, %v1853, %v1375
        %v1887 = vsel %vm1880, %v1854, %v1377
        %v1888 = vsel %vm1880, %v1855, %v1379
        %v1889 = vsel %vm1880, %v1856, %v1381
        %v1890 = vsel %vm1880, %v1857, %v1383
        %v1891 = vsel %vm1880, %v1858, %v1385
        %v1892 = vsel %vm1880, %v1859, %v1387
        %v1893 = vsel %vm1880, %v1860, %v1389
        %v1894 = vsel %vm1880, %v1861, %v1391
        %v1895 = vsel %vm1880, %v1862, %v1393
        %v1896 = vsel %vm1880, %v1863, %v1395
        %v1897 = vsel %vm1880, %v1864, %v1397
        %v1898 = vsel %vm1880, %v1865, %v1399
        %v1899 = vsel %vm1880, %v1866, %v1401
        %v1900 = vsel %vm1880, %v1867, %v1403
        %v1901 = vsel %vm1880, %v1868, %v1405
        %v1902 = vsel %vm1880, %v1869, %v1407
        %v1903 = vsel %vm1880, %v1870, %v1409
        %v1904 = vsel %vm1880, %v1871, %v1411
        %v1905 = vsel %vm1880, %v1872, %v1413
        %v1906 = vsel %vm1880, %v1873, %v1415
        %v1907 = vsel %vm1880, %v1874, %v1417
        %v1908 = vsel %vm1880, %v1875, %v1419
        %v1909 = vsel %vm1880, %v1876, %v1421
        %v1910 = vsel %vm1880, %v1877, %v1423
        %v1911 = vsel %vm1880, %v1878, %v1425
        %v1912 = vsel %vm1880, %v1879, %v1427
        %vm1913 = vcmask 228352
        %v1914 = vsel %vm1913, %v1881, %v1493
        %v1915 = vsel %vm1913, %v1882, %v1495
        %v1916 = vsel %vm1913, %v1883, %v1497
        %v1917 = vsel %vm1913, %v1884, %v1499
        %v1918 = vsel %vm1913, %v1885, %v1501
        %v1919 = vsel %vm1913, %v1886, %v1503
        %v1920 = vsel %vm1913, %v1887, %v1505
        %v1921 = vsel %vm1913, %v1888, %v1507
        %v1922 = vsel %vm1913, %v1889, %v1509
        %v1923 = vsel %vm1913, %v1890, %v1511
        %v1924 = vsel %vm1913, %v1891, %v1513
        %v1925 = vsel %vm1913, %v1892, %v1515
        %v1926 = vsel %vm1913, %v1893, %v1517
        %v1927 = vsel %vm1913, %v1894, %v1519
        %v1928 = vsel %vm1913, %v1895, %v1521
        %v1929 = vsel %vm1913, %v1896, %v1523
        %v1930 = vsel %vm1913, %v1897, %v1525
        %v1931 = vsel %vm1913, %v1898, %v1527
        %v1932 = vsel %vm1913, %v1899, %v1529
        %v1933 = vsel %vm1913, %v1900, %v1531
        %v1934 = vsel %vm1913, %v1901, %v1533
        %v1935 = vsel %vm1913, %v1902, %v1535
        %v1936 = vsel %vm1913, %v1903, %v1537
        %v1937 = vsel %vm1913, %v1904, %v1539
        %v1938 = vsel %vm1913, %v1905, %v1541
        %v1939 = vsel %vm1913, %v1906, %v1543
        %v1940 = vsel %vm1913, %v1907, %v1545
        %v1941 = vsel %vm1913, %v1908, %v1547
        %v1942 = vsel %vm1913, %v1909, %v1549
        %v1943 = vsel %vm1913, %v1910, %v1551
        %v1944 = vsel %vm1913, %v1911, %v1553
        %v1945 = vsel %vm1913, %v1912, %v1555
        %vm1946 = vcmask 261120
        %v1947 = vsel %vm1946, %v1914, %v1621
        %v1948 = vsel %vm1946, %v1915, %v1623
        %v1949 = vsel %vm1946, %v1916, %v1625
        %v1950 = vsel %vm1946, %v1917, %v1627
        %v1951 = vsel %vm1946, %v1918, %v1629
        %v1952 = vsel %vm1946, %v1919, %v1631
        %v1953 = vsel %vm1946, %v1920, %v1633
        %v1954 = vsel %vm1946, %v1921, %v1635
        %v1955 = vsel %vm1946, %v1922, %v1637
        %v1956 = vsel %vm1946, %v1923, %v1639
        %v1957 = vsel %vm1946, %v1924, %v1641
        %v1958 = vsel %vm1946, %v1925, %v1643
        %v1959 = vsel %vm1946, %v1926, %v1645
        %v1960 = vsel %vm1946, %v1927, %v1647
        %v1961 = vsel %vm1946, %v1928, %v1649
        %v1962 = vsel %vm1946, %v1929, %v1651
        %v1963 = vsel %vm1946, %v1930, %v1653
        %v1964 = vsel %vm1946, %v1931, %v1655
        %v1965 = vsel %vm1946, %v1932, %v1657
        %v1966 = vsel %vm1946, %v1933, %v1659
        %v1967 = vsel %vm1946, %v1934, %v1661
        %v1968 = vsel %vm1946, %v1935, %v1663
        %v1969 = vsel %vm1946, %v1936, %v1665
        %v1970 = vsel %vm1946, %v1937, %v1667
        %v1971 = vsel %vm1946, %v1938, %v1669
        %v1972 = vsel %vm1946, %v1939, %v1671
        %v1973 = vsel %vm1946, %v1940, %v1673
        %v1974 = vsel %vm1946, %v1941, %v1675
        %v1975 = vsel %vm1946, %v1942, %v1677
        %v1976 = vsel %vm1946, %v1943, %v1679
        %v1977 = vsel %vm1946, %v1944, %v1681
        %v1978 = vsel %vm1946, %v1945, %v1683
        %v1979 = vld [vmem:[%s1] sm:$0xff]
        %v1980 = vld [vmem:[%s1 + $0x8] sm:$0xff]
        %v1981 = vld [vmem:[%s1 + $0x10] sm:$0xff]
        %v1982 = vld [vmem:[%s1 + $0x18] sm:$0xff]
        %v1983 = vld [vmem:[%s1 + $0x20] sm:$0xf]
        %vm1984 = vcmask 293888
        %v1986 = vsel %vm1984, %v1947, 0
        %v1989 = vsel %vm1984, %v1948, 0
        %v1992 = vsel %vm1984, %v1949, 0
        %v1995 = vsel %vm1984, %v1950, 0
        %v1998 = vsel %vm1984, %v1951, 0
        %v2001 = vsel %vm1984, %v1952, 0
        %v2004 = vsel %vm1984, %v1953, 0
        %v2007 = vsel %vm1984, %v1954, 0
        %v2010 = vsel %vm1984, %v1955, 0
        %v2013 = vsel %vm1984, %v1956, 0
        %v2016 = vsel %vm1984, %v1957, 0
        %v2019 = vsel %vm1984, %v1958, 0
        %v2022 = vsel %vm1984, %v1959, 0
        %v2025 = vsel %vm1984, %v1960, 0
        %v2028 = vsel %vm1984, %v1961, 0
        %v2031 = vsel %vm1984, %v1962, 0
        %v2034 = vsel %vm1984, %v1963, 0
        %v2037 = vsel %vm1984, %v1964, 0
        %v2040 = vsel %vm1984, %v1965, 0
        %v2043 = vsel %vm1984, %v1966, 0
        %v2046 = vsel %vm1984, %v1967, 0
        %v2049 = vsel %vm1984, %v1968, 0
        %v2052 = vsel %vm1984, %v1969, 0
        %v2055 = vsel %vm1984, %v1970, 0
        %v2058 = vsel %vm1984, %v1971, 0
        %v2061 = vsel %vm1984, %v1972, 0
        %v2064 = vsel %vm1984, %v1973, 0
        %v2067 = vsel %vm1984, %v1974, 0
        %v2070 = vsel %vm1984, %v1975, 0
        %v2073 = vsel %vm1984, %v1976, 0
        %v2076 = vsel %vm1984, %v1977, 0
        %v2079 = vsel %vm1984, %v1978, 0
        %vm2081 = vcmask 1043456
        %v2083 = vsel %vm2081, %v1983, 0
        %2085 = vmatprep.subr.mxu0 0.0
        %2086 = vmatpush1.msra.mxu0 %v1979
        %2087 = vmatprep.subr.mxu0 0.0
        %2088 = vmatpush1.msra.mxu0 %v1980
        %2089 = vmatprep.subr.mxu0 0.0
        %2090 = vmatpush1.msra.mxu0 %v1981
        %2091 = vmatprep.subr.mxu0 0.0
        %2092 = vmatpush1.msra.mxu0 %v1982
        %2093 = vmatprep.subr.mxu0 0.0
        %2094 = vmatpush1.msra.mxu0 %v2083
        %2095 = vmatprep.subr.mxu0 0.0
        %2096 = vmatpush1.msra.mxu0 0.0
        %2097 = vmatprep.subr.mxu0 0.0
        %2098 = vmatpush1.msra.mxu0 0.0
        %2099 = vmatprep.subr.mxu0 0.0
        %2100 = vmatpush1.msra.mxu0 0.0
        %2101 = vmatprep.subr.mxu0 0.0
        %2102 = vmatpush1.msra.mxu0 0.0
        %2103 = vmatprep.subr.mxu0 0.0
        %2104 = vmatpush1.msra.mxu0 0.0
        %2105 = vmatprep.subr.mxu0 0.0
        %2106 = vmatpush1.msra.mxu0 0.0
        %2107 = vmatprep.subr.mxu0 0.0
        %2108 = vmatpush1.msra.mxu0 0.0
        %2109 = vmatprep.subr.mxu0 0.0
        %2110 = vmatpush1.msra.mxu0 0.0
        %2111 = vmatprep.subr.mxu0 0.0
        %2112 = vmatpush1.msra.mxu0 0.0
        %2113 = vmatprep.subr.mxu0 0.0
        %2114 = vmatpush1.msra.mxu0 0.0
        %2115 = vmatprep.subr.mxu0 0.0
        %2116 = vmatpush1.msra.mxu0 0.0
        %2117 = vmatprep.subr.mxu0 0.0
        %2118 = vmatpush1.msra.mxu0 0.0
        %2119 = vmatprep.subr.mxu0 0.0
        %2120 = vmatpush1.msra.mxu0 0.0
        %2121 = vmatprep.subr.mxu0 0.0
        %2122 = vmatpush1.msra.mxu0 0.0
        %2123 = vmatprep.subr.mxu0 0.0
        %2124 = vmatpush1.msra.mxu0 0.0
        %2125 = vmatprep.subr.mxu0 0.0
        %2126 = vmatpush1.msra.mxu0 0.0
        %2127 = vmatprep.subr.mxu0 0.0
        %2128 = vmatpush1.msra.mxu0 0.0
        %2129 = vmatprep.subr.mxu0 0.0
        %2130 = vmatpush1.msra.mxu0 0.0
        %2131 = vmatprep.subr.mxu0 0.0
        %2132 = vmatpush1.msra.mxu0 0.0
        %2133 = vmatprep.subr.mxu0 0.0
        %2134 = vmatpush1.msra.mxu0 0.0
        %2135 = vmatprep.subr.mxu0 0.0
        %2136 = vmatpush1.msra.mxu0 0.0
        %2137 = vmatprep.subr.mxu0 0.0
        %2138 = vmatpush1.msra.mxu0 0.0
        %2139 = vmatprep.subr.mxu0 0.0
        %2140 = vmatpush1.msra.mxu0 0.0
        %2141 = vmatprep.subr.mxu0 0.0
        %2142 = vmatpush1.msra.mxu0 0.0
        %2143 = vmatprep.subr.mxu0 0.0
        %2144 = vmatpush1.msra.mxu0 0.0
        %2145 = vmatprep.subr.mxu0 0.0
        %2146 = vmatpush1.msra.mxu0 0.0
        %2147 = vmatprep.subr.mxu0 0.0
        %2148 = vmatpush1.msra.mxu0 0.0
        %2149 = vmatprep.mubr.f32.mxu0 0.0
        %2150 = vmatmul.mubr.f32.gmra.mrb[0].mxu0 %v1986
        %v2151 = vpop.f32.mrb[0].mxu0
        %v2152 = vadd.f32 0.0, %v2151
        %v2153 = vpop.f32.mrb[0].mxu0
        %2154 = vmatprep.mubr.f32.mxu0 0.0
        %2155 = vmatmul.mubr.f32.gmra.mrb[0].mxu0 %v1989
        %v2156 = vpop.f32.mrb[0].mxu0
        %v2157 = vadd.f32 0.0, %v2156
        %v2158 = vpop.f32.mrb[0].mxu0
        %2159 = vmatprep.mubr.f32.mxu0 0.0
        %2160 = vmatmul.mubr.f32.gmra.mrb[0].mxu0 %v1992
        %v2161 = vpop.f32.mrb[0].mxu0
        %v2162 = vadd.f32 0.0, %v2161
        %v2163 = vpop.f32.mrb[0].mxu0
        %2164 = vmatprep.mubr.f32.mxu0 0.0
        %2165 = vmatmul.mubr.f32.gmra.mrb[0].mxu0 %v1995
        %v2166 = vpop.f32.mrb[0].mxu0
        %v2167 = vadd.f32 0.0, %v2166
        %v2168 = vpop.f32.mrb[0].mxu0
        %2169 = vmatprep.mubr.f32.mxu0 0.0
        %2170 = vmatmul.mubr.f32.gmra.mrb[0].mxu0 %v1998
        %v2171 = vpop.f32.mrb[0].mxu0
        %v2172 = vadd.f32 0.0, %v2171
        %v2173 = vpop.f32.mrb[0].mxu0
        %2174 = vmatprep.mubr.f32.mxu0 0.0
        %2175 = vmatmul.mubr.f32.gmra.mrb[0].mxu0 %v2001
        %v2176 = vpop.f32.mrb[0].mxu0
        %v2177 = vadd.f32 0.0, %v2176
        %v2178 = vpop.f32.mrb[0].mxu0
        %2179 = vmatprep.mubr.f32.mxu0 0.0
        %2180 = vmatmul.mubr.f32.gmra.mrb[0].mxu0 %v2004
        %v2181 = vpop.f32.mrb[0].mxu0
        %v2182 = vadd.f32 0.0, %v2181
        %v2183 = vpop.f32.mrb[0].mxu0
        %2184 = vmatprep.mubr.f32.mxu0 0.0
        %2185 = vmatmul.mubr.f32.gmra.mrb[0].mxu0 %v2007
        %v2186 = vpop.f32.mrb[0].mxu0
        %v2187 = vadd.f32 0.0, %v2186
        %v2188 = vpop.f32.mrb[0].mxu0
        %2189 = vmatprep.mubr.f32.mxu0 0.0
        %2190 = vmatmul.mubr.f32.gmra.mrb[0].mxu0 %v2010
        %v2191 = vpop.f32.mrb[0].mxu0
        %v2192 = vadd.f32 0.0, %v2191
        %v2193 = vpop.f32.mrb[0].mxu0
        %2194 = vmatprep.mubr.f32.mxu0 0.0
        %2195 = vmatmul.mubr.f32.gmra.mrb[0].mxu0 %v2013
        %v2196 = vpop.f32.mrb[0].mxu0
        %v2197 = vadd.f32 0.0, %v2196
        %v2198 = vpop.f32.mrb[0].mxu0
        %2199 = vmatprep.mubr.f32.mxu0 0.0
        %2200 = vmatmul.mubr.f32.gmra.mrb[0].mxu0 %v2016
        %v2201 = vpop.f32.mrb[0].mxu0
        %v2202 = vadd.f32 0.0, %v2201
        %v2203 = vpop.f32.mrb[0].mxu0
        %2204 = vmatprep.mubr.f32.mxu0 0.0
        %2205 = vmatmul.mubr.f32.gmra.mrb[0].mxu0 %v2019
        %v2206 = vpop.f32.mrb[0].mxu0
        %v2207 = vadd.f32 0.0, %v2206
        %v2208 = vpop.f32.mrb[0].mxu0
        %2209 = vmatprep.mubr.f32.mxu0 0.0
        %2210 = vmatmul.mubr.f32.gmra.mrb[0].mxu0 %v2022
        %v2211 = vpop.f32.mrb[0].mxu0
        %v2212 = vadd.f32 0.0, %v2211
        %v2213 = vpop.f32.mrb[0].mxu0
        %2214 = vmatprep.mubr.f32.mxu0 0.0
        %2215 = vmatmul.mubr.f32.gmra.mrb[0].mxu0 %v2025
        %v2216 = vpop.f32.mrb[0].mxu0
        %v2217 = vadd.f32 0.0, %v2216
        %v2218 = vpop.f32.mrb[0].mxu0
        %2219 = vmatprep.mubr.f32.mxu0 0.0
        %2220 = vmatmul.mubr.f32.gmra.mrb[0].mxu0 %v2028
        %v2221 = vpop.f32.mrb[0].mxu0
        %v2222 = vadd.f32 0.0, %v2221
        %v2223 = vpop.f32.mrb[0].mxu0
        %2224 = vmatprep.mubr.f32.mxu0 0.0
        %2225 = vmatmul.mubr.f32.gmra.mrb[0].mxu0 %v2031
        %v2226 = vpop.f32.mrb[0].mxu0
        %v2227 = vadd.f32 0.0, %v2226
        %v2228 = vpop.f32.mrb[0].mxu0
        %2229 = vmatprep.mubr.f32.mxu0 0.0
        %2230 = vmatmul.mubr.f32.gmra.mrb[0].mxu0 %v2034
        %v2231 = vpop.f32.mrb[0].mxu0
        %v2232 = vadd.f32 0.0, %v2231
        %v2233 = vpop.f32.mrb[0].mxu0
        %2234 = vmatprep.mubr.f32.mxu0 0.0
        %2235 = vmatmul.mubr.f32.gmra.mrb[0].mxu0 %v2037
        %v2236 = vpop.f32.mrb[0].mxu0
        %v2237 = vadd.f32 0.0, %v2236
        %v2238 = vpop.f32.mrb[0].mxu0
        %2239 = vmatprep.mubr.f32.mxu0 0.0
        %2240 = vmatmul.mubr.f32.gmra.mrb[0].mxu0 %v2040
        %v2241 = vpop.f32.mrb[0].mxu0
        %v2242 = vadd.f32 0.0, %v2241
        %v2243 = vpop.f32.mrb[0].mxu0
        %2244 = vmatprep.mubr.f32.mxu0 0.0
        %2245 = vmatmul.mubr.f32.gmra.mrb[0].mxu0 %v2043
        %v2246 = vpop.f32.mrb[0].mxu0
        %v2247 = vadd.f32 0.0, %v2246
        %v2248 = vpop.f32.mrb[0].mxu0
        %2249 = vmatprep.mubr.f32.mxu0 0.0
        %2250 = vmatmul.mubr.f32.gmra.mrb[0].mxu0 %v2046
        %v2251 = vpop.f32.mrb[0].mxu0
        %v2252 = vadd.f32 0.0, %v2251
        %v2253 = vpop.f32.mrb[0].mxu0
        %2254 = vmatprep.mubr.f32.mxu0 0.0
        %2255 = vmatmul.mubr.f32.gmra.mrb[0].mxu0 %v2049
        %v2256 = vpop.f32.mrb[0].mxu0
        %v2257 = vadd.f32 0.0, %v2256
        %v2258 = vpop.f32.mrb[0].mxu0
        %2259 = vmatprep.mubr.f32.mxu0 0.0
        %2260 = vmatmul.mubr.f32.gmra.mrb[0].mxu0 %v2052
        %v2261 = vpop.f32.mrb[0].mxu0
        %v2262 = vadd.f32 0.0, %v2261
        %v2263 = vpop.f32.mrb[0].mxu0
        %2264 = vmatprep.mubr.f32.mxu0 0.0
        %2265 = vmatmul.mubr.f32.gmra.mrb[0].mxu0 %v2055
        %v2266 = vpop.f32.mrb[0].mxu0
        %v2267 = vadd.f32 0.0, %v2266
        %v2268 = vpop.f32.mrb[0].mxu0
        %2269 = vmatprep.mubr.f32.mxu0 0.0
        %2270 = vmatmul.mubr.f32.gmra.mrb[0].mxu0 %v2058
        %v2271 = vpop.f32.mrb[0].mxu0
        %v2272 = vadd.f32 0.0, %v2271
        %v2273 = vpop.f32.mrb[0].mxu0
        %2274 = vmatprep.mubr.f32.mxu0 0.0
        %2275 = vmatmul.mubr.f32.gmra.mrb[0].mxu0 %v2061
        %v2276 = vpop.f32.mrb[0].mxu0
        %v2277 = vadd.f32 0.0, %v2276
        %v2278 = vpop.f32.mrb[0].mxu0
        %2279 = vmatprep.mubr.f32.mxu0 0.0
        %2280 = vmatmul.mubr.f32.gmra.mrb[0].mxu0 %v2064
        %v2281 = vpop.f32.mrb[0].mxu0
        %v2282 = vadd.f32 0.0, %v2281
        %v2283 = vpop.f32.mrb[0].mxu0
        %2284 = vmatprep.mubr.f32.mxu0 0.0
        %2285 = vmatmul.mubr.f32.gmra.mrb[0].mxu0 %v2067
        %v2286 = vpop.f32.mrb[0].mxu0
        %v2287 = vadd.f32 0.0, %v2286
        %v2288 = vpop.f32.mrb[0].mxu0
        %2289 = vmatprep.mubr.f32.mxu0 0.0
        %2290 = vmatmul.mubr.f32.gmra.mrb[0].mxu0 %v2070
        %v2291 = vpop.f32.mrb[0].mxu0
        %v2292 = vadd.f32 0.0, %v2291
        %v2293 = vpop.f32.mrb[0].mxu0
        %2294 = vmatprep.mubr.f32.mxu0 0.0
        %2295 = vmatmul.mubr.f32.gmra.mrb[0].mxu0 %v2073
        %v2296 = vpop.f32.mrb[0].mxu0
        %v2297 = vadd.f32 0.0, %v2296
        %v2298 = vpop.f32.mrb[0].mxu0
        %2299 = vmatprep.mubr.f32.mxu0 0.0
        %2300 = vmatmul.mubr.f32.gmra.mrb[0].mxu0 %v2076
        %v2301 = vpop.f32.mrb[0].mxu0
        %v2302 = vadd.f32 0.0, %v2301
        %v2303 = vpop.f32.mrb[0].mxu0
        %2304 = vmatprep.mubr.f32.mxu0 0.0
        %2305 = vmatmul.mubr.f32.gmra.mrb[0].mxu0 %v2079
        %v2306 = vpop.f32.mrb[0].mxu0
        %v2307 = vadd.f32 0.0, %v2306
        %v2308 = vpop.f32.mrb[0].mxu0
        %2309 = vdwg.mxu0
        %v2310 = vld [vmem:[%s2] sm:$0x1]
        %v2312 = vlaneseq
        %v2313 = vshrl.u32 %v2312, 7
        %v2314 = vsub.s32 0, %v2313
        %v2315 = vrot.slane %v2310, %v2314
        %v2317 = vmul.f32 %v2152, %v2315
        %v2318 = vmul.f32 %v2157, %v2315
        %v2319 = vmul.f32 %v2162, %v2315
        %v2320 = vmul.f32 %v2167, %v2315
        %v2321 = vmul.f32 %v2172, %v2315
        %v2322 = vmul.f32 %v2177, %v2315
        %v2323 = vmul.f32 %v2182, %v2315
        %v2324 = vmul.f32 %v2187, %v2315
        %v2325 = vmul.f32 %v2192, %v2315
        %v2326 = vmul.f32 %v2197, %v2315
        %v2327 = vmul.f32 %v2202, %v2315
        %v2328 = vmul.f32 %v2207, %v2315
        %v2329 = vmul.f32 %v2212, %v2315
        %v2330 = vmul.f32 %v2217, %v2315
        %v2331 = vmul.f32 %v2222, %v2315
        %v2332 = vmul.f32 %v2227, %v2315
        %v2333 = vmul.f32 %v2232, %v2315
        %v2334 = vmul.f32 %v2237, %v2315
        %v2335 = vmul.f32 %v2242, %v2315
        %v2336 = vmul.f32 %v2247, %v2315
        %v2337 = vmul.f32 %v2252, %v2315
        %v2338 = vmul.f32 %v2257, %v2315
        %v2339 = vmul.f32 %v2262, %v2315
        %v2340 = vmul.f32 %v2267, %v2315
        %v2341 = vmul.f32 %v2272, %v2315
        %v2342 = vmul.f32 %v2277, %v2315
        %v2343 = vmul.f32 %v2282, %v2315
        %v2344 = vmul.f32 %v2287, %v2315
        %v2345 = vmul.f32 %v2292, %v2315
        %v2346 = vmul.f32 %v2297, %v2315
        %v2347 = vmul.f32 %v2302, %v2315
        %v2348 = vmul.f32 %v2307, %v2315
        %v2349 = vld [vmem:[%s3] sm:$0x1]
        %v2351 = vlaneseq
        %v2352 = vshrl.u32 %v2351, 7
        %v2353 = vsub.s32 0, %v2352
        %v2354 = vrot.slane %v2349, %v2353
        %v2356 = vadd.f32 %v2317, %v2354
        %v2357 = vadd.f32 %v2318, %v2354
        %v2358 = vadd.f32 %v2319, %v2354
        %v2359 = vadd.f32 %v2320, %v2354
        %v2360 = vadd.f32 %v2321, %v2354
        %v2361 = vadd.f32 %v2322, %v2354
        %v2362 = vadd.f32 %v2323, %v2354
        %v2363 = vadd.f32 %v2324, %v2354
        %v2364 = vadd.f32 %v2325, %v2354
        %v2365 = vadd.f32 %v2326, %v2354
        %v2366 = vadd.f32 %v2327, %v2354
        %v2367 = vadd.f32 %v2328, %v2354
        %v2368 = vadd.f32 %v2329, %v2354
        %v2369 = vadd.f32 %v2330, %v2354
        %v2370 = vadd.f32 %v2331, %v2354
        %v2371 = vadd.f32 %v2332, %v2354
        %v2372 = vadd.f32 %v2333, %v2354
        %v2373 = vadd.f32 %v2334, %v2354
        %v2374 = vadd.f32 %v2335, %v2354
        %v2375 = vadd.f32 %v2336, %v2354
        %v2376 = vadd.f32 %v2337, %v2354
        %v2377 = vadd.f32 %v2338, %v2354
        %v2378 = vadd.f32 %v2339, %v2354
        %v2379 = vadd.f32 %v2340, %v2354
        %v2380 = vadd.f32 %v2341, %v2354
        %v2381 = vadd.f32 %v2342, %v2354
        %v2382 = vadd.f32 %v2343, %v2354
        %v2383 = vadd.f32 %v2344, %v2354
        %v2384 = vadd.f32 %v2345, %v2354
        %v2385 = vadd.f32 %v2346, %v2354
        %v2386 = vadd.f32 %v2347, %v2354
        %v2387 = vadd.f32 %v2348, %v2354
        %v2388 = vmax.f32 %v2356, 0.0
        %v2389 = vmax.f32 %v2357, 0.0
        %v2390 = vmax.f32 %v2358, 0.0
        %v2391 = vmax.f32 %v2359, 0.0
        %v2392 = vmax.f32 %v2360, 0.0
        %v2393 = vmax.f32 %v2361, 0.0
        %v2394 = vmax.f32 %v2362, 0.0
        %v2395 = vmax.f32 %v2363, 0.0
        %v2396 = vmax.f32 %v2364, 0.0
        %v2397 = vmax.f32 %v2365, 0.0
        %v2398 = vmax.f32 %v2366, 0.0
        %v2399 = vmax.f32 %v2367, 0.0
        %v2400 = vmax.f32 %v2368, 0.0
        %v2401 = vmax.f32 %v2369, 0.0
        %v2402 = vmax.f32 %v2370, 0.0
        %v2403 = vmax.f32 %v2371, 0.0
        %v2404 = vmax.f32 %v2372, 0.0
        %v2405 = vmax.f32 %v2373, 0.0
        %v2406 = vmax.f32 %v2374, 0.0
        %v2407 = vmax.f32 %v2375, 0.0
        %v2408 = vmax.f32 %v2376, 0.0
        %v2409 = vmax.f32 %v2377, 0.0
        %v2410 = vmax.f32 %v2378, 0.0
        %v2411 = vmax.f32 %v2379, 0.0
        %v2412 = vmax.f32 %v2380, 0.0
        %v2413 = vmax.f32 %v2381, 0.0
        %v2414 = vmax.f32 %v2382, 0.0
        %v2415 = vmax.f32 %v2383, 0.0
        %v2416 = vmax.f32 %v2384, 0.0
        %v2417 = vmax.f32 %v2385, 0.0
        %v2418 = vmax.f32 %v2386, 0.0
        %v2419 = vmax.f32 %v2387, 0.0
        %2420 = vst [vmem:[#allocation3] sm:$0xff] 0.0
        %2421 = vst [vmem:[#allocation3 + $0x8] sm:$0xff] 0.0
        %2422 = vst [vmem:[#allocation3 + $0x10] sm:$0x3] 0.0
        %s2423 = scalar_lea.vmem [#allocation3], 408
        %2424 = vst [vmem:[%s2423] sm:$0xff] 0.0
        %2425 = vst [vmem:[%s2423 + $0x8] sm:$0xff] 0.0
        %2426 = vst [vmem:[%s2423 + $0x10] sm:$0x3] 0.0
        %2427 = vst [vmem:[#allocation3] sm:$0x1] 0.0
        %2428 = vst [vmem:[#allocation3 + $0x18] sm:$0x1] 0.0
        %2429 = vst [vmem:[#allocation3 + $0x30] sm:$0x1] 0.0
        %2430 = vst [vmem:[#allocation3 + $0x48] sm:$0x1] 0.0
        %2431 = vst [vmem:[#allocation3 + $0x60] sm:$0x1] 0.0
        %2432 = vst [vmem:[#allocation3 + $0x78] sm:$0x1] 0.0
        %2433 = vst [vmem:[#allocation3 + $0x90] sm:$0x1] 0.0
        %2434 = vst [vmem:[#allocation3 + $0xa8] sm:$0x1] 0.0
        %2435 = vst [vmem:[#allocation3 + $0xc0] sm:$0x1] 0.0
        %2436 = vst [vmem:[#allocation3 + $0xd8] sm:$0x1] 0.0
        %2437 = vst [vmem:[#allocation3 + $0xf0] sm:$0x1] 0.0
        %2438 = vst [vmem:[#allocation3 + $0x108] sm:$0x1] 0.0
        %2439 = vst [vmem:[#allocation3 + $0x120] sm:$0x1] 0.0
        %2440 = vst [vmem:[#allocation3 + $0x138] sm:$0x1] 0.0
        %2441 = vst [vmem:[#allocation3 + $0x150] sm:$0x1] 0.0
        %2442 = vst [vmem:[#allocation3 + $0x168] sm:$0x1] 0.0
        %2443 = vst [vmem:[#allocation3 + $0x180] sm:$0x1] 0.0
        %2444 = vst [vmem:[#allocation3 + $0x198] sm:$0x1] 0.0
        %2445 = vst [vmem:[#allocation3 + $0x11] sm:$0x1] 0.0
        %2446 = vst [vmem:[#allocation3 + $0x29] sm:$0x1] 0.0
        %2447 = vst [vmem:[#allocation3 + $0x41] sm:$0x1] 0.0
        %2448 = vst [vmem:[#allocation3 + $0x59] sm:$0x1] 0.0
        %2449 = vst [vmem:[#allocation3 + $0x71] sm:$0x1] 0.0
        %2450 = vst [vmem:[#allocation3 + $0x89] sm:$0x1] 0.0
        %2451 = vst [vmem:[#allocation3 + $0xa1] sm:$0x1] 0.0
        %2452 = vst [vmem:[#allocation3 + $0xb9] sm:$0x1] 0.0
        %2453 = vst [vmem:[#allocation3 + $0xd1] sm:$0x1] 0.0
        %2454 = vst [vmem:[#allocation3 + $0xe9] sm:$0x1] 0.0
        %2455 = vst [vmem:[#allocation3 + $0x101] sm:$0x1] 0.0
        %2456 = vst [vmem:[#allocation3 + $0x119] sm:$0x1] 0.0
        %2457 = vst [vmem:[#allocation3 + $0x131] sm:$0x1] 0.0
        %2458 = vst [vmem:[#allocation3 + $0x149] sm:$0x1] 0.0
        %2459 = vst [vmem:[#allocation3 + $0x161] sm:$0x1] 0.0
        %2460 = vst [vmem:[#allocation3 + $0x179] sm:$0x1] 0.0
        %2461 = vst [vmem:[#allocation3 + $0x191] sm:$0x1] 0.0
        %2462 = vst [vmem:[#allocation3 + $0x1a9] sm:$0x1] 0.0
        %s2463 = scalar_lea.vmem [#allocation3], 24
        %2464 = vst [vmem:[%s2463 + $0x1] sm:$0xff] %v2388
        %2465 = vst [vmem:[%s2463 + $0x9] sm:$0xff] %v2389
        %2466 = vst [vmem:[%s2463 + $0x19] sm:$0xff] %v2390
        %2467 = vst [vmem:[%s2463 + $0x21] sm:$0xff] %v2391
        %2468 = vst [vmem:[%s2463 + $0x31] sm:$0xff] %v2392
        %2469 = vst [vmem:[%s2463 + $0x39] sm:$0xff] %v2393
        %2470 = vst [vmem:[%s2463 + $0x49] sm:$0xff] %v2394
        %2471 = vst [vmem:[%s2463 + $0x51] sm:$0xff] %v2395
        %2472 = vst [vmem:[%s2463 + $0x61] sm:$0xff] %v2396
        %2473 = vst [vmem:[%s2463 + $0x69] sm:$0xff] %v2397
        %2474 = vst [vmem:[%s2463 + $0x79] sm:$0xff] %v2398
        %2475 = vst [vmem:[%s2463 + $0x81] sm:$0xff] %v2399
        %2476 = vst [vmem:[%s2463 + $0x91] sm:$0xff] %v2400
        %2477 = vst [vmem:[%s2463 + $0x99] sm:$0xff] %v2401
        %2478 = vst [vmem:[%s2463 + $0xa9] sm:$0xff] %v2402
        %2479 = vst [vmem:[%s2463 + $0xb1] sm:$0xff] %v2403
        %2480 = vst [vmem:[%s2463 + $0xc1] sm:$0xff] %v2404
        %2481 = vst [vmem:[%s2463 + $0xc9] sm:$0xff] %v2405
        %2482 = vst [vmem:[%s2463 + $0xd9] sm:$0xff] %v2406
        %2483 = vst [vmem:[%s2463 + $0xe1] sm:$0xff] %v2407
        %2484 = vst [vmem:[%s2463 + $0xf1] sm:$0xff] %v2408
        %2485 = vst [vmem:[%s2463 + $0xf9] sm:$0xff] %v2409
        %2486 = vst [vmem:[%s2463 + $0x109] sm:$0xff] %v2410
        %2487 = vst [vmem:[%s2463 + $0x111] sm:$0xff] %v2411
        %2488 = vst [vmem:[%s2463 + $0x121] sm:$0xff] %v2412
        %2489 = vst [vmem:[%s2463 + $0x129] sm:$0xff] %v2413
        %2490 = vst [vmem:[%s2463 + $0x139] sm:$0xff] %v2414
        %2491 = vst [vmem:[%s2463 + $0x141] sm:$0xff] %v2415
        %2492 = vst [vmem:[%s2463 + $0x151] sm:$0xff] %v2416
        %2493 = vst [vmem:[%s2463 + $0x159] sm:$0xff] %v2417
        %2494 = vst [vmem:[%s2463 + $0x169] sm:$0xff] %v2418
        %2495 = vst [vmem:[%s2463 + $0x171] sm:$0xff] %v2419
        %v2496 = vld [vmem:[#allocation3] sm:$0xff]
        %v2497 = vld [vmem:[#allocation3 + $0x8] sm:$0xff]
        %v2498 = vld [vmem:[#allocation3 + $0x18] sm:$0xff]
        %v2499 = vld [vmem:[#allocation3 + $0x20] sm:$0xff]
        %v2500 = vld [vmem:[#allocation3 + $0x30] sm:$0xff]
        %v2501 = vld [vmem:[#allocation3 + $0x38] sm:$0xff]
        %v2502 = vld [vmem:[#allocation3 + $0x48] sm:$0xff]
        %v2503 = vld [vmem:[#allocation3 + $0x50] sm:$0xff]
        %v2504 = vld [vmem:[#allocation3 + $0x60] sm:$0xff]
        %v2505 = vld [vmem:[#allocation3 + $0x68] sm:$0xff]
        %v2506 = vld [vmem:[#allocation3 + $0x78] sm:$0xff]
        %v2507 = vld [vmem:[#allocation3 + $0x80] sm:$0xff]
        %v2508 = vld [vmem:[#allocation3 + $0x90] sm:$0xff]
        %v2509 = vld [vmem:[#allocation3 + $0x98] sm:$0xff]
        %v2510 = vld [vmem:[#allocation3 + $0xa8] sm:$0xff]
        %v2511 = vld [vmem:[#allocation3 + $0xb0] sm:$0xff]
        %v2512 = vld [vmem:[#allocation3 + $0xc0] sm:$0xff]
        %v2513 = vld [vmem:[#allocation3 + $0xc8] sm:$0xff]
        %v2514 = vld [vmem:[#allocation3 + $0xd8] sm:$0xff]
        %v2515 = vld [vmem:[#allocation3 + $0xe0] sm:$0xff]
        %v2516 = vld [vmem:[#allocation3 + $0xf0] sm:$0xff]
        %v2517 = vld [vmem:[#allocation3 + $0xf8] sm:$0xff]
        %v2518 = vld [vmem:[#allocation3 + $0x108] sm:$0xff]
        %v2519 = vld [vmem:[#allocation3 + $0x110] sm:$0xff]
        %v2520 = vld [vmem:[#allocation3 + $0x120] sm:$0xff]
        %v2521 = vld [vmem:[#allocation3 + $0x128] sm:$0xff]
        %v2522 = vld [vmem:[#allocation3 + $0x138] sm:$0xff]
        %v2523 = vld [vmem:[#allocation3 + $0x140] sm:$0xff]
        %v2524 = vld [vmem:[#allocation3 + $0x150] sm:$0xff]
        %v2525 = vld [vmem:[#allocation3 + $0x158] sm:$0xff]
        %v2526 = vld [vmem:[#allocation3 + $0x168] sm:$0xff]
        %v2527 = vld [vmem:[#allocation3 + $0x170] sm:$0xff]
        %v2528 = vld [vmem:[#allocation4] sm:$0xff]
        %v2529 = vld [vmem:[#allocation4 + $0x8] sm:$0xff]
        %v2530 = vld [vmem:[#allocation4 + $0x10] sm:$0xff]
        %v2531 = vld [vmem:[#allocation4 + $0x18] sm:$0xff]
        %v2532 = vld [vmem:[#allocation4 + $0x20] sm:$0xff]
        %v2533 = vld [vmem:[#allocation4 + $0x28] sm:$0xff]
        %v2534 = vld [vmem:[#allocation4 + $0x30] sm:$0xff]
        %v2535 = vld [vmem:[#allocation4 + $0x38] sm:$0xff]
        %v2536 = vld [vmem:[#allocation4 + $0x40] sm:$0xff]
        %v2537 = vld [vmem:[#allocation4 + $0x48] sm:$0xff]
        %v2538 = vld [vmem:[#allocation4 + $0x50] sm:$0xff]
        %v2539 = vld [vmem:[#allocation4 + $0x58] sm:$0xff]
        %v2540 = vld [vmem:[#allocation4 + $0x60] sm:$0xff]
        %v2541 = vld [vmem:[#allocation4 + $0x68] sm:$0xff]
        %v2542 = vld [vmem:[#allocation4 + $0x70] sm:$0xff]
        %v2543 = vld [vmem:[#allocation4 + $0x78] sm:$0xff]
        %v2544 = vld [vmem:[#allocation3 + $0x1] sm:$0xff]
        %v2545 = vld [vmem:[#allocation3 + $0x9] sm:$0xff]
        %v2546 = vld [vmem:[#allocation3 + $0x19] sm:$0xff]
        %v2547 = vld [vmem:[#allocation3 + $0x21] sm:$0xff]
        %v2548 = vld [vmem:[#allocation3 + $0x31] sm:$0xff]
        %v2549 = vld [vmem:[#allocation3 + $0x39] sm:$0xff]
        %v2550 = vld [vmem:[#allocation3 + $0x49] sm:$0xff]
        %v2551 = vld [vmem:[#allocation3 + $0x51] sm:$0xff]
        %v2552 = vld [vmem:[#allocation3 + $0x61] sm:$0xff]
        %v2553 = vld [vmem:[#allocation3 + $0x69] sm:$0xff]
        %v2554 = vld [vmem:[#allocation3 + $0x79] sm:$0xff]
        %v2555 = vld [vmem:[#allocation3 + $0x81] sm:$0xff]
        %v2556 = vld [vmem:[#allocation3 + $0x91] sm:$0xff]
        %v2557 = vld [vmem:[#allocation3 + $0x99] sm:$0xff]
        %v2558 = vld [vmem:[#allocation3 + $0xa9] sm:$0xff]
        %v2559 = vld [vmem:[#allocation3 + $0xb1] sm:$0xff]
        %v2560 = vld [vmem:[#allocation3 + $0xc1] sm:$0xff]
        %v2561 = vld [vmem:[#allocation3 + $0xc9] sm:$0xff]
        %v2562 = vld [vmem:[#allocation3 + $0xd9] sm:$0xff]
        %v2563 = vld [vmem:[#allocation3 + $0xe1] sm:$0xff]
        %v2564 = vld [vmem:[#allocation3 + $0xf1] sm:$0xff]
        %v2565 = vld [vmem:[#allocation3 + $0xf9] sm:$0xff]
        %v2566 = vld [vmem:[#allocation3 + $0x109] sm:$0xff]
        %v2567 = vld [vmem:[#allocation3 + $0x111] sm:$0xff]
        %v2568 = vld [vmem:[#allocation3 + $0x121] sm:$0xff]
        %v2569 = vld [vmem:[#allocation3 + $0x129] sm:$0xff]
        %v2570 = vld [vmem:[#allocation3 + $0x139] sm:$0xff]
        %v2571 = vld [vmem:[#allocation3 + $0x141] sm:$0xff]
        %v2572 = vld [vmem:[#allocation3 + $0x151] sm:$0xff]
        %v2573 = vld [vmem:[#allocation3 + $0x159] sm:$0xff]
        %v2574 = vld [vmem:[#allocation3 + $0x169] sm:$0xff]
        %v2575 = vld [vmem:[#allocation3 + $0x171] sm:$0xff]
        %s2576 = scalar_lea.vmem [#allocation4], 128
        %v2577 = vld [vmem:[%s2576] sm:$0xff]
        %v2578 = vld [vmem:[%s2576 + $0x8] sm:$0xff]
        %v2579 = vld [vmem:[%s2576 + $0x10] sm:$0xff]
        %v2580 = vld [vmem:[%s2576 + $0x18] sm:$0xff]
        %v2581 = vld [vmem:[%s2576 + $0x20] sm:$0xff]
        %v2582 = vld [vmem:[%s2576 + $0x28] sm:$0xff]
        %v2583 = vld [vmem:[%s2576 + $0x30] sm:$0xff]
        %v2584 = vld [vmem:[%s2576 + $0x38] sm:$0xff]
        %v2585 = vld [vmem:[%s2576 + $0x40] sm:$0xff]
        %v2586 = vld [vmem:[%s2576 + $0x48] sm:$0xff]
        %v2587 = vld [vmem:[%s2576 + $0x50] sm:$0xff]
        %v2588 = vld [vmem:[%s2576 + $0x58] sm:$0xff]
        %v2589 = vld [vmem:[%s2576 + $0x60] sm:$0xff]
        %v2590 = vld [vmem:[%s2576 + $0x68] sm:$0xff]
        %v2591 = vld [vmem:[%s2576 + $0x70] sm:$0xff]
        %v2592 = vld [vmem:[%s2576 + $0x78] sm:$0xff]
        %2593 = vmatprep.subr.mxu0 0.0
        %2594 = vmatpush1.msra.mxu0 %v2577
        %2595 = vmatprep.subr.mxu0 0.0
        %2596 = vmatpush1.msra.mxu0 %v2578
        %2597 = vmatprep.subr.mxu0 0.0
        %2598 = vmatpush1.msra.mxu0 %v2579
        %2599 = vmatprep.subr.mxu0 0.0
        %2600 = vmatpush1.msra.mxu0 %v2580
        %2601 = vmatprep.subr.mxu0 0.0
        %2602 = vmatpush1.msra.mxu0 %v2581
        %2603 = vmatprep.subr.mxu0 0.0
        %2604 = vmatpush1.msra.mxu0 %v2582
        %2605 = vmatprep.subr.mxu0 0.0
        %2606 = vmatpush1.msra.mxu0 %v2583
        %2607 = vmatprep.subr.mxu0 0.0
        %2608 = vmatpush1.msra.mxu0 %v2584
        %2609 = vmatprep.subr.mxu0 0.0
        %2610 = vmatpush1.msra.mxu0 %v2585
        %2611 = vmatprep.subr.mxu0 0.0
        %2612 = vmatpush1.msra.mxu0 %v2586
        %2613 = vmatprep.subr.mxu0 0.0
        %2614 = vmatpush1.msra.mxu0 %v2587
        %2615 = vmatprep.subr.mxu0 0.0
        %2616 = vmatpush1.msra.mxu0 %v2588
        %2617 = vmatprep.subr.mxu0 0.0
        %2618 = vmatpush1.msra.mxu0 %v2589
        %2619 = vmatprep.subr.mxu0 0.0
        %2620 = vmatpush1.msra.mxu0 %v2590
        %2621 = vmatprep.subr.mxu0 0.0
        %2622 = vmatpush1.msra.mxu0 %v2591
        %2623 = vmatprep.subr.mxu0 0.0
        %2624 = vmatpush1.msra.mxu0 %v2592
        %2625 = vmatprep.subr.mxu0 0.0
        %2626 = vmatpush1.msra.mxu0 0.0
        %2627 = vmatprep.subr.mxu0 0.0
        %2628 = vmatpush1.msra.mxu0 0.0
        %2629 = vmatprep.subr.mxu0 0.0
        %2630 = vmatpush1.msra.mxu0 0.0
        %2631 = vmatprep.subr.mxu0 0.0
        %2632 = vmatpush1.msra.mxu0 0.0
        %2633 = vmatprep.subr.mxu0 0.0
        %2634 = vmatpush1.msra.mxu0 0.0
        %2635 = vmatprep.subr.mxu0 0.0
        %2636 = vmatpush1.msra.mxu0 0.0
        %2637 = vmatprep.subr.mxu0 0.0
        %2638 = vmatpush1.msra.mxu0 0.0
        %2639 = vmatprep.subr.mxu0 0.0
        %2640 = vmatpush1.msra.mxu0 0.0
        %2641 = vmatprep.subr.mxu0 0.0
        %2642 = vmatpush1.msra.mxu0 0.0
        %2643 = vmatprep.subr.mxu0 0.0
        %2644 = vmatpush1.msra.mxu0 0.0
        %2645 = vmatprep.subr.mxu0 0.0
        %2646 = vmatpush1.msra.mxu0 0.0
        %2647 = vmatprep.subr.mxu0 0.0
        %2648 = vmatpush1.msra.mxu0 0.0
        %2649 = vmatprep.subr.mxu0 0.0
        %2650 = vmatpush1.msra.mxu0 0.0
        %2651 = vmatprep.subr.mxu0 0.0
        %2652 = vmatpush1.msra.mxu0 0.0
        %2653 = vmatprep.subr.mxu0 0.0
        %2654 = vmatpush1.msra.mxu0 0.0
        %2655 = vmatprep.subr.mxu0 0.0
        %2656 = vmatpush1.msra.mxu0 0.0
        %2657 = vmatprep.mubr.f32.mxu0 0.0
        %2658 = vmatmul.mubr.f32.gmra.mrb[0].mxu0 %v2544
        %v2659 = vpop.f32.mrb[0].mxu0
        %v2660 = vadd.f32 0.0, %v2659
        %v2661 = vpop.f32.mrb[0].mxu0
        %2662 = vmatprep.mubr.f32.mxu0 0.0
        %2663 = vmatmul.mubr.f32.gmra.mrb[0].mxu0 %v2545
        %v2664 = vpop.f32.mrb[0].mxu0
        %v2665 = vadd.f32 0.0, %v2664
        %v2666 = vpop.f32.mrb[0].mxu0
        %2667 = vmatprep.mubr.f32.mxu0 0.0
        %2668 = vmatmul.mubr.f32.gmra.mrb[0].mxu0 %v2546
        %v2669 = vpop.f32.mrb[0].mxu0
        %v2670 = vadd.f32 0.0, %v2669
        %v2671 = vpop.f32.mrb[0].mxu0
        %2672 = vmatprep.mubr.f32.mxu0 0.0
        %2673 = vmatmul.mubr.f32.gmra.mrb[0].mxu0 %v2547
        %v2674 = vpop.f32.mrb[0].mxu0
        %v2675 = vadd.f32 0.0, %v2674
        %v2676 = vpop.f32.mrb[0].mxu0
        %2677 = vmatprep.mubr.f32.mxu0 0.0
        %2678 = vmatmul.mubr.f32.gmra.mrb[0].mxu0 %v2548
        %v2679 = vpop.f32.mrb[0].mxu0
        %v2680 = vadd.f32 0.0, %v2679
        %v2681 = vpop.f32.mrb[0].mxu0
        %2682 = vmatprep.mubr.f32.mxu0 0.0
        %2683 = vmatmul.mubr.f32.gmra.mrb[0].mxu0 %v2549
        %v2684 = vpop.f32.mrb[0].mxu0
        %v2685 = vadd.f32 0.0, %v2684
        %v2686 = vpop.f32.mrb[0].mxu0
        %2687 = vmatprep.mubr.f32.mxu0 0.0
        %2688 = vmatmul.mubr.f32.gmra.mrb[0].mxu0 %v2550
        %v2689 = vpop.f32.mrb[0].mxu0
        %v2690 = vadd.f32 0.0, %v2689
        %v2691 = vpop.f32.mrb[0].mxu0
        %2692 = vmatprep.mubr.f32.mxu0 0.0
        %2693 = vmatmul.mubr.f32.gmra.mrb[0].mxu0 %v2551
        %v2694 = vpop.f32.mrb[0].mxu0
        %v2695 = vadd.f32 0.0, %v2694
        %v2696 = vpop.f32.mrb[0].mxu0
        %2697 = vmatprep.mubr.f32.mxu0 0.0
        %2698 = vmatmul.mubr.f32.gmra.mrb[0].mxu0 %v2552
        %v2699 = vpop.f32.mrb[0].mxu0
        %v2700 = vadd.f32 0.0, %v2699
        %v2701 = vpop.f32.mrb[0].mxu0
        %2702 = vmatprep.mubr.f32.mxu0 0.0
        %2703 = vmatmul.mubr.f32.gmra.mrb[0].mxu0 %v2553
        %v2704 = vpop.f32.mrb[0].mxu0
        %v2705 = vadd.f32 0.0, %v2704
        %v2706 = vpop.f32.mrb[0].mxu0
        %2707 = vmatprep.mubr.f32.mxu0 0.0
        %2708 = vmatmul.mubr.f32.gmra.mrb[0].mxu0 %v2554
        %v2709 = vpop.f32.mrb[0].mxu0
        %v2710 = vadd.f32 0.0, %v2709
        %v2711 = vpop.f32.mrb[0].mxu0
        %2712 = vmatprep.mubr.f32.mxu0 0.0
        %2713 = vmatmul.mubr.f32.gmra.mrb[0].mxu0 %v2555
        %v2714 = vpop.f32.mrb[0].mxu0
        %v2715 = vadd.f32 0.0, %v2714
        %v2716 = vpop.f32.mrb[0].mxu0
        %2717 = vmatprep.mubr.f32.mxu0 0.0
        %2718 = vmatmul.mubr.f32.gmra.mrb[0].mxu0 %v2556
        %v2719 = vpop.f32.mrb[0].mxu0
        %v2720 = vadd.f32 0.0, %v2719
        %v2721 = vpop.f32.mrb[0].mxu0
        %2722 = vmatprep.mubr.f32.mxu0 0.0
        %2723 = vmatmul.mubr.f32.gmra.mrb[0].mxu0 %v2557
        %v2724 = vpop.f32.mrb[0].mxu0
        %v2725 = vadd.f32 0.0, %v2724
        %v2726 = vpop.f32.mrb[0].mxu0
        %2727 = vmatprep.mubr.f32.mxu0 0.0
        %2728 = vmatmul.mubr.f32.gmra.mrb[0].mxu0 %v2558
        %v2729 = vpop.f32.mrb[0].mxu0
        %v2730 = vadd.f32 0.0, %v2729
        %v2731 = vpop.f32.mrb[0].mxu0
        %2732 = vmatprep.mubr.f32.mxu0 0.0
        %2733 = vmatmul.mubr.f32.gmra.mrb[0].mxu0 %v2559
        %v2734 = vpop.f32.mrb[0].mxu0
        %v2735 = vadd.f32 0.0, %v2734
        %v2736 = vpop.f32.mrb[0].mxu0
        %2737 = vmatprep.mubr.f32.mxu0 0.0
        %2738 = vmatmul.mubr.f32.gmra.mrb[0].mxu0 %v2560
        %v2739 = vpop.f32.mrb[0].mxu0
        %v2740 = vadd.f32 0.0, %v2739
        %v2741 = vpop.f32.mrb[0].mxu0
        %2742 = vmatprep.mubr.f32.mxu0 0.0
        %2743 = vmatmul.mubr.f32.gmra.mrb[0].mxu0 %v2561
        %v2744 = vpop.f32.mrb[0].mxu0
        %v2745 = vadd.f32 0.0, %v2744
        %v2746 = vpop.f32.mrb[0].mxu0
        %2747 = vmatprep.mubr.f32.mxu0 0.0
        %2748 = vmatmul.mubr.f32.gmra.mrb[0].mxu0 %v2562
        %v2749 = vpop.f32.mrb[0].mxu0
        %v2750 = vadd.f32 0.0, %v2749
        %v2751 = vpop.f32.mrb[0].mxu0
        %2752 = vmatprep.mubr.f32.mxu0 0.0
        %2753 = vmatmul.mubr.f32.gmra.mrb[0].mxu0 %v2563
        %v2754 = vpop.f32.mrb[0].mxu0
        %v2755 = vadd.f32 0.0, %v2754
        %v2756 = vpop.f32.mrb[0].mxu0
        %2757 = vmatprep.mubr.f32.mxu0 0.0
        %2758 = vmatmul.mubr.f32.gmra.mrb[0].mxu0 %v2564
        %v2759 = vpop.f32.mrb[0].mxu0
        %v2760 = vadd.f32 0.0, %v2759
        %v2761 = vpop.f32.mrb[0].mxu0
        %2762 = vmatprep.mubr.f32.mxu0 0.0
        %2763 = vmatmul.mubr.f32.gmra.mrb[0].mxu0 %v2565
        %v2764 = vpop.f32.mrb[0].mxu0
        %v2765 = vadd.f32 0.0, %v2764
        %v2766 = vpop.f32.mrb[0].mxu0
        %2767 = vmatprep.mubr.f32.mxu0 0.0
        %2768 = vmatmul.mubr.f32.gmra.mrb[0].mxu0 %v2566
        %v2769 = vpop.f32.mrb[0].mxu0
        %v2770 = vadd.f32 0.0, %v2769
        %v2771 = vpop.f32.mrb[0].mxu0
        %2772 = vmatprep.mubr.f32.mxu0 0.0
        %2773 = vmatmul.mubr.f32.gmra.mrb[0].mxu0 %v2567
        %v2774 = vpop.f32.mrb[0].mxu0
        %v2775 = vadd.f32 0.0, %v2774
        %v2776 = vpop.f32.mrb[0].mxu0
        %2777 = vmatprep.mubr.f32.mxu0 0.0
        %2778 = vmatmul.mubr.f32.gmra.mrb[0].mxu0 %v2568
        %v2779 = vpop.f32.mrb[0].mxu0
        %v2780 = vadd.f32 0.0, %v2779
        %v2781 = vpop.f32.mrb[0].mxu0
        %2782 = vmatprep.mubr.f32.mxu0 0.0
        %2783 = vmatmul.mubr.f32.gmra.mrb[0].mxu0 %v2569
        %v2784 = vpop.f32.mrb[0].mxu0
        %v2785 = vadd.f32 0.0, %v2784
        %v2786 = vpop.f32.mrb[0].mxu0
        %2787 = vmatprep.mubr.f32.mxu0 0.0
        %2788 = vmatmul.mubr.f32.gmra.mrb[0].mxu0 %v2570
        %v2789 = vpop.f32.mrb[0].mxu0
        %v2790 = vadd.f32 0.0, %v2789
        %v2791 = vpop.f32.mrb[0].mxu0
        %2792 = vmatprep.mubr.f32.mxu0 0.0
        %2793 = vmatmul.mubr.f32.gmra.mrb[0].mxu0 %v2571
        %v2794 = vpop.f32.mrb[0].mxu0
        %v2795 = vadd.f32 0.0, %v2794
        %v2796 = vpop.f32.mrb[0].mxu0
        %2797 = vmatprep.mubr.f32.mxu0 0.0
        %2798 = vmatmul.mubr.f32.gmra.mrb[0].mxu0 %v2572
        %v2799 = vpop.f32.mrb[0].mxu0
        %v2800 = vadd.f32 0.0, %v2799
        %v2801 = vpop.f32.mrb[0].mxu0
        %2802 = vmatprep.mubr.f32.mxu0 0.0
        %2803 = vmatmul.mubr.f32.gmra.mrb[0].mxu0 %v2573
        %v2804 = vpop.f32.mrb[0].mxu0
        %v2805 = vadd.f32 0.0, %v2804
        %v2806 = vpop.f32.mrb[0].mxu0
        %2807 = vmatprep.mubr.f32.mxu0 0.0
        %2808 = vmatmul.mubr.f32.gmra.mrb[0].mxu0 %v2574
        %v2809 = vpop.f32.mrb[0].mxu0
        %v2810 = vadd.f32 0.0, %v2809
        %v2811 = vpop.f32.mrb[0].mxu0
        %2812 = vmatprep.mubr.f32.mxu0 0.0
        %2813 = vmatmul.mubr.f32.gmra.mrb[0].mxu0 %v2575
        %v2814 = vpop.f32.mrb[0].mxu0
        %v2815 = vadd.f32 0.0, %v2814
        %v2816 = vpop.f32.mrb[0].mxu0
        %2817 = vdwg.mxu0
        %2818 = vmatprep.subr.mxu0 0.0
        %2819 = vmatpush1.msra.mxu0 %v2528
        %2820 = vmatprep.subr.mxu0 0.0
        %2821 = vmatpush1.msra.mxu0 %v2529
        %2822 = vmatprep.subr.mxu0 0.0
        %2823 = vmatpush1.msra.mxu0 %v2530
        %2824 = vmatprep.subr.mxu0 0.0
        %2825 = vmatpush1.msra.mxu0 %v2531
        %2826 = vmatprep.subr.mxu0 0.0
        %2827 = vmatpush1.msra.mxu0 %v2532
        %2828 = vmatprep.subr.mxu0 0.0
        %2829 = vmatpush1.msra.mxu0 %v2533
        %2830 = vmatprep.subr.mxu0 0.0
        %2831 = vmatpush1.msra.mxu0 %v2534
        %2832 = vmatprep.subr.mxu0 0.0
        %2833 = vmatpush1.msra.mxu0 %v2535
        %2834 = vmatprep.subr.mxu0 0.0
        %2835 = vmatpush1.msra.mxu0 %v2536
        %2836 = vmatprep.subr.mxu0 0.0
        %2837 = vmatpush1.msra.mxu0 %v2537
        %2838 = vmatprep.subr.mxu0 0.0
        %2839 = vmatpush1.msra.mxu0 %v2538
        %2840 = vmatprep.subr.mxu0 0.0
        %2841 = vmatpush1.msra.mxu0 %v2539
        %2842 = vmatprep.subr.mxu0 0.0
        %2843 = vmatpush1.msra.mxu0 %v2540
        %2844 = vmatprep.subr.mxu0 0.0
        %2845 = vmatpush1.msra.mxu0 %v2541
        %2846 = vmatprep.subr.mxu0 0.0
        %2847 = vmatpush1.msra.mxu0 %v2542
        %2848 = vmatprep.subr.mxu0 0.0
        %2849 = vmatpush1.msra.mxu0 %v2543
        %2850 = vmatprep.subr.mxu0 0.0
        %2851 = vmatpush1.msra.mxu0 0.0
        %2852 = vmatprep.subr.mxu0 0.0
        %2853 = vmatpush1.msra.mxu0 0.0
        %2854 = vmatprep.subr.mxu0 0.0
        %2855 = vmatpush1.msra.mxu0 0.0
        %2856 = vmatprep.subr.mxu0 0.0
        %2857 = vmatpush1.msra.mxu0 0.0
        %2858 = vmatprep.subr.mxu0 0.0
        %2859 = vmatpush1.msra.mxu0 0.0
        %2860 = vmatprep.subr.mxu0 0.0
        %2861 = vmatpush1.msra.mxu0 0.0
        %2862 = vmatprep.subr.mxu0 0.0
        %2863 = vmatpush1.msra.mxu0 0.0
        %2864 = vmatprep.subr.mxu0 0.0
        %2865 = vmatpush1.msra.mxu0 0.0
        %2866 = vmatprep.subr.mxu0 0.0
        %2867 = vmatpush1.msra.mxu0 0.0
        %2868 = vmatprep.subr.mxu0 0.0
        %2869 = vmatpush1.msra.mxu0 0.0
        %2870 = vmatprep.subr.mxu0 0.0
        %2871 = vmatpush1.msra.mxu0 0.0
        %2872 = vmatprep.subr.mxu0 0.0
        %2873 = vmatpush1.msra.mxu0 0.0
        %2874 = vmatprep.subr.mxu0 0.0
        %2875 = vmatpush1.msra.mxu0 0.0
        %2876 = vmatprep.subr.mxu0 0.0
        %2877 = vmatpush1.msra.mxu0 0.0
        %2878 = vmatprep.subr.mxu0 0.0
        %2879 = vmatpush1.msra.mxu0 0.0
        %2880 = vmatprep.subr.mxu0 0.0
        %2881 = vmatpush1.msra.mxu0 0.0
        %2882 = vmatprep.mubr.f32.mxu0 0.0
        %2883 = vmatmul.mubr.f32.gmra.mrb[0].mxu0 %v2496
        %v2884 = vpop.f32.mrb[0].mxu0
        %v2885 = vadd.f32 %v2660, %v2884
        %v2886 = vpop.f32.mrb[0].mxu0
        %2887 = vmatprep.mubr.f32.mxu0 0.0
        %2888 = vmatmul.mubr.f32.gmra.mrb[0].mxu0 %v2497
        %v2889 = vpop.f32.mrb[0].mxu0
        %v2890 = vadd.f32 %v2665, %v2889
        %v2891 = vpop.f32.mrb[0].mxu0
        %2892 = vmatprep.mubr.f32.mxu0 0.0
        %2893 = vmatmul.mubr.f32.gmra.mrb[0].mxu0 %v2498
        %v2894 = vpop.f32.mrb[0].mxu0
        %v2895 = vadd.f32 %v2670, %v2894
        %v2896 = vpop.f32.mrb[0].mxu0
        %2897 = vmatprep.mubr.f32.mxu0 0.0
        %2898 = vmatmul.mubr.f32.gmra.mrb[0].mxu0 %v2499
        %v2899 = vpop.f32.mrb[0].mxu0
        %v2900 = vadd.f32 %v2675, %v2899
        %v2901 = vpop.f32.mrb[0].mxu0
        %2902 = vmatprep.mubr.f32.mxu0 0.0
        %2903 = vmatmul.mubr.f32.gmra.mrb[0].mxu0 %v2500
        %v2904 = vpop.f32.mrb[0].mxu0
        %v2905 = vadd.f32 %v2680, %v2904
        %v2906 = vpop.f32.mrb[0].mxu0
        %2907 = vmatprep.mubr.f32.mxu0 0.0
        %2908 = vmatmul.mubr.f32.gmra.mrb[0].mxu0 %v2501
        %v2909 = vpop.f32.mrb[0].mxu0
        %v2910 = vadd.f32 %v2685, %v2909
        %v2911 = vpop.f32.mrb[0].mxu0
        %2912 = vmatprep.mubr.f32.mxu0 0.0
        %2913 = vmatmul.mubr.f32.gmra.mrb[0].mxu0 %v2502
        %v2914 = vpop.f32.mrb[0].mxu0
        %v2915 = vadd.f32 %v2690, %v2914
        %v2916 = vpop.f32.mrb[0].mxu0
        %2917 = vmatprep.mubr.f32.mxu0 0.0
        %2918 = vmatmul.mubr.f32.gmra.mrb[0].mxu0 %v2503
        %v2919 = vpop.f32.mrb[0].mxu0
        %v2920 = vadd.f32 %v2695, %v2919
        %v2921 = vpop.f32.mrb[0].mxu0
        %2922 = vmatprep.mubr.f32.mxu0 0.0
        %2923 = vmatmul.mubr.f32.gmra.mrb[0].mxu0 %v2504
        %v2924 = vpop.f32.mrb[0].mxu0
        %v2925 = vadd.f32 %v2700, %v2924
        %v2926 = vpop.f32.mrb[0].mxu0
        %2927 = vmatprep.mubr.f32.mxu0 0.0
        %2928 = vmatmul.mubr.f32.gmra.mrb[0].mxu0 %v2505
        %v2929 = vpop.f32.mrb[0].mxu0
        %v2930 = vadd.f32 %v2705, %v2929
        %v2931 = vpop.f32.mrb[0].mxu0
        %2932 = vmatprep.mubr.f32.mxu0 0.0
        %2933 = vmatmul.mubr.f32.gmra.mrb[0].mxu0 %v2506
        %v2934 = vpop.f32.mrb[0].mxu0
        %v2935 = vadd.f32 %v2710, %v2934
        %v2936 = vpop.f32.mrb[0].mxu0
        %2937 = vmatprep.mubr.f32.mxu0 0.0
        %2938 = vmatmul.mubr.f32.gmra.mrb[0].mxu0 %v2507
        %v2939 = vpop.f32.mrb[0].mxu0
        %v2940 = vadd.f32 %v2715, %v2939
        %v2941 = vpop.f32.mrb[0].mxu0
        %2942 = vmatprep.mubr.f32.mxu0 0.0
        %2943 = vmatmul.mubr.f32.gmra.mrb[0].mxu0 %v2508
        %v2944 = vpop.f32.mrb[0].mxu0
        %v2945 = vadd.f32 %v2720, %v2944
        %v2946 = vpop.f32.mrb[0].mxu0
        %2947 = vmatprep.mubr.f32.mxu0 0.0
        %2948 = vmatmul.mubr.f32.gmra.mrb[0].mxu0 %v2509
        %v2949 = vpop.f32.mrb[0].mxu0
        %v2950 = vadd.f32 %v2725, %v2949
        %v2951 = vpop.f32.mrb[0].mxu0
        %2952 = vmatprep.mubr.f32.mxu0 0.0
        %2953 = vmatmul.mubr.f32.gmra.mrb[0].mxu0 %v2510
        %v2954 = vpop.f32.mrb[0].mxu0
        %v2955 = vadd.f32 %v2730, %v2954
        %v2956 = vpop.f32.mrb[0].mxu0
        %2957 = vmatprep.mubr.f32.mxu0 0.0
        %2958 = vmatmul.mubr.f32.gmra.mrb[0].mxu0 %v2511
        %v2959 = vpop.f32.mrb[0].mxu0
        %v2960 = vadd.f32 %v2735, %v2959
        %v2961 = vpop.f32.mrb[0].mxu0
        %2962 = vmatprep.mubr.f32.mxu0 0.0
        %2963 = vmatmul.mubr.f32.gmra.mrb[0].mxu0 %v2512
        %v2964 = vpop.f32.mrb[0].mxu0
        %v2965 = vadd.f32 %v2740, %v2964
        %v2966 = vpop.f32.mrb[0].mxu0
        %2967 = vmatprep.mubr.f32.mxu0 0.0
        %2968 = vmatmul.mubr.f32.gmra.mrb[0].mxu0 %v2513
        %v2969 = vpop.f32.mrb[0].mxu0
        %v2970 = vadd.f32 %v2745, %v2969
        %v2971 = vpop.f32.mrb[0].mxu0
        %2972 = vmatprep.mubr.f32.mxu0 0.0
        %2973 = vmatmul.mubr.f32.gmra.mrb[0].mxu0 %v2514
        %v2974 = vpop.f32.mrb[0].mxu0
        %v2975 = vadd.f32 %v2750, %v2974
        %v2976 = vpop.f32.mrb[0].mxu0
        %2977 = vmatprep.mubr.f32.mxu0 0.0
        %2978 = vmatmul.mubr.f32.gmra.mrb[0].mxu0 %v2515
        %v2979 = vpop.f32.mrb[0].mxu0
        %v2980 = vadd.f32 %v2755, %v2979
        %v2981 = vpop.f32.mrb[0].mxu0
        %2982 = vmatprep.mubr.f32.mxu0 0.0
        %2983 = vmatmul.mubr.f32.gmra.mrb[0].mxu0 %v2516
        %v2984 = vpop.f32.mrb[0].mxu0
        %v2985 = vadd.f32 %v2760, %v2984
        %v2986 = vpop.f32.mrb[0].mxu0
        %2987 = vmatprep.mubr.f32.mxu0 0.0
        %2988 = vmatmul.mubr.f32.gmra.mrb[0].mxu0 %v2517
        %v2989 = vpop.f32.mrb[0].mxu0
        %v2990 = vadd.f32 %v2765, %v2989
        %v2991 = vpop.f32.mrb[0].mxu0
        %2992 = vmatprep.mubr.f32.mxu0 0.0
        %2993 = vmatmul.mubr.f32.gmra.mrb[0].mxu0 %v2518
        %v2994 = vpop.f32.mrb[0].mxu0
        %v2995 = vadd.f32 %v2770, %v2994
        %v2996 = vpop.f32.mrb[0].mxu0
        %2997 = vmatprep.mubr.f32.mxu0 0.0
        %2998 = vmatmul.mubr.f32.gmra.mrb[0].mxu0 %v2519
        %v2999 = vpop.f32.mrb[0].mxu0
        %v3000 = vadd.f32 %v2775, %v2999
        %v3001 = vpop.f32.mrb[0].mxu0
        %3002 = vmatprep.mubr.f32.mxu0 0.0
        %3003 = vmatmul.mubr.f32.gmra.mrb[0].mxu0 %v2520
        %v3004 = vpop.f32.mrb[0].mxu0
        %v3005 = vadd.f32 %v2780, %v3004
        %v3006 = vpop.f32.mrb[0].mxu0
        %3007 = vmatprep.mubr.f32.mxu0 0.0
        %3008 = vmatmul.mubr.f32.gmra.mrb[0].mxu0 %v2521
        %v3009 = vpop.f32.mrb[0].mxu0
        %v3010 = vadd.f32 %v2785, %v3009
        %v3011 = vpop.f32.mrb[0].mxu0
        %3012 = vmatprep.mubr.f32.mxu0 0.0
        %3013 = vmatmul.mubr.f32.gmra.mrb[0].mxu0 %v2522
        %v3014 = vpop.f32.mrb[0].mxu0
        %v3015 = vadd.f32 %v2790, %v3014
        %v3016 = vpop.f32.mrb[0].mxu0
        %3017 = vmatprep.mubr.f32.mxu0 0.0
        %3018 = vmatmul.mubr.f32.gmra.mrb[0].mxu0 %v2523
        %v3019 = vpop.f32.mrb[0].mxu0
        %v3020 = vadd.f32 %v2795, %v3019
        %v3021 = vpop.f32.mrb[0].mxu0
        %3022 = vmatprep.mubr.f32.mxu0 0.0
        %3023 = vmatmul.mubr.f32.gmra.mrb[0].mxu0 %v2524
        %v3024 = vpop.f32.mrb[0].mxu0
        %v3025 = vadd.f32 %v2800, %v3024
        %v3026 = vpop.f32.mrb[0].mxu0
        %3027 = vmatprep.mubr.f32.mxu0 0.0
        %3028 = vmatmul.mubr.f32.gmra.mrb[0].mxu0 %v2525
        %v3029 = vpop.f32.mrb[0].mxu0
        %v3030 = vadd.f32 %v2805, %v3029
        %v3031 = vpop.f32.mrb[0].mxu0
        %3032 = vmatprep.mubr.f32.mxu0 0.0
        %3033 = vmatmul.mubr.f32.gmra.mrb[0].mxu0 %v2526
        %v3034 = vpop.f32.mrb[0].mxu0
        %v3035 = vadd.f32 %v2810, %v3034
        %v3036 = vpop.f32.mrb[0].mxu0
        %3037 = vmatprep.mubr.f32.mxu0 0.0
        %3038 = vmatmul.mubr.f32.gmra.mrb[0].mxu0 %v2527
        %v3039 = vpop.f32.mrb[0].mxu0
        %v3040 = vadd.f32 %v2815, %v3039
        %v3041 = vpop.f32.mrb[0].mxu0
        %3042 = vdwg.mxu0
        %v3043 = vld [vmem:[#allocation3 + $0x2] sm:$0xff]
        %v3044 = vld [vmem:[#allocation3 + $0xa] sm:$0xff]
        %v3045 = vld [vmem:[#allocation3 + $0x1a] sm:$0xff]
        %v3046 = vld [vmem:[#allocation3 + $0x22] sm:$0xff]
        %v3047 = vld [vmem:[#allocation3 + $0x32] sm:$0xff]
        %v3048 = vld [vmem:[#allocation3 + $0x3a] sm:$0xff]
        %v3049 = vld [vmem:[#allocation3 + $0x4a] sm:$0xff]
        %v3050 = vld [vmem:[#allocation3 + $0x52] sm:$0xff]
        %v3051 = vld [vmem:[#allocation3 + $0x62] sm:$0xff]
        %v3052 = vld [vmem:[#allocation3 + $0x6a] sm:$0xff]
        %v3053 = vld [vmem:[#allocation3 + $0x7a] sm:$0xff]
        %v3054 = vld [vmem:[#allocation3 + $0x82] sm:$0xff]
        %v3055 = vld [vmem:[#allocation3 + $0x92] sm:$0xff]
        %v3056 = vld [vmem:[#allocation3 + $0x9a] sm:$0xff]
        %v3057 = vld [vmem:[#allocation3 + $0xaa] sm:$0xff]
        %v3058 = vld [vmem:[#allocation3 + $0xb2] sm:$0xff]
        %v3059 = vld [vmem:[#allocation3 + $0xc2] sm:$0xff]
        %v3060 = vld [vmem:[#allocation3 + $0xca] sm:$0xff]
        %v3061 = vld [vmem:[#allocation3 + $0xda] sm:$0xff]
        %v3062 = vld [vmem:[#allocation3 + $0xe2] sm:$0xff]
        %v3063 = vld [vmem:[#allocation3 + $0xf2] sm:$0xff]
        %v3064 = vld [vmem:[#allocation3 + $0xfa] sm:$0xff]
        %v3065 = vld [vmem:[#allocation3 + $0x10a] sm:$0xff]
        %v3066 = vld [vmem:[#allocation3 + $0x112] sm:$0xff]
        %v3067 = vld [vmem:[#allocation3 + $0x122] sm:$0xff]
        %v3068 = vld [vmem:[#allocation3 + $0x12a] sm:$0xff]
        %v3069 = vld [vmem:[#allocation3 + $0x13a] sm:$0xff]
        %v3070 = vld [vmem:[#allocation3 + $0x142] sm:$0xff]
        %v3071 = vld [vmem:[#allocation3 + $0x152] sm:$0xff]
        %v3072 = vld [vmem:[#allocation3 + $0x15a] sm:$0xff]
        %v3073 = vld [vmem:[#allocation3 + $0x16a] sm:$0xff]
        %v3074 = vld [vmem:[#allocation3 + $0x172] sm:$0xff]
        %s3075 = scalar_lea.vmem [#allocation4], 256
        %v3076 = vld [vmem:[%s3075] sm:$0xff]
        %v3077 = vld [vmem:[%s3075 + $0x8] sm:$0xff]
        %v3078 = vld [vmem:[%s3075 + $0x10] sm:$0xff]
        %v3079 = vld [vmem:[%s3075 + $0x18] sm:$0xff]
        %v3080 = vld [vmem:[%s3075 + $0x20] sm:$0xff]
        %v3081 = vld [vmem:[%s3075 + $0x28] sm:$0xff]
        %v3082 = vld [vmem:[%s3075 + $0x30] sm:$0xff]
        %v3083 = vld [vmem:[%s3075 + $0x38] sm:$0xff]
        %v3084 = vld [vmem:[%s3075 + $0x40] sm:$0xff]
        %v3085 = vld [vmem:[%s3075 + $0x48] sm:$0xff]
        %v3086 = vld [vmem:[%s3075 + $0x50] sm:$0xff]
        %v3087 = vld [vmem:[%s3075 + $0x58] sm:$0xff]
        %v3088 = vld [vmem:[%s3075 + $0x60] sm:$0xff]
        %v3089 = vld [vmem:[%s3075 + $0x68] sm:$0xff]
        %v3090 = vld [vmem:[%s3075 + $0x70] sm:$0xff]
        %v3091 = vld [vmem:[%s3075 + $0x78] sm:$0xff]
        %3092 = vmatprep.subr.mxu0 0.0
        %3093 = vmatpush1.msra.mxu0 %v3076
        %3094 = vmatprep.subr.mxu0 0.0
        %3095 = vmatpush1.msra.mxu0 %v3077
        %3096 = vmatprep.subr.mxu0 0.0
        %3097 = vmatpush1.msra.mxu0 %v3078
        %3098 = vmatprep.subr.mxu0 0.0
        %3099 = vmatpush1.msra.mxu0 %v3079
        %3100 = vmatprep.subr.mxu0 0.0
        %3101 = vmatpush1.msra.mxu0 %v3080
        %3102 = vmatprep.subr.mxu0 0.0
        %3103 = vmatpush1.msra.mxu0 %v3081
        %3104 = vmatprep.subr.mxu0 0.0
        %3105 = vmatpush1.msra.mxu0 %v3082
        %3106 = vmatprep.subr.mxu0 0.0
        %3107 = vmatpush1.msra.mxu0 %v3083
        %3108 = vmatprep.subr.mxu0 0.0
        %3109 = vmatpush1.msra.mxu0 %v3084
        %3110 = vmatprep.subr.mxu0 0.0
        %3111 = vmatpush1.msra.mxu0 %v3085
        %3112 = vmatprep.subr.mxu0 0.0
        %3113 = vmatpush1.msra.mxu0 %v3086
        %3114 = vmatprep.subr.mxu0 0.0
        %3115 = vmatpush1.msra.mxu0 %v3087
        %3116 = vmatprep.subr.mxu0 0.0
        %3117 = vmatpush1.msra.mxu0 %v3088
        %3118 = vmatprep.subr.mxu0 0.0
        %3119 = vmatpush1.msra.mxu0 %v3089
        %3120 = vmatprep.subr.mxu0 0.0
        %3121 = vmatpush1.msra.mxu0 %v3090
        %3122 = vmatprep.subr.mxu0 0.0
        %3123 = vmatpush1.msra.mxu0 %v3091
        %3124 = vmatprep.subr.mxu0 0.0
        %3125 = vmatpush1.msra.mxu0 0.0
        %3126 = vmatprep.subr.mxu0 0.0
        %3127 = vmatpush1.msra.mxu0 0.0
        %3128 = vmatprep.subr.mxu0 0.0
        %3129 = vmatpush1.msra.mxu0 0.0
        %3130 = vmatprep.subr.mxu0 0.0
        %3131 = vmatpush1.msra.mxu0 0.0
        %3132 = vmatprep.subr.mxu0 0.0
        %3133 = vmatpush1.msra.mxu0 0.0
        %3134 = vmatprep.subr.mxu0 0.0
        %3135 = vmatpush1.msra.mxu0 0.0
        %3136 = vmatprep.subr.mxu0 0.0
        %3137 = vmatpush1.msra.mxu0 0.0
        %3138 = vmatprep.subr.mxu0 0.0
        %3139 = vmatpush1.msra.mxu0 0.0
        %3140 = vmatprep.subr.mxu0 0.0
        %3141 = vmatpush1.msra.mxu0 0.0
        %3142 = vmatprep.subr.mxu0 0.0
        %3143 = vmatpush1.msra.mxu0 0.0
        %3144 = vmatprep.subr.mxu0 0.0
        %3145 = vmatpush1.msra.mxu0 0.0
        %3146 = vmatprep.subr.mxu0 0.0
        %3147 = vmatpush1.msra.mxu0 0.0
        %3148 = vmatprep.subr.mxu0 0.0
        %3149 = vmatpush1.msra.mxu0 0.0
        %3150 = vmatprep.subr.mxu0 0.0
        %3151 = vmatpush1.msra.mxu0 0.0
        %3152 = vmatprep.subr.mxu0 0.0
        %3153 = vmatpush1.msra.mxu0 0.0
        %3154 = vmatprep.subr.mxu0 0.0
        %3155 = vmatpush1.msra.mxu0 0.0
        %3156 = vmatprep.mubr.f32.mxu0 0.0
        %3157 = vmatmul.mubr.f32.gmra.mrb[0].mxu0 %v3043
        %v3158 = vpop.f32.mrb[0].mxu0
        %v3159 = vadd.f32 0.0, %v3158
        %v3160 = vpop.f32.mrb[0].mxu0
        %3161 = vmatprep.mubr.f32.mxu0 0.0
        %3162 = vmatmul.mubr.f32.gmra.mrb[0].mxu0 %v3044
        %v3163 = vpop.f32.mrb[0].mxu0
        %v3164 = vadd.f32 0.0, %v3163
        %v3165 = vpop.f32.mrb[0].mxu0
        %3166 = vmatprep.mubr.f32.mxu0 0.0
        %3167 = vmatmul.mubr.f32.gmra.mrb[0].mxu0 %v3045
        %v3168 = vpop.f32.mrb[0].mxu0
        %v3169 = vadd.f32 0.0, %v3168
        %v3170 = vpop.f32.mrb[0].mxu0
        %3171 = vmatprep.mubr.f32.mxu0 0.0
        %3172 = vmatmul.mubr.f32.gmra.mrb[0].mxu0 %v3046
        %v3173 = vpop.f32.mrb[0].mxu0
        %v3174 = vadd.f32 0.0, %v3173
        %v3175 = vpop.f32.mrb[0].mxu0
        %3176 = vmatprep.mubr.f32.mxu0 0.0
        %3177 = vmatmul.mubr.f32.gmra.mrb[0].mxu0 %v3047
        %v3178 = vpop.f32.mrb[0].mxu0
        %v3179 = vadd.f32 0.0, %v3178
        %v3180 = vpop.f32.mrb[0].mxu0
        %3181 = vmatprep.mubr.f32.mxu0 0.0
        %3182 = vmatmul.mubr.f32.gmra.mrb[0].mxu0 %v3048
        %v3183 = vpop.f32.mrb[0].mxu0
        %v3184 = vadd.f32 0.0, %v3183
        %v3185 = vpop.f32.mrb[0].mxu0
        %3186 = vmatprep.mubr.f32.mxu0 0.0
        %3187 = vmatmul.mubr.f32.gmra.mrb[0].mxu0 %v3049
        %v3188 = vpop.f32.mrb[0].mxu0
        %v3189 = vadd.f32 0.0, %v3188
        %v3190 = vpop.f32.mrb[0].mxu0
        %3191 = vmatprep.mubr.f32.mxu0 0.0
        %3192 = vmatmul.mubr.f32.gmra.mrb[0].mxu0 %v3050
        %v3193 = vpop.f32.mrb[0].mxu0
        %v3194 = vadd.f32 0.0, %v3193
        %v3195 = vpop.f32.mrb[0].mxu0
        %3196 = vmatprep.mubr.f32.mxu0 0.0
        %3197 = vmatmul.mubr.f32.gmra.mrb[0].mxu0 %v3051
        %v3198 = vpop.f32.mrb[0].mxu0
        %v3199 = vadd.f32 0.0, %v3198
        %v3200 = vpop.f32.mrb[0].mxu0
        %3201 = vmatprep.mubr.f32.mxu0 0.0
        %3202 = vmatmul.mubr.f32.gmra.mrb[0].mxu0 %v3052
        %v3203 = vpop.f32.mrb[0].mxu0
        %v3204 = vadd.f32 0.0, %v3203
        %v3205 = vpop.f32.mrb[0].mxu0
        %3206 = vmatprep.mubr.f32.mxu0 0.0
        %3207 = vmatmul.mubr.f32.gmra.mrb[0].mxu0 %v3053
        %v3208 = vpop.f32.mrb[0].mxu0
        %v3209 = vadd.f32 0.0, %v3208
        %v3210 = vpop.f32.mrb[0].mxu0
        %3211 = vmatprep.mubr.f32.mxu0 0.0
        %3212 = vmatmul.mubr.f32.gmra.mrb[0].mxu0 %v3054
        %v3213 = vpop.f32.mrb[0].mxu0
        %v3214 = vadd.f32 0.0, %v3213
        %v3215 = vpop.f32.mrb[0].mxu0
        %3216 = vmatprep.mubr.f32.mxu0 0.0
        %3217 = vmatmul.mubr.f32.gmra.mrb[0].mxu0 %v3055
        %v3218 = vpop.f32.mrb[0].mxu0
        %v3219 = vadd.f32 0.0, %v3218
        %v3220 = vpop.f32.mrb[0].mxu0
        %3221 = vmatprep.mubr.f32.mxu0 0.0
        %3222 = vmatmul.mubr.f32.gmra.mrb[0].mxu0 %v3056
        %v3223 = vpop.f32.mrb[0].mxu0
        %v3224 = vadd.f32 0.0, %v3223
        %v3225 = vpop.f32.mrb[0].mxu0
        %3226 = vmatprep.mubr.f32.mxu0 0.0
        %3227 = vmatmul.mubr.f32.gmra.mrb[0].mxu0 %v3057
        %v3228 = vpop.f32.mrb[0].mxu0
        %v3229 = vadd.f32 0.0, %v3228
        %v3230 = vpop.f32.mrb[0].mxu0
        %3231 = vmatprep.mubr.f32.mxu0 0.0
        %3232 = vmatmul.mubr.f32.gmra.mrb[0].mxu0 %v3058
        %v3233 = vpop.f32.mrb[0].mxu0
        %v3234 = vadd.f32 0.0, %v3233
        %v3235 = vpop.f32.mrb[0].mxu0
        %3236 = vmatprep.mubr.f32.mxu0 0.0
        %3237 = vmatmul.mubr.f32.gmra.mrb[0].mxu0 %v3059
        %v3238 = vpop.f32.mrb[0].mxu0
        %v3239 = vadd.f32 0.0, %v3238
        %v3240 = vpop.f32.mrb[0].mxu0
        %3241 = vmatprep.mubr.f32.mxu0 0.0
        %3242 = vmatmul.mubr.f32.gmra.mrb[0].mxu0 %v3060
        %v3243 = vpop.f32.mrb[0].mxu0
        %v3244 = vadd.f32 0.0, %v3243
        %v3245 = vpop.f32.mrb[0].mxu0
        %3246 = vmatprep.mubr.f32.mxu0 0.0
        %3247 = vmatmul.mubr.f32.gmra.mrb[0].mxu0 %v3061
        %v3248 = vpop.f32.mrb[0].mxu0
        %v3249 = vadd.f32 0.0, %v3248
        %v3250 = vpop.f32.mrb[0].mxu0
        %3251 = vmatprep.mubr.f32.mxu0 0.0
        %3252 = vmatmul.mubr.f32.gmra.mrb[0].mxu0 %v3062
        %v3253 = vpop.f32.mrb[0].mxu0
        %v3254 = vadd.f32 0.0, %v3253
        %v3255 = vpop.f32.mrb[0].mxu0
        %3256 = vmatprep.mubr.f32.mxu0 0.0
        %3257 = vmatmul.mubr.f32.gmra.mrb[0].mxu0 %v3063
        %v3258 = vpop.f32.mrb[0].mxu0
        %v3259 = vadd.f32 0.0, %v3258
        %v3260 = vpop.f32.mrb[0].mxu0
        %3261 = vmatprep.mubr.f32.mxu0 0.0
        %3262 = vmatmul.mubr.f32.gmra.mrb[0].mxu0 %v3064
        %v3263 = vpop.f32.mrb[0].mxu0
        %v3264 = vadd.f32 0.0, %v3263
        %v3265 = vpop.f32.mrb[0].mxu0
        %3266 = vmatprep.mubr.f32.mxu0 0.0
        %3267 = vmatmul.mubr.f32.gmra.mrb[0].mxu0 %v3065
        %v3268 = vpop.f32.mrb[0].mxu0
        %v3269 = vadd.f32 0.0, %v3268
        %v3270 = vpop.f32.mrb[0].mxu0
        %3271 = vmatprep.mubr.f32.mxu0 0.0
        %3272 = vmatmul.mubr.f32.gmra.mrb[0].mxu0 %v3066
        %v3273 = vpop.f32.mrb[0].mxu0
        %v3274 = vadd.f32 0.0, %v3273
        %v3275 = vpop.f32.mrb[0].mxu0
        %3276 = vmatprep.mubr.f32.mxu0 0.0
        %3277 = vmatmul.mubr.f32.gmra.mrb[0].mxu0 %v3067
        %v3278 = vpop.f32.mrb[0].mxu0
        %v3279 = vadd.f32 0.0, %v3278
        %v3280 = vpop.f32.mrb[0].mxu0
        %3281 = vmatprep.mubr.f32.mxu0 0.0
        %3282 = vmatmul.mubr.f32.gmra.mrb[0].mxu0 %v3068
        %v3283 = vpop.f32.mrb[0].mxu0
        %v3284 = vadd.f32 0.0, %v3283
        %v3285 = vpop.f32.mrb[0].mxu0
        %3286 = vmatprep.mubr.f32.mxu0 0.0
        %3287 = vmatmul.mubr.f32.gmra.mrb[0].mxu0 %v3069
        %v3288 = vpop.f32.mrb[0].mxu0
        %v3289 = vadd.f32 0.0, %v3288
        %v3290 = vpop.f32.mrb[0].mxu0
        %3291 = vmatprep.mubr.f32.mxu0 0.0
        %3292 = vmatmul.mubr.f32.gmra.mrb[0].mxu0 %v3070
        %v3293 = vpop.f32.mrb[0].mxu0
        %v3294 = vadd.f32 0.0, %v3293
        %v3295 = vpop.f32.mrb[0].mxu0
        %3296 = vmatprep.mubr.f32.mxu0 0.0
        %3297 = vmatmul.mubr.f32.gmra.mrb[0].mxu0 %v3071
        %v3298 = vpop.f32.mrb[0].mxu0
        %v3299 = vadd.f32 0.0, %v3298
        %v3300 = vpop.f32.mrb[0].mxu0
        %3301 = vmatprep.mubr.f32.mxu0 0.0
        %3302 = vmatmul.mubr.f32.gmra.mrb[0].mxu0 %v3072
        %v3303 = vpop.f32.mrb[0].mxu0
        %v3304 = vadd.f32 0.0, %v3303
        %v3305 = vpop.f32.mrb[0].mxu0
        %3306 = vmatprep.mubr.f32.mxu0 0.0
        %3307 = vmatmul.mubr.f32.gmra.mrb[0].mxu0 %v3073
        %v3308 = vpop.f32.mrb[0].mxu0
        %v3309 = vadd.f32 0.0, %v3308
        %v3310 = vpop.f32.mrb[0].mxu0
        %3311 = vmatprep.mubr.f32.mxu0 0.0
        %3312 = vmatmul.mubr.f32.gmra.mrb[0].mxu0 %v3074
        %v3313 = vpop.f32.mrb[0].mxu0
        %v3314 = vadd.f32 0.0, %v3313
        %v3315 = vpop.f32.mrb[0].mxu0
        %3316 = vdwg.mxu0
        %v3317 = vadd.f32 %v2885, %v3159
        %v3318 = vadd.f32 %v2890, %v3164
        %v3319 = vadd.f32 %v2895, %v3169
        %v3320 = vadd.f32 %v2900, %v3174
        %v3321 = vadd.f32 %v2905, %v3179
        %v3322 = vadd.f32 %v2910, %v3184
        %v3323 = vadd.f32 %v2915, %v3189
        %v3324 = vadd.f32 %v2920, %v3194
        %v3325 = vadd.f32 %v2925, %v3199
        %v3326 = vadd.f32 %v2930, %v3204
        %v3327 = vadd.f32 %v2935, %v3209
        %v3328 = vadd.f32 %v2940, %v3214
        %v3329 = vadd.f32 %v2945, %v3219
        %v3330 = vadd.f32 %v2950, %v3224
        %v3331 = vadd.f32 %v2955, %v3229
        %v3332 = vadd.f32 %v2960, %v3234
        %v3333 = vadd.f32 %v2965, %v3239
        %v3334 = vadd.f32 %v2970, %v3244
        %v3335 = vadd.f32 %v2975, %v3249
        %v3336 = vadd.f32 %v2980, %v3254
        %v3337 = vadd.f32 %v2985, %v3259
        %v3338 = vadd.f32 %v2990, %v3264
        %v3339 = vadd.f32 %v2995, %v3269
        %v3340 = vadd.f32 %v3000, %v3274
        %v3341 = vadd.f32 %v3005, %v3279
        %v3342 = vadd.f32 %v3010, %v3284
        %v3343 = vadd.f32 %v3015, %v3289
        %v3344 = vadd.f32 %v3020, %v3294
        %v3345 = vadd.f32 %v3025, %v3299
        %v3346 = vadd.f32 %v3030, %v3304
        %v3347 = vadd.f32 %v3035, %v3309
        %v3348 = vadd.f32 %v3040, %v3314
        %v3349 = vld [vmem:[%s2463] sm:$0xff]
        %v3350 = vld [vmem:[%s2463 + $0x8] sm:$0xff]
        %v3351 = vld [vmem:[%s2463 + $0x18] sm:$0xff]
        %v3352 = vld [vmem:[%s2463 + $0x20] sm:$0xff]
        %v3353 = vld [vmem:[%s2463 + $0x30] sm:$0xff]
        %v3354 = vld [vmem:[%s2463 + $0x38] sm:$0xff]
        %v3355 = vld [vmem:[%s2463 + $0x48] sm:$0xff]
        %v3356 = vld [vmem:[%s2463 + $0x50] sm:$0xff]
        %v3357 = vld [vmem:[%s2463 + $0x60] sm:$0xff]
        %v3358 = vld [vmem:[%s2463 + $0x68] sm:$0xff]
        %v3359 = vld [vmem:[%s2463 + $0x78] sm:$0xff]
        %v3360 = vld [vmem:[%s2463 + $0x80] sm:$0xff]
        %v3361 = vld [vmem:[%s2463 + $0x90] sm:$0xff]
        %v3362 = vld [vmem:[%s2463 + $0x98] sm:$0xff]
        %v3363 = vld [vmem:[%s2463 + $0xa8] sm:$0xff]
        %v3364 = vld [vmem:[%s2463 + $0xb0] sm:$0xff]
        %v3365 = vld [vmem:[%s2463 + $0xc0] sm:$0xff]
        %v3366 = vld [vmem:[%s2463 + $0xc8] sm:$0xff]
        %v3367 = vld [vmem:[%s2463 + $0xd8] sm:$0xff]
        %v3368 = vld [vmem:[%s2463 + $0xe0] sm:$0xff]
        %v3369 = vld [vmem:[%s2463 + $0xf0] sm:$0xff]
        %v3370 = vld [vmem:[%s2463 + $0xf8] sm:$0xff]
        %v3371 = vld [vmem:[%s2463 + $0x108] sm:$0xff]
        %v3372 = vld [vmem:[%s2463 + $0x110] sm:$0xff]
        %v3373 = vld [vmem:[%s2463 + $0x120] sm:$0xff]
        %v3374 = vld [vmem:[%s2463 + $0x128] sm:$0xff]
        %v3375 = vld [vmem:[%s2463 + $0x138] sm:$0xff]
        %v3376 = vld [vmem:[%s2463 + $0x140] sm:$0xff]
        %v3377 = vld [vmem:[%s2463 + $0x150] sm:$0xff]
        %v3378 = vld [vmem:[%s2463 + $0x158] sm:$0xff]
        %v3379 = vld [vmem:[%s2463 + $0x168] sm:$0xff]
        %v3380 = vld [vmem:[%s2463 + $0x170] sm:$0xff]
        %s3381 = scalar_lea.vmem [#allocation4], 384
        %v3382 = vld [vmem:[%s3381] sm:$0xff]
        %v3383 = vld [vmem:[%s3381 + $0x8] sm:$0xff]
        %v3384 = vld [vmem:[%s3381 + $0x10] sm:$0xff]
        %v3385 = vld [vmem:[%s3381 + $0x18] sm:$0xff]
        %v3386 = vld [vmem:[%s3381 + $0x20] sm:$0xff]
        %v3387 = vld [vmem:[%s3381 + $0x28] sm:$0xff]
        %v3388 = vld [vmem:[%s3381 + $0x30] sm:$0xff]
        %v3389 = vld [vmem:[%s3381 + $0x38] sm:$0xff]
        %v3390 = vld [vmem:[%s3381 + $0x40] sm:$0xff]
        %v3391 = vld [vmem:[%s3381 + $0x48] sm:$0xff]
        %v3392 = vld [vmem:[%s3381 + $0x50] sm:$0xff]
        %v3393 = vld [vmem:[%s3381 + $0x58] sm:$0xff]
        %v3394 = vld [vmem:[%s3381 + $0x60] sm:$0xff]
        %v3395 = vld [vmem:[%s3381 + $0x68] sm:$0xff]
        %v3396 = vld [vmem:[%s3381 + $0x70] sm:$0xff]
        %v3397 = vld [vmem:[%s3381 + $0x78] sm:$0xff]
        %3398 = vmatprep.subr.mxu0 0.0
        %3399 = vmatpush1.msra.mxu0 %v3382
        %3400 = vmatprep.subr.mxu0 0.0
        %3401 = vmatpush1.msra.mxu0 %v3383
        %3402 = vmatprep.subr.mxu0 0.0
        %3403 = vmatpush1.msra.mxu0 %v3384
        %3404 = vmatprep.subr.mxu0 0.0
        %3405 = vmatpush1.msra.mxu0 %v3385
        %3406 = vmatprep.subr.mxu0 0.0
        %3407 = vmatpush1.msra.mxu0 %v3386
        %3408 = vmatprep.subr.mxu0 0.0
        %3409 = vmatpush1.msra.mxu0 %v3387
        %3410 = vmatprep.subr.mxu0 0.0
        %3411 = vmatpush1.msra.mxu0 %v3388
        %3412 = vmatprep.subr.mxu0 0.0
        %3413 = vmatpush1.msra.mxu0 %v3389
        %3414 = vmatprep.subr.mxu0 0.0
        %3415 = vmatpush1.msra.mxu0 %v3390
        %3416 = vmatprep.subr.mxu0 0.0
        %3417 = vmatpush1.msra.mxu0 %v3391
        %3418 = vmatprep.subr.mxu0 0.0
        %3419 = vmatpush1.msra.mxu0 %v3392
        %3420 = vmatprep.subr.mxu0 0.0
        %3421 = vmatpush1.msra.mxu0 %v3393
        %3422 = vmatprep.subr.mxu0 0.0
        %3423 = vmatpush1.msra.mxu0 %v3394
        %3424 = vmatprep.subr.mxu0 0.0
        %3425 = vmatpush1.msra.mxu0 %v3395
        %3426 = vmatprep.subr.mxu0 0.0
        %3427 = vmatpush1.msra.mxu0 %v3396
        %3428 = vmatprep.subr.mxu0 0.0
        %3429 = vmatpush1.msra.mxu0 %v3397
        %3430 = vmatprep.subr.mxu0 0.0
        %3431 = vmatpush1.msra.mxu0 0.0
        %3432 = vmatprep.subr.mxu0 0.0
        %3433 = vmatpush1.msra.mxu0 0.0
        %3434 = vmatprep.subr.mxu0 0.0
        %3435 = vmatpush1.msra.mxu0 0.0
        %3436 = vmatprep.subr.mxu0 0.0
        %3437 = vmatpush1.msra.mxu0 0.0
        %3438 = vmatprep.subr.mxu0 0.0
        %3439 = vmatpush1.msra.mxu0 0.0
        %3440 = vmatprep.subr.mxu0 0.0
        %3441 = vmatpush1.msra.mxu0 0.0
        %3442 = vmatprep.subr.mxu0 0.0
        %3443 = vmatpush1.msra.mxu0 0.0
        %3444 = vmatprep.subr.mxu0 0.0
        %3445 = vmatpush1.msra.mxu0 0.0
        %3446 = vmatprep.subr.mxu0 0.0
        %3447 = vmatpush1.msra.mxu0 0.0
        %3448 = vmatprep.subr.mxu0 0.0
        %3449 = vmatpush1.msra.mxu0 0.0
        %3450 = vmatprep.subr.mxu0 0.0
        %3451 = vmatpush1.msra.mxu0 0.0
        %3452 = vmatprep.subr.mxu0 0.0
        %3453 = vmatpush1.msra.mxu0 0.0
        %3454 = vmatprep.subr.mxu0 0.0
        %3455 = vmatpush1.msra.mxu0 0.0
        %3456 = vmatprep.subr.mxu0 0.0
        %3457 = vmatpush1.msra.mxu0 0.0
        %3458 = vmatprep.subr.mxu0 0.0
        %3459 = vmatpush1.msra.mxu0 0.0
        %3460 = vmatprep.subr.mxu0 0.0
        %3461 = vmatpush1.msra.mxu0 0.0
        %3462 = vmatprep.mubr.f32.mxu0 0.0
        %3463 = vmatmul.mubr.f32.gmra.mrb[0].mxu0 %v3349
        %v3464 = vpop.f32.mrb[0].mxu0
        %v3465 = vadd.f32 0.0, %v3464
        %v3466 = vpop.f32.mrb[0].mxu0
        %3467 = vmatprep.mubr.f32.mxu0 0.0
        %3468 = vmatmul.mubr.f32.gmra.mrb[0].mxu0 %v3350
        %v3469 = vpop.f32.mrb[0].mxu0
        %v3470 = vadd.f32 0.0, %v3469
        %v3471 = vpop.f32.mrb[0].mxu0
        %3472 = vmatprep.mubr.f32.mxu0 0.0
        %3473 = vmatmul.mubr.f32.gmra.mrb[0].mxu0 %v3351
        %v3474 = vpop.f32.mrb[0].mxu0
        %v3475 = vadd.f32 0.0, %v3474
        %v3476 = vpop.f32.mrb[0].mxu0
        %3477 = vmatprep.mubr.f32.mxu0 0.0
        %3478 = vmatmul.mubr.f32.gmra.mrb[0].mxu0 %v3352
        %v3479 = vpop.f32.mrb[0].mxu0
        %v3480 = vadd.f32 0.0, %v3479
        %v3481 = vpop.f32.mrb[0].mxu0
        %3482 = vmatprep.mubr.f32.mxu0 0.0
        %3483 = vmatmul.mubr.f32.gmra.mrb[0].mxu0 %v3353
        %v3484 = vpop.f32.mrb[0].mxu0
        %v3485 = vadd.f32 0.0, %v3484
        %v3486 = vpop.f32.mrb[0].mxu0
        %3487 = vmatprep.mubr.f32.mxu0 0.0
        %3488 = vmatmul.mubr.f32.gmra.mrb[0].mxu0 %v3354
        %v3489 = vpop.f32.mrb[0].mxu0
        %v3490 = vadd.f32 0.0, %v3489
        %v3491 = vpop.f32.mrb[0].mxu0
        %3492 = vmatprep.mubr.f32.mxu0 0.0
        %3493 = vmatmul.mubr.f32.gmra.mrb[0].mxu0 %v3355
        %v3494 = vpop.f32.mrb[0].mxu0
        %v3495 = vadd.f32 0.0, %v3494
        %v3496 = vpop.f32.mrb[0].mxu0
        %3497 = vmatprep.mubr.f32.mxu0 0.0
        %3498 = vmatmul.mubr.f32.gmra.mrb[0].mxu0 %v3356
        %v3499 = vpop.f32.mrb[0].mxu0
        %v3500 = vadd.f32 0.0, %v3499
        %v3501 = vpop.f32.mrb[0].mxu0
        %3502 = vmatprep.mubr.f32.mxu0 0.0
        %3503 = vmatmul.mubr.f32.gmra.mrb[0].mxu0 %v3357
        %v3504 = vpop.f32.mrb[0].mxu0
        %v3505 = vadd.f32 0.0, %v3504
        %v3506 = vpop.f32.mrb[0].mxu0
        %3507 = vmatprep.mubr.f32.mxu0 0.0
        %3508 = vmatmul.mubr.f32.gmra.mrb[0].mxu0 %v3358
        %v3509 = vpop.f32.mrb[0].mxu0
        %v3510 = vadd.f32 0.0, %v3509
        %v3511 = vpop.f32.mrb[0].mxu0
        %3512 = vmatprep.mubr.f32.mxu0 0.0
        %3513 = vmatmul.mubr.f32.gmra.mrb[0].mxu0 %v3359
        %v3514 = vpop.f32.mrb[0].mxu0
        %v3515 = vadd.f32 0.0, %v3514
        %v3516 = vpop.f32.mrb[0].mxu0
        %3517 = vmatprep.mubr.f32.mxu0 0.0
        %3518 = vmatmul.mubr.f32.gmra.mrb[0].mxu0 %v3360
        %v3519 = vpop.f32.mrb[0].mxu0
        %v3520 = vadd.f32 0.0, %v3519
        %v3521 = vpop.f32.mrb[0].mxu0
        %3522 = vmatprep.mubr.f32.mxu0 0.0
        %3523 = vmatmul.mubr.f32.gmra.mrb[0].mxu0 %v3361
        %v3524 = vpop.f32.mrb[0].mxu0
        %v3525 = vadd.f32 0.0, %v3524
        %v3526 = vpop.f32.mrb[0].mxu0
        %3527 = vmatprep.mubr.f32.mxu0 0.0
        %3528 = vmatmul.mubr.f32.gmra.mrb[0].mxu0 %v3362
        %v3529 = vpop.f32.mrb[0].mxu0
        %v3530 = vadd.f32 0.0, %v3529
        %v3531 = vpop.f32.mrb[0].mxu0
        %3532 = vmatprep.mubr.f32.mxu0 0.0
        %3533 = vmatmul.mubr.f32.gmra.mrb[0].mxu0 %v3363
        %v3534 = vpop.f32.mrb[0].mxu0
        %v3535 = vadd.f32 0.0, %v3534
        %v3536 = vpop.f32.mrb[0].mxu0
        %3537 = vmatprep.mubr.f32.mxu0 0.0
        %3538 = vmatmul.mubr.f32.gmra.mrb[0].mxu0 %v3364
        %v3539 = vpop.f32.mrb[0].mxu0
        %v3540 = vadd.f32 0.0, %v3539
        %v3541 = vpop.f32.mrb[0].mxu0
        %3542 = vmatprep.mubr.f32.mxu0 0.0
        %3543 = vmatmul.mubr.f32.gmra.mrb[0].mxu0 %v3365
        %v3544 = vpop.f32.mrb[0].mxu0
        %v3545 = vadd.f32 0.0, %v3544
        %v3546 = vpop.f32.mrb[0].mxu0
        %3547 = vmatprep.mubr.f32.mxu0 0.0
        %3548 = vmatmul.mubr.f32.gmra.mrb[0].mxu0 %v3366
        %v3549 = vpop.f32.mrb[0].mxu0
        %v3550 = vadd.f32 0.0, %v3549
        %v3551 = vpop.f32.mrb[0].mxu0
        %3552 = vmatprep.mubr.f32.mxu0 0.0
        %3553 = vmatmul.mubr.f32.gmra.mrb[0].mxu0 %v3367
        %v3554 = vpop.f32.mrb[0].mxu0
        %v3555 = vadd.f32 0.0, %v3554
        %v3556 = vpop.f32.mrb[0].mxu0
        %3557 = vmatprep.mubr.f32.mxu0 0.0
        %3558 = vmatmul.mubr.f32.gmra.mrb[0].mxu0 %v3368
        %v3559 = vpop.f32.mrb[0].mxu0
        %v3560 = vadd.f32 0.0, %v3559
        %v3561 = vpop.f32.mrb[0].mxu0
        %3562 = vmatprep.mubr.f32.mxu0 0.0
        %3563 = vmatmul.mubr.f32.gmra.mrb[0].mxu0 %v3369
        %v3564 = vpop.f32.mrb[0].mxu0
        %v3565 = vadd.f32 0.0, %v3564
        %v3566 = vpop.f32.mrb[0].mxu0
        %3567 = vmatprep.mubr.f32.mxu0 0.0
        %3568 = vmatmul.mubr.f32.gmra.mrb[0].mxu0 %v3370
        %v3569 = vpop.f32.mrb[0].mxu0
        %v3570 = vadd.f32 0.0, %v3569
        %v3571 = vpop.f32.mrb[0].mxu0
        %3572 = vmatprep.mubr.f32.mxu0 0.0
        %3573 = vmatmul.mubr.f32.gmra.mrb[0].mxu0 %v3371
        %v3574 = vpop.f32.mrb[0].mxu0
        %v3575 = vadd.f32 0.0, %v3574
        %v3576 = vpop.f32.mrb[0].mxu0
        %3577 = vmatprep.mubr.f32.mxu0 0.0
        %3578 = vmatmul.mubr.f32.gmra.mrb[0].mxu0 %v3372
        %v3579 = vpop.f32.mrb[0].mxu0
        %v3580 = vadd.f32 0.0, %v3579
        %v3581 = vpop.f32.mrb[0].mxu0
        %3582 = vmatprep.mubr.f32.mxu0 0.0
        %3583 = vmatmul.mubr.f32.gmra.mrb[0].mxu0 %v3373
        %v3584 = vpop.f32.mrb[0].mxu0
        %v3585 = vadd.f32 0.0, %v3584
        %v3586 = vpop.f32.mrb[0].mxu0
        %3587 = vmatprep.mubr.f32.mxu0 0.0
        %3588 = vmatmul.mubr.f32.gmra.mrb[0].mxu0 %v3374
        %v3589 = vpop.f32.mrb[0].mxu0
        %v3590 = vadd.f32 0.0, %v3589
        %v3591 = vpop.f32.mrb[0].mxu0
        %3592 = vmatprep.mubr.f32.mxu0 0.0
        %3593 = vmatmul.mubr.f32.gmra.mrb[0].mxu0 %v3375
        %v3594 = vpop.f32.mrb[0].mxu0
        %v3595 = vadd.f32 0.0, %v3594
        %v3596 = vpop.f32.mrb[0].mxu0
        %3597 = vmatprep.mubr.f32.mxu0 0.0
        %3598 = vmatmul.mubr.f32.gmra.mrb[0].mxu0 %v3376
        %v3599 = vpop.f32.mrb[0].mxu0
        %v3600 = vadd.f32 0.0, %v3599
        %v3601 = vpop.f32.mrb[0].mxu0
        %3602 = vmatprep.mubr.f32.mxu0 0.0
        %3603 = vmatmul.mubr.f32.gmra.mrb[0].mxu0 %v3377
        %v3604 = vpop.f32.mrb[0].mxu0
        %v3605 = vadd.f32 0.0, %v3604
        %v3606 = vpop.f32.mrb[0].mxu0
        %3607 = vmatprep.mubr.f32.mxu0 0.0
        %3608 = vmatmul.mubr.f32.gmra.mrb[0].mxu0 %v3378
        %v3609 = vpop.f32.mrb[0].mxu0
        %v3610 = vadd.f32 0.0, %v3609
        %v3611 = vpop.f32.mrb[0].mxu0
        %3612 = vmatprep.mubr.f32.mxu0 0.0
        %3613 = vmatmul.mubr.f32.gmra.mrb[0].mxu0 %v3379
        %v3614 = vpop.f32.mrb[0].mxu0
        %v3615 = vadd.f32 0.0, %v3614
        %v3616 = vpop.f32.mrb[0].mxu0
        %3617 = vmatprep.mubr.f32.mxu0 0.0
        %3618 = vmatmul.mubr.f32.gmra.mrb[0].mxu0 %v3380
        %v3619 = vpop.f32.mrb[0].mxu0
        %v3620 = vadd.f32 0.0, %v3619
        %v3621 = vpop.f32.mrb[0].mxu0
        %3622 = vdwg.mxu0
        %v3623 = vadd.f32 %v3317, %v3465
        %v3624 = vadd.f32 %v3318, %v3470
        %v3625 = vadd.f32 %v3319, %v3475
        %v3626 = vadd.f32 %v3320, %v3480
        %v3627 = vadd.f32 %v3321, %v3485
        %v3628 = vadd.f32 %v3322, %v3490
        %v3629 = vadd.f32 %v3323, %v3495
        %v3630 = vadd.f32 %v3324, %v3500
        %v3631 = vadd.f32 %v3325, %v3505
        %v3632 = vadd.f32 %v3326, %v3510
        %v3633 = vadd.f32 %v3327, %v3515
        %v3634 = vadd.f32 %v3328, %v3520
        %v3635 = vadd.f32 %v3329, %v3525
        %v3636 = vadd.f32 %v3330, %v3530
        %v3637 = vadd.f32 %v3331, %v3535
        %v3638 = vadd.f32 %v3332, %v3540
        %v3639 = vadd.f32 %v3333, %v3545
        %v3640 = vadd.f32 %v3334, %v3550
        %v3641 = vadd.f32 %v3335, %v3555
        %v3642 = vadd.f32 %v3336, %v3560
        %v3643 = vadd.f32 %v3337, %v3565
        %v3644 = vadd.f32 %v3338, %v3570
        %v3645 = vadd.f32 %v3339, %v3575
        %v3646 = vadd.f32 %v3340, %v3580
        %v3647 = vadd.f32 %v3341, %v3585
        %v3648 = vadd.f32 %v3342, %v3590
        %v3649 = vadd.f32 %v3343, %v3595
        %v3650 = vadd.f32 %v3344, %v3600
        %v3651 = vadd.f32 %v3345, %v3605
        %v3652 = vadd.f32 %v3346, %v3610
        %v3653 = vadd.f32 %v3347, %v3615
        %v3654 = vadd.f32 %v3348, %v3620
        %v3655 = vld [vmem:[%s2463 + $0x1] sm:$0xff]
        %v3656 = vld [vmem:[%s2463 + $0x9] sm:$0xff]
        %v3657 = vld [vmem:[%s2463 + $0x19] sm:$0xff]
        %v3658 = vld [vmem:[%s2463 + $0x21] sm:$0xff]
        %v3659 = vld [vmem:[%s2463 + $0x31] sm:$0xff]
        %v3660 = vld [vmem:[%s2463 + $0x39] sm:$0xff]
        %v3661 = vld [vmem:[%s2463 + $0x49] sm:$0xff]
        %v3662 = vld [vmem:[%s2463 + $0x51] sm:$0xff]
        %v3663 = vld [vmem:[%s2463 + $0x61] sm:$0xff]
        %v3664 = vld [vmem:[%s2463 + $0x69] sm:$0xff]
        %v3665 = vld [vmem:[%s2463 + $0x79] sm:$0xff]
        %v3666 = vld [vmem:[%s2463 + $0x81] sm:$0xff]
        %v3667 = vld [vmem:[%s2463 + $0x91] sm:$0xff]
        %v3668 = vld [vmem:[%s2463 + $0x99] sm:$0xff]
        %v3669 = vld [vmem:[%s2463 + $0xa9] sm:$0xff]
        %v3670 = vld [vmem:[%s2463 + $0xb1] sm:$0xff]
        %v3671 = vld [vmem:[%s2463 + $0xc1] sm:$0xff]
        %v3672 = vld [vmem:[%s2463 + $0xc9] sm:$0xff]
        %v3673 = vld [vmem:[%s2463 + $0xd9] sm:$0xff]
        %v3674 = vld [vmem:[%s2463 + $0xe1] sm:$0xff]
        %v3675 = vld [vmem:[%s2463 + $0xf1] sm:$0xff]
        %v3676 = vld [vmem:[%s2463 + $0xf9] sm:$0xff]
        %v3677 = vld [vmem:[%s2463 + $0x109] sm:$0xff]
        %v3678 = vld [vmem:[%s2463 + $0x111] sm:$0xff]
        %v3679 = vld [vmem:[%s2463 + $0x121] sm:$0xff]
        %v3680 = vld [vmem:[%s2463 + $0x129] sm:$0xff]
        %v3681 = vld [vmem:[%s2463 + $0x139] sm:$0xff]
        %v3682 = vld [vmem:[%s2463 + $0x141] sm:$0xff]
        %v3683 = vld [vmem:[%s2463 + $0x151] sm:$0xff]
        %v3684 = vld [vmem:[%s2463 + $0x159] sm:$0xff]
        %v3685 = vld [vmem:[%s2463 + $0x169] sm:$0xff]
        %v3686 = vld [vmem:[%s2463 + $0x171] sm:$0xff]
        %s3687 = scalar_lea.vmem [#allocation4], 512
        %v3688 = vld [vmem:[%s3687] sm:$0xff]
        %v3689 = vld [vmem:[%s3687 + $0x8] sm:$0xff]
        %v3690 = vld [vmem:[%s3687 + $0x10] sm:$0xff]
        %v3691 = vld [vmem:[%s3687 + $0x18] sm:$0xff]
        %v3692 = vld [vmem:[%s3687 + $0x20] sm:$0xff]
        %v3693 = vld [vmem:[%s3687 + $0x28] sm:$0xff]
        %v3694 = vld [vmem:[%s3687 + $0x30] sm:$0xff]
        %v3695 = vld [vmem:[%s3687 + $0x38] sm:$0xff]
        %v3696 = vld [vmem:[%s3687 + $0x40] sm:$0xff]
        %v3697 = vld [vmem:[%s3687 + $0x48] sm:$0xff]
        %v3698 = vld [vmem:[%s3687 + $0x50] sm:$0xff]
        %v3699 = vld [vmem:[%s3687 + $0x58] sm:$0xff]
        %v3700 = vld [vmem:[%s3687 + $0x60] sm:$0xff]
        %v3701 = vld [vmem:[%s3687 + $0x68] sm:$0xff]
        %v3702 = vld [vmem:[%s3687 + $0x70] sm:$0xff]
        %v3703 = vld [vmem:[%s3687 + $0x78] sm:$0xff]
        %3704 = vmatprep.subr.mxu0 0.0
        %3705 = vmatpush1.msra.mxu0 %v3688
        %3706 = vmatprep.subr.mxu0 0.0
        %3707 = vmatpush1.msra.mxu0 %v3689
        %3708 = vmatprep.subr.mxu0 0.0
        %3709 = vmatpush1.msra.mxu0 %v3690
        %3710 = vmatprep.subr.mxu0 0.0
        %3711 = vmatpush1.msra.mxu0 %v3691
        %3712 = vmatprep.subr.mxu0 0.0
        %3713 = vmatpush1.msra.mxu0 %v3692
        %3714 = vmatprep.subr.mxu0 0.0
        %3715 = vmatpush1.msra.mxu0 %v3693
        %3716 = vmatprep.subr.mxu0 0.0
        %3717 = vmatpush1.msra.mxu0 %v3694
        %3718 = vmatprep.subr.mxu0 0.0
        %3719 = vmatpush1.msra.mxu0 %v3695
        %3720 = vmatprep.subr.mxu0 0.0
        %3721 = vmatpush1.msra.mxu0 %v3696
        %3722 = vmatprep.subr.mxu0 0.0
        %3723 = vmatpush1.msra.mxu0 %v3697
        %3724 = vmatprep.subr.mxu0 0.0
        %3725 = vmatpush1.msra.mxu0 %v3698
        %3726 = vmatprep.subr.mxu0 0.0
        %3727 = vmatpush1.msra.mxu0 %v3699
        %3728 = vmatprep.subr.mxu0 0.0
        %3729 = vmatpush1.msra.mxu0 %v3700
        %3730 = vmatprep.subr.mxu0 0.0
        %3731 = vmatpush1.msra.mxu0 %v3701
        %3732 = vmatprep.subr.mxu0 0.0
        %3733 = vmatpush1.msra.mxu0 %v3702
        %3734 = vmatprep.subr.mxu0 0.0
        %3735 = vmatpush1.msra.mxu0 %v3703
        %3736 = vmatprep.subr.mxu0 0.0
        %3737 = vmatpush1.msra.mxu0 0.0
        %3738 = vmatprep.subr.mxu0 0.0
        %3739 = vmatpush1.msra.mxu0 0.0
        %3740 = vmatprep.subr.mxu0 0.0
        %3741 = vmatpush1.msra.mxu0 0.0
        %3742 = vmatprep.subr.mxu0 0.0
        %3743 = vmatpush1.msra.mxu0 0.0
        %3744 = vmatprep.subr.mxu0 0.0
        %3745 = vmatpush1.msra.mxu0 0.0
        %3746 = vmatprep.subr.mxu0 0.0
        %3747 = vmatpush1.msra.mxu0 0.0
        %3748 = vmatprep.subr.mxu0 0.0
        %3749 = vmatpush1.msra.mxu0 0.0
        %3750 = vmatprep.subr.mxu0 0.0
        %3751 = vmatpush1.msra.mxu0 0.0
        %3752 = vmatprep.subr.mxu0 0.0
        %3753 = vmatpush1.msra.mxu0 0.0
        %3754 = vmatprep.subr.mxu0 0.0
        %3755 = vmatpush1.msra.mxu0 0.0
        %3756 = vmatprep.subr.mxu0 0.0
        %3757 = vmatpush1.msra.mxu0 0.0
        %3758 = vmatprep.subr.mxu0 0.0
        %3759 = vmatpush1.msra.mxu0 0.0
        %3760 = vmatprep.subr.mxu0 0.0
        %3761 = vmatpush1.msra.mxu0 0.0
        %3762 = vmatprep.subr.mxu0 0.0
        %3763 = vmatpush1.msra.mxu0 0.0
        %3764 = vmatprep.subr.mxu0 0.0
        %3765 = vmatpush1.msra.mxu0 0.0
        %3766 = vmatprep.subr.mxu0 0.0
        %3767 = vmatpush1.msra.mxu0 0.0
        %3768 = vmatprep.mubr.f32.mxu0 0.0
        %3769 = vmatmul.mubr.f32.gmra.mrb[0].mxu0 %v3655
        %v3770 = vpop.f32.mrb[0].mxu0
        %v3771 = vadd.f32 0.0, %v3770
        %v3772 = vpop.f32.mrb[0].mxu0
        %3773 = vmatprep.mubr.f32.mxu0 0.0
        %3774 = vmatmul.mubr.f32.gmra.mrb[0].mxu0 %v3656
        %v3775 = vpop.f32.mrb[0].mxu0
        %v3776 = vadd.f32 0.0, %v3775
        %v3777 = vpop.f32.mrb[0].mxu0
        %3778 = vmatprep.mubr.f32.mxu0 0.0
        %3779 = vmatmul.mubr.f32.gmra.mrb[0].mxu0 %v3657
        %v3780 = vpop.f32.mrb[0].mxu0
        %v3781 = vadd.f32 0.0, %v3780
        %v3782 = vpop.f32.mrb[0].mxu0
        %3783 = vmatprep.mubr.f32.mxu0 0.0
        %3784 = vmatmul.mubr.f32.gmra.mrb[0].mxu0 %v3658
        %v3785 = vpop.f32.mrb[0].mxu0
        %v3786 = vadd.f32 0.0, %v3785
        %v3787 = vpop.f32.mrb[0].mxu0
        %3788 = vmatprep.mubr.f32.mxu0 0.0
        %3789 = vmatmul.mubr.f32.gmra.mrb[0].mxu0 %v3659
        %v3790 = vpop.f32.mrb[0].mxu0
        %v3791 = vadd.f32 0.0, %v3790
        %v3792 = vpop.f32.mrb[0].mxu0
        %3793 = vmatprep.mubr.f32.mxu0 0.0
        %3794 = vmatmul.mubr.f32.gmra.mrb[0].mxu0 %v3660
        %v3795 = vpop.f32.mrb[0].mxu0
        %v3796 = vadd.f32 0.0, %v3795
        %v3797 = vpop.f32.mrb[0].mxu0
        %3798 = vmatprep.mubr.f32.mxu0 0.0
        %3799 = vmatmul.mubr.f32.gmra.mrb[0].mxu0 %v3661
        %v3800 = vpop.f32.mrb[0].mxu0
        %v3801 = vadd.f32 0.0, %v3800
        %v3802 = vpop.f32.mrb[0].mxu0
        %3803 = vmatprep.mubr.f32.mxu0 0.0
        %3804 = vmatmul.mubr.f32.gmra.mrb[0].mxu0 %v3662
        %v3805 = vpop.f32.mrb[0].mxu0
        %v3806 = vadd.f32 0.0, %v3805
        %v3807 = vpop.f32.mrb[0].mxu0
        %3808 = vmatprep.mubr.f32.mxu0 0.0
        %3809 = vmatmul.mubr.f32.gmra.mrb[0].mxu0 %v3663
        %v3810 = vpop.f32.mrb[0].mxu0
        %v3811 = vadd.f32 0.0, %v3810
        %v3812 = vpop.f32.mrb[0].mxu0
        %3813 = vmatprep.mubr.f32.mxu0 0.0
        %3814 = vmatmul.mubr.f32.gmra.mrb[0].mxu0 %v3664
        %v3815 = vpop.f32.mrb[0].mxu0
        %v3816 = vadd.f32 0.0, %v3815
        %v3817 = vpop.f32.mrb[0].mxu0
        %3818 = vmatprep.mubr.f32.mxu0 0.0
        %3819 = vmatmul.mubr.f32.gmra.mrb[0].mxu0 %v3665
        %v3820 = vpop.f32.mrb[0].mxu0
        %v3821 = vadd.f32 0.0, %v3820
        %v3822 = vpop.f32.mrb[0].mxu0
        %3823 = vmatprep.mubr.f32.mxu0 0.0
        %3824 = vmatmul.mubr.f32.gmra.mrb[0].mxu0 %v3666
        %v3825 = vpop.f32.mrb[0].mxu0
        %v3826 = vadd.f32 0.0, %v3825
        %v3827 = vpop.f32.mrb[0].mxu0
        %3828 = vmatprep.mubr.f32.mxu0 0.0
        %3829 = vmatmul.mubr.f32.gmra.mrb[0].mxu0 %v3667
        %v3830 = vpop.f32.mrb[0].mxu0
        %v3831 = vadd.f32 0.0, %v3830
        %v3832 = vpop.f32.mrb[0].mxu0
        %3833 = vmatprep.mubr.f32.mxu0 0.0
        %3834 = vmatmul.mubr.f32.gmra.mrb[0].mxu0 %v3668
        %v3835 = vpop.f32.mrb[0].mxu0
        %v3836 = vadd.f32 0.0, %v3835
        %v3837 = vpop.f32.mrb[0].mxu0
        %3838 = vmatprep.mubr.f32.mxu0 0.0
        %3839 = vmatmul.mubr.f32.gmra.mrb[0].mxu0 %v3669
        %v3840 = vpop.f32.mrb[0].mxu0
        %v3841 = vadd.f32 0.0, %v3840
        %v3842 = vpop.f32.mrb[0].mxu0
        %3843 = vmatprep.mubr.f32.mxu0 0.0
        %3844 = vmatmul.mubr.f32.gmra.mrb[0].mxu0 %v3670
        %v3845 = vpop.f32.mrb[0].mxu0
        %v3846 = vadd.f32 0.0, %v3845
        %v3847 = vpop.f32.mrb[0].mxu0
        %3848 = vmatprep.mubr.f32.mxu0 0.0
        %3849 = vmatmul.mubr.f32.gmra.mrb[0].mxu0 %v3671
        %v3850 = vpop.f32.mrb[0].mxu0
        %v3851 = vadd.f32 0.0, %v3850
        %v3852 = vpop.f32.mrb[0].mxu0
        %3853 = vmatprep.mubr.f32.mxu0 0.0
        %3854 = vmatmul.mubr.f32.gmra.mrb[0].mxu0 %v3672
        %v3855 = vpop.f32.mrb[0].mxu0
        %v3856 = vadd.f32 0.0, %v3855
        %v3857 = vpop.f32.mrb[0].mxu0
        %3858 = vmatprep.mubr.f32.mxu0 0.0
        %3859 = vmatmul.mubr.f32.gmra.mrb[0].mxu0 %v3673
        %v3860 = vpop.f32.mrb[0].mxu0
        %v3861 = vadd.f32 0.0, %v3860
        %v3862 = vpop.f32.mrb[0].mxu0
        %3863 = vmatprep.mubr.f32.mxu0 0.0
        %3864 = vmatmul.mubr.f32.gmra.mrb[0].mxu0 %v3674
        %v3865 = vpop.f32.mrb[0].mxu0
        %v3866 = vadd.f32 0.0, %v3865
        %v3867 = vpop.f32.mrb[0].mxu0
        %3868 = vmatprep.mubr.f32.mxu0 0.0
        %3869 = vmatmul.mubr.f32.gmra.mrb[0].mxu0 %v3675
        %v3870 = vpop.f32.mrb[0].mxu0
        %v3871 = vadd.f32 0.0, %v3870
        %v3872 = vpop.f32.mrb[0].mxu0
        %3873 = vmatprep.mubr.f32.mxu0 0.0
        %3874 = vmatmul.mubr.f32.gmra.mrb[0].mxu0 %v3676
        %v3875 = vpop.f32.mrb[0].mxu0
        %v3876 = vadd.f32 0.0, %v3875
        %v3877 = vpop.f32.mrb[0].mxu0
        %3878 = vmatprep.mubr.f32.mxu0 0.0
        %3879 = vmatmul.mubr.f32.gmra.mrb[0].mxu0 %v3677
        %v3880 = vpop.f32.mrb[0].mxu0
        %v3881 = vadd.f32 0.0, %v3880
        %v3882 = vpop.f32.mrb[0].mxu0
        %3883 = vmatprep.mubr.f32.mxu0 0.0
        %3884 = vmatmul.mubr.f32.gmra.mrb[0].mxu0 %v3678
        %v3885 = vpop.f32.mrb[0].mxu0
        %v3886 = vadd.f32 0.0, %v3885
        %v3887 = vpop.f32.mrb[0].mxu0
        %3888 = vmatprep.mubr.f32.mxu0 0.0
        %3889 = vmatmul.mubr.f32.gmra.mrb[0].mxu0 %v3679
        %v3890 = vpop.f32.mrb[0].mxu0
        %v3891 = vadd.f32 0.0, %v3890
        %v3892 = vpop.f32.mrb[0].mxu0
        %3893 = vmatprep.mubr.f32.mxu0 0.0
        %3894 = vmatmul.mubr.f32.gmra.mrb[0].mxu0 %v3680
        %v3895 = vpop.f32.mrb[0].mxu0
        %v3896 = vadd.f32 0.0, %v3895
        %v3897 = vpop.f32.mrb[0].mxu0
        %3898 = vmatprep.mubr.f32.mxu0 0.0
        %3899 = vmatmul.mubr.f32.gmra.mrb[0].mxu0 %v3681
        %v3900 = vpop.f32.mrb[0].mxu0
        %v3901 = vadd.f32 0.0, %v3900
        %v3902 = vpop.f32.mrb[0].mxu0
        %3903 = vmatprep.mubr.f32.mxu0 0.0
        %3904 = vmatmul.mubr.f32.gmra.mrb[0].mxu0 %v3682
        %v3905 = vpop.f32.mrb[0].mxu0
        %v3906 = vadd.f32 0.0, %v3905
        %v3907 = vpop.f32.mrb[0].mxu0
        %3908 = vmatprep.mubr.f32.mxu0 0.0
        %3909 = vmatmul.mubr.f32.gmra.mrb[0].mxu0 %v3683
        %v3910 = vpop.f32.mrb[0].mxu0
        %v3911 = vadd.f32 0.0, %v3910
        %v3912 = vpop.f32.mrb[0].mxu0
        %3913 = vmatprep.mubr.f32.mxu0 0.0
        %3914 = vmatmul.mubr.f32.gmra.mrb[0].mxu0 %v3684
        %v3915 = vpop.f32.mrb[0].mxu0
        %v3916 = vadd.f32 0.0, %v3915
        %v3917 = vpop.f32.mrb[0].mxu0
        %3918 = vmatprep.mubr.f32.mxu0 0.0
        %3919 = vmatmul.mubr.f32.gmra.mrb[0].mxu0 %v3685
        %v3920 = vpop.f32.mrb[0].mxu0
        %v3921 = vadd.f32 0.0, %v3920
        %v3922 = vpop.f32.mrb[0].mxu0
        %3923 = vmatprep.mubr.f32.mxu0 0.0
        %3924 = vmatmul.mubr.f32.gmra.mrb[0].mxu0 %v3686
        %v3925 = vpop.f32.mrb[0].mxu0
        %v3926 = vadd.f32 0.0, %v3925
        %v3927 = vpop.f32.mrb[0].mxu0
        %3928 = vdwg.mxu0
        %v3929 = vadd.f32 %v3623, %v3771
        %v3930 = vadd.f32 %v3624, %v3776
        %v3931 = vadd.f32 %v3625, %v3781
        %v3932 = vadd.f32 %v3626, %v3786
        %v3933 = vadd.f32 %v3627, %v3791
        %v3934 = vadd.f32 %v3628, %v3796
        %v3935 = vadd.f32 %v3629, %v3801
        %v3936 = vadd.f32 %v3630, %v3806
        %v3937 = vadd.f32 %v3631, %v3811
        %v3938 = vadd.f32 %v3632, %v3816
        %v3939 = vadd.f32 %v3633, %v3821
        %v3940 = vadd.f32 %v3634, %v3826
        %v3941 = vadd.f32 %v3635, %v3831
        %v3942 = vadd.f32 %v3636, %v3836
        %v3943 = vadd.f32 %v3637, %v3841
        %v3944 = vadd.f32 %v3638, %v3846
        %v3945 = vadd.f32 %v3639, %v3851
        %v3946 = vadd.f32 %v3640, %v3856
        %v3947 = vadd.f32 %v3641, %v3861
        %v3948 = vadd.f32 %v3642, %v3866
        %v3949 = vadd.f32 %v3643, %v3871
        %v3950 = vadd.f32 %v3644, %v3876
        %v3951 = vadd.f32 %v3645, %v3881
        %v3952 = vadd.f32 %v3646, %v3886
        %v3953 = vadd.f32 %v3647, %v3891
        %v3954 = vadd.f32 %v3648, %v3896
        %v3955 = vadd.f32 %v3649, %v3901
        %v3956 = vadd.f32 %v3650, %v3906
        %v3957 = vadd.f32 %v3651, %v3911
        %v3958 = vadd.f32 %v3652, %v3916
        %v3959 = vadd.f32 %v3653, %v3921
        %v3960 = vadd.f32 %v3654, %v3926
        %v3961 = vld [vmem:[%s2463 + $0x2] sm:$0xff]
        %v3962 = vld [vmem:[%s2463 + $0xa] sm:$0xff]
        %v3963 = vld [vmem:[%s2463 + $0x1a] sm:$0xff]
        %v3964 = vld [vmem:[%s2463 + $0x22] sm:$0xff]
        %v3965 = vld [vmem:[%s2463 + $0x32] sm:$0xff]
        %v3966 = vld [vmem:[%s2463 + $0x3a] sm:$0xff]
        %v3967 = vld [vmem:[%s2463 + $0x4a] sm:$0xff]
        %v3968 = vld [vmem:[%s2463 + $0x52] sm:$0xff]
        %v3969 = vld [vmem:[%s2463 + $0x62] sm:$0xff]
        %v3970 = vld [vmem:[%s2463 + $0x6a] sm:$0xff]
        %v3971 = vld [vmem:[%s2463 + $0x7a] sm:$0xff]
        %v3972 = vld [vmem:[%s2463 + $0x82] sm:$0xff]
        %v3973 = vld [vmem:[%s2463 + $0x92] sm:$0xff]
        %v3974 = vld [vmem:[%s2463 + $0x9a] sm:$0xff]
        %v3975 = vld [vmem:[%s2463 + $0xaa] sm:$0xff]
        %v3976 = vld [vmem:[%s2463 + $0xb2] sm:$0xff]
        %v3977 = vld [vmem:[%s2463 + $0xc2] sm:$0xff]
        %v3978 = vld [vmem:[%s2463 + $0xca] sm:$0xff]
        %v3979 = vld [vmem:[%s2463 + $0xda] sm:$0xff]
        %v3980 = vld [vmem:[%s2463 + $0xe2] sm:$0xff]
        %v3981 = vld [vmem:[%s2463 + $0xf2] sm:$0xff]
        %v3982 = vld [vmem:[%s2463 + $0xfa] sm:$0xff]
        %v3983 = vld [vmem:[%s2463 + $0x10a] sm:$0xff]
        %v3984 = vld [vmem:[%s2463 + $0x112] sm:$0xff]
        %v3985 = vld [vmem:[%s2463 + $0x122] sm:$0xff]
        %v3986 = vld [vmem:[%s2463 + $0x12a] sm:$0xff]
        %v3987 = vld [vmem:[%s2463 + $0x13a] sm:$0xff]
        %v3988 = vld [vmem:[%s2463 + $0x142] sm:$0xff]
        %v3989 = vld [vmem:[%s2463 + $0x152] sm:$0xff]
        %v3990 = vld [vmem:[%s2463 + $0x15a] sm:$0xff]
        %v3991 = vld [vmem:[%s2463 + $0x16a] sm:$0xff]
        %v3992 = vld [vmem:[%s2463 + $0x172] sm:$0xff]
        %s3993 = scalar_lea.vmem [#allocation4], 640
        %v3994 = vld [vmem:[%s3993] sm:$0xff]
        %v3995 = vld [vmem:[%s3993 + $0x8] sm:$0xff]
        %v3996 = vld [vmem:[%s3993 + $0x10] sm:$0xff]
        %v3997 = vld [vmem:[%s3993 + $0x18] sm:$0xff]
        %v3998 = vld [vmem:[%s3993 + $0x20] sm:$0xff]
        %v3999 = vld [vmem:[%s3993 + $0x28] sm:$0xff]
        %v4000 = vld [vmem:[%s3993 + $0x30] sm:$0xff]
        %v4001 = vld [vmem:[%s3993 + $0x38] sm:$0xff]
        %v4002 = vld [vmem:[%s3993 + $0x40] sm:$0xff]
        %v4003 = vld [vmem:[%s3993 + $0x48] sm:$0xff]
        %v4004 = vld [vmem:[%s3993 + $0x50] sm:$0xff]
        %v4005 = vld [vmem:[%s3993 + $0x58] sm:$0xff]
        %v4006 = vld [vmem:[%s3993 + $0x60] sm:$0xff]
        %v4007 = vld [vmem:[%s3993 + $0x68] sm:$0xff]
        %v4008 = vld [vmem:[%s3993 + $0x70] sm:$0xff]
        %v4009 = vld [vmem:[%s3993 + $0x78] sm:$0xff]
        %4010 = vmatprep.subr.mxu0 0.0
        %4011 = vmatpush1.msra.mxu0 %v3994
        %4012 = vmatprep.subr.mxu0 0.0
        %4013 = vmatpush1.msra.mxu0 %v3995
        %4014 = vmatprep.subr.mxu0 0.0
        %4015 = vmatpush1.msra.mxu0 %v3996
        %4016 = vmatprep.subr.mxu0 0.0
        %4017 = vmatpush1.msra.mxu0 %v3997
        %4018 = vmatprep.subr.mxu0 0.0
        %4019 = vmatpush1.msra.mxu0 %v3998
        %4020 = vmatprep.subr.mxu0 0.0
        %4021 = vmatpush1.msra.mxu0 %v3999
        %4022 = vmatprep.subr.mxu0 0.0
        %4023 = vmatpush1.msra.mxu0 %v4000
        %4024 = vmatprep.subr.mxu0 0.0
        %4025 = vmatpush1.msra.mxu0 %v4001
        %4026 = vmatprep.subr.mxu0 0.0
        %4027 = vmatpush1.msra.mxu0 %v4002
        %4028 = vmatprep.subr.mxu0 0.0
        %4029 = vmatpush1.msra.mxu0 %v4003
        %4030 = vmatprep.subr.mxu0 0.0
        %4031 = vmatpush1.msra.mxu0 %v4004
        %4032 = vmatprep.subr.mxu0 0.0
        %4033 = vmatpush1.msra.mxu0 %v4005
        %4034 = vmatprep.subr.mxu0 0.0
        %4035 = vmatpush1.msra.mxu0 %v4006
        %4036 = vmatprep.subr.mxu0 0.0
        %4037 = vmatpush1.msra.mxu0 %v4007
        %4038 = vmatprep.subr.mxu0 0.0
        %4039 = vmatpush1.msra.mxu0 %v4008
        %4040 = vmatprep.subr.mxu0 0.0
        %4041 = vmatpush1.msra.mxu0 %v4009
        %4042 = vmatprep.subr.mxu0 0.0
        %4043 = vmatpush1.msra.mxu0 0.0
        %4044 = vmatprep.subr.mxu0 0.0
        %4045 = vmatpush1.msra.mxu0 0.0
        %4046 = vmatprep.subr.mxu0 0.0
        %4047 = vmatpush1.msra.mxu0 0.0
        %4048 = vmatprep.subr.mxu0 0.0
        %4049 = vmatpush1.msra.mxu0 0.0
        %4050 = vmatprep.subr.mxu0 0.0
        %4051 = vmatpush1.msra.mxu0 0.0
        %4052 = vmatprep.subr.mxu0 0.0
        %4053 = vmatpush1.msra.mxu0 0.0
        %4054 = vmatprep.subr.mxu0 0.0
        %4055 = vmatpush1.msra.mxu0 0.0
        %4056 = vmatprep.subr.mxu0 0.0
        %4057 = vmatpush1.msra.mxu0 0.0
        %4058 = vmatprep.subr.mxu0 0.0
        %4059 = vmatpush1.msra.mxu0 0.0
        %4060 = vmatprep.subr.mxu0 0.0
        %4061 = vmatpush1.msra.mxu0 0.0
        %4062 = vmatprep.subr.mxu0 0.0
        %4063 = vmatpush1.msra.mxu0 0.0
        %4064 = vmatprep.subr.mxu0 0.0
        %4065 = vmatpush1.msra.mxu0 0.0
        %4066 = vmatprep.subr.mxu0 0.0
        %4067 = vmatpush1.msra.mxu0 0.0
        %4068 = vmatprep.subr.mxu0 0.0
        %4069 = vmatpush1.msra.mxu0 0.0
        %4070 = vmatprep.subr.mxu0 0.0
        %4071 = vmatpush1.msra.mxu0 0.0
        %4072 = vmatprep.subr.mxu0 0.0
        %4073 = vmatpush1.msra.mxu0 0.0
        %4074 = vmatprep.mubr.f32.mxu0 0.0
        %4075 = vmatmul.mubr.f32.gmra.mrb[0].mxu0 %v3961
        %v4076 = vpop.f32.mrb[0].mxu0
        %v4077 = vadd.f32 0.0, %v4076
        %v4078 = vpop.f32.mrb[0].mxu0
        %4079 = vmatprep.mubr.f32.mxu0 0.0
        %4080 = vmatmul.mubr.f32.gmra.mrb[0].mxu0 %v3962
        %v4081 = vpop.f32.mrb[0].mxu0
        %v4082 = vadd.f32 0.0, %v4081
        %v4083 = vpop.f32.mrb[0].mxu0
        %4084 = vmatprep.mubr.f32.mxu0 0.0
        %4085 = vmatmul.mubr.f32.gmra.mrb[0].mxu0 %v3963
        %v4086 = vpop.f32.mrb[0].mxu0
        %v4087 = vadd.f32 0.0, %v4086
        %v4088 = vpop.f32.mrb[0].mxu0
        %4089 = vmatprep.mubr.f32.mxu0 0.0
        %4090 = vmatmul.mubr.f32.gmra.mrb[0].mxu0 %v3964
        %v4091 = vpop.f32.mrb[0].mxu0
        %v4092 = vadd.f32 0.0, %v4091
        %v4093 = vpop.f32.mrb[0].mxu0
        %4094 = vmatprep.mubr.f32.mxu0 0.0
        %4095 = vmatmul.mubr.f32.gmra.mrb[0].mxu0 %v3965
        %v4096 = vpop.f32.mrb[0].mxu0
        %v4097 = vadd.f32 0.0, %v4096
        %v4098 = vpop.f32.mrb[0].mxu0
        %4099 = vmatprep.mubr.f32.mxu0 0.0
        %4100 = vmatmul.mubr.f32.gmra.mrb[0].mxu0 %v3966
        %v4101 = vpop.f32.mrb[0].mxu0
        %v4102 = vadd.f32 0.0, %v4101
        %v4103 = vpop.f32.mrb[0].mxu0
        %4104 = vmatprep.mubr.f32.mxu0 0.0
        %4105 = vmatmul.mubr.f32.gmra.mrb[0].mxu0 %v3967
        %v4106 = vpop.f32.mrb[0].mxu0
        %v4107 = vadd.f32 0.0, %v4106
        %v4108 = vpop.f32.mrb[0].mxu0
        %4109 = vmatprep.mubr.f32.mxu0 0.0
        %4110 = vmatmul.mubr.f32.gmra.mrb[0].mxu0 %v3968
        %v4111 = vpop.f32.mrb[0].mxu0
        %v4112 = vadd.f32 0.0, %v4111
        %v4113 = vpop.f32.mrb[0].mxu0
        %4114 = vmatprep.mubr.f32.mxu0 0.0
        %4115 = vmatmul.mubr.f32.gmra.mrb[0].mxu0 %v3969
        %v4116 = vpop.f32.mrb[0].mxu0
        %v4117 = vadd.f32 0.0, %v4116
        %v4118 = vpop.f32.mrb[0].mxu0
        %4119 = vmatprep.mubr.f32.mxu0 0.0
        %4120 = vmatmul.mubr.f32.gmra.mrb[0].mxu0 %v3970
        %v4121 = vpop.f32.mrb[0].mxu0
        %v4122 = vadd.f32 0.0, %v4121
        %v4123 = vpop.f32.mrb[0].mxu0
        %4124 = vmatprep.mubr.f32.mxu0 0.0
        %4125 = vmatmul.mubr.f32.gmra.mrb[0].mxu0 %v3971
        %v4126 = vpop.f32.mrb[0].mxu0
        %v4127 = vadd.f32 0.0, %v4126
        %v4128 = vpop.f32.mrb[0].mxu0
        %4129 = vmatprep.mubr.f32.mxu0 0.0
        %4130 = vmatmul.mubr.f32.gmra.mrb[0].mxu0 %v3972
        %v4131 = vpop.f32.mrb[0].mxu0
        %v4132 = vadd.f32 0.0, %v4131
        %v4133 = vpop.f32.mrb[0].mxu0
        %4134 = vmatprep.mubr.f32.mxu0 0.0
        %4135 = vmatmul.mubr.f32.gmra.mrb[0].mxu0 %v3973
        %v4136 = vpop.f32.mrb[0].mxu0
        %v4137 = vadd.f32 0.0, %v4136
        %v4138 = vpop.f32.mrb[0].mxu0
        %4139 = vmatprep.mubr.f32.mxu0 0.0
        %4140 = vmatmul.mubr.f32.gmra.mrb[0].mxu0 %v3974
        %v4141 = vpop.f32.mrb[0].mxu0
        %v4142 = vadd.f32 0.0, %v4141
        %v4143 = vpop.f32.mrb[0].mxu0
        %4144 = vmatprep.mubr.f32.mxu0 0.0
        %4145 = vmatmul.mubr.f32.gmra.mrb[0].mxu0 %v3975
        %v4146 = vpop.f32.mrb[0].mxu0
        %v4147 = vadd.f32 0.0, %v4146
        %v4148 = vpop.f32.mrb[0].mxu0
        %4149 = vmatprep.mubr.f32.mxu0 0.0
        %4150 = vmatmul.mubr.f32.gmra.mrb[0].mxu0 %v3976
        %v4151 = vpop.f32.mrb[0].mxu0
        %v4152 = vadd.f32 0.0, %v4151
        %v4153 = vpop.f32.mrb[0].mxu0
        %4154 = vmatprep.mubr.f32.mxu0 0.0
        %4155 = vmatmul.mubr.f32.gmra.mrb[0].mxu0 %v3977
        %v4156 = vpop.f32.mrb[0].mxu0
        %v4157 = vadd.f32 0.0, %v4156
        %v4158 = vpop.f32.mrb[0].mxu0
        %4159 = vmatprep.mubr.f32.mxu0 0.0
        %4160 = vmatmul.mubr.f32.gmra.mrb[0].mxu0 %v3978
        %v4161 = vpop.f32.mrb[0].mxu0
        %v4162 = vadd.f32 0.0, %v4161
        %v4163 = vpop.f32.mrb[0].mxu0
        %4164 = vmatprep.mubr.f32.mxu0 0.0
        %4165 = vmatmul.mubr.f32.gmra.mrb[0].mxu0 %v3979
        %v4166 = vpop.f32.mrb[0].mxu0
        %v4167 = vadd.f32 0.0, %v4166
        %v4168 = vpop.f32.mrb[0].mxu0
        %4169 = vmatprep.mubr.f32.mxu0 0.0
        %4170 = vmatmul.mubr.f32.gmra.mrb[0].mxu0 %v3980
        %v4171 = vpop.f32.mrb[0].mxu0
        %v4172 = vadd.f32 0.0, %v4171
        %v4173 = vpop.f32.mrb[0].mxu0
        %4174 = vmatprep.mubr.f32.mxu0 0.0
        %4175 = vmatmul.mubr.f32.gmra.mrb[0].mxu0 %v3981
        %v4176 = vpop.f32.mrb[0].mxu0
        %v4177 = vadd.f32 0.0, %v4176
        %v4178 = vpop.f32.mrb[0].mxu0
        %4179 = vmatprep.mubr.f32.mxu0 0.0
        %4180 = vmatmul.mubr.f32.gmra.mrb[0].mxu0 %v3982
        %v4181 = vpop.f32.mrb[0].mxu0
        %v4182 = vadd.f32 0.0, %v4181
        %v4183 = vpop.f32.mrb[0].mxu0
        %4184 = vmatprep.mubr.f32.mxu0 0.0
        %4185 = vmatmul.mubr.f32.gmra.mrb[0].mxu0 %v3983
        %v4186 = vpop.f32.mrb[0].mxu0
        %v4187 = vadd.f32 0.0, %v4186
        %v4188 = vpop.f32.mrb[0].mxu0
        %4189 = vmatprep.mubr.f32.mxu0 0.0
        %4190 = vmatmul.mubr.f32.gmra.mrb[0].mxu0 %v3984
        %v4191 = vpop.f32.mrb[0].mxu0
        %v4192 = vadd.f32 0.0, %v4191
        %v4193 = vpop.f32.mrb[0].mxu0
        %4194 = vmatprep.mubr.f32.mxu0 0.0
        %4195 = vmatmul.mubr.f32.gmra.mrb[0].mxu0 %v3985
        %v4196 = vpop.f32.mrb[0].mxu0
        %v4197 = vadd.f32 0.0, %v4196
        %v4198 = vpop.f32.mrb[0].mxu0
        %4199 = vmatprep.mubr.f32.mxu0 0.0
        %4200 = vmatmul.mubr.f32.gmra.mrb[0].mxu0 %v3986
        %v4201 = vpop.f32.mrb[0].mxu0
        %v4202 = vadd.f32 0.0, %v4201
        %v4203 = vpop.f32.mrb[0].mxu0
        %4204 = vmatprep.mubr.f32.mxu0 0.0
        %4205 = vmatmul.mubr.f32.gmra.mrb[0].mxu0 %v3987
        %v4206 = vpop.f32.mrb[0].mxu0
        %v4207 = vadd.f32 0.0, %v4206
        %v4208 = vpop.f32.mrb[0].mxu0
        %4209 = vmatprep.mubr.f32.mxu0 0.0
        %4210 = vmatmul.mubr.f32.gmra.mrb[0].mxu0 %v3988
        %v4211 = vpop.f32.mrb[0].mxu0
        %v4212 = vadd.f32 0.0, %v4211
        %v4213 = vpop.f32.mrb[0].mxu0
        %4214 = vmatprep.mubr.f32.mxu0 0.0
        %4215 = vmatmul.mubr.f32.gmra.mrb[0].mxu0 %v3989
        %v4216 = vpop.f32.mrb[0].mxu0
        %v4217 = vadd.f32 0.0, %v4216
        %v4218 = vpop.f32.mrb[0].mxu0
        %4219 = vmatprep.mubr.f32.mxu0 0.0
        %4220 = vmatmul.mubr.f32.gmra.mrb[0].mxu0 %v3990
        %v4221 = vpop.f32.mrb[0].mxu0
        %v4222 = vadd.f32 0.0, %v4221
        %v4223 = vpop.f32.mrb[0].mxu0
        %4224 = vmatprep.mubr.f32.mxu0 0.0
        %4225 = vmatmul.mubr.f32.gmra.mrb[0].mxu0 %v3991
        %v4226 = vpop.f32.mrb[0].mxu0
        %v4227 = vadd.f32 0.0, %v4226
        %v4228 = vpop.f32.mrb[0].mxu0
        %4229 = vmatprep.mubr.f32.mxu0 0.0
        %4230 = vmatmul.mubr.f32.gmra.mrb[0].mxu0 %v3992
        %v4231 = vpop.f32.mrb[0].mxu0
        %v4232 = vadd.f32 0.0, %v4231
        %v4233 = vpop.f32.mrb[0].mxu0
        %4234 = vdwg.mxu0
        %v4235 = vadd.f32 %v3929, %v4077
        %v4236 = vadd.f32 %v3930, %v4082
        %v4237 = vadd.f32 %v3931, %v4087
        %v4238 = vadd.f32 %v3932, %v4092
        %v4239 = vadd.f32 %v3933, %v4097
        %v4240 = vadd.f32 %v3934, %v4102
        %v4241 = vadd.f32 %v3935, %v4107
        %v4242 = vadd.f32 %v3936, %v4112
        %v4243 = vadd.f32 %v3937, %v4117
        %v4244 = vadd.f32 %v3938, %v4122
        %v4245 = vadd.f32 %v3939, %v4127
        %v4246 = vadd.f32 %v3940, %v4132
        %v4247 = vadd.f32 %v3941, %v4137
        %v4248 = vadd.f32 %v3942, %v4142
        %v4249 = vadd.f32 %v3943, %v4147
        %v4250 = vadd.f32 %v3944, %v4152
        %v4251 = vadd.f32 %v3945, %v4157
        %v4252 = vadd.f32 %v3946, %v4162
        %v4253 = vadd.f32 %v3947, %v4167
        %v4254 = vadd.f32 %v3948, %v4172
        %v4255 = vadd.f32 %v3949, %v4177
        %v4256 = vadd.f32 %v3950, %v4182
        %v4257 = vadd.f32 %v3951, %v4187
        %v4258 = vadd.f32 %v3952, %v4192
        %v4259 = vadd.f32 %v3953, %v4197
        %v4260 = vadd.f32 %v3954, %v4202
        %v4261 = vadd.f32 %v3955, %v4207
        %v4262 = vadd.f32 %v3956, %v4212
        %v4263 = vadd.f32 %v3957, %v4217
        %v4264 = vadd.f32 %v3958, %v4222
        %v4265 = vadd.f32 %v3959, %v4227
        %v4266 = vadd.f32 %v3960, %v4232
        %s4267 = scalar_lea.vmem [#allocation3], 48
        %v4268 = vld [vmem:[%s4267] sm:$0xff]
        %v4269 = vld [vmem:[%s4267 + $0x8] sm:$0xff]
        %v4270 = vld [vmem:[%s4267 + $0x18] sm:$0xff]
        %v4271 = vld [vmem:[%s4267 + $0x20] sm:$0xff]
        %v4272 = vld [vmem:[%s4267 + $0x30] sm:$0xff]
        %v4273 = vld [vmem:[%s4267 + $0x38] sm:$0xff]
        %v4274 = vld [vmem:[%s4267 + $0x48] sm:$0xff]
        %v4275 = vld [vmem:[%s4267 + $0x50] sm:$0xff]
        %v4276 = vld [vmem:[%s4267 + $0x60] sm:$0xff]
        %v4277 = vld [vmem:[%s4267 + $0x68] sm:$0xff]
        %v4278 = vld [vmem:[%s4267 + $0x78] sm:$0xff]
        %v4279 = vld [vmem:[%s4267 + $0x80] sm:$0xff]
        %v4280 = vld [vmem:[%s4267 + $0x90] sm:$0xff]
        %v4281 = vld [vmem:[%s4267 + $0x98] sm:$0xff]
        %v4282 = vld [vmem:[%s4267 + $0xa8] sm:$0xff]
        %v4283 = vld [vmem:[%s4267 + $0xb0] sm:$0xff]
        %v4284 = vld [vmem:[%s4267 + $0xc0] sm:$0xff]
        %v4285 = vld [vmem:[%s4267 + $0xc8] sm:$0xff]
        %v4286 = vld [vmem:[%s4267 + $0xd8] sm:$0xff]
        %v4287 = vld [vmem:[%s4267 + $0xe0] sm:$0xff]
        %v4288 = vld [vmem:[%s4267 + $0xf0] sm:$0xff]
        %v4289 = vld [vmem:[%s4267 + $0xf8] sm:$0xff]
        %v4290 = vld [vmem:[%s4267 + $0x108] sm:$0xff]
        %v4291 = vld [vmem:[%s4267 + $0x110] sm:$0xff]
        %v4292 = vld [vmem:[%s4267 + $0x120] sm:$0xff]
        %v4293 = vld [vmem:[%s4267 + $0x128] sm:$0xff]
        %v4294 = vld [vmem:[%s4267 + $0x138] sm:$0xff]
        %v4295 = vld [vmem:[%s4267 + $0x140] sm:$0xff]
        %v4296 = vld [vmem:[%s4267 + $0x150] sm:$0xff]
        %v4297 = vld [vmem:[%s4267 + $0x158] sm:$0xff]
        %v4298 = vld [vmem:[%s4267 + $0x168] sm:$0xff]
        %v4299 = vld [vmem:[%s4267 + $0x170] sm:$0xff]
        %s4300 = scalar_lea.vmem [#allocation4], 768
        %v4301 = vld [vmem:[%s4300] sm:$0xff]
        %v4302 = vld [vmem:[%s4300 + $0x8] sm:$0xff]
        %v4303 = vld [vmem:[%s4300 + $0x10] sm:$0xff]
        %v4304 = vld [vmem:[%s4300 + $0x18] sm:$0xff]
        %v4305 = vld [vmem:[%s4300 + $0x20] sm:$0xff]
        %v4306 = vld [vmem:[%s4300 + $0x28] sm:$0xff]
        %v4307 = vld [vmem:[%s4300 + $0x30] sm:$0xff]
        %v4308 = vld [vmem:[%s4300 + $0x38] sm:$0xff]
        %v4309 = vld [vmem:[%s4300 + $0x40] sm:$0xff]
        %v4310 = vld [vmem:[%s4300 + $0x48] sm:$0xff]
        %v4311 = vld [vmem:[%s4300 + $0x50] sm:$0xff]
        %v4312 = vld [vmem:[%s4300 + $0x58] sm:$0xff]
        %v4313 = vld [vmem:[%s4300 + $0x60] sm:$0xff]
        %v4314 = vld [vmem:[%s4300 + $0x68] sm:$0xff]
        %v4315 = vld [vmem:[%s4300 + $0x70] sm:$0xff]
        %v4316 = vld [vmem:[%s4300 + $0x78] sm:$0xff]
        %4317 = vmatprep.subr.mxu0 0.0
        %4318 = vmatpush1.msra.mxu0 %v4301
        %4319 = vmatprep.subr.mxu0 0.0
        %4320 = vmatpush1.msra.mxu0 %v4302
        %4321 = vmatprep.subr.mxu0 0.0
        %4322 = vmatpush1.msra.mxu0 %v4303
        %4323 = vmatprep.subr.mxu0 0.0
        %4324 = vmatpush1.msra.mxu0 %v4304
        %4325 = vmatprep.subr.mxu0 0.0
        %4326 = vmatpush1.msra.mxu0 %v4305
        %4327 = vmatprep.subr.mxu0 0.0
        %4328 = vmatpush1.msra.mxu0 %v4306
        %4329 = vmatprep.subr.mxu0 0.0
        %4330 = vmatpush1.msra.mxu0 %v4307
        %4331 = vmatprep.subr.mxu0 0.0
        %4332 = vmatpush1.msra.mxu0 %v4308
        %4333 = vmatprep.subr.mxu0 0.0
        %4334 = vmatpush1.msra.mxu0 %v4309
        %4335 = vmatprep.subr.mxu0 0.0
        %4336 = vmatpush1.msra.mxu0 %v4310
        %4337 = vmatprep.subr.mxu0 0.0
        %4338 = vmatpush1.msra.mxu0 %v4311
        %4339 = vmatprep.subr.mxu0 0.0
        %4340 = vmatpush1.msra.mxu0 %v4312
        %4341 = vmatprep.subr.mxu0 0.0
        %4342 = vmatpush1.msra.mxu0 %v4313
        %4343 = vmatprep.subr.mxu0 0.0
        %4344 = vmatpush1.msra.mxu0 %v4314
        %4345 = vmatprep.subr.mxu0 0.0
        %4346 = vmatpush1.msra.mxu0 %v4315
        %4347 = vmatprep.subr.mxu0 0.0
        %4348 = vmatpush1.msra.mxu0 %v4316
        %4349 = vmatprep.subr.mxu0 0.0
        %4350 = vmatpush1.msra.mxu0 0.0
        %4351 = vmatprep.subr.mxu0 0.0
        %4352 = vmatpush1.msra.mxu0 0.0
        %4353 = vmatprep.subr.mxu0 0.0
        %4354 = vmatpush1.msra.mxu0 0.0
        %4355 = vmatprep.subr.mxu0 0.0
        %4356 = vmatpush1.msra.mxu0 0.0
        %4357 = vmatprep.subr.mxu0 0.0
        %4358 = vmatpush1.msra.mxu0 0.0
        %4359 = vmatprep.subr.mxu0 0.0
        %4360 = vmatpush1.msra.mxu0 0.0
        %4361 = vmatprep.subr.mxu0 0.0
        %4362 = vmatpush1.msra.mxu0 0.0
        %4363 = vmatprep.subr.mxu0 0.0
        %4364 = vmatpush1.msra.mxu0 0.0
        %4365 = vmatprep.subr.mxu0 0.0
        %4366 = vmatpush1.msra.mxu0 0.0
        %4367 = vmatprep.subr.mxu0 0.0
        %4368 = vmatpush1.msra.mxu0 0.0
        %4369 = vmatprep.subr.mxu0 0.0
        %4370 = vmatpush1.msra.mxu0 0.0
        %4371 = vmatprep.subr.mxu0 0.0
        %4372 = vmatpush1.msra.mxu0 0.0
        %4373 = vmatprep.subr.mxu0 0.0
        %4374 = vmatpush1.msra.mxu0 0.0
        %4375 = vmatprep.subr.mxu0 0.0
        %4376 = vmatpush1.msra.mxu0 0.0
        %4377 = vmatprep.subr.mxu0 0.0
        %4378 = vmatpush1.msra.mxu0 0.0
        %4379 = vmatprep.subr.mxu0 0.0
        %4380 = vmatpush1.msra.mxu0 0.0
        %4381 = vmatprep.mubr.f32.mxu0 0.0
        %4382 = vmatmul.mubr.f32.gmra.mrb[0].mxu0 %v4268
        %v4383 = vpop.f32.mrb[0].mxu0
        %v4384 = vadd.f32 0.0, %v4383
        %v4385 = vpop.f32.mrb[0].mxu0
        %4386 = vmatprep.mubr.f32.mxu0 0.0
        %4387 = vmatmul.mubr.f32.gmra.mrb[0].mxu0 %v4269
        %v4388 = vpop.f32.mrb[0].mxu0
        %v4389 = vadd.f32 0.0, %v4388
        %v4390 = vpop.f32.mrb[0].mxu0
        %4391 = vmatprep.mubr.f32.mxu0 0.0
        %4392 = vmatmul.mubr.f32.gmra.mrb[0].mxu0 %v4270
        %v4393 = vpop.f32.mrb[0].mxu0
        %v4394 = vadd.f32 0.0, %v4393
        %v4395 = vpop.f32.mrb[0].mxu0
        %4396 = vmatprep.mubr.f32.mxu0 0.0
        %4397 = vmatmul.mubr.f32.gmra.mrb[0].mxu0 %v4271
        %v4398 = vpop.f32.mrb[0].mxu0
        %v4399 = vadd.f32 0.0, %v4398
        %v4400 = vpop.f32.mrb[0].mxu0
        %4401 = vmatprep.mubr.f32.mxu0 0.0
        %4402 = vmatmul.mubr.f32.gmra.mrb[0].mxu0 %v4272
        %v4403 = vpop.f32.mrb[0].mxu0
        %v4404 = vadd.f32 0.0, %v4403
        %v4405 = vpop.f32.mrb[0].mxu0
        %4406 = vmatprep.mubr.f32.mxu0 0.0
        %4407 = vmatmul.mubr.f32.gmra.mrb[0].mxu0 %v4273
        %v4408 = vpop.f32.mrb[0].mxu0
        %v4409 = vadd.f32 0.0, %v4408
        %v4410 = vpop.f32.mrb[0].mxu0
        %4411 = vmatprep.mubr.f32.mxu0 0.0
        %4412 = vmatmul.mubr.f32.gmra.mrb[0].mxu0 %v4274
        %v4413 = vpop.f32.mrb[0].mxu0
        %v4414 = vadd.f32 0.0, %v4413
        %v4415 = vpop.f32.mrb[0].mxu0
        %4416 = vmatprep.mubr.f32.mxu0 0.0
        %4417 = vmatmul.mubr.f32.gmra.mrb[0].mxu0 %v4275
        %v4418 = vpop.f32.mrb[0].mxu0
        %v4419 = vadd.f32 0.0, %v4418
        %v4420 = vpop.f32.mrb[0].mxu0
        %4421 = vmatprep.mubr.f32.mxu0 0.0
        %4422 = vmatmul.mubr.f32.gmra.mrb[0].mxu0 %v4276
        %v4423 = vpop.f32.mrb[0].mxu0
        %v4424 = vadd.f32 0.0, %v4423
        %v4425 = vpop.f32.mrb[0].mxu0
        %4426 = vmatprep.mubr.f32.mxu0 0.0
        %4427 = vmatmul.mubr.f32.gmra.mrb[0].mxu0 %v4277
        %v4428 = vpop.f32.mrb[0].mxu0
        %v4429 = vadd.f32 0.0, %v4428
        %v4430 = vpop.f32.mrb[0].mxu0
        %4431 = vmatprep.mubr.f32.mxu0 0.0
        %4432 = vmatmul.mubr.f32.gmra.mrb[0].mxu0 %v4278
        %v4433 = vpop.f32.mrb[0].mxu0
        %v4434 = vadd.f32 0.0, %v4433
        %v4435 = vpop.f32.mrb[0].mxu0
        %4436 = vmatprep.mubr.f32.mxu0 0.0
        %4437 = vmatmul.mubr.f32.gmra.mrb[0].mxu0 %v4279
        %v4438 = vpop.f32.mrb[0].mxu0
        %v4439 = vadd.f32 0.0, %v4438
        %v4440 = vpop.f32.mrb[0].mxu0
        %4441 = vmatprep.mubr.f32.mxu0 0.0
        %4442 = vmatmul.mubr.f32.gmra.mrb[0].mxu0 %v4280
        %v4443 = vpop.f32.mrb[0].mxu0
        %v4444 = vadd.f32 0.0, %v4443
        %v4445 = vpop.f32.mrb[0].mxu0
        %4446 = vmatprep.mubr.f32.mxu0 0.0
        %4447 = vmatmul.mubr.f32.gmra.mrb[0].mxu0 %v4281
        %v4448 = vpop.f32.mrb[0].mxu0
        %v4449 = vadd.f32 0.0, %v4448
        %v4450 = vpop.f32.mrb[0].mxu0
        %4451 = vmatprep.mubr.f32.mxu0 0.0
        %4452 = vmatmul.mubr.f32.gmra.mrb[0].mxu0 %v4282
        %v4453 = vpop.f32.mrb[0].mxu0
        %v4454 = vadd.f32 0.0, %v4453
        %v4455 = vpop.f32.mrb[0].mxu0
        %4456 = vmatprep.mubr.f32.mxu0 0.0
        %4457 = vmatmul.mubr.f32.gmra.mrb[0].mxu0 %v4283
        %v4458 = vpop.f32.mrb[0].mxu0
        %v4459 = vadd.f32 0.0, %v4458
        %v4460 = vpop.f32.mrb[0].mxu0
        %4461 = vmatprep.mubr.f32.mxu0 0.0
        %4462 = vmatmul.mubr.f32.gmra.mrb[0].mxu0 %v4284
        %v4463 = vpop.f32.mrb[0].mxu0
        %v4464 = vadd.f32 0.0, %v4463
        %v4465 = vpop.f32.mrb[0].mxu0
        %4466 = vmatprep.mubr.f32.mxu0 0.0
        %4467 = vmatmul.mubr.f32.gmra.mrb[0].mxu0 %v4285
        %v4468 = vpop.f32.mrb[0].mxu0
        %v4469 = vadd.f32 0.0, %v4468
        %v4470 = vpop.f32.mrb[0].mxu0
        %4471 = vmatprep.mubr.f32.mxu0 0.0
        %4472 = vmatmul.mubr.f32.gmra.mrb[0].mxu0 %v4286
        %v4473 = vpop.f32.mrb[0].mxu0
        %v4474 = vadd.f32 0.0, %v4473
        %v4475 = vpop.f32.mrb[0].mxu0
        %4476 = vmatprep.mubr.f32.mxu0 0.0
        %4477 = vmatmul.mubr.f32.gmra.mrb[0].mxu0 %v4287
        %v4478 = vpop.f32.mrb[0].mxu0
        %v4479 = vadd.f32 0.0, %v4478
        %v4480 = vpop.f32.mrb[0].mxu0
        %4481 = vmatprep.mubr.f32.mxu0 0.0
        %4482 = vmatmul.mubr.f32.gmra.mrb[0].mxu0 %v4288
        %v4483 = vpop.f32.mrb[0].mxu0
        %v4484 = vadd.f32 0.0, %v4483
        %v4485 = vpop.f32.mrb[0].mxu0
        %4486 = vmatprep.mubr.f32.mxu0 0.0
        %4487 = vmatmul.mubr.f32.gmra.mrb[0].mxu0 %v4289
        %v4488 = vpop.f32.mrb[0].mxu0
        %v4489 = vadd.f32 0.0, %v4488
        %v4490 = vpop.f32.mrb[0].mxu0
        %4491 = vmatprep.mubr.f32.mxu0 0.0
        %4492 = vmatmul.mubr.f32.gmra.mrb[0].mxu0 %v4290
        %v4493 = vpop.f32.mrb[0].mxu0
        %v4494 = vadd.f32 0.0, %v4493
        %v4495 = vpop.f32.mrb[0].mxu0
        %4496 = vmatprep.mubr.f32.mxu0 0.0
        %4497 = vmatmul.mubr.f32.gmra.mrb[0].mxu0 %v4291
        %v4498 = vpop.f32.mrb[0].mxu0
        %v4499 = vadd.f32 0.0, %v4498
        %v4500 = vpop.f32.mrb[0].mxu0
        %4501 = vmatprep.mubr.f32.mxu0 0.0
        %4502 = vmatmul.mubr.f32.gmra.mrb[0].mxu0 %v4292
        %v4503 = vpop.f32.mrb[0].mxu0
        %v4504 = vadd.f32 0.0, %v4503
        %v4505 = vpop.f32.mrb[0].mxu0
        %4506 = vmatprep.mubr.f32.mxu0 0.0
        %4507 = vmatmul.mubr.f32.gmra.mrb[0].mxu0 %v4293
        %v4508 = vpop.f32.mrb[0].mxu0
        %v4509 = vadd.f32 0.0, %v4508
        %v4510 = vpop.f32.mrb[0].mxu0
        %4511 = vmatprep.mubr.f32.mxu0 0.0
        %4512 = vmatmul.mubr.f32.gmra.mrb[0].mxu0 %v4294
        %v4513 = vpop.f32.mrb[0].mxu0
        %v4514 = vadd.f32 0.0, %v4513
        %v4515 = vpop.f32.mrb[0].mxu0
        %4516 = vmatprep.mubr.f32.mxu0 0.0
        %4517 = vmatmul.mubr.f32.gmra.mrb[0].mxu0 %v4295
        %v4518 = vpop.f32.mrb[0].mxu0
        %v4519 = vadd.f32 0.0, %v4518
        %v4520 = vpop.f32.mrb[0].mxu0
        %4521 = vmatprep.mubr.f32.mxu0 0.0
        %4522 = vmatmul.mubr.f32.gmra.mrb[0].mxu0 %v4296
        %v4523 = vpop.f32.mrb[0].mxu0
        %v4524 = vadd.f32 0.0, %v4523
        %v4525 = vpop.f32.mrb[0].mxu0
        %4526 = vmatprep.mubr.f32.mxu0 0.0
        %4527 = vmatmul.mubr.f32.gmra.mrb[0].mxu0 %v4297
        %v4528 = vpop.f32.mrb[0].mxu0
        %v4529 = vadd.f32 0.0, %v4528
        %v4530 = vpop.f32.mrb[0].mxu0
        %4531 = vmatprep.mubr.f32.mxu0 0.0
        %4532 = vmatmul.mubr.f32.gmra.mrb[0].mxu0 %v4298
        %v4533 = vpop.f32.mrb[0].mxu0
        %v4534 = vadd.f32 0.0, %v4533
        %v4535 = vpop.f32.mrb[0].mxu0
        %4536 = vmatprep.mubr.f32.mxu0 0.0
        %4537 = vmatmul.mubr.f32.gmra.mrb[0].mxu0 %v4299
        %v4538 = vpop.f32.mrb[0].mxu0
        %v4539 = vadd.f32 0.0, %v4538
        %v4540 = vpop.f32.mrb[0].mxu0
        %4541 = vdwg.mxu0
        %v4542 = vadd.f32 %v4235, %v4384
        %v4543 = vadd.f32 %v4236, %v4389
        %v4544 = vadd.f32 %v4237, %v4394
        %v4545 = vadd.f32 %v4238, %v4399
        %v4546 = vadd.f32 %v4239, %v4404
        %v4547 = vadd.f32 %v4240, %v4409
        %v4548 = vadd.f32 %v4241, %v4414
        %v4549 = vadd.f32 %v4242, %v4419
        %v4550 = vadd.f32 %v4243, %v4424
        %v4551 = vadd.f32 %v4244, %v4429
        %v4552 = vadd.f32 %v4245, %v4434
        %v4553 = vadd.f32 %v4246, %v4439
        %v4554 = vadd.f32 %v4247, %v4444
        %v4555 = vadd.f32 %v4248, %v4449
        %v4556 = vadd.f32 %v4249, %v4454
        %v4557 = vadd.f32 %v4250, %v4459
        %v4558 = vadd.f32 %v4251, %v4464
        %v4559 = vadd.f32 %v4252, %v4469
        %v4560 = vadd.f32 %v4253, %v4474
        %v4561 = vadd.f32 %v4254, %v4479
        %v4562 = vadd.f32 %v4255, %v4484
        %v4563 = vadd.f32 %v4256, %v4489
        %v4564 = vadd.f32 %v4257, %v4494
        %v4565 = vadd.f32 %v4258, %v4499
        %v4566 = vadd.f32 %v4259, %v4504
        %v4567 = vadd.f32 %v4260, %v4509
        %v4568 = vadd.f32 %v4261, %v4514
        %v4569 = vadd.f32 %v4262, %v4519
        %v4570 = vadd.f32 %v4263, %v4524
        %v4571 = vadd.f32 %v4264, %v4529
        %v4572 = vadd.f32 %v4265, %v4534
        %v4573 = vadd.f32 %v4266, %v4539
        %v4574 = vld [vmem:[%s4267 + $0x1] sm:$0xff]
        %v4575 = vld [vmem:[%s4267 + $0x9] sm:$0xff]
        %v4576 = vld [vmem:[%s4267 + $0x19] sm:$0xff]
        %v4577 = vld [vmem:[%s4267 + $0x21] sm:$0xff]
        %v4578 = vld [vmem:[%s4267 + $0x31] sm:$0xff]
        %v4579 = vld [vmem:[%s4267 + $0x39] sm:$0xff]
        %v4580 = vld [vmem:[%s4267 + $0x49] sm:$0xff]
        %v4581 = vld [vmem:[%s4267 + $0x51] sm:$0xff]
        %v4582 = vld [vmem:[%s4267 + $0x61] sm:$0xff]
        %v4583 = vld [vmem:[%s4267 + $0x69] sm:$0xff]
        %v4584 = vld [vmem:[%s4267 + $0x79] sm:$0xff]
        %v4585 = vld [vmem:[%s4267 + $0x81] sm:$0xff]
        %v4586 = vld [vmem:[%s4267 + $0x91] sm:$0xff]
        %v4587 = vld [vmem:[%s4267 + $0x99] sm:$0xff]
        %v4588 = vld [vmem:[%s4267 + $0xa9] sm:$0xff]
        %v4589 = vld [vmem:[%s4267 + $0xb1] sm:$0xff]
        %v4590 = vld [vmem:[%s4267 + $0xc1] sm:$0xff]
        %v4591 = vld [vmem:[%s4267 + $0xc9] sm:$0xff]
        %v4592 = vld [vmem:[%s4267 + $0xd9] sm:$0xff]
        %v4593 = vld [vmem:[%s4267 + $0xe1] sm:$0xff]
        %v4594 = vld [vmem:[%s4267 + $0xf1] sm:$0xff]
        %v4595 = vld [vmem:[%s4267 + $0xf9] sm:$0xff]
        %v4596 = vld [vmem:[%s4267 + $0x109] sm:$0xff]
        %v4597 = vld [vmem:[%s4267 + $0x111] sm:$0xff]
        %v4598 = vld [vmem:[%s4267 + $0x121] sm:$0xff]
        %v4599 = vld [vmem:[%s4267 + $0x129] sm:$0xff]
        %v4600 = vld [vmem:[%s4267 + $0x139] sm:$0xff]
        %v4601 = vld [vmem:[%s4267 + $0x141] sm:$0xff]
        %v4602 = vld [vmem:[%s4267 + $0x151] sm:$0xff]
        %v4603 = vld [vmem:[%s4267 + $0x159] sm:$0xff]
        %v4604 = vld [vmem:[%s4267 + $0x169] sm:$0xff]
        %v4605 = vld [vmem:[%s4267 + $0x171] sm:$0xff]
        %s4606 = scalar_lea.vmem [#allocation4], 896
        %v4607 = vld [vmem:[%s4606] sm:$0xff]
        %v4608 = vld [vmem:[%s4606 + $0x8] sm:$0xff]
        %v4609 = vld [vmem:[%s4606 + $0x10] sm:$0xff]
        %v4610 = vld [vmem:[%s4606 + $0x18] sm:$0xff]
        %v4611 = vld [vmem:[%s4606 + $0x20] sm:$0xff]
        %v4612 = vld [vmem:[%s4606 + $0x28] sm:$0xff]
        %v4613 = vld [vmem:[%s4606 + $0x30] sm:$0xff]
        %v4614 = vld [vmem:[%s4606 + $0x38] sm:$0xff]
        %v4615 = vld [vmem:[%s4606 + $0x40] sm:$0xff]
        %v4616 = vld [vmem:[%s4606 + $0x48] sm:$0xff]
        %v4617 = vld [vmem:[%s4606 + $0x50] sm:$0xff]
        %v4618 = vld [vmem:[%s4606 + $0x58] sm:$0xff]
        %v4619 = vld [vmem:[%s4606 + $0x60] sm:$0xff]
        %v4620 = vld [vmem:[%s4606 + $0x68] sm:$0xff]
        %v4621 = vld [vmem:[%s4606 + $0x70] sm:$0xff]
        %v4622 = vld [vmem:[%s4606 + $0x78] sm:$0xff]
        %4623 = vmatprep.subr.mxu0 0.0
        %4624 = vmatpush1.msra.mxu0 %v4607
        %4625 = vmatprep.subr.mxu0 0.0
        %4626 = vmatpush1.msra.mxu0 %v4608
        %4627 = vmatprep.subr.mxu0 0.0
        %4628 = vmatpush1.msra.mxu0 %v4609
        %4629 = vmatprep.subr.mxu0 0.0
        %4630 = vmatpush1.msra.mxu0 %v4610
        %4631 = vmatprep.subr.mxu0 0.0
        %4632 = vmatpush1.msra.mxu0 %v4611
        %4633 = vmatprep.subr.mxu0 0.0
        %4634 = vmatpush1.msra.mxu0 %v4612
        %4635 = vmatprep.subr.mxu0 0.0
        %4636 = vmatpush1.msra.mxu0 %v4613
        %4637 = vmatprep.subr.mxu0 0.0
        %4638 = vmatpush1.msra.mxu0 %v4614
        %4639 = vmatprep.subr.mxu0 0.0
        %4640 = vmatpush1.msra.mxu0 %v4615
        %4641 = vmatprep.subr.mxu0 0.0
        %4642 = vmatpush1.msra.mxu0 %v4616
        %4643 = vmatprep.subr.mxu0 0.0
        %4644 = vmatpush1.msra.mxu0 %v4617
        %4645 = vmatprep.subr.mxu0 0.0
        %4646 = vmatpush1.msra.mxu0 %v4618
        %4647 = vmatprep.subr.mxu0 0.0
        %4648 = vmatpush1.msra.mxu0 %v4619
        %4649 = vmatprep.subr.mxu0 0.0
        %4650 = vmatpush1.msra.mxu0 %v4620
        %4651 = vmatprep.subr.mxu0 0.0
        %4652 = vmatpush1.msra.mxu0 %v4621
        %4653 = vmatprep.subr.mxu0 0.0
        %4654 = vmatpush1.msra.mxu0 %v4622
        %4655 = vmatprep.subr.mxu0 0.0
        %4656 = vmatpush1.msra.mxu0 0.0
        %4657 = vmatprep.subr.mxu0 0.0
        %4658 = vmatpush1.msra.mxu0 0.0
        %4659 = vmatprep.subr.mxu0 0.0
        %4660 = vmatpush1.msra.mxu0 0.0
        %4661 = vmatprep.subr.mxu0 0.0
        %4662 = vmatpush1.msra.mxu0 0.0
        %4663 = vmatprep.subr.mxu0 0.0
        %4664 = vmatpush1.msra.mxu0 0.0
        %4665 = vmatprep.subr.mxu0 0.0
        %4666 = vmatpush1.msra.mxu0 0.0
        %4667 = vmatprep.subr.mxu0 0.0
        %4668 = vmatpush1.msra.mxu0 0.0
        %4669 = vmatprep.subr.mxu0 0.0
        %4670 = vmatpush1.msra.mxu0 0.0
        %4671 = vmatprep.subr.mxu0 0.0
        %4672 = vmatpush1.msra.mxu0 0.0
        %4673 = vmatprep.subr.mxu0 0.0
        %4674 = vmatpush1.msra.mxu0 0.0
        %4675 = vmatprep.subr.mxu0 0.0
        %4676 = vmatpush1.msra.mxu0 0.0
        %4677 = vmatprep.subr.mxu0 0.0
        %4678 = vmatpush1.msra.mxu0 0.0
        %4679 = vmatprep.subr.mxu0 0.0
        %4680 = vmatpush1.msra.mxu0 0.0
        %4681 = vmatprep.subr.mxu0 0.0
        %4682 = vmatpush1.msra.mxu0 0.0
        %4683 = vmatprep.subr.mxu0 0.0
        %4684 = vmatpush1.msra.mxu0 0.0
        %4685 = vmatprep.subr.mxu0 0.0
        %4686 = vmatpush1.msra.mxu0 0.0
        %4687 = vmatprep.mubr.f32.mxu0 0.0
        %4688 = vmatmul.mubr.f32.gmra.mrb[0].mxu0 %v4574
        %v4689 = vpop.f32.mrb[0].mxu0
        %v4690 = vadd.f32 0.0, %v4689
        %v4691 = vpop.f32.mrb[0].mxu0
        %4692 = vmatprep.mubr.f32.mxu0 0.0
        %4693 = vmatmul.mubr.f32.gmra.mrb[0].mxu0 %v4575
        %v4694 = vpop.f32.mrb[0].mxu0
        %v4695 = vadd.f32 0.0, %v4694
        %v4696 = vpop.f32.mrb[0].mxu0
        %4697 = vmatprep.mubr.f32.mxu0 0.0
        %4698 = vmatmul.mubr.f32.gmra.mrb[0].mxu0 %v4576
        %v4699 = vpop.f32.mrb[0].mxu0
        %v4700 = vadd.f32 0.0, %v4699
        %v4701 = vpop.f32.mrb[0].mxu0
        %4702 = vmatprep.mubr.f32.mxu0 0.0
        %4703 = vmatmul.mubr.f32.gmra.mrb[0].mxu0 %v4577
        %v4704 = vpop.f32.mrb[0].mxu0
        %v4705 = vadd.f32 0.0, %v4704
        %v4706 = vpop.f32.mrb[0].mxu0
        %4707 = vmatprep.mubr.f32.mxu0 0.0
        %4708 = vmatmul.mubr.f32.gmra.mrb[0].mxu0 %v4578
        %v4709 = vpop.f32.mrb[0].mxu0
        %v4710 = vadd.f32 0.0, %v4709
        %v4711 = vpop.f32.mrb[0].mxu0
        %4712 = vmatprep.mubr.f32.mxu0 0.0
        %4713 = vmatmul.mubr.f32.gmra.mrb[0].mxu0 %v4579
        %v4714 = vpop.f32.mrb[0].mxu0
        %v4715 = vadd.f32 0.0, %v4714
        %v4716 = vpop.f32.mrb[0].mxu0
        %4717 = vmatprep.mubr.f32.mxu0 0.0
        %4718 = vmatmul.mubr.f32.gmra.mrb[0].mxu0 %v4580
        %v4719 = vpop.f32.mrb[0].mxu0
        %v4720 = vadd.f32 0.0, %v4719
        %v4721 = vpop.f32.mrb[0].mxu0
        %4722 = vmatprep.mubr.f32.mxu0 0.0
        %4723 = vmatmul.mubr.f32.gmra.mrb[0].mxu0 %v4581
        %v4724 = vpop.f32.mrb[0].mxu0
        %v4725 = vadd.f32 0.0, %v4724
        %v4726 = vpop.f32.mrb[0].mxu0
        %4727 = vmatprep.mubr.f32.mxu0 0.0
        %4728 = vmatmul.mubr.f32.gmra.mrb[0].mxu0 %v4582
        %v4729 = vpop.f32.mrb[0].mxu0
        %v4730 = vadd.f32 0.0, %v4729
        %v4731 = vpop.f32.mrb[0].mxu0
        %4732 = vmatprep.mubr.f32.mxu0 0.0
        %4733 = vmatmul.mubr.f32.gmra.mrb[0].mxu0 %v4583
        %v4734 = vpop.f32.mrb[0].mxu0
        %v4735 = vadd.f32 0.0, %v4734
        %v4736 = vpop.f32.mrb[0].mxu0
        %4737 = vmatprep.mubr.f32.mxu0 0.0
        %4738 = vmatmul.mubr.f32.gmra.mrb[0].mxu0 %v4584
        %v4739 = vpop.f32.mrb[0].mxu0
        %v4740 = vadd.f32 0.0, %v4739
        %v4741 = vpop.f32.mrb[0].mxu0
        %4742 = vmatprep.mubr.f32.mxu0 0.0
        %4743 = vmatmul.mubr.f32.gmra.mrb[0].mxu0 %v4585
        %v4744 = vpop.f32.mrb[0].mxu0
        %v4745 = vadd.f32 0.0, %v4744
        %v4746 = vpop.f32.mrb[0].mxu0
        %4747 = vmatprep.mubr.f32.mxu0 0.0
        %4748 = vmatmul.mubr.f32.gmra.mrb[0].mxu0 %v4586
        %v4749 = vpop.f32.mrb[0].mxu0
        %v4750 = vadd.f32 0.0, %v4749
        %v4751 = vpop.f32.mrb[0].mxu0
        %4752 = vmatprep.mubr.f32.mxu0 0.0
        %4753 = vmatmul.mubr.f32.gmra.mrb[0].mxu0 %v4587
        %v4754 = vpop.f32.mrb[0].mxu0
        %v4755 = vadd.f32 0.0, %v4754
        %v4756 = vpop.f32.mrb[0].mxu0
        %4757 = vmatprep.mubr.f32.mxu0 0.0
        %4758 = vmatmul.mubr.f32.gmra.mrb[0].mxu0 %v4588
        %v4759 = vpop.f32.mrb[0].mxu0
        %v4760 = vadd.f32 0.0, %v4759
        %v4761 = vpop.f32.mrb[0].mxu0
        %4762 = vmatprep.mubr.f32.mxu0 0.0
        %4763 = vmatmul.mubr.f32.gmra.mrb[0].mxu0 %v4589
        %v4764 = vpop.f32.mrb[0].mxu0
        %v4765 = vadd.f32 0.0, %v4764
        %v4766 = vpop.f32.mrb[0].mxu0
        %4767 = vmatprep.mubr.f32.mxu0 0.0
        %4768 = vmatmul.mubr.f32.gmra.mrb[0].mxu0 %v4590
        %v4769 = vpop.f32.mrb[0].mxu0
        %v4770 = vadd.f32 0.0, %v4769
        %v4771 = vpop.f32.mrb[0].mxu0
        %4772 = vmatprep.mubr.f32.mxu0 0.0
        %4773 = vmatmul.mubr.f32.gmra.mrb[0].mxu0 %v4591
        %v4774 = vpop.f32.mrb[0].mxu0
        %v4775 = vadd.f32 0.0, %v4774
        %v4776 = vpop.f32.mrb[0].mxu0
        %4777 = vmatprep.mubr.f32.mxu0 0.0
        %4778 = vmatmul.mubr.f32.gmra.mrb[0].mxu0 %v4592
        %v4779 = vpop.f32.mrb[0].mxu0
        %v4780 = vadd.f32 0.0, %v4779
        %v4781 = vpop.f32.mrb[0].mxu0
        %4782 = vmatprep.mubr.f32.mxu0 0.0
        %4783 = vmatmul.mubr.f32.gmra.mrb[0].mxu0 %v4593
        %v4784 = vpop.f32.mrb[0].mxu0
        %v4785 = vadd.f32 0.0, %v4784
        %v4786 = vpop.f32.mrb[0].mxu0
        %4787 = vmatprep.mubr.f32.mxu0 0.0
        %4788 = vmatmul.mubr.f32.gmra.mrb[0].mxu0 %v4594
        %v4789 = vpop.f32.mrb[0].mxu0
        %v4790 = vadd.f32 0.0, %v4789
        %v4791 = vpop.f32.mrb[0].mxu0
        %4792 = vmatprep.mubr.f32.mxu0 0.0
        %4793 = vmatmul.mubr.f32.gmra.mrb[0].mxu0 %v4595
        %v4794 = vpop.f32.mrb[0].mxu0
        %v4795 = vadd.f32 0.0, %v4794
        %v4796 = vpop.f32.mrb[0].mxu0
        %4797 = vmatprep.mubr.f32.mxu0 0.0
        %4798 = vmatmul.mubr.f32.gmra.mrb[0].mxu0 %v4596
        %v4799 = vpop.f32.mrb[0].mxu0
        %v4800 = vadd.f32 0.0, %v4799
        %v4801 = vpop.f32.mrb[0].mxu0
        %4802 = vmatprep.mubr.f32.mxu0 0.0
        %4803 = vmatmul.mubr.f32.gmra.mrb[0].mxu0 %v4597
        %v4804 = vpop.f32.mrb[0].mxu0
        %v4805 = vadd.f32 0.0, %v4804
        %v4806 = vpop.f32.mrb[0].mxu0
        %4807 = vmatprep.mubr.f32.mxu0 0.0
        %4808 = vmatmul.mubr.f32.gmra.mrb[0].mxu0 %v4598
        %v4809 = vpop.f32.mrb[0].mxu0
        %v4810 = vadd.f32 0.0, %v4809
        %v4811 = vpop.f32.mrb[0].mxu0
        %4812 = vmatprep.mubr.f32.mxu0 0.0
        %4813 = vmatmul.mubr.f32.gmra.mrb[0].mxu0 %v4599
        %v4814 = vpop.f32.mrb[0].mxu0
        %v4815 = vadd.f32 0.0, %v4814
        %v4816 = vpop.f32.mrb[0].mxu0
        %4817 = vmatprep.mubr.f32.mxu0 0.0
        %4818 = vmatmul.mubr.f32.gmra.mrb[0].mxu0 %v4600
        %v4819 = vpop.f32.mrb[0].mxu0
        %v4820 = vadd.f32 0.0, %v4819
        %v4821 = vpop.f32.mrb[0].mxu0
        %4822 = vmatprep.mubr.f32.mxu0 0.0
        %4823 = vmatmul.mubr.f32.gmra.mrb[0].mxu0 %v4601
        %v4824 = vpop.f32.mrb[0].mxu0
        %v4825 = vadd.f32 0.0, %v4824
        %v4826 = vpop.f32.mrb[0].mxu0
        %4827 = vmatprep.mubr.f32.mxu0 0.0
        %4828 = vmatmul.mubr.f32.gmra.mrb[0].mxu0 %v4602
        %v4829 = vpop.f32.mrb[0].mxu0
        %v4830 = vadd.f32 0.0, %v4829
        %v4831 = vpop.f32.mrb[0].mxu0
        %4832 = vmatprep.mubr.f32.mxu0 0.0
        %4833 = vmatmul.mubr.f32.gmra.mrb[0].mxu0 %v4603
        %v4834 = vpop.f32.mrb[0].mxu0
        %v4835 = vadd.f32 0.0, %v4834
        %v4836 = vpop.f32.mrb[0].mxu0
        %4837 = vmatprep.mubr.f32.mxu0 0.0
        %4838 = vmatmul.mubr.f32.gmra.mrb[0].mxu0 %v4604
        %v4839 = vpop.f32.mrb[0].mxu0
        %v4840 = vadd.f32 0.0, %v4839
        %v4841 = vpop.f32.mrb[0].mxu0
        %4842 = vmatprep.mubr.f32.mxu0 0.0
        %4843 = vmatmul.mubr.f32.gmra.mrb[0].mxu0 %v4605
        %v4844 = vpop.f32.mrb[0].mxu0
        %v4845 = vadd.f32 0.0, %v4844
        %v4846 = vpop.f32.mrb[0].mxu0
        %4847 = vdwg.mxu0
        %v4848 = vadd.f32 %v4542, %v4690
        %v4849 = vadd.f32 %v4543, %v4695
        %v4850 = vadd.f32 %v4544, %v4700
        %v4851 = vadd.f32 %v4545, %v4705
        %v4852 = vadd.f32 %v4546, %v4710
        %v4853 = vadd.f32 %v4547, %v4715
        %v4854 = vadd.f32 %v4548, %v4720
        %v4855 = vadd.f32 %v4549, %v4725
        %v4856 = vadd.f32 %v4550, %v4730
        %v4857 = vadd.f32 %v4551, %v4735
        %v4858 = vadd.f32 %v4552, %v4740
        %v4859 = vadd.f32 %v4553, %v4745
        %v4860 = vadd.f32 %v4554, %v4750
        %v4861 = vadd.f32 %v4555, %v4755
        %v4862 = vadd.f32 %v4556, %v4760
        %v4863 = vadd.f32 %v4557, %v4765
        %v4864 = vadd.f32 %v4558, %v4770
        %v4865 = vadd.f32 %v4559, %v4775
        %v4866 = vadd.f32 %v4560, %v4780
        %v4867 = vadd.f32 %v4561, %v4785
        %v4868 = vadd.f32 %v4562, %v4790
        %v4869 = vadd.f32 %v4563, %v4795
        %v4870 = vadd.f32 %v4564, %v4800
        %v4871 = vadd.f32 %v4565, %v4805
        %v4872 = vadd.f32 %v4566, %v4810
        %v4873 = vadd.f32 %v4567, %v4815
        %v4874 = vadd.f32 %v4568, %v4820
        %v4875 = vadd.f32 %v4569, %v4825
        %v4876 = vadd.f32 %v4570, %v4830
        %v4877 = vadd.f32 %v4571, %v4835
        %v4878 = vadd.f32 %v4572, %v4840
        %v4879 = vadd.f32 %v4573, %v4845
        %v4880 = vld [vmem:[%s4267 + $0x2] sm:$0xff]
        %v4881 = vld [vmem:[%s4267 + $0xa] sm:$0xff]
        %v4882 = vld [vmem:[%s4267 + $0x1a] sm:$0xff]
        %v4883 = vld [vmem:[%s4267 + $0x22] sm:$0xff]
        %v4884 = vld [vmem:[%s4267 + $0x32] sm:$0xff]
        %v4885 = vld [vmem:[%s4267 + $0x3a] sm:$0xff]
        %v4886 = vld [vmem:[%s4267 + $0x4a] sm:$0xff]
        %v4887 = vld [vmem:[%s4267 + $0x52] sm:$0xff]
        %v4888 = vld [vmem:[%s4267 + $0x62] sm:$0xff]
        %v4889 = vld [vmem:[%s4267 + $0x6a] sm:$0xff]
        %v4890 = vld [vmem:[%s4267 + $0x7a] sm:$0xff]
        %v4891 = vld [vmem:[%s4267 + $0x82] sm:$0xff]
        %v4892 = vld [vmem:[%s4267 + $0x92] sm:$0xff]
        %v4893 = vld [vmem:[%s4267 + $0x9a] sm:$0xff]
        %v4894 = vld [vmem:[%s4267 + $0xaa] sm:$0xff]
        %v4895 = vld [vmem:[%s4267 + $0xb2] sm:$0xff]
        %v4896 = vld [vmem:[%s4267 + $0xc2] sm:$0xff]
        %v4897 = vld [vmem:[%s4267 + $0xca] sm:$0xff]
        %v4898 = vld [vmem:[%s4267 + $0xda] sm:$0xff]
        %v4899 = vld [vmem:[%s4267 + $0xe2] sm:$0xff]
        %v4900 = vld [vmem:[%s4267 + $0xf2] sm:$0xff]
        %v4901 = vld [vmem:[%s4267 + $0xfa] sm:$0xff]
        %v4902 = vld [vmem:[%s4267 + $0x10a] sm:$0xff]
        %v4903 = vld [vmem:[%s4267 + $0x112] sm:$0xff]
        %v4904 = vld [vmem:[%s4267 + $0x122] sm:$0xff]
        %v4905 = vld [vmem:[%s4267 + $0x12a] sm:$0xff]
        %v4906 = vld [vmem:[%s4267 + $0x13a] sm:$0xff]
        %v4907 = vld [vmem:[%s4267 + $0x142] sm:$0xff]
        %v4908 = vld [vmem:[%s4267 + $0x152] sm:$0xff]
        %v4909 = vld [vmem:[%s4267 + $0x15a] sm:$0xff]
        %v4910 = vld [vmem:[%s4267 + $0x16a] sm:$0xff]
        %v4911 = vld [vmem:[%s4267 + $0x172] sm:$0xff]
        %s4912 = scalar_lea.vmem [#allocation4], 1024
        %v4913 = vld [vmem:[%s4912] sm:$0xff]
        %v4914 = vld [vmem:[%s4912 + $0x8] sm:$0xff]
        %v4915 = vld [vmem:[%s4912 + $0x10] sm:$0xff]
        %v4916 = vld [vmem:[%s4912 + $0x18] sm:$0xff]
        %v4917 = vld [vmem:[%s4912 + $0x20] sm:$0xff]
        %v4918 = vld [vmem:[%s4912 + $0x28] sm:$0xff]
        %v4919 = vld [vmem:[%s4912 + $0x30] sm:$0xff]
        %v4920 = vld [vmem:[%s4912 + $0x38] sm:$0xff]
        %v4921 = vld [vmem:[%s4912 + $0x40] sm:$0xff]
        %v4922 = vld [vmem:[%s4912 + $0x48] sm:$0xff]
        %v4923 = vld [vmem:[%s4912 + $0x50] sm:$0xff]
        %v4924 = vld [vmem:[%s4912 + $0x58] sm:$0xff]
        %v4925 = vld [vmem:[%s4912 + $0x60] sm:$0xff]
        %v4926 = vld [vmem:[%s4912 + $0x68] sm:$0xff]
        %v4927 = vld [vmem:[%s4912 + $0x70] sm:$0xff]
        %v4928 = vld [vmem:[%s4912 + $0x78] sm:$0xff]
        %4929 = vmatprep.subr.mxu0 0.0
        %4930 = vmatpush1.msra.mxu0 %v4913
        %4931 = vmatprep.subr.mxu0 0.0
        %4932 = vmatpush1.msra.mxu0 %v4914
        %4933 = vmatprep.subr.mxu0 0.0
        %4934 = vmatpush1.msra.mxu0 %v4915
        %4935 = vmatprep.subr.mxu0 0.0
        %4936 = vmatpush1.msra.mxu0 %v4916
        %4937 = vmatprep.subr.mxu0 0.0
        %4938 = vmatpush1.msra.mxu0 %v4917
        %4939 = vmatprep.subr.mxu0 0.0
        %4940 = vmatpush1.msra.mxu0 %v4918
        %4941 = vmatprep.subr.mxu0 0.0
        %4942 = vmatpush1.msra.mxu0 %v4919
        %4943 = vmatprep.subr.mxu0 0.0
        %4944 = vmatpush1.msra.mxu0 %v4920
        %4945 = vmatprep.subr.mxu0 0.0
        %4946 = vmatpush1.msra.mxu0 %v4921
        %4947 = vmatprep.subr.mxu0 0.0
        %4948 = vmatpush1.msra.mxu0 %v4922
        %4949 = vmatprep.subr.mxu0 0.0
        %4950 = vmatpush1.msra.mxu0 %v4923
        %4951 = vmatprep.subr.mxu0 0.0
        %4952 = vmatpush1.msra.mxu0 %v4924
        %4953 = vmatprep.subr.mxu0 0.0
        %4954 = vmatpush1.msra.mxu0 %v4925
        %4955 = vmatprep.subr.mxu0 0.0
        %4956 = vmatpush1.msra.mxu0 %v4926
        %4957 = vmatprep.subr.mxu0 0.0
        %4958 = vmatpush1.msra.mxu0 %v4927
        %4959 = vmatprep.subr.mxu0 0.0
        %4960 = vmatpush1.msra.mxu0 %v4928
        %4961 = vmatprep.subr.mxu0 0.0
        %4962 = vmatpush1.msra.mxu0 0.0
        %4963 = vmatprep.subr.mxu0 0.0
        %4964 = vmatpush1.msra.mxu0 0.0
        %4965 = vmatprep.subr.mxu0 0.0
        %4966 = vmatpush1.msra.mxu0 0.0
        %4967 = vmatprep.subr.mxu0 0.0
        %4968 = vmatpush1.msra.mxu0 0.0
        %4969 = vmatprep.subr.mxu0 0.0
        %4970 = vmatpush1.msra.mxu0 0.0
        %4971 = vmatprep.subr.mxu0 0.0
        %4972 = vmatpush1.msra.mxu0 0.0
        %4973 = vmatprep.subr.mxu0 0.0
        %4974 = vmatpush1.msra.mxu0 0.0
        %4975 = vmatprep.subr.mxu0 0.0
        %4976 = vmatpush1.msra.mxu0 0.0
        %4977 = vmatprep.subr.mxu0 0.0
        %4978 = vmatpush1.msra.mxu0 0.0
        %4979 = vmatprep.subr.mxu0 0.0
        %4980 = vmatpush1.msra.mxu0 0.0
        %4981 = vmatprep.subr.mxu0 0.0
        %4982 = vmatpush1.msra.mxu0 0.0
        %4983 = vmatprep.subr.mxu0 0.0
        %4984 = vmatpush1.msra.mxu0 0.0
        %4985 = vmatprep.subr.mxu0 0.0
        %4986 = vmatpush1.msra.mxu0 0.0
        %4987 = vmatprep.subr.mxu0 0.0
        %4988 = vmatpush1.msra.mxu0 0.0
        %4989 = vmatprep.subr.mxu0 0.0
        %4990 = vmatpush1.msra.mxu0 0.0
        %4991 = vmatprep.subr.mxu0 0.0
        %4992 = vmatpush1.msra.mxu0 0.0
        %4993 = vmatprep.mubr.f32.mxu0 0.0
        %4994 = vmatmul.mubr.f32.gmra.mrb[0].mxu0 %v4880
        %v4995 = vpop.f32.mrb[0].mxu0
        %v4996 = vadd.f32 0.0, %v4995
        %v4997 = vpop.f32.mrb[0].mxu0
        %4998 = vmatprep.mubr.f32.mxu0 0.0
        %4999 = vmatmul.mubr.f32.gmra.mrb[0].mxu0 %v4881
        %v5000 = vpop.f32.mrb[0].mxu0
        %v5001 = vadd.f32 0.0, %v5000
        %v5002 = vpop.f32.mrb[0].mxu0
        %5003 = vmatprep.mubr.f32.mxu0 0.0
        %5004 = vmatmul.mubr.f32.gmra.mrb[0].mxu0 %v4882
        %v5005 = vpop.f32.mrb[0].mxu0
        %v5006 = vadd.f32 0.0, %v5005
        %v5007 = vpop.f32.mrb[0].mxu0
        %5008 = vmatprep.mubr.f32.mxu0 0.0
        %5009 = vmatmul.mubr.f32.gmra.mrb[0].mxu0 %v4883
        %v5010 = vpop.f32.mrb[0].mxu0
        %v5011 = vadd.f32 0.0, %v5010
        %v5012 = vpop.f32.mrb[0].mxu0
        %5013 = vmatprep.mubr.f32.mxu0 0.0
        %5014 = vmatmul.mubr.f32.gmra.mrb[0].mxu0 %v4884
        %v5015 = vpop.f32.mrb[0].mxu0
        %v5016 = vadd.f32 0.0, %v5015
        %v5017 = vpop.f32.mrb[0].mxu0
        %5018 = vmatprep.mubr.f32.mxu0 0.0
        %5019 = vmatmul.mubr.f32.gmra.mrb[0].mxu0 %v4885
        %v5020 = vpop.f32.mrb[0].mxu0
        %v5021 = vadd.f32 0.0, %v5020
        %v5022 = vpop.f32.mrb[0].mxu0
        %5023 = vmatprep.mubr.f32.mxu0 0.0
        %5024 = vmatmul.mubr.f32.gmra.mrb[0].mxu0 %v4886
        %v5025 = vpop.f32.mrb[0].mxu0
        %v5026 = vadd.f32 0.0, %v5025
        %v5027 = vpop.f32.mrb[0].mxu0
        %5028 = vmatprep.mubr.f32.mxu0 0.0
        %5029 = vmatmul.mubr.f32.gmra.mrb[0].mxu0 %v4887
        %v5030 = vpop.f32.mrb[0].mxu0
        %v5031 = vadd.f32 0.0, %v5030
        %v5032 = vpop.f32.mrb[0].mxu0
        %5033 = vmatprep.mubr.f32.mxu0 0.0
        %5034 = vmatmul.mubr.f32.gmra.mrb[0].mxu0 %v4888
        %v5035 = vpop.f32.mrb[0].mxu0
        %v5036 = vadd.f32 0.0, %v5035
        %v5037 = vpop.f32.mrb[0].mxu0
        %5038 = vmatprep.mubr.f32.mxu0 0.0
        %5039 = vmatmul.mubr.f32.gmra.mrb[0].mxu0 %v4889
        %v5040 = vpop.f32.mrb[0].mxu0
        %v5041 = vadd.f32 0.0, %v5040
        %v5042 = vpop.f32.mrb[0].mxu0
        %5043 = vmatprep.mubr.f32.mxu0 0.0
        %5044 = vmatmul.mubr.f32.gmra.mrb[0].mxu0 %v4890
        %v5045 = vpop.f32.mrb[0].mxu0
        %v5046 = vadd.f32 0.0, %v5045
        %v5047 = vpop.f32.mrb[0].mxu0
        %5048 = vmatprep.mubr.f32.mxu0 0.0
        %5049 = vmatmul.mubr.f32.gmra.mrb[0].mxu0 %v4891
        %v5050 = vpop.f32.mrb[0].mxu0
        %v5051 = vadd.f32 0.0, %v5050
        %v5052 = vpop.f32.mrb[0].mxu0
        %5053 = vmatprep.mubr.f32.mxu0 0.0
        %5054 = vmatmul.mubr.f32.gmra.mrb[0].mxu0 %v4892
        %v5055 = vpop.f32.mrb[0].mxu0
        %v5056 = vadd.f32 0.0, %v5055
        %v5057 = vpop.f32.mrb[0].mxu0
        %5058 = vmatprep.mubr.f32.mxu0 0.0
        %5059 = vmatmul.mubr.f32.gmra.mrb[0].mxu0 %v4893
        %v5060 = vpop.f32.mrb[0].mxu0
        %v5061 = vadd.f32 0.0, %v5060
        %v5062 = vpop.f32.mrb[0].mxu0
        %5063 = vmatprep.mubr.f32.mxu0 0.0
        %5064 = vmatmul.mubr.f32.gmra.mrb[0].mxu0 %v4894
        %v5065 = vpop.f32.mrb[0].mxu0
        %v5066 = vadd.f32 0.0, %v5065
        %v5067 = vpop.f32.mrb[0].mxu0
        %5068 = vmatprep.mubr.f32.mxu0 0.0
        %5069 = vmatmul.mubr.f32.gmra.mrb[0].mxu0 %v4895
        %v5070 = vpop.f32.mrb[0].mxu0
        %v5071 = vadd.f32 0.0, %v5070
        %v5072 = vpop.f32.mrb[0].mxu0
        %5073 = vmatprep.mubr.f32.mxu0 0.0
        %5074 = vmatmul.mubr.f32.gmra.mrb[0].mxu0 %v4896
        %v5075 = vpop.f32.mrb[0].mxu0
        %v5076 = vadd.f32 0.0, %v5075
        %v5077 = vpop.f32.mrb[0].mxu0
        %5078 = vmatprep.mubr.f32.mxu0 0.0
        %5079 = vmatmul.mubr.f32.gmra.mrb[0].mxu0 %v4897
        %v5080 = vpop.f32.mrb[0].mxu0
        %v5081 = vadd.f32 0.0, %v5080
        %v5082 = vpop.f32.mrb[0].mxu0
        %5083 = vmatprep.mubr.f32.mxu0 0.0
        %5084 = vmatmul.mubr.f32.gmra.mrb[0].mxu0 %v4898
        %v5085 = vpop.f32.mrb[0].mxu0
        %v5086 = vadd.f32 0.0, %v5085
        %v5087 = vpop.f32.mrb[0].mxu0
        %5088 = vmatprep.mubr.f32.mxu0 0.0
        %5089 = vmatmul.mubr.f32.gmra.mrb[0].mxu0 %v4899
        %v5090 = vpop.f32.mrb[0].mxu0
        %v5091 = vadd.f32 0.0, %v5090
        %v5092 = vpop.f32.mrb[0].mxu0
        %5093 = vmatprep.mubr.f32.mxu0 0.0
        %5094 = vmatmul.mubr.f32.gmra.mrb[0].mxu0 %v4900
        %v5095 = vpop.f32.mrb[0].mxu0
        %v5096 = vadd.f32 0.0, %v5095
        %v5097 = vpop.f32.mrb[0].mxu0
        %5098 = vmatprep.mubr.f32.mxu0 0.0
        %5099 = vmatmul.mubr.f32.gmra.mrb[0].mxu0 %v4901
        %v5100 = vpop.f32.mrb[0].mxu0
        %v5101 = vadd.f32 0.0, %v5100
        %v5102 = vpop.f32.mrb[0].mxu0
        %5103 = vmatprep.mubr.f32.mxu0 0.0
        %5104 = vmatmul.mubr.f32.gmra.mrb[0].mxu0 %v4902
        %v5105 = vpop.f32.mrb[0].mxu0
        %v5106 = vadd.f32 0.0, %v5105
        %v5107 = vpop.f32.mrb[0].mxu0
        %5108 = vmatprep.mubr.f32.mxu0 0.0
        %5109 = vmatmul.mubr.f32.gmra.mrb[0].mxu0 %v4903
        %v5110 = vpop.f32.mrb[0].mxu0
        %v5111 = vadd.f32 0.0, %v5110
        %v5112 = vpop.f32.mrb[0].mxu0
        %5113 = vmatprep.mubr.f32.mxu0 0.0
        %5114 = vmatmul.mubr.f32.gmra.mrb[0].mxu0 %v4904
        %v5115 = vpop.f32.mrb[0].mxu0
        %v5116 = vadd.f32 0.0, %v5115
        %v5117 = vpop.f32.mrb[0].mxu0
        %5118 = vmatprep.mubr.f32.mxu0 0.0
        %5119 = vmatmul.mubr.f32.gmra.mrb[0].mxu0 %v4905
        %v5120 = vpop.f32.mrb[0].mxu0
        %v5121 = vadd.f32 0.0, %v5120
        %v5122 = vpop.f32.mrb[0].mxu0
        %5123 = vmatprep.mubr.f32.mxu0 0.0
        %5124 = vmatmul.mubr.f32.gmra.mrb[0].mxu0 %v4906
        %v5125 = vpop.f32.mrb[0].mxu0
        %v5126 = vadd.f32 0.0, %v5125
        %v5127 = vpop.f32.mrb[0].mxu0
        %5128 = vmatprep.mubr.f32.mxu0 0.0
        %5129 = vmatmul.mubr.f32.gmra.mrb[0].mxu0 %v4907
        %v5130 = vpop.f32.mrb[0].mxu0
        %v5131 = vadd.f32 0.0, %v5130
        %v5132 = vpop.f32.mrb[0].mxu0
        %5133 = vmatprep.mubr.f32.mxu0 0.0
        %5134 = vmatmul.mubr.f32.gmra.mrb[0].mxu0 %v4908
        %v5135 = vpop.f32.mrb[0].mxu0
        %v5136 = vadd.f32 0.0, %v5135
        %v5137 = vpop.f32.mrb[0].mxu0
        %5138 = vmatprep.mubr.f32.mxu0 0.0
        %5139 = vmatmul.mubr.f32.gmra.mrb[0].mxu0 %v4909
        %v5140 = vpop.f32.mrb[0].mxu0
        %v5141 = vadd.f32 0.0, %v5140
        %v5142 = vpop.f32.mrb[0].mxu0
        %5143 = vmatprep.mubr.f32.mxu0 0.0
        %5144 = vmatmul.mubr.f32.gmra.mrb[0].mxu0 %v4910
        %v5145 = vpop.f32.mrb[0].mxu0
        %v5146 = vadd.f32 0.0, %v5145
        %v5147 = vpop.f32.mrb[0].mxu0
        %5148 = vmatprep.mubr.f32.mxu0 0.0
        %5149 = vmatmul.mubr.f32.gmra.mrb[0].mxu0 %v4911
        %v5150 = vpop.f32.mrb[0].mxu0
        %v5151 = vadd.f32 0.0, %v5150
        %v5152 = vpop.f32.mrb[0].mxu0
        %5153 = vdwg.mxu0
        %v5154 = vadd.f32 %v4848, %v4996
        %v5155 = vadd.f32 %v4849, %v5001
        %v5156 = vadd.f32 %v4850, %v5006
        %v5157 = vadd.f32 %v4851, %v5011
        %v5158 = vadd.f32 %v4852, %v5016
        %v5159 = vadd.f32 %v4853, %v5021
        %v5160 = vadd.f32 %v4854, %v5026
        %v5161 = vadd.f32 %v4855, %v5031
        %v5162 = vadd.f32 %v4856, %v5036
        %v5163 = vadd.f32 %v4857, %v5041
        %v5164 = vadd.f32 %v4858, %v5046
        %v5165 = vadd.f32 %v4859, %v5051
        %v5166 = vadd.f32 %v4860, %v5056
        %v5167 = vadd.f32 %v4861, %v5061
        %v5168 = vadd.f32 %v4862, %v5066
        %v5169 = vadd.f32 %v4863, %v5071
        %v5170 = vadd.f32 %v4864, %v5076
        %v5171 = vadd.f32 %v4865, %v5081
        %v5172 = vadd.f32 %v4866, %v5086
        %v5173 = vadd.f32 %v4867, %v5091
        %v5174 = vadd.f32 %v4868, %v5096
        %v5175 = vadd.f32 %v4869, %v5101
        %v5176 = vadd.f32 %v4870, %v5106
        %v5177 = vadd.f32 %v4871, %v5111
        %v5178 = vadd.f32 %v4872, %v5116
        %v5179 = vadd.f32 %v4873, %v5121
        %v5180 = vadd.f32 %v4874, %v5126
        %v5181 = vadd.f32 %v4875, %v5131
        %v5182 = vadd.f32 %v4876, %v5136
        %v5183 = vadd.f32 %v4877, %v5141
        %v5184 = vadd.f32 %v4878, %v5146
        %v5185 = vadd.f32 %v4879, %v5151
        %v5186 = vld [vmem:[%s5] sm:$0x1]
        %v5188 = vlaneseq
        %v5189 = vshrl.u32 %v5188, 7
        %v5190 = vsub.s32 0, %v5189
        %v5191 = vrot.slane %v5186, %v5190
        %v5193 = vmul.f32 %v5154, %v5191
        %v5194 = vmul.f32 %v5155, %v5191
        %v5195 = vmul.f32 %v5156, %v5191
        %v5196 = vmul.f32 %v5157, %v5191
        %v5197 = vmul.f32 %v5158, %v5191
        %v5198 = vmul.f32 %v5159, %v5191
        %v5199 = vmul.f32 %v5160, %v5191
        %v5200 = vmul.f32 %v5161, %v5191
        %v5201 = vmul.f32 %v5162, %v5191
        %v5202 = vmul.f32 %v5163, %v5191
        %v5203 = vmul.f32 %v5164, %v5191
        %v5204 = vmul.f32 %v5165, %v5191
        %v5205 = vmul.f32 %v5166, %v5191
        %v5206 = vmul.f32 %v5167, %v5191
        %v5207 = vmul.f32 %v5168, %v5191
        %v5208 = vmul.f32 %v5169, %v5191
        %v5209 = vmul.f32 %v5170, %v5191
        %v5210 = vmul.f32 %v5171, %v5191
        %v5211 = vmul.f32 %v5172, %v5191
        %v5212 = vmul.f32 %v5173, %v5191
        %v5213 = vmul.f32 %v5174, %v5191
        %v5214 = vmul.f32 %v5175, %v5191
        %v5215 = vmul.f32 %v5176, %v5191
        %v5216 = vmul.f32 %v5177, %v5191
        %v5217 = vmul.f32 %v5178, %v5191
        %v5218 = vmul.f32 %v5179, %v5191
        %v5219 = vmul.f32 %v5180, %v5191
        %v5220 = vmul.f32 %v5181, %v5191
        %v5221 = vmul.f32 %v5182, %v5191
        %v5222 = vmul.f32 %v5183, %v5191
        %v5223 = vmul.f32 %v5184, %v5191
        %v5224 = vmul.f32 %v5185, %v5191
        %v5225 = vld [vmem:[%s6] sm:$0x1]
        %v5227 = vlaneseq
        %v5228 = vshrl.u32 %v5227, 7
        %v5229 = vsub.s32 0, %v5228
        %v5230 = vrot.slane %v5225, %v5229
        %v5232 = vadd.f32 %v5193, %v5230
        %v5233 = vadd.f32 %v5194, %v5230
        %v5234 = vadd.f32 %v5195, %v5230
        %v5235 = vadd.f32 %v5196, %v5230
        %v5236 = vadd.f32 %v5197, %v5230
        %v5237 = vadd.f32 %v5198, %v5230
        %v5238 = vadd.f32 %v5199, %v5230
        %v5239 = vadd.f32 %v5200, %v5230
        %v5240 = vadd.f32 %v5201, %v5230
        %v5241 = vadd.f32 %v5202, %v5230
        %v5242 = vadd.f32 %v5203, %v5230
        %v5243 = vadd.f32 %v5204, %v5230
        %v5244 = vadd.f32 %v5205, %v5230
        %v5245 = vadd.f32 %v5206, %v5230
        %v5246 = vadd.f32 %v5207, %v5230
        %v5247 = vadd.f32 %v5208, %v5230
        %v5248 = vadd.f32 %v5209, %v5230
        %v5249 = vadd.f32 %v5210, %v5230
        %v5250 = vadd.f32 %v5211, %v5230
        %v5251 = vadd.f32 %v5212, %v5230
        %v5252 = vadd.f32 %v5213, %v5230
        %v5253 = vadd.f32 %v5214, %v5230
        %v5254 = vadd.f32 %v5215, %v5230
        %v5255 = vadd.f32 %v5216, %v5230
        %v5256 = vadd.f32 %v5217, %v5230
        %v5257 = vadd.f32 %v5218, %v5230
        %v5258 = vadd.f32 %v5219, %v5230
        %v5259 = vadd.f32 %v5220, %v5230
        %v5260 = vadd.f32 %v5221, %v5230
        %v5261 = vadd.f32 %v5222, %v5230
        %v5262 = vadd.f32 %v5223, %v5230
        %v5263 = vadd.f32 %v5224, %v5230
        %v5264 = vmax.f32 %v5232, 0.0
        %v5265 = vmax.f32 %v5233, 0.0
        %v5266 = vmax.f32 %v5234, 0.0
        %v5267 = vmax.f32 %v5235, 0.0
        %v5268 = vmax.f32 %v5236, 0.0
        %v5269 = vmax.f32 %v5237, 0.0
        %v5270 = vmax.f32 %v5238, 0.0
        %v5271 = vmax.f32 %v5239, 0.0
        %v5272 = vmax.f32 %v5240, 0.0
        %v5273 = vmax.f32 %v5241, 0.0
        %v5274 = vmax.f32 %v5242, 0.0
        %v5275 = vmax.f32 %v5243, 0.0
        %v5276 = vmax.f32 %v5244, 0.0
        %v5277 = vmax.f32 %v5245, 0.0
        %v5278 = vmax.f32 %v5246, 0.0
        %v5279 = vmax.f32 %v5247, 0.0
        %v5280 = vmax.f32 %v5248, 0.0
        %v5281 = vmax.f32 %v5249, 0.0
        %v5282 = vmax.f32 %v5250, 0.0
        %v5283 = vmax.f32 %v5251, 0.0
        %v5284 = vmax.f32 %v5252, 0.0
        %v5285 = vmax.f32 %v5253, 0.0
        %v5286 = vmax.f32 %v5254, 0.0
        %v5287 = vmax.f32 %v5255, 0.0
        %v5288 = vmax.f32 %v5256, 0.0
        %v5289 = vmax.f32 %v5257, 0.0
        %v5290 = vmax.f32 %v5258, 0.0
        %v5291 = vmax.f32 %v5259, 0.0
        %v5292 = vmax.f32 %v5260, 0.0
        %v5293 = vmax.f32 %v5261, 0.0
        %v5294 = vmax.f32 %v5262, 0.0
        %v5295 = vmax.f32 %v5263, 0.0
        %v5296 = vmax.f32 %v5264, %v5266
        %v5297 = vmax.f32 %v5265, %v5267
        %v5298 = vmax.f32 %v5268, %v5270
        %v5299 = vmax.f32 %v5269, %v5271
        %v5300 = vmax.f32 %v5272, %v5274
        %v5301 = vmax.f32 %v5273, %v5275
        %v5302 = vmax.f32 %v5276, %v5278
        %v5303 = vmax.f32 %v5277, %v5279
        %v5304 = vmax.f32 %v5280, %v5282
        %v5305 = vmax.f32 %v5281, %v5283
        %v5306 = vmax.f32 %v5284, %v5286
        %v5307 = vmax.f32 %v5285, %v5287
        %v5308 = vmax.f32 %v5288, %v5290
        %v5309 = vmax.f32 %v5289, %v5291
        %v5310 = vmax.f32 %v5292, %v5294
        %v5311 = vmax.f32 %v5293, %v5295
        %v5328 = vcombine.high %v5296, %v5296
        %v5330 = vunpack.c.l.s4 1983009808
        %v5331 = vunpack.c.0.s8 %v5330
        %v5332 = vlaneseq
        %v5333 = vshrl.u32 %v5332, 7
        %v5334 = vsub.s32 %v5331, %v5333
        %v5335 = vrot.slane %v5296, %v5334
        %v5337 = vunpack.c.l.s4 1983009808
        %v5338 = vunpack.c.0.s8 %v5337
        %v5339 = vlaneseq
        %v5340 = vshrl.u32 %v5339, 7
        %v5341 = vsub.s32 %v5338, %v5340
        %v5342 = vrot.slane %v5328, %v5341
        %v5343 = vcombine.high %v5335, %v5335
        %v5344 = vcombine.high %v5342, %v5342
        %v5345 = vcombine.high %v5297, %v5297
        %v5347 = vunpack.c.l.s4 1983009808
        %v5348 = vunpack.c.0.s8 %v5347
        %v5349 = vlaneseq
        %v5350 = vshrl.u32 %v5349, 7
        %v5351 = vsub.s32 %v5348, %v5350
        %v5352 = vrot.slane %v5297, %v5351
        %v5354 = vunpack.c.l.s4 1983009808
        %v5355 = vunpack.c.0.s8 %v5354
        %v5356 = vlaneseq
        %v5357 = vshrl.u32 %v5356, 7
        %v5358 = vsub.s32 %v5355, %v5357
        %v5359 = vrot.slane %v5345, %v5358
        %v5360 = vcombine.high %v5352, %v5352
        %v5361 = vcombine.high %v5359, %v5359
        %v5362 = vcombine.high %v5298, %v5298
        %v5364 = vunpack.c.l.s4 1983009808
        %v5365 = vunpack.c.0.s8 %v5364
        %v5366 = vlaneseq
        %v5367 = vshrl.u32 %v5366, 7
        %v5368 = vsub.s32 %v5365, %v5367
        %v5369 = vrot.slane %v5298, %v5368
        %v5371 = vunpack.c.l.s4 1983009808
        %v5372 = vunpack.c.0.s8 %v5371
        %v5373 = vlaneseq
        %v5374 = vshrl.u32 %v5373, 7
        %v5375 = vsub.s32 %v5372, %v5374
        %v5376 = vrot.slane %v5362, %v5375
        %v5377 = vcombine.high %v5369, %v5369
        %v5378 = vcombine.high %v5376, %v5376
        %v5379 = vcombine.high %v5299, %v5299
        %v5381 = vunpack.c.l.s4 1983009808
        %v5382 = vunpack.c.0.s8 %v5381
        %v5383 = vlaneseq
        %v5384 = vshrl.u32 %v5383, 7
        %v5385 = vsub.s32 %v5382, %v5384
        %v5386 = vrot.slane %v5299, %v5385
        %v5388 = vunpack.c.l.s4 1983009808
        %v5389 = vunpack.c.0.s8 %v5388
        %v5390 = vlaneseq
        %v5391 = vshrl.u32 %v5390, 7
        %v5392 = vsub.s32 %v5389, %v5391
        %v5393 = vrot.slane %v5379, %v5392
        %v5394 = vcombine.high %v5386, %v5386
        %v5395 = vcombine.high %v5393, %v5393
        %v5396 = vcombine.high %v5300, %v5300
        %v5398 = vunpack.c.l.s4 1983009808
        %v5399 = vunpack.c.0.s8 %v5398
        %v5400 = vlaneseq
        %v5401 = vshrl.u32 %v5400, 7
        %v5402 = vsub.s32 %v5399, %v5401
        %v5403 = vrot.slane %v5300, %v5402
        %v5405 = vunpack.c.l.s4 1983009808
        %v5406 = vunpack.c.0.s8 %v5405
        %v5407 = vlaneseq
        %v5408 = vshrl.u32 %v5407, 7
        %v5409 = vsub.s32 %v5406, %v5408
        %v5410 = vrot.slane %v5396, %v5409
        %v5411 = vcombine.high %v5403, %v5403
        %v5412 = vcombine.high %v5410, %v5410
        %v5413 = vcombine.high %v5301, %v5301
        %v5415 = vunpack.c.l.s4 1983009808
        %v5416 = vunpack.c.0.s8 %v5415
        %v5417 = vlaneseq
        %v5418 = vshrl.u32 %v5417, 7
        %v5419 = vsub.s32 %v5416, %v5418
        %v5420 = vrot.slane %v5301, %v5419
        %v5422 = vunpack.c.l.s4 1983009808
        %v5423 = vunpack.c.0.s8 %v5422
        %v5424 = vlaneseq
        %v5425 = vshrl.u32 %v5424, 7
        %v5426 = vsub.s32 %v5423, %v5425
        %v5427 = vrot.slane %v5413, %v5426
        %v5428 = vcombine.high %v5420, %v5420
        %v5429 = vcombine.high %v5427, %v5427
        %v5430 = vcombine.high %v5302, %v5302
        %v5432 = vunpack.c.l.s4 1983009808
        %v5433 = vunpack.c.0.s8 %v5432
        %v5434 = vlaneseq
        %v5435 = vshrl.u32 %v5434, 7
        %v5436 = vsub.s32 %v5433, %v5435
        %v5437 = vrot.slane %v5302, %v5436
        %v5439 = vunpack.c.l.s4 1983009808
        %v5440 = vunpack.c.0.s8 %v5439
        %v5441 = vlaneseq
        %v5442 = vshrl.u32 %v5441, 7
        %v5443 = vsub.s32 %v5440, %v5442
        %v5444 = vrot.slane %v5430, %v5443
        %v5445 = vcombine.high %v5437, %v5437
        %v5446 = vcombine.high %v5444, %v5444
        %v5447 = vcombine.high %v5303, %v5303
        %v5449 = vunpack.c.l.s4 1983009808
        %v5450 = vunpack.c.0.s8 %v5449
        %v5451 = vlaneseq
        %v5452 = vshrl.u32 %v5451, 7
        %v5453 = vsub.s32 %v5450, %v5452
        %v5454 = vrot.slane %v5303, %v5453
        %v5456 = vunpack.c.l.s4 1983009808
        %v5457 = vunpack.c.0.s8 %v5456
        %v5458 = vlaneseq
        %v5459 = vshrl.u32 %v5458, 7
        %v5460 = vsub.s32 %v5457, %v5459
        %v5461 = vrot.slane %v5447, %v5460
        %v5462 = vcombine.high %v5454, %v5454
        %v5463 = vcombine.high %v5461, %v5461
        %v5464 = vcombine.high %v5304, %v5304
        %v5466 = vunpack.c.l.s4 1983009808
        %v5467 = vunpack.c.0.s8 %v5466
        %v5468 = vlaneseq
        %v5469 = vshrl.u32 %v5468, 7
        %v5470 = vsub.s32 %v5467, %v5469
        %v5471 = vrot.slane %v5304, %v5470
        %v5473 = vunpack.c.l.s4 1983009808
        %v5474 = vunpack.c.0.s8 %v5473
        %v5475 = vlaneseq
        %v5476 = vshrl.u32 %v5475, 7
        %v5477 = vsub.s32 %v5474, %v5476
        %v5478 = vrot.slane %v5464, %v5477
        %v5479 = vcombine.high %v5471, %v5471
        %v5480 = vcombine.high %v5478, %v5478
        %v5481 = vcombine.high %v5305, %v5305
        %v5483 = vunpack.c.l.s4 1983009808
        %v5484 = vunpack.c.0.s8 %v5483
        %v5485 = vlaneseq
        %v5486 = vshrl.u32 %v5485, 7
        %v5487 = vsub.s32 %v5484, %v5486
        %v5488 = vrot.slane %v5305, %v5487
        %v5490 = vunpack.c.l.s4 1983009808
        %v5491 = vunpack.c.0.s8 %v5490
        %v5492 = vlaneseq
        %v5493 = vshrl.u32 %v5492, 7
        %v5494 = vsub.s32 %v5491, %v5493
        %v5495 = vrot.slane %v5481, %v5494
        %v5496 = vcombine.high %v5488, %v5488
        %v5497 = vcombine.high %v5495, %v5495
        %v5498 = vcombine.high %v5306, %v5306
        %v5500 = vunpack.c.l.s4 1983009808
        %v5501 = vunpack.c.0.s8 %v5500
        %v5502 = vlaneseq
        %v5503 = vshrl.u32 %v5502, 7
        %v5504 = vsub.s32 %v5501, %v5503
        %v5505 = vrot.slane %v5306, %v5504
        %v5507 = vunpack.c.l.s4 1983009808
        %v5508 = vunpack.c.0.s8 %v5507
        %v5509 = vlaneseq
        %v5510 = vshrl.u32 %v5509, 7
        %v5511 = vsub.s32 %v5508, %v5510
        %v5512 = vrot.slane %v5498, %v5511
        %v5513 = vcombine.high %v5505, %v5505
        %v5514 = vcombine.high %v5512, %v5512
        %v5515 = vcombine.high %v5307, %v5307
        %v5517 = vunpack.c.l.s4 1983009808
        %v5518 = vunpack.c.0.s8 %v5517
        %v5519 = vlaneseq
        %v5520 = vshrl.u32 %v5519, 7
        %v5521 = vsub.s32 %v5518, %v5520
        %v5522 = vrot.slane %v5307, %v5521
        %v5524 = vunpack.c.l.s4 1983009808
        %v5525 = vunpack.c.0.s8 %v5524
        %v5526 = vlaneseq
        %v5527 = vshrl.u32 %v5526, 7
        %v5528 = vsub.s32 %v5525, %v5527
        %v5529 = vrot.slane %v5515, %v5528
        %v5530 = vcombine.high %v5522, %v5522
        %v5531 = vcombine.high %v5529, %v5529
        %v5532 = vcombine.high %v5308, %v5308
        %v5534 = vunpack.c.l.s4 1983009808
        %v5535 = vunpack.c.0.s8 %v5534
        %v5536 = vlaneseq
        %v5537 = vshrl.u32 %v5536, 7
        %v5538 = vsub.s32 %v5535, %v5537
        %v5539 = vrot.slane %v5308, %v5538
        %v5541 = vunpack.c.l.s4 1983009808
        %v5542 = vunpack.c.0.s8 %v5541
        %v5543 = vlaneseq
        %v5544 = vshrl.u32 %v5543, 7
        %v5545 = vsub.s32 %v5542, %v5544
        %v5546 = vrot.slane %v5532, %v5545
        %v5547 = vcombine.high %v5539, %v5539
        %v5548 = vcombine.high %v5546, %v5546
        %v5549 = vcombine.high %v5309, %v5309
        %v5551 = vunpack.c.l.s4 1983009808
        %v5552 = vunpack.c.0.s8 %v5551
        %v5553 = vlaneseq
        %v5554 = vshrl.u32 %v5553, 7
        %v5555 = vsub.s32 %v5552, %v5554
        %v5556 = vrot.slane %v5309, %v5555
        %v5558 = vunpack.c.l.s4 1983009808
        %v5559 = vunpack.c.0.s8 %v5558
        %v5560 = vlaneseq
        %v5561 = vshrl.u32 %v5560, 7
        %v5562 = vsub.s32 %v5559, %v5561
        %v5563 = vrot.slane %v5549, %v5562
        %v5564 = vcombine.high %v5556, %v5556
        %v5565 = vcombine.high %v5563, %v5563
        %v5566 = vcombine.high %v5310, %v5310
        %v5568 = vunpack.c.l.s4 1983009808
        %v5569 = vunpack.c.0.s8 %v5568
        %v5570 = vlaneseq
        %v5571 = vshrl.u32 %v5570, 7
        %v5572 = vsub.s32 %v5569, %v5571
        %v5573 = vrot.slane %v5310, %v5572
        %v5575 = vunpack.c.l.s4 1983009808
        %v5576 = vunpack.c.0.s8 %v5575
        %v5577 = vlaneseq
        %v5578 = vshrl.u32 %v5577, 7
        %v5579 = vsub.s32 %v5576, %v5578
        %v5580 = vrot.slane %v5566, %v5579
        %v5581 = vcombine.high %v5573, %v5573
        %v5582 = vcombine.high %v5580, %v5580
        %v5583 = vcombine.high %v5311, %v5311
        %v5585 = vunpack.c.l.s4 1983009808
        %v5586 = vunpack.c.0.s8 %v5585
        %v5587 = vlaneseq
        %v5588 = vshrl.u32 %v5587, 7
        %v5589 = vsub.s32 %v5586, %v5588
        %v5590 = vrot.slane %v5311, %v5589
        %v5592 = vunpack.c.l.s4 1983009808
        %v5593 = vunpack.c.0.s8 %v5592
        %v5594 = vlaneseq
        %v5595 = vshrl.u32 %v5594, 7
        %v5596 = vsub.s32 %v5593, %v5595
        %v5597 = vrot.slane %v5583, %v5596
        %v5598 = vcombine.high %v5590, %v5590
        %v5599 = vcombine.high %v5597, %v5597
        %vm5664 = vcmask 1041408
        %v5665 = vsel %vm5664, %v5335, -inf
        %v5666 = vrot.slane %v5665, 4
        %v5667 = vmax.f32 %v5665, %v5666
        %v5668 = vrot.slane %v5667, 2
        %v5669 = vmax.f32 %v5667, %v5668
        %v5670 = vrot.slane %v5669, 1
        %v5671 = vmax.f32 %v5669, %v5670
        %v5672 = vsel %vm5664, %v5343, -inf
        %v5673 = vrot.slane %v5672, 4
        %v5674 = vmax.f32 %v5672, %v5673
        %v5675 = vrot.slane %v5674, 2
        %v5676 = vmax.f32 %v5674, %v5675
        %v5677 = vrot.slane %v5676, 1
        %v5678 = vmax.f32 %v5676, %v5677
        %v5679 = vsel %vm5664, %v5342, -inf
        %v5680 = vrot.slane %v5679, 4
        %v5681 = vmax.f32 %v5679, %v5680
        %v5682 = vrot.slane %v5681, 2
        %v5683 = vmax.f32 %v5681, %v5682
        %v5684 = vrot.slane %v5683, 1
        %v5685 = vmax.f32 %v5683, %v5684
        %v5686 = vsel %vm5664, %v5344, -inf
        %v5687 = vrot.slane %v5686, 4
        %v5688 = vmax.f32 %v5686, %v5687
        %v5689 = vrot.slane %v5688, 2
        %v5690 = vmax.f32 %v5688, %v5689
        %v5691 = vrot.slane %v5690, 1
        %v5692 = vmax.f32 %v5690, %v5691
        %v5693 = vsel %vm5664, %v5352, -inf
        %v5694 = vrot.slane %v5693, 4
        %v5695 = vmax.f32 %v5693, %v5694
        %v5696 = vrot.slane %v5695, 2
        %v5697 = vmax.f32 %v5695, %v5696
        %v5698 = vrot.slane %v5697, 1
        %v5699 = vmax.f32 %v5697, %v5698
        %v5700 = vsel %vm5664, %v5360, -inf
        %v5701 = vrot.slane %v5700, 4
        %v5702 = vmax.f32 %v5700, %v5701
        %v5703 = vrot.slane %v5702, 2
        %v5704 = vmax.f32 %v5702, %v5703
        %v5705 = vrot.slane %v5704, 1
        %v5706 = vmax.f32 %v5704, %v5705
        %v5707 = vsel %vm5664, %v5359, -inf
        %v5708 = vrot.slane %v5707, 4
        %v5709 = vmax.f32 %v5707, %v5708
        %v5710 = vrot.slane %v5709, 2
        %v5711 = vmax.f32 %v5709, %v5710
        %v5712 = vrot.slane %v5711, 1
        %v5713 = vmax.f32 %v5711, %v5712
        %v5714 = vsel %vm5664, %v5361, -inf
        %v5715 = vrot.slane %v5714, 4
        %v5716 = vmax.f32 %v5714, %v5715
        %v5717 = vrot.slane %v5716, 2
        %v5718 = vmax.f32 %v5716, %v5717
        %v5719 = vrot.slane %v5718, 1
        %v5720 = vmax.f32 %v5718, %v5719
        %v5721 = vsel %vm5664, %v5369, -inf
        %v5722 = vrot.slane %v5721, 4
        %v5723 = vmax.f32 %v5721, %v5722
        %v5724 = vrot.slane %v5723, 2
        %v5725 = vmax.f32 %v5723, %v5724
        %v5726 = vrot.slane %v5725, 1
        %v5727 = vmax.f32 %v5725, %v5726
        %v5728 = vsel %vm5664, %v5377, -inf
        %v5729 = vrot.slane %v5728, 4
        %v5730 = vmax.f32 %v5728, %v5729
        %v5731 = vrot.slane %v5730, 2
        %v5732 = vmax.f32 %v5730, %v5731
        %v5733 = vrot.slane %v5732, 1
        %v5734 = vmax.f32 %v5732, %v5733
        %v5735 = vsel %vm5664, %v5376, -inf
        %v5736 = vrot.slane %v5735, 4
        %v5737 = vmax.f32 %v5735, %v5736
        %v5738 = vrot.slane %v5737, 2
        %v5739 = vmax.f32 %v5737, %v5738
        %v5740 = vrot.slane %v5739, 1
        %v5741 = vmax.f32 %v5739, %v5740
        %v5742 = vsel %vm5664, %v5378, -inf
        %v5743 = vrot.slane %v5742, 4
        %v5744 = vmax.f32 %v5742, %v5743
        %v5745 = vrot.slane %v5744, 2
        %v5746 = vmax.f32 %v5744, %v5745
        %v5747 = vrot.slane %v5746, 1
        %v5748 = vmax.f32 %v5746, %v5747
        %v5749 = vsel %vm5664, %v5386, -inf
        %v5750 = vrot.slane %v5749, 4
        %v5751 = vmax.f32 %v5749, %v5750
        %v5752 = vrot.slane %v5751, 2
        %v5753 = vmax.f32 %v5751, %v5752
        %v5754 = vrot.slane %v5753, 1
        %v5755 = vmax.f32 %v5753, %v5754
        %v5756 = vsel %vm5664, %v5394, -inf
        %v5757 = vrot.slane %v5756, 4
        %v5758 = vmax.f32 %v5756, %v5757
        %v5759 = vrot.slane %v5758, 2
        %v5760 = vmax.f32 %v5758, %v5759
        %v5761 = vrot.slane %v5760, 1
        %v5762 = vmax.f32 %v5760, %v5761
        %v5763 = vsel %vm5664, %v5393, -inf
        %v5764 = vrot.slane %v5763, 4
        %v5765 = vmax.f32 %v5763, %v5764
        %v5766 = vrot.slane %v5765, 2
        %v5767 = vmax.f32 %v5765, %v5766
        %v5768 = vrot.slane %v5767, 1
        %v5769 = vmax.f32 %v5767, %v5768
        %v5770 = vsel %vm5664, %v5395, -inf
        %v5771 = vrot.slane %v5770, 4
        %v5772 = vmax.f32 %v5770, %v5771
        %v5773 = vrot.slane %v5772, 2
        %v5774 = vmax.f32 %v5772, %v5773
        %v5775 = vrot.slane %v5774, 1
        %v5776 = vmax.f32 %v5774, %v5775
        %v5777 = vsel %vm5664, %v5403, -inf
        %v5778 = vrot.slane %v5777, 4
        %v5779 = vmax.f32 %v5777, %v5778
        %v5780 = vrot.slane %v5779, 2
        %v5781 = vmax.f32 %v5779, %v5780
        %v5782 = vrot.slane %v5781, 1
        %v5783 = vmax.f32 %v5781, %v5782
        %v5784 = vsel %vm5664, %v5411, -inf
        %v5785 = vrot.slane %v5784, 4
        %v5786 = vmax.f32 %v5784, %v5785
        %v5787 = vrot.slane %v5786, 2
        %v5788 = vmax.f32 %v5786, %v5787
        %v5789 = vrot.slane %v5788, 1
        %v5790 = vmax.f32 %v5788, %v5789
        %v5791 = vsel %vm5664, %v5410, -inf
        %v5792 = vrot.slane %v5791, 4
        %v5793 = vmax.f32 %v5791, %v5792
        %v5794 = vrot.slane %v5793, 2
        %v5795 = vmax.f32 %v5793, %v5794
        %v5796 = vrot.slane %v5795, 1
        %v5797 = vmax.f32 %v5795, %v5796
        %v5798 = vsel %vm5664, %v5412, -inf
        %v5799 = vrot.slane %v5798, 4
        %v5800 = vmax.f32 %v5798, %v5799
        %v5801 = vrot.slane %v5800, 2
        %v5802 = vmax.f32 %v5800, %v5801
        %v5803 = vrot.slane %v5802, 1
        %v5804 = vmax.f32 %v5802, %v5803
        %v5805 = vsel %vm5664, %v5420, -inf
        %v5806 = vrot.slane %v5805, 4
        %v5807 = vmax.f32 %v5805, %v5806
        %v5808 = vrot.slane %v5807, 2
        %v5809 = vmax.f32 %v5807, %v5808
        %v5810 = vrot.slane %v5809, 1
        %v5811 = vmax.f32 %v5809, %v5810
        %v5812 = vsel %vm5664, %v5428, -inf
        %v5813 = vrot.slane %v5812, 4
        %v5814 = vmax.f32 %v5812, %v5813
        %v5815 = vrot.slane %v5814, 2
        %v5816 = vmax.f32 %v5814, %v5815
        %v5817 = vrot.slane %v5816, 1
        %v5818 = vmax.f32 %v5816, %v5817
        %v5819 = vsel %vm5664, %v5427, -inf
        %v5820 = vrot.slane %v5819, 4
        %v5821 = vmax.f32 %v5819, %v5820
        %v5822 = vrot.slane %v5821, 2
        %v5823 = vmax.f32 %v5821, %v5822
        %v5824 = vrot.slane %v5823, 1
        %v5825 = vmax.f32 %v5823, %v5824
        %v5826 = vsel %vm5664, %v5429, -inf
        %v5827 = vrot.slane %v5826, 4
        %v5828 = vmax.f32 %v5826, %v5827
        %v5829 = vrot.slane %v5828, 2
        %v5830 = vmax.f32 %v5828, %v5829
        %v5831 = vrot.slane %v5830, 1
        %v5832 = vmax.f32 %v5830, %v5831
        %v5833 = vsel %vm5664, %v5437, -inf
        %v5834 = vrot.slane %v5833, 4
        %v5835 = vmax.f32 %v5833, %v5834
        %v5836 = vrot.slane %v5835, 2
        %v5837 = vmax.f32 %v5835, %v5836
        %v5838 = vrot.slane %v5837, 1
        %v5839 = vmax.f32 %v5837, %v5838
        %v5840 = vsel %vm5664, %v5445, -inf
        %v5841 = vrot.slane %v5840, 4
        %v5842 = vmax.f32 %v5840, %v5841
        %v5843 = vrot.slane %v5842, 2
        %v5844 = vmax.f32 %v5842, %v5843
        %v5845 = vrot.slane %v5844, 1
        %v5846 = vmax.f32 %v5844, %v5845
        %v5847 = vsel %vm5664, %v5444, -inf
        %v5848 = vrot.slane %v5847, 4
        %v5849 = vmax.f32 %v5847, %v5848
        %v5850 = vrot.slane %v5849, 2
        %v5851 = vmax.f32 %v5849, %v5850
        %v5852 = vrot.slane %v5851, 1
        %v5853 = vmax.f32 %v5851, %v5852
        %v5854 = vsel %vm5664, %v5446, -inf
        %v5855 = vrot.slane %v5854, 4
        %v5856 = vmax.f32 %v5854, %v5855
        %v5857 = vrot.slane %v5856, 2
        %v5858 = vmax.f32 %v5856, %v5857
        %v5859 = vrot.slane %v5858, 1
        %v5860 = vmax.f32 %v5858, %v5859
        %v5861 = vsel %vm5664, %v5454, -inf
        %v5862 = vrot.slane %v5861, 4
        %v5863 = vmax.f32 %v5861, %v5862
        %v5864 = vrot.slane %v5863, 2
        %v5865 = vmax.f32 %v5863, %v5864
        %v5866 = vrot.slane %v5865, 1
        %v5867 = vmax.f32 %v5865, %v5866
        %v5868 = vsel %vm5664, %v5462, -inf
        %v5869 = vrot.slane %v5868, 4
        %v5870 = vmax.f32 %v5868, %v5869
        %v5871 = vrot.slane %v5870, 2
        %v5872 = vmax.f32 %v5870, %v5871
        %v5873 = vrot.slane %v5872, 1
        %v5874 = vmax.f32 %v5872, %v5873
        %v5875 = vsel %vm5664, %v5461, -inf
        %v5876 = vrot.slane %v5875, 4
        %v5877 = vmax.f32 %v5875, %v5876
        %v5878 = vrot.slane %v5877, 2
        %v5879 = vmax.f32 %v5877, %v5878
        %v5880 = vrot.slane %v5879, 1
        %v5881 = vmax.f32 %v5879, %v5880
        %v5882 = vsel %vm5664, %v5463, -inf
        %v5883 = vrot.slane %v5882, 4
        %v5884 = vmax.f32 %v5882, %v5883
        %v5885 = vrot.slane %v5884, 2
        %v5886 = vmax.f32 %v5884, %v5885
        %v5887 = vrot.slane %v5886, 1
        %v5888 = vmax.f32 %v5886, %v5887
        %v5889 = vsel %vm5664, %v5471, -inf
        %v5890 = vrot.slane %v5889, 4
        %v5891 = vmax.f32 %v5889, %v5890
        %v5892 = vrot.slane %v5891, 2
        %v5893 = vmax.f32 %v5891, %v5892
        %v5894 = vrot.slane %v5893, 1
        %v5895 = vmax.f32 %v5893, %v5894
        %v5896 = vsel %vm5664, %v5479, -inf
        %v5897 = vrot.slane %v5896, 4
        %v5898 = vmax.f32 %v5896, %v5897
        %v5899 = vrot.slane %v5898, 2
        %v5900 = vmax.f32 %v5898, %v5899
        %v5901 = vrot.slane %v5900, 1
        %v5902 = vmax.f32 %v5900, %v5901
        %v5903 = vsel %vm5664, %v5478, -inf
        %v5904 = vrot.slane %v5903, 4
        %v5905 = vmax.f32 %v5903, %v5904
        %v5906 = vrot.slane %v5905, 2
        %v5907 = vmax.f32 %v5905, %v5906
        %v5908 = vrot.slane %v5907, 1
        %v5909 = vmax.f32 %v5907, %v5908
        %v5910 = vsel %vm5664, %v5480, -inf
        %v5911 = vrot.slane %v5910, 4
        %v5912 = vmax.f32 %v5910, %v5911
        %v5913 = vrot.slane %v5912, 2
        %v5914 = vmax.f32 %v5912, %v5913
        %v5915 = vrot.slane %v5914, 1
        %v5916 = vmax.f32 %v5914, %v5915
        %v5917 = vsel %vm5664, %v5488, -inf
        %v5918 = vrot.slane %v5917, 4
        %v5919 = vmax.f32 %v5917, %v5918
        %v5920 = vrot.slane %v5919, 2
        %v5921 = vmax.f32 %v5919, %v5920
        %v5922 = vrot.slane %v5921, 1
        %v5923 = vmax.f32 %v5921, %v5922
        %v5924 = vsel %vm5664, %v5496, -inf
        %v5925 = vrot.slane %v5924, 4
        %v5926 = vmax.f32 %v5924, %v5925
        %v5927 = vrot.slane %v5926, 2
        %v5928 = vmax.f32 %v5926, %v5927
        %v5929 = vrot.slane %v5928, 1
        %v5930 = vmax.f32 %v5928, %v5929
        %v5931 = vsel %vm5664, %v5495, -inf
        %v5932 = vrot.slane %v5931, 4
        %v5933 = vmax.f32 %v5931, %v5932
        %v5934 = vrot.slane %v5933, 2
        %v5935 = vmax.f32 %v5933, %v5934
        %v5936 = vrot.slane %v5935, 1
        %v5937 = vmax.f32 %v5935, %v5936
        %v5938 = vsel %vm5664, %v5497, -inf
        %v5939 = vrot.slane %v5938, 4
        %v5940 = vmax.f32 %v5938, %v5939
        %v5941 = vrot.slane %v5940, 2
        %v5942 = vmax.f32 %v5940, %v5941
        %v5943 = vrot.slane %v5942, 1
        %v5944 = vmax.f32 %v5942, %v5943
        %v5945 = vsel %vm5664, %v5505, -inf
        %v5946 = vrot.slane %v5945, 4
        %v5947 = vmax.f32 %v5945, %v5946
        %v5948 = vrot.slane %v5947, 2
        %v5949 = vmax.f32 %v5947, %v5948
        %v5950 = vrot.slane %v5949, 1
        %v5951 = vmax.f32 %v5949, %v5950
        %v5952 = vsel %vm5664, %v5513, -inf
        %v5953 = vrot.slane %v5952, 4
        %v5954 = vmax.f32 %v5952, %v5953
        %v5955 = vrot.slane %v5954, 2
        %v5956 = vmax.f32 %v5954, %v5955
        %v5957 = vrot.slane %v5956, 1
        %v5958 = vmax.f32 %v5956, %v5957
        %v5959 = vsel %vm5664, %v5512, -inf
        %v5960 = vrot.slane %v5959, 4
        %v5961 = vmax.f32 %v5959, %v5960
        %v5962 = vrot.slane %v5961, 2
        %v5963 = vmax.f32 %v5961, %v5962
        %v5964 = vrot.slane %v5963, 1
        %v5965 = vmax.f32 %v5963, %v5964
        %v5966 = vsel %vm5664, %v5514, -inf
        %v5967 = vrot.slane %v5966, 4
        %v5968 = vmax.f32 %v5966, %v5967
        %v5969 = vrot.slane %v5968, 2
        %v5970 = vmax.f32 %v5968, %v5969
        %v5971 = vrot.slane %v5970, 1
        %v5972 = vmax.f32 %v5970, %v5971
        %v5973 = vsel %vm5664, %v5522, -inf
        %v5974 = vrot.slane %v5973, 4
        %v5975 = vmax.f32 %v5973, %v5974
        %v5976 = vrot.slane %v5975, 2
        %v5977 = vmax.f32 %v5975, %v5976
        %v5978 = vrot.slane %v5977, 1
        %v5979 = vmax.f32 %v5977, %v5978
        %v5980 = vsel %vm5664, %v5530, -inf
        %v5981 = vrot.slane %v5980, 4
        %v5982 = vmax.f32 %v5980, %v5981
        %v5983 = vrot.slane %v5982, 2
        %v5984 = vmax.f32 %v5982, %v5983
        %v5985 = vrot.slane %v5984, 1
        %v5986 = vmax.f32 %v5984, %v5985
        %v5987 = vsel %vm5664, %v5529, -inf
        %v5988 = vrot.slane %v5987, 4
        %v5989 = vmax.f32 %v5987, %v5988
        %v5990 = vrot.slane %v5989, 2
        %v5991 = vmax.f32 %v5989, %v5990
        %v5992 = vrot.slane %v5991, 1
        %v5993 = vmax.f32 %v5991, %v5992
        %v5994 = vsel %vm5664, %v5531, -inf
        %v5995 = vrot.slane %v5994, 4
        %v5996 = vmax.f32 %v5994, %v5995
        %v5997 = vrot.slane %v5996, 2
        %v5998 = vmax.f32 %v5996, %v5997
        %v5999 = vrot.slane %v5998, 1
        %v6000 = vmax.f32 %v5998, %v5999
        %v6001 = vsel %vm5664, %v5539, -inf
        %v6002 = vrot.slane %v6001, 4
        %v6003 = vmax.f32 %v6001, %v6002
        %v6004 = vrot.slane %v6003, 2
        %v6005 = vmax.f32 %v6003, %v6004
        %v6006 = vrot.slane %v6005, 1
        %v6007 = vmax.f32 %v6005, %v6006
        %v6008 = vsel %vm5664, %v5547, -inf
        %v6009 = vrot.slane %v6008, 4
        %v6010 = vmax.f32 %v6008, %v6009
        %v6011 = vrot.slane %v6010, 2
        %v6012 = vmax.f32 %v6010, %v6011
        %v6013 = vrot.slane %v6012, 1
        %v6014 = vmax.f32 %v6012, %v6013
        %v6015 = vsel %vm5664, %v5546, -inf
        %v6016 = vrot.slane %v6015, 4
        %v6017 = vmax.f32 %v6015, %v6016
        %v6018 = vrot.slane %v6017, 2
        %v6019 = vmax.f32 %v6017, %v6018
        %v6020 = vrot.slane %v6019, 1
        %v6021 = vmax.f32 %v6019, %v6020
        %v6022 = vsel %vm5664, %v5548, -inf
        %v6023 = vrot.slane %v6022, 4
        %v6024 = vmax.f32 %v6022, %v6023
        %v6025 = vrot.slane %v6024, 2
        %v6026 = vmax.f32 %v6024, %v6025
        %v6027 = vrot.slane %v6026, 1
        %v6028 = vmax.f32 %v6026, %v6027
        %v6029 = vsel %vm5664, %v5556, -inf
        %v6030 = vrot.slane %v6029, 4
        %v6031 = vmax.f32 %v6029, %v6030
        %v6032 = vrot.slane %v6031, 2
        %v6033 = vmax.f32 %v6031, %v6032
        %v6034 = vrot.slane %v6033, 1
        %v6035 = vmax.f32 %v6033, %v6034
        %v6036 = vsel %vm5664, %v5564, -inf
        %v6037 = vrot.slane %v6036, 4
        %v6038 = vmax.f32 %v6036, %v6037
        %v6039 = vrot.slane %v6038, 2
        %v6040 = vmax.f32 %v6038, %v6039
        %v6041 = vrot.slane %v6040, 1
        %v6042 = vmax.f32 %v6040, %v6041
        %v6043 = vsel %vm5664, %v5563, -inf
        %v6044 = vrot.slane %v6043, 4
        %v6045 = vmax.f32 %v6043, %v6044
        %v6046 = vrot.slane %v6045, 2
        %v6047 = vmax.f32 %v6045, %v6046
        %v6048 = vrot.slane %v6047, 1
        %v6049 = vmax.f32 %v6047, %v6048
        %v6050 = vsel %vm5664, %v5565, -inf
        %v6051 = vrot.slane %v6050, 4
        %v6052 = vmax.f32 %v6050, %v6051
        %v6053 = vrot.slane %v6052, 2
        %v6054 = vmax.f32 %v6052, %v6053
        %v6055 = vrot.slane %v6054, 1
        %v6056 = vmax.f32 %v6054, %v6055
        %v6057 = vsel %vm5664, %v5573, -inf
        %v6058 = vrot.slane %v6057, 4
        %v6059 = vmax.f32 %v6057, %v6058
        %v6060 = vrot.slane %v6059, 2
        %v6061 = vmax.f32 %v6059, %v6060
        %v6062 = vrot.slane %v6061, 1
        %v6063 = vmax.f32 %v6061, %v6062
        %v6064 = vsel %vm5664, %v5581, -inf
        %v6065 = vrot.slane %v6064, 4
        %v6066 = vmax.f32 %v6064, %v6065
        %v6067 = vrot.slane %v6066, 2
        %v6068 = vmax.f32 %v6066, %v6067
        %v6069 = vrot.slane %v6068, 1
        %v6070 = vmax.f32 %v6068, %v6069
        %v6071 = vsel %vm5664, %v5580, -inf
        %v6072 = vrot.slane %v6071, 4
        %v6073 = vmax.f32 %v6071, %v6072
        %v6074 = vrot.slane %v6073, 2
        %v6075 = vmax.f32 %v6073, %v6074
        %v6076 = vrot.slane %v6075, 1
        %v6077 = vmax.f32 %v6075, %v6076
        %v6078 = vsel %vm5664, %v5582, -inf
        %v6079 = vrot.slane %v6078, 4
        %v6080 = vmax.f32 %v6078, %v6079
        %v6081 = vrot.slane %v6080, 2
        %v6082 = vmax.f32 %v6080, %v6081
        %v6083 = vrot.slane %v6082, 1
        %v6084 = vmax.f32 %v6082, %v6083
        %v6085 = vsel %vm5664, %v5590, -inf
        %v6086 = vrot.slane %v6085, 4
        %v6087 = vmax.f32 %v6085, %v6086
        %v6088 = vrot.slane %v6087, 2
        %v6089 = vmax.f32 %v6087, %v6088
        %v6090 = vrot.slane %v6089, 1
        %v6091 = vmax.f32 %v6089, %v6090
        %v6092 = vsel %vm5664, %v5598, -inf
        %v6093 = vrot.slane %v6092, 4
        %v6094 = vmax.f32 %v6092, %v6093
        %v6095 = vrot.slane %v6094, 2
        %v6096 = vmax.f32 %v6094, %v6095
        %v6097 = vrot.slane %v6096, 1
        %v6098 = vmax.f32 %v6096, %v6097
        %v6099 = vsel %vm5664, %v5597, -inf
        %v6100 = vrot.slane %v6099, 4
        %v6101 = vmax.f32 %v6099, %v6100
        %v6102 = vrot.slane %v6101, 2
        %v6103 = vmax.f32 %v6101, %v6102
        %v6104 = vrot.slane %v6103, 1
        %v6105 = vmax.f32 %v6103, %v6104
        %v6106 = vsel %vm5664, %v5599, -inf
        %v6107 = vrot.slane %v6106, 4
        %v6108 = vmax.f32 %v6106, %v6107
        %v6109 = vrot.slane %v6108, 2
        %v6110 = vmax.f32 %v6108, %v6109
        %v6111 = vrot.slane %v6110, 1
        %v6112 = vmax.f32 %v6110, %v6111
        %vm6177 = vcmask 1041409
        %v6178 = vsel %vm6177, %v5678, %v5671
        %vm6179 = vcmask 1042434
        %v6180 = vsel %vm6179, %v5685, %v6178
        %vm6181 = vcmask 1043459
        %v6182 = vsel %vm6181, %v5692, %v6180
        %vm6183 = vcmask 1044484
        %v6184 = vsel %vm6183, %v5699, %v6182
        %vm6185 = vcmask 1045509
        %v6186 = vsel %vm6185, %v5706, %v6184
        %vm6187 = vcmask 1046534
        %v6188 = vsel %vm6187, %v5713, %v6186
        %vm6189 = vcmask 1047559
        %v6190 = vsel %vm6189, %v5720, %v6188
        %v6191 = vsel %vm6177, %v5734, %v5727
        %v6192 = vsel %vm6179, %v5741, %v6191
        %v6193 = vsel %vm6181, %v5748, %v6192
        %v6194 = vsel %vm6183, %v5755, %v6193
        %v6195 = vsel %vm6185, %v5762, %v6194
        %v6196 = vsel %vm6187, %v5769, %v6195
        %v6197 = vsel %vm6189, %v5776, %v6196
        %v6198 = vsel %vm6177, %v5790, %v5783
        %v6199 = vsel %vm6179, %v5797, %v6198
        %v6200 = vsel %vm6181, %v5804, %v6199
        %v6201 = vsel %vm6183, %v5811, %v6200
        %v6202 = vsel %vm6185, %v5818, %v6201
        %v6203 = vsel %vm6187, %v5825, %v6202
        %v6204 = vsel %vm6189, %v5832, %v6203
        %v6205 = vsel %vm6177, %v5846, %v5839
        %v6206 = vsel %vm6179, %v5853, %v6205
        %v6207 = vsel %vm6181, %v5860, %v6206
        %v6208 = vsel %vm6183, %v5867, %v6207
        %v6209 = vsel %vm6185, %v5874, %v6208
        %v6210 = vsel %vm6187, %v5881, %v6209
        %v6211 = vsel %vm6189, %v5888, %v6210
        %v6212 = vsel %vm6177, %v5902, %v5895
        %v6213 = vsel %vm6179, %v5909, %v6212
        %v6214 = vsel %vm6181, %v5916, %v6213
        %v6215 = vsel %vm6183, %v5923, %v6214
        %v6216 = vsel %vm6185, %v5930, %v6215
        %v6217 = vsel %vm6187, %v5937, %v6216
        %v6218 = vsel %vm6189, %v5944, %v6217
        %v6219 = vsel %vm6177, %v5958, %v5951
        %v6220 = vsel %vm6179, %v5965, %v6219
        %v6221 = vsel %vm6181, %v5972, %v6220
        %v6222 = vsel %vm6183, %v5979, %v6221
        %v6223 = vsel %vm6185, %v5986, %v6222
        %v6224 = vsel %vm6187, %v5993, %v6223
        %v6225 = vsel %vm6189, %v6000, %v6224
        %v6226 = vsel %vm6177, %v6014, %v6007
        %v6227 = vsel %vm6179, %v6021, %v6226
        %v6228 = vsel %vm6181, %v6028, %v6227
        %v6229 = vsel %vm6183, %v6035, %v6228
        %v6230 = vsel %vm6185, %v6042, %v6229
        %v6231 = vsel %vm6187, %v6049, %v6230
        %v6232 = vsel %vm6189, %v6056, %v6231
        %v6233 = vsel %vm6177, %v6070, %v6063
        %v6234 = vsel %vm6179, %v6077, %v6233
        %v6235 = vsel %vm6181, %v6084, %v6234
        %v6236 = vsel %vm6183, %v6091, %v6235
        %v6237 = vsel %vm6185, %v6098, %v6236
        %v6238 = vsel %vm6187, %v6105, %v6237
        %v6239 = vsel %vm6189, %v6112, %v6238
        %6248 = vst [vmem:[%s286] sm:$0xff] %v6190
        %6249 = vst [vmem:[%s286 + $0x8] sm:$0xff] %v6197
        %6250 = vst [vmem:[%s286 + $0x10] sm:$0xff] %v6204
        %6251 = vst [vmem:[%s286 + $0x18] sm:$0xff] %v6211
        %6252 = vst [vmem:[%s286 + $0x20] sm:$0xff] %v6218
        %6253 = vst [vmem:[%s286 + $0x28] sm:$0xff] %v6225
        %6254 = vst [vmem:[%s286 + $0x30] sm:$0xff] %v6232
        %6255 = vst [vmem:[%s286 + $0x38] sm:$0xff] %v6239
        %s6256 = sand.u32 %s182, 1
        %s6257 = scalar_lea.sflag [#allocation6], %s6256
        %s6258 = sand.u32 %s182, 1
        %s6259 = smul.addr %s6258, 64
        %s6260 = scalar_lea.vmem [#allocation7], %s6259
        // Predicated region
        $region53: #{tpu_custom_call.1} parent=47 // pred_check
          %p6261 = pneg %p192
        $region54: #{tpu_custom_call.1} parent=47 // pred_check_branch
          %6263 = sbr.rel (%p6261) target = $region56
        $region55: #{tpu_custom_call.1} parent=47 // pred_region
          %s6265 = ssub.s32 1024, 1024
          %6266 = vsyncadd %s6257, %s6265
          %s6267 = smul.addr %s22, 8
          %s6268 = smul.addr %s6267, 128
          %s6269 = scalar_lea.hbm %s7, %s6268
          %s6270 = sshll.u32 %s6260, 4
          %s6271 = int_to_ptr.vmem [resolvable:$true] %s6270
          %6276 = dma.vmem_to_hbm [thread:$0]  %s6271, 1024, %s6269, %s6257, 128, 128, 8
        $region56: #{tpu_custom_call.1} parent=47 // pred_fallthru
          _
      $region48: #{tpu_custom_call.1} parent=5 // pred_fallthru
        _
      %p6277 = scmp.le.s32.totalorder 2, %s17
      // Predicated region
      $region57: #{tpu_custom_call.1} parent=5 // pred_check
        %p6278 = pneg %p6277
      $region58: #{tpu_custom_call.1} parent=5 // pred_check_branch
        %6280 = sbr.rel (%p6278) target = $region60
      $region59: #{tpu_custom_call.1} parent=5 // pred_region
        %s6281 = ssub.s32 %s17, 2
        // Predicated region
        $region61: #{tpu_custom_call.1} parent=59 // pred_check
          %p6282 = pneg %p198
        $region62: #{tpu_custom_call.1} parent=59 // pred_check_branch
          %6284 = sbr.rel (%p6282) target = $region64
        $region63: #{tpu_custom_call.1} parent=59 // pred_region
          %s6285 = sand.u32 %s183, 1
          %s6286 = scalar_lea.sflag [#allocation6], %s6285
          %s6287 = sand.u32 %s183, 1
          %s6288 = smul.addr %s6287, 64
          %s6289 = scalar_lea.vmem [#allocation7], %s6288
          %6290 = dma.done %s6286, 1024
        $region64: #{tpu_custom_call.1} parent=59 // pred_fallthru
          _
      $region60: #{tpu_custom_call.1} parent=5 // pred_fallthru
        _
    $region6: #{tpu_custom_call.1} parent=1 // loop_footer
      %s21 = sadd.s32 1, %s17
    $region7: #{tpu_custom_call.1} parent=1 // loop_footer_branch
      %16 = sbr.rel target = $region3
    $region8: #{tpu_custom_call.1} parent=1 // loop_exit
      _
    %6291 = vsyncpa [#allocation5], 1
    %s6292 = scalar_lea.sflag [#allocation5], 1
    %6293 = vsyncpa %s6292, 1
    %6294 = vsyncpa [#allocation6], 1
    %s6295 = scalar_lea.sflag [#allocation6], 1
    %6296 = vsyncpa %s6295, 1

</llo_original>
